<compile_context>
chip_gen: v7x
topology: tpu7x:2x2x1
jax: 0.10.0
libtpu: 0.0.40
codegen_flags: <defaults>
</compile_context>

<pallas_src>
import functools

import jax
import jax.numpy as jnp
from jax import lax
from jax.experimental import pallas as pl
from jax.experimental.pallas import tpu as pltpu


# ----------------------------------------------------------------------------
# In-kernel helpers (operate on VMEM-resident bf16 activations).
# ----------------------------------------------------------------------------
def _conv3x3(x, w_ref, b_ref, relu=True):
    """3x3 'same' conv, stride 1, NHWC.

    x:     (B, H, W, Cin) bf16 value
    w_ref: (3, 3, Cin, Cout) bf16 ref          (per-tap matmuls), or
           (3, 3*Cin, Cout)  bf16 ref          (dy taps pre-fused; Cin%128==0)
    b_ref: (1, Cout) f32 ref
    returns (B, H, W, Cout) bf16
    """
    B, H, W, Cin = x.shape
    Cout = w_ref.shape[-1]
    fused = len(w_ref.shape) == 3
    M = B * H * W
    zcol = jnp.zeros((B, H, 1, Cin), jnp.bfloat16)
    zrow = jnp.zeros((B, 1, W, Cin), jnp.bfloat16)

    # Bias folded into the accumulator init (f32 epilogue stays exact).
    acc = jnp.broadcast_to(b_ref[...], (M, Cout))

    for dx in (-1, 0, 1):
        # Horizontal shift: one sublane concat per dx (dx=0 is free).
        if dx == -1:
            xd = jnp.concatenate([zcol, x[:, :, :W - 1, :]], axis=2)
        elif dx == 1:
            xd = jnp.concatenate([x[:, :, 1:, :], zcol], axis=2)
        else:
            xd = x
        if fused:
            # Vertical (H) shifts are leading-axis -> essentially free; the 3
            # dy taps stack along the 128-aligned lane axis, so one K=3*Cin
            # matmul per dx keeps accumulation inside the MXU.
            up = jnp.concatenate([zrow, xd[:, :H - 1]], axis=1)
            dn = jnp.concatenate([xd[:, 1:], zrow], axis=1)
            patch = jnp.concatenate([up, xd, dn], axis=-1).reshape(M, 3 * Cin)
            acc = acc + jnp.dot(patch, w_ref[dx + 1],
                                preferred_element_type=jnp.float32)
        else:
            for dy in (-1, 0, 1):
                if dy == -1:
                    p = jnp.concatenate([zrow, xd[:, :H - 1]], axis=1)
                elif dy == 1:
                    p = jnp.concatenate([xd[:, 1:], zrow], axis=1)
                else:
                    p = xd
                acc = acc + jnp.dot(p.reshape(M, Cin), w_ref[dy + 1, dx + 1],
                                    preferred_element_type=jnp.float32)
    if relu:
        acc = jnp.maximum(acc, 0.0)
    return acc.astype(jnp.bfloat16).reshape(B, H, W, Cout)


def _upsample_nearest(x, sel_ref, out_h, out_w):
    """Nearest resize (B,H,W,C)->(B,out_h,out_w,C) via a hoisted one-hot
    selection matmul. 0/1 selector is exact in bf16; rows are exact copies."""
    B, H, W, C = x.shape
    sel = sel_ref[...]                                  # (out_h*out_w, H*W)
    ys = []
    for b in range(B):
        yb = jnp.dot(sel, x[b].reshape(H * W, C),
                     preferred_element_type=jnp.float32)
        ys.append(yb.astype(jnp.bfloat16).reshape(1, out_h, out_w, C))
    return ys[0] if B == 1 else jnp.concatenate(ys, axis=0)


# ----------------------------------------------------------------------------
# Fused decoder kernel: one grid step = one batch tile ("parallel" for v7x).
# ----------------------------------------------------------------------------
def _decoder_kernel(x_ref, sel_ref, w30_ref, b30_ref, w31_ref, b31_ref,
                    w40_ref, b40_ref, w41_ref, b41_ref, wf_ref, bf_ref,
                    o_ref, *, out_h, out_w):
    x = x_ref[...]                                      # (B, H, W, Cin) bf16

    # dec_block3
    x = _conv3x3(x, w30_ref, b30_ref)                   # (B, H, W, 256)
    x = _conv3x3(x, w31_ref, b31_ref)                   # (B, H, W, 128)

    # F.interpolate(..., size=images.shape[-2:], mode='nearest')
    x = _upsample_nearest(x, sel_ref, out_h, out_w)     # (B, Ho, Wo, 128)

    # dec_block4
    x = _conv3x3(x, w40_ref, b40_ref)                   # (B, Ho, Wo, 64)
    x = _conv3x3(x, w41_ref, b41_ref)                   # (B, Ho, Wo, out_ch)

    # final 1x1 conv (no relu); store lane-dense as (out_ch, Ho*Wo).
    B, Ho, Wo, C = x.shape
    Cout = wf_ref.shape[-1]
    m = Ho * Wo
    y = jnp.dot(x.reshape(B * m, C), wf_ref[...],
                preferred_element_type=jnp.float32) + bf_ref[...]
    y = y.reshape(B, m, Cout)
    for b in range(B):
        o_ref[b] = y[b].T                               # tiny (m x Cout) xpose


# ----------------------------------------------------------------------------
# Wrapper: single pallas_call for the whole active forward.
# ----------------------------------------------------------------------------
def unet_decoder_forward(params, enc_out5, enc_out4, enc_out3, enc_out2,
                         enc_out1, images, *, batch_tile=1):
    del enc_out5, enc_out4, enc_out3, enc_out2          # dead in active branch
    # NCHW -> NHWC, bf16 activations (halves the input DMA; matches reference
    # numerics, which cast every conv input to bf16 anyway).
    x = jnp.transpose(enc_out1, (0, 2, 3, 1)).astype(jnp.bfloat16)
    N, H, W, Cin = x.shape
    Hout, Wout = int(images.shape[-2]), int(images.shape[-1])
    assert N % batch_tile == 0, (N, batch_tile)

    # Nearest-neighbour one-hot selector (PyTorch legacy 'nearest' mapping),
    # built once from static shapes and passed into the kernel as bf16.
    r = jnp.arange(Hout * Wout, dtype=jnp.int32)
    src_h = ((r // Wout) * H) // Hout
    src_w = ((r % Wout) * W) // Wout
    src = src_h * W + src_w
    sel = (src[:, None] == jnp.arange(H * W, dtype=jnp.int32)[None, :]
           ).astype(jnp.bfloat16)                       # (Hout*Wout, H*W)

    def maybe_fuse(w):
        # (3,3,Cin,Cout) -> (3, 3*Cin, Cout) when Cin is lane-aligned so the
        # kernel can fuse the 3 dy taps into one matmul per dx.
        k, _, ci, co = w.shape
        if ci % 128 == 0:
            return jnp.transpose(w, (1, 0, 2, 3)).reshape(k, k * ci, co)
        return w

    # bf16 weights (MXU operands), f32 biases (epilogue).
    w30 = maybe_fuse(params["db3_w0"]).astype(jnp.bfloat16)   # Cin=264: raw
    w31 = maybe_fuse(params["db3_w1"]).astype(jnp.bfloat16)   # Cin=256: fused
    w40 = maybe_fuse(params["db4_w0"]).astype(jnp.bfloat16)   # Cin=128: fused
    w41 = maybe_fuse(params["db4_w1"]).astype(jnp.bfloat16)   # Cin=64 : raw
    wf = params["fin_w"][0, 0].astype(jnp.bfloat16)           # (Cin, Cout) 1x1
    out_ch = wf.shape[-1]
    b30 = params["db3_b0"].reshape(1, -1).astype(jnp.float32)
    b31 = params["db3_b1"].reshape(1, -1).astype(jnp.float32)
    b40 = params["db4_b0"].reshape(1, -1).astype(jnp.float32)
    b41 = params["db4_b1"].reshape(1, -1).astype(jnp.float32)
    bf = params["fin_b"].reshape(1, -1).astype(jnp.float32)

    kernel = functools.partial(_decoder_kernel, out_h=Hout, out_w=Wout)

    def const_spec(a):
        # Grid-invariant operand (weights / biases / selector): full block,
        # constant index map (never re-DMA'd).  NOTE: could be single-buffered
        # with pipeline_mode=pl.Buffered(1) to drop the dead second VMEM copy
        # on v7x; left at the default since total weight VMEM is ~2 MB here.
        nd = a.ndim
        return pl.BlockSpec(a.shape, lambda n, _nd=nd: (0,) * _nd)

    out = pl.pallas_call(
        kernel,
        out_shape=jax.ShapeDtypeStruct((N, out_ch, Hout * Wout), jnp.float32),
        grid=(N // batch_tile,),
        in_specs=[
            pl.BlockSpec((batch_tile, H, W, Cin), lambda n: (n, 0, 0, 0)),
            const_spec(sel),
            const_spec(w30), const_spec(b30),
            const_spec(w31), const_spec(b31),
            const_spec(w40), const_spec(b40),
            const_spec(w41), const_spec(b41),
            const_spec(wf), const_spec(bf),
        ],
        out_specs=pl.BlockSpec((batch_tile, out_ch, Hout * Wout),
                               lambda n: (n, 0, 0)),
        compiler_params=pltpu.CompilerParams(
            dimension_semantics=("parallel",)),
    )(x, sel, w30, b30, w31, b31, w40, b40, w41, b41, wf, bf)

    # Lane-dense (N, out_ch, Hout*Wout) is already channels-first: just unfold
    # the spatial axis -> NCHW, no transpose needed.
    # TODO(synk): at realistic image sizes add an output-row grid axis with a
    # 1-row halo (spatial tiling) so activations + selector stay under VMEM.
    return out.reshape(N, out_ch, Hout, Wout)


# ----------------------------------------------------------------------------
# Parameter init (kaiming_normal_, fan_in, relu; bias = 0), deterministic.
# Conv weights stored as (K, K, Cin, Cout) for the NHWC kernel.
# ----------------------------------------------------------------------------
def _kaiming_conv(key, k, cin, cout):
    fan_in = cin * k * k
    std = (2.0 / fan_in) ** 0.5
    w = jax.random.normal(key, (k, k, cin, cout), jnp.float32) * std
    b = jnp.zeros((cout,), jnp.float32)
    return w, b


def init_params(key, enc_out1_channels, out_channels):
    keys = jax.random.split(key, 5)
    p = {}
    # dec_block3 = DecoderBlock(256 + enc_out1_channels, 256, 128)
    p["db3_w0"], p["db3_b0"] = _kaiming_conv(keys[0], 3,
                                             256 + enc_out1_channels, 256)
    p["db3_w1"], p["db3_b1"] = _kaiming_conv(keys[1], 3, 256, 128)
    # dec_block4 = DecoderBlock(128, 64, out_channels)
    p["db4_w0"], p["db4_b0"] = _kaiming_conv(keys[2], 3, 128, 64)
    p["db4_w1"], p["db4_b1"] = _kaiming_conv(keys[3], 3, 64, out_channels)
    # final_layer = Conv2d(out_channels, out_channels, kernel_size=1)
    p["fin_w"], p["fin_b"] = _kaiming_conv(keys[4], 1, out_channels,
                                           out_channels)
    return p


# ----------------------------------------------------------------------------
# Pure-JAX reference (lax.conv) with matching bf16-operand / f32-accum numerics.
# ----------------------------------------------------------------------------
def _ref_conv(x, w, b, relu, pad):
    y = lax.conv_general_dilated(
        x.astype(jnp.bfloat16), w.astype(jnp.bfloat16),
        window_strides=(1, 1), padding=[(pad, pad), (pad, pad)],
        dimension_numbers=("NHWC", "HWIO", "NHWC"),
        preferred_element_type=jnp.float32)
    y = y + b[None, None, None, :].astype(jnp.float32)
    return jnp.maximum(y, 0.0) if relu else y


def nearest_resize_nhwc(x, out_h, out_w):
    _, H, W, _ = x.shape
    hi = (jnp.arange(out_h) * H) // out_h
    wi = (jnp.arange(out_w) * W) // out_w
    return x[:, hi][:, :, wi]


def unet_decoder_ref(params, enc_out1, images):
    x = jnp.transpose(enc_out1, (0, 2, 3, 1)).astype(jnp.float32)
    x = _ref_conv(x, params["db3_w0"], params["db3_b0"], True, 1)
    x = _ref_conv(x, params["db3_w1"], params["db3_b1"], True, 1)
    x = nearest_resize_nhwc(x, images.shape[-2], images.shape[-1])
    x = _ref_conv(x, params["db4_w0"], params["db4_b0"], True, 1)
    x = _ref_conv(x, params["db4_w1"], params["db4_b1"], True, 1)
    x = _ref_conv(x, params["fin_w"], params["fin_b"], False, 0)
    return jnp.transpose(x, (0, 3, 1, 2))


if __name__ == "__main__":
    key = jax.random.PRNGKey(0)
    k_p, k1, k2, k3, k4, k5, k_img = jax.random.split(key, 7)

    # Small, module-consistent shapes.
    batch = 2
    enc_out1_channels = 8       # dec_block3 input channels = 256 + 8 = 264
    out_channels = 4
    params = init_params(k_p, enc_out1_channels, out_channels)

    # enc_out1 must carry 256 + enc_out1_channels channels for the active
    # forward path (dec_block3 is applied directly to it).
    enc_out5 = jax.random.normal(k1, (batch, 16, 2, 2), jnp.float32)
    enc_out4 = jax.random.normal(k2, (batch, 16, 4, 4), jnp.float32)
    enc_out3 = jax.random.normal(k3, (batch, 16, 8, 8), jnp.float32)
    enc_out2 = jax.random.normal(k4, (batch, 16, 8, 8), jnp.float32)
    enc_out1 = jax.random.normal(
        k5, (batch, 256 + enc_out1_channels, 8, 8), jnp.float32)
    images = jax.random.normal(k_img, (batch, 3, 16, 16), jnp.float32)

    # batch_tile=1 keeps grid=(2,) so both v7x TensorCores get a step; raise
    # batch_tile (e.g. 4) for larger N to fill the 256-row MXU on v6e/v7x.
    out = unet_decoder_forward(params, enc_out5, enc_out4, enc_out3,
                               enc_out2, enc_out1, images, batch_tile=1)
    out = jax.block_until_ready(out)

    ref = jax.block_until_ready(unet_decoder_ref(params, enc_out1, images))
    assert out.shape == (batch, out_channels, 16, 16), out.shape
    max_err = float(jnp.max(jnp.abs(out - ref)))
    assert jnp.allclose(out, ref, rtol=1e-2, atol=1e-2), max_err

    print("KERNEL_OK")
</pallas_src>

<mosaic_0001>
module attributes {stable_mosaic.version = 11 : i64} {
  func.func @_decoder_kernel(%arg0: i32, %arg1: memref<1x8x8x264xbf16, #tpu.memory_space<vmem>>, %arg2: memref<256x64xbf16, #tpu.memory_space<vmem>>, %arg3: memref<3x3x264x256xbf16, #tpu.memory_space<vmem>>, %arg4: memref<1x256xf32, #tpu.memory_space<vmem>>, %arg5: memref<3x768x128xbf16, #tpu.memory_space<vmem>>, %arg6: memref<1x128xf32, #tpu.memory_space<vmem>>, %arg7: memref<3x384x64xbf16, #tpu.memory_space<vmem>>, %arg8: memref<1x64xf32, #tpu.memory_space<vmem>>, %arg9: memref<3x3x64x4xbf16, #tpu.memory_space<vmem>>, %arg10: memref<1x4xf32, #tpu.memory_space<vmem>>, %arg11: memref<4x4xbf16, #tpu.memory_space<vmem>>, %arg12: memref<1x4xf32, #tpu.memory_space<vmem>>, %arg13: memref<1x4x256xf32, #tpu.memory_space<vmem>>) attributes {dimension_semantics = [#tpu.dimension_semantics<parallel>], iteration_bounds = array<i64: 2>, scalar_prefetch = 0 : i64, scratch_operands = 0 : i64, tpu.core_type = #tpu.core_type<tc>, window_params = [{transform_indices = @transform_0, window_bounds = array<i64: 1, 8, 8, 264>}, {pipeline_mode = #tpu.pipeline_mode<synchronous>, transform_indices = @transform_1, window_bounds = array<i64: 256, 64>}, {pipeline_mode = #tpu.pipeline_mode<synchronous>, transform_indices = @transform_2, window_bounds = array<i64: 3, 3, 264, 256>}, {pipeline_mode = #tpu.pipeline_mode<synchronous>, transform_indices = @transform_3, window_bounds = array<i64: 1, 256>}, {pipeline_mode = #tpu.pipeline_mode<synchronous>, transform_indices = @transform_4, window_bounds = array<i64: 3, 768, 128>}, {pipeline_mode = #tpu.pipeline_mode<synchronous>, transform_indices = @transform_5, window_bounds = array<i64: 1, 128>}, {pipeline_mode = #tpu.pipeline_mode<synchronous>, transform_indices = @transform_6, window_bounds = array<i64: 3, 384, 64>}, {pipeline_mode = #tpu.pipeline_mode<synchronous>, transform_indices = @transform_7, window_bounds = array<i64: 1, 64>}, {pipeline_mode = #tpu.pipeline_mode<synchronous>, transform_indices = @transform_8, window_bounds = array<i64: 3, 3, 64, 4>}, {pipeline_mode = #tpu.pipeline_mode<synchronous>, transform_indices = @transform_9, window_bounds = array<i64: 1, 4>}, {pipeline_mode = #tpu.pipeline_mode<synchronous>, transform_indices = @transform_10, window_bounds = array<i64: 4, 4>}, {pipeline_mode = #tpu.pipeline_mode<synchronous>, transform_indices = @transform_11, window_bounds = array<i64: 1, 4>}, {transform_indices = @transform_12, window_bounds = array<i64: 1, 4, 256>}]} {
    %c0 = arith.constant 0 : index
    %c0_0 = arith.constant 0 : index
    %c0_1 = arith.constant 0 : index
    %c0_2 = arith.constant 0 : index
    %0 = vector.load %arg1[%c0, %c0_0, %c0_1, %c0_2] : memref<1x8x8x264xbf16, #tpu.memory_space<vmem>>, vector<1x8x8x264xbf16>
    %cst = arith.constant 0.000000e+00 : bf16
    %1 = vector.broadcast %cst : bf16 to vector<1x8x1x264xbf16>
    %cst_3 = arith.constant 0.000000e+00 : bf16
    %2 = vector.broadcast %cst_3 : bf16 to vector<1x1x8x264xbf16>
    %c0_4 = arith.constant 0 : index
    %c0_5 = arith.constant 0 : index
    %3 = vector.load %arg4[%c0_4, %c0_5] : memref<1x256xf32, #tpu.memory_space<vmem>>, vector<1x256xf32>
    %4 = vector.shape_cast %3 : vector<1x256xf32> to vector<1x256xf32>
    %5 = vector.broadcast %4 : vector<1x256xf32> to vector<64x256xf32>
    %6 = vector.extract_strided_slice %0 {offsets = [0, 0, 0, 0], sizes = [1, 8, 7, 264], strides = [1, 1, 1, 1]} : vector<1x8x8x264xbf16> to vector<1x8x7x264xbf16>
    %7 = tpu.concatenate %1, %6 in 2 : vector<1x8x1x264xbf16>, vector<1x8x7x264xbf16> -> vector<1x8x8x264xbf16>
    %8 = vector.extract_strided_slice %7 {offsets = [0, 0, 0, 0], sizes = [1, 7, 8, 264], strides = [1, 1, 1, 1]} : vector<1x8x8x264xbf16> to vector<1x7x8x264xbf16>
    %9 = tpu.concatenate %2, %8 in 1 : vector<1x1x8x264xbf16>, vector<1x7x8x264xbf16> -> vector<1x8x8x264xbf16>
    %10 = vector.shape_cast %9 : vector<1x8x8x264xbf16> to vector<64x264xbf16>
    %c0_6 = arith.constant 0 : index
    %c0_7 = arith.constant 0 : index
    %c0_8 = arith.constant 0 : index
    %c0_9 = arith.constant 0 : index
    %11 = vector.load %arg3[%c0_6, %c0_7, %c0_8, %c0_9] : memref<3x3x264x256xbf16, #tpu.memory_space<vmem>>, vector<1x1x264x256xbf16>
    %12 = vector.shape_cast %11 : vector<1x1x264x256xbf16> to vector<264x256xbf16>
    %cst_10 = arith.constant dense<0.000000e+00> : vector<64x256xf32>
    %13 = tpu.matmul %10, %12, %cst_10 {dimension_numbers = #tpu.dot_dimension_numbers<[1], [0], [0], [1], [0, 0, 1, 1], [], []>} : vector<64x264xbf16>, vector<264x256xbf16>, vector<64x256xf32> -> vector<64x256xf32>
    %14 = arith.addf %5, %13 : vector<64x256xf32>
    %15 = vector.shape_cast %7 : vector<1x8x8x264xbf16> to vector<64x264xbf16>
    %c1 = arith.constant 1 : index
    %c0_11 = arith.constant 0 : index
    %c0_12 = arith.constant 0 : index
    %c0_13 = arith.constant 0 : index
    %16 = vector.load %arg3[%c1, %c0_11, %c0_12, %c0_13] : memref<3x3x264x256xbf16, #tpu.memory_space<vmem>>, vector<1x1x264x256xbf16>
    %17 = vector.shape_cast %16 : vector<1x1x264x256xbf16> to vector<264x256xbf16>
    %cst_14 = arith.constant dense<0.000000e+00> : vector<64x256xf32>
    %18 = tpu.matmul %15, %17, %cst_14 {dimension_numbers = #tpu.dot_dimension_numbers<[1], [0], [0], [1], [0, 0, 1, 1], [], []>} : vector<64x264xbf16>, vector<264x256xbf16>, vector<64x256xf32> -> vector<64x256xf32>
    %19 = arith.addf %14, %18 : vector<64x256xf32>
    %20 = vector.extract_strided_slice %7 {offsets = [0, 1, 0, 0], sizes = [1, 7, 8, 264], strides = [1, 1, 1, 1]} : vector<1x8x8x264xbf16> to vector<1x7x8x264xbf16>
    %21 = tpu.concatenate %20, %2 in 1 : vector<1x7x8x264xbf16>, vector<1x1x8x264xbf16> -> vector<1x8x8x264xbf16>
    %22 = vector.shape_cast %21 : vector<1x8x8x264xbf16> to vector<64x264xbf16>
    %c2 = arith.constant 2 : index
    %c0_15 = arith.constant 0 : index
    %c0_16 = arith.constant 0 : index
    %c0_17 = arith.constant 0 : index
    %23 = vector.load %arg3[%c2, %c0_15, %c0_16, %c0_17] : memref<3x3x264x256xbf16, #tpu.memory_space<vmem>>, vector<1x1x264x256xbf16>
    %24 = vector.shape_cast %23 : vector<1x1x264x256xbf16> to vector<264x256xbf16>
    %cst_18 = arith.constant dense<0.000000e+00> : vector<64x256xf32>
    %25 = tpu.matmul %22, %24, %cst_18 {dimension_numbers = #tpu.dot_dimension_numbers<[1], [0], [0], [1], [0, 0, 1, 1], [], []>} : vector<64x264xbf16>, vector<264x256xbf16>, vector<64x256xf32> -> vector<64x256xf32>
    %26 = arith.addf %19, %25 : vector<64x256xf32>
    %27 = vector.extract_strided_slice %0 {offsets = [0, 0, 0, 0], sizes = [1, 7, 8, 264], strides = [1, 1, 1, 1]} : vector<1x8x8x264xbf16> to vector<1x7x8x264xbf16>
    %28 = tpu.concatenate %2, %27 in 1 : vector<1x1x8x264xbf16>, vector<1x7x8x264xbf16> -> vector<1x8x8x264xbf16>
    %29 = vector.shape_cast %28 : vector<1x8x8x264xbf16> to vector<64x264xbf16>
    %c0_19 = arith.constant 0 : index
    %c1_20 = arith.constant 1 : index
    %c0_21 = arith.constant 0 : index
    %c0_22 = arith.constant 0 : index
    %30 = vector.load %arg3[%c0_19, %c1_20, %c0_21, %c0_22] : memref<3x3x264x256xbf16, #tpu.memory_space<vmem>>, vector<1x1x264x256xbf16>
    %31 = vector.shape_cast %30 : vector<1x1x264x256xbf16> to vector<264x256xbf16>
    %cst_23 = arith.constant dense<0.000000e+00> : vector<64x256xf32>
    %32 = tpu.matmul %29, %31, %cst_23 {dimension_numbers = #tpu.dot_dimension_numbers<[1], [0], [0], [1], [0, 0, 1, 1], [], []>} : vector<64x264xbf16>, vector<264x256xbf16>, vector<64x256xf32> -> vector<64x256xf32>
    %33 = arith.addf %26, %32 : vector<64x256xf32>
    %34 = vector.shape_cast %0 : vector<1x8x8x264xbf16> to vector<64x264xbf16>
    %c1_24 = arith.constant 1 : index
    %c1_25 = arith.constant 1 : index
    %c0_26 = arith.constant 0 : index
    %c0_27 = arith.constant 0 : index
    %35 = vector.load %arg3[%c1_24, %c1_25, %c0_26, %c0_27] : memref<3x3x264x256xbf16, #tpu.memory_space<vmem>>, vector<1x1x264x256xbf16>
    %36 = vector.shape_cast %35 : vector<1x1x264x256xbf16> to vector<264x256xbf16>
    %cst_28 = arith.constant dense<0.000000e+00> : vector<64x256xf32>
    %37 = tpu.matmul %34, %36, %cst_28 {dimension_numbers = #tpu.dot_dimension_numbers<[1], [0], [0], [1], [0, 0, 1, 1], [], []>} : vector<64x264xbf16>, vector<264x256xbf16>, vector<64x256xf32> -> vector<64x256xf32>
    %38 = arith.addf %33, %37 : vector<64x256xf32>
    %39 = vector.extract_strided_slice %0 {offsets = [0, 1, 0, 0], sizes = [1, 7, 8, 264], strides = [1, 1, 1, 1]} : vector<1x8x8x264xbf16> to vector<1x7x8x264xbf16>
    %40 = tpu.concatenate %39, %2 in 1 : vector<1x7x8x264xbf16>, vector<1x1x8x264xbf16> -> vector<1x8x8x264xbf16>
    %41 = vector.shape_cast %40 : vector<1x8x8x264xbf16> to vector<64x264xbf16>
    %c2_29 = arith.constant 2 : index
    %c1_30 = arith.constant 1 : index
    %c0_31 = arith.constant 0 : index
    %c0_32 = arith.constant 0 : index
    %42 = vector.load %arg3[%c2_29, %c1_30, %c0_31, %c0_32] : memref<3x3x264x256xbf16, #tpu.memory_space<vmem>>, vector<1x1x264x256xbf16>
    %43 = vector.shape_cast %42 : vector<1x1x264x256xbf16> to vector<264x256xbf16>
    %cst_33 = arith.constant dense<0.000000e+00> : vector<64x256xf32>
    %44 = tpu.matmul %41, %43, %cst_33 {dimension_numbers = #tpu.dot_dimension_numbers<[1], [0], [0], [1], [0, 0, 1, 1], [], []>} : vector<64x264xbf16>, vector<264x256xbf16>, vector<64x256xf32> -> vector<64x256xf32>
    %45 = arith.addf %38, %44 : vector<64x256xf32>
    %46 = vector.extract_strided_slice %0 {offsets = [0, 0, 1, 0], sizes = [1, 8, 7, 264], strides = [1, 1, 1, 1]} : vector<1x8x8x264xbf16> to vector<1x8x7x264xbf16>
    %47 = tpu.concatenate %46, %1 in 2 : vector<1x8x7x264xbf16>, vector<1x8x1x264xbf16> -> vector<1x8x8x264xbf16>
    %48 = vector.extract_strided_slice %47 {offsets = [0, 0, 0, 0], sizes = [1, 7, 8, 264], strides = [1, 1, 1, 1]} : vector<1x8x8x264xbf16> to vector<1x7x8x264xbf16>
    %49 = tpu.concatenate %2, %48 in 1 : vector<1x1x8x264xbf16>, vector<1x7x8x264xbf16> -> vector<1x8x8x264xbf16>
    %50 = vector.shape_cast %49 : vector<1x8x8x264xbf16> to vector<64x264xbf16>
    %c0_34 = arith.constant 0 : index
    %c2_35 = arith.constant 2 : index
    %c0_36 = arith.constant 0 : index
    %c0_37 = arith.constant 0 : index
    %51 = vector.load %arg3[%c0_34, %c2_35, %c0_36, %c0_37] : memref<3x3x264x256xbf16, #tpu.memory_space<vmem>>, vector<1x1x264x256xbf16>
    %52 = vector.shape_cast %51 : vector<1x1x264x256xbf16> to vector<264x256xbf16>
    %cst_38 = arith.constant dense<0.000000e+00> : vector<64x256xf32>
    %53 = tpu.matmul %50, %52, %cst_38 {dimension_numbers = #tpu.dot_dimension_numbers<[1], [0], [0], [1], [0, 0, 1, 1], [], []>} : vector<64x264xbf16>, vector<264x256xbf16>, vector<64x256xf32> -> vector<64x256xf32>
    %54 = arith.addf %45, %53 : vector<64x256xf32>
    %55 = vector.shape_cast %47 : vector<1x8x8x264xbf16> to vector<64x264xbf16>
    %c1_39 = arith.constant 1 : index
    %c2_40 = arith.constant 2 : index
    %c0_41 = arith.constant 0 : index
    %c0_42 = arith.constant 0 : index
    %56 = vector.load %arg3[%c1_39, %c2_40, %c0_41, %c0_42] : memref<3x3x264x256xbf16, #tpu.memory_space<vmem>>, vector<1x1x264x256xbf16>
    %57 = vector.shape_cast %56 : vector<1x1x264x256xbf16> to vector<264x256xbf16>
    %cst_43 = arith.constant dense<0.000000e+00> : vector<64x256xf32>
    %58 = tpu.matmul %55, %57, %cst_43 {dimension_numbers = #tpu.dot_dimension_numbers<[1], [0], [0], [1], [0, 0, 1, 1], [], []>} : vector<64x264xbf16>, vector<264x256xbf16>, vector<64x256xf32> -> vector<64x256xf32>
    %59 = arith.addf %54, %58 : vector<64x256xf32>
    %60 = vector.extract_strided_slice %47 {offsets = [0, 1, 0, 0], sizes = [1, 7, 8, 264], strides = [1, 1, 1, 1]} : vector<1x8x8x264xbf16> to vector<1x7x8x264xbf16>
    %61 = tpu.concatenate %60, %2 in 1 : vector<1x7x8x264xbf16>, vector<1x1x8x264xbf16> -> vector<1x8x8x264xbf16>
    %62 = vector.shape_cast %61 : vector<1x8x8x264xbf16> to vector<64x264xbf16>
    %c2_44 = arith.constant 2 : index
    %c2_45 = arith.constant 2 : index
    %c0_46 = arith.constant 0 : index
    %c0_47 = arith.constant 0 : index
    %63 = vector.load %arg3[%c2_44, %c2_45, %c0_46, %c0_47] : memref<3x3x264x256xbf16, #tpu.memory_space<vmem>>, vector<1x1x264x256xbf16>
    %64 = vector.shape_cast %63 : vector<1x1x264x256xbf16> to vector<264x256xbf16>
    %cst_48 = arith.constant dense<0.000000e+00> : vector<64x256xf32>
    %65 = tpu.matmul %62, %64, %cst_48 {dimension_numbers = #tpu.dot_dimension_numbers<[1], [0], [0], [1], [0, 0, 1, 1], [], []>} : vector<64x264xbf16>, vector<264x256xbf16>, vector<64x256xf32> -> vector<64x256xf32>
    %66 = arith.addf %59, %65 : vector<64x256xf32>
    %cst_49 = arith.constant 0.000000e+00 : f32
    %67 = vector.broadcast %cst_49 : f32 to vector<64x256xf32>
    %68 = arith.maximumf %66, %67 : vector<64x256xf32>
    %69 = arith.truncf %68 : vector<64x256xf32> to vector<64x256xbf16>
    %70 = vector.shape_cast %69 : vector<64x256xbf16> to vector<1x8x8x256xbf16>
    %cst_50 = arith.constant 0.000000e+00 : bf16
    %71 = vector.broadcast %cst_50 : bf16 to vector<1x8x1x256xbf16>
    %cst_51 = arith.constant 0.000000e+00 : bf16
    %72 = vector.broadcast %cst_51 : bf16 to vector<1x1x8x256xbf16>
    %c0_52 = arith.constant 0 : index
    %c0_53 = arith.constant 0 : index
    %73 = vector.load %arg6[%c0_52, %c0_53] : memref<1x128xf32, #tpu.memory_space<vmem>>, vector<1x128xf32>
    %74 = vector.shape_cast %73 : vector<1x128xf32> to vector<1x128xf32>
    %75 = vector.broadcast %74 : vector<1x128xf32> to vector<64x128xf32>
    %76 = vector.extract_strided_slice %70 {offsets = [0, 0, 0, 0], sizes = [1, 8, 7, 256], strides = [1, 1, 1, 1]} : vector<1x8x8x256xbf16> to vector<1x8x7x256xbf16>
    %77 = tpu.concatenate %71, %76 in 2 : vector<1x8x1x256xbf16>, vector<1x8x7x256xbf16> -> vector<1x8x8x256xbf16>
    %78 = vector.extract_strided_slice %77 {offsets = [0, 0, 0, 0], sizes = [1, 7, 8, 256], strides = [1, 1, 1, 1]} : vector<1x8x8x256xbf16> to vector<1x7x8x256xbf16>
    %79 = tpu.concatenate %72, %78 in 1 : vector<1x1x8x256xbf16>, vector<1x7x8x256xbf16> -> vector<1x8x8x256xbf16>
    %80 = vector.extract_strided_slice %77 {offsets = [0, 1, 0, 0], sizes = [1, 7, 8, 256], strides = [1, 1, 1, 1]} : vector<1x8x8x256xbf16> to vector<1x7x8x256xbf16>
    %81 = tpu.concatenate %80, %72 in 1 : vector<1x7x8x256xbf16>, vector<1x1x8x256xbf16> -> vector<1x8x8x256xbf16>
    %82 = tpu.concatenate %79, %77, %81 in 3 : vector<1x8x8x256xbf16>, vector<1x8x8x256xbf16>, vector<1x8x8x256xbf16> -> vector<1x8x8x768xbf16>
    %83 = vector.shape_cast %82 : vector<1x8x8x768xbf16> to vector<64x768xbf16>
    %c0_54 = arith.constant 0 : index
    %c0_55 = arith.constant 0 : index
    %c0_56 = arith.constant 0 : index
    %84 = vector.load %arg5[%c0_54, %c0_55, %c0_56] : memref<3x768x128xbf16, #tpu.memory_space<vmem>>, vector<1x768x128xbf16>
    %85 = vector.shape_cast %84 : vector<1x768x128xbf16> to vector<768x128xbf16>
    %cst_57 = arith.constant dense<0.000000e+00> : vector<64x128xf32>
    %86 = tpu.matmul %83, %85, %cst_57 {dimension_numbers = #tpu.dot_dimension_numbers<[1], [0], [0], [1], [0, 0, 1, 1], [], []>} : vector<64x768xbf16>, vector<768x128xbf16>, vector<64x128xf32> -> vector<64x128xf32>
    %87 = arith.addf %75, %86 : vector<64x128xf32>
    %88 = vector.extract_strided_slice %70 {offsets = [0, 0, 0, 0], sizes = [1, 7, 8, 256], strides = [1, 1, 1, 1]} : vector<1x8x8x256xbf16> to vector<1x7x8x256xbf16>
    %89 = tpu.concatenate %72, %88 in 1 : vector<1x1x8x256xbf16>, vector<1x7x8x256xbf16> -> vector<1x8x8x256xbf16>
    %90 = vector.extract_strided_slice %70 {offsets = [0, 1, 0, 0], sizes = [1, 7, 8, 256], strides = [1, 1, 1, 1]} : vector<1x8x8x256xbf16> to vector<1x7x8x256xbf16>
    %91 = tpu.concatenate %90, %72 in 1 : vector<1x7x8x256xbf16>, vector<1x1x8x256xbf16> -> vector<1x8x8x256xbf16>
    %92 = tpu.concatenate %89, %70, %91 in 3 : vector<1x8x8x256xbf16>, vector<1x8x8x256xbf16>, vector<1x8x8x256xbf16> -> vector<1x8x8x768xbf16>
    %93 = vector.shape_cast %92 : vector<1x8x8x768xbf16> to vector<64x768xbf16>
    %c1_58 = arith.constant 1 : index
    %c0_59 = arith.constant 0 : index
    %c0_60 = arith.constant 0 : index
    %94 = vector.load %arg5[%c1_58, %c0_59, %c0_60] : memref<3x768x128xbf16, #tpu.memory_space<vmem>>, vector<1x768x128xbf16>
    %95 = vector.shape_cast %94 : vector<1x768x128xbf16> to vector<768x128xbf16>
    %cst_61 = arith.constant dense<0.000000e+00> : vector<64x128xf32>
    %96 = tpu.matmul %93, %95, %cst_61 {dimension_numbers = #tpu.dot_dimension_numbers<[1], [0], [0], [1], [0, 0, 1, 1], [], []>} : vector<64x768xbf16>, vector<768x128xbf16>, vector<64x128xf32> -> vector<64x128xf32>
    %97 = arith.addf %87, %96 : vector<64x128xf32>
    %98 = vector.extract_strided_slice %70 {offsets = [0, 0, 1, 0], sizes = [1, 8, 7, 256], strides = [1, 1, 1, 1]} : vector<1x8x8x256xbf16> to vector<1x8x7x256xbf16>
    %99 = tpu.concatenate %98, %71 in 2 : vector<1x8x7x256xbf16>, vector<1x8x1x256xbf16> -> vector<1x8x8x256xbf16>
    %100 = vector.extract_strided_slice %99 {offsets = [0, 0, 0, 0], sizes = [1, 7, 8, 256], strides = [1, 1, 1, 1]} : vector<1x8x8x256xbf16> to vector<1x7x8x256xbf16>
    %101 = tpu.concatenate %72, %100 in 1 : vector<1x1x8x256xbf16>, vector<1x7x8x256xbf16> -> vector<1x8x8x256xbf16>
    %102 = vector.extract_strided_slice %99 {offsets = [0, 1, 0, 0], sizes = [1, 7, 8, 256], strides = [1, 1, 1, 1]} : vector<1x8x8x256xbf16> to vector<1x7x8x256xbf16>
    %103 = tpu.concatenate %102, %72 in 1 : vector<1x7x8x256xbf16>, vector<1x1x8x256xbf16> -> vector<1x8x8x256xbf16>
    %104 = tpu.concatenate %101, %99, %103 in 3 : vector<1x8x8x256xbf16>, vector<1x8x8x256xbf16>, vector<1x8x8x256xbf16> -> vector<1x8x8x768xbf16>
    %105 = vector.shape_cast %104 : vector<1x8x8x768xbf16> to vector<64x768xbf16>
    %c2_62 = arith.constant 2 : index
    %c0_63 = arith.constant 0 : index
    %c0_64 = arith.constant 0 : index
    %106 = vector.load %arg5[%c2_62, %c0_63, %c0_64] : memref<3x768x128xbf16, #tpu.memory_space<vmem>>, vector<1x768x128xbf16>
    %107 = vector.shape_cast %106 : vector<1x768x128xbf16> to vector<768x128xbf16>
    %cst_65 = arith.constant dense<0.000000e+00> : vector<64x128xf32>
    %108 = tpu.matmul %105, %107, %cst_65 {dimension_numbers = #tpu.dot_dimension_numbers<[1], [0], [0], [1], [0, 0, 1, 1], [], []>} : vector<64x768xbf16>, vector<768x128xbf16>, vector<64x128xf32> -> vector<64x128xf32>
    %109 = arith.addf %97, %108 : vector<64x128xf32>
    %cst_66 = arith.constant 0.000000e+00 : f32
    %110 = vector.broadcast %cst_66 : f32 to vector<64x128xf32>
    %111 = arith.maximumf %109, %110 : vector<64x128xf32>
    %112 = arith.truncf %111 : vector<64x128xf32> to vector<64x128xbf16>
    %113 = vector.shape_cast %112 : vector<64x128xbf16> to vector<1x8x8x128xbf16>
    %c0_67 = arith.constant 0 : index
    %c0_68 = arith.constant 0 : index
    %114 = vector.load %arg2[%c0_67, %c0_68] : memref<256x64xbf16, #tpu.memory_space<vmem>>, vector<256x64xbf16>
    %115 = vector.shape_cast %113 : vector<1x8x8x128xbf16> to vector<8x8x128xbf16>
    %116 = vector.shape_cast %115 : vector<8x8x128xbf16> to vector<64x128xbf16>
    %cst_69 = arith.constant dense<0.000000e+00> : vector<256x128xf32>
    %117 = tpu.matmul %114, %116, %cst_69 {dimension_numbers = #tpu.dot_dimension_numbers<[1], [0], [0], [1], [0, 0, 1, 1], [], []>} : vector<256x64xbf16>, vector<64x128xbf16>, vector<256x128xf32> -> vector<256x128xf32>
    %118 = arith.truncf %117 : vector<256x128xf32> to vector<256x128xbf16>
    %119 = vector.shape_cast %118 : vector<256x128xbf16> to vector<1x16x16x128xbf16>
    %cst_70 = arith.constant 0.000000e+00 : bf16
    %120 = vector.broadcast %cst_70 : bf16 to vector<1x16x1x128xbf16>
    %cst_71 = arith.constant 0.000000e+00 : bf16
    %121 = vector.broadcast %cst_71 : bf16 to vector<1x1x16x128xbf16>
    %c0_72 = arith.constant 0 : index
    %c0_73 = arith.constant 0 : index
    %122 = vector.load %arg8[%c0_72, %c0_73] : memref<1x64xf32, #tpu.memory_space<vmem>>, vector<1x64xf32>
    %123 = vector.shape_cast %122 : vector<1x64xf32> to vector<1x64xf32>
    %124 = vector.broadcast %123 : vector<1x64xf32> to vector<256x64xf32>
    %125 = vector.extract_strided_slice %119 {offsets = [0, 0, 0, 0], sizes = [1, 16, 15, 128], strides = [1, 1, 1, 1]} : vector<1x16x16x128xbf16> to vector<1x16x15x128xbf16>
    %126 = tpu.concatenate %120, %125 in 2 : vector<1x16x1x128xbf16>, vector<1x16x15x128xbf16> -> vector<1x16x16x128xbf16>
    %127 = vector.extract_strided_slice %126 {offsets = [0, 0, 0, 0], sizes = [1, 15, 16, 128], strides = [1, 1, 1, 1]} : vector<1x16x16x128xbf16> to vector<1x15x16x128xbf16>
    %128 = tpu.concatenate %121, %127 in 1 : vector<1x1x16x128xbf16>, vector<1x15x16x128xbf16> -> vector<1x16x16x128xbf16>
    %129 = vector.extract_strided_slice %126 {offsets = [0, 1, 0, 0], sizes = [1, 15, 16, 128], strides = [1, 1, 1, 1]} : vector<1x16x16x128xbf16> to vector<1x15x16x128xbf16>
    %130 = tpu.concatenate %129, %121 in 1 : vector<1x15x16x128xbf16>, vector<1x1x16x128xbf16> -> vector<1x16x16x128xbf16>
    %131 = tpu.concatenate %128, %126, %130 in 3 : vector<1x16x16x128xbf16>, vector<1x16x16x128xbf16>, vector<1x16x16x128xbf16> -> vector<1x16x16x384xbf16>
    %132 = vector.shape_cast %131 : vector<1x16x16x384xbf16> to vector<256x384xbf16>
    %c0_74 = arith.constant 0 : index
    %c0_75 = arith.constant 0 : index
    %c0_76 = arith.constant 0 : index
    %133 = vector.load %arg7[%c0_74, %c0_75, %c0_76] : memref<3x384x64xbf16, #tpu.memory_space<vmem>>, vector<1x384x64xbf16>
    %134 = vector.shape_cast %133 : vector<1x384x64xbf16> to vector<384x64xbf16>
    %cst_77 = arith.constant dense<0.000000e+00> : vector<256x64xf32>
    %135 = tpu.matmul %132, %134, %cst_77 {dimension_numbers = #tpu.dot_dimension_numbers<[1], [0], [0], [1], [0, 0, 1, 1], [], []>} : vector<256x384xbf16>, vector<384x64xbf16>, vector<256x64xf32> -> vector<256x64xf32>
    %136 = arith.addf %124, %135 : vector<256x64xf32>
    %137 = vector.extract_strided_slice %119 {offsets = [0, 0, 0, 0], sizes = [1, 15, 16, 128], strides = [1, 1, 1, 1]} : vector<1x16x16x128xbf16> to vector<1x15x16x128xbf16>
    %138 = tpu.concatenate %121, %137 in 1 : vector<1x1x16x128xbf16>, vector<1x15x16x128xbf16> -> vector<1x16x16x128xbf16>
    %139 = vector.extract_strided_slice %119 {offsets = [0, 1, 0, 0], sizes = [1, 15, 16, 128], strides = [1, 1, 1, 1]} : vector<1x16x16x128xbf16> to vector<1x15x16x128xbf16>
    %140 = tpu.concatenate %139, %121 in 1 : vector<1x15x16x128xbf16>, vector<1x1x16x128xbf16> -> vector<1x16x16x128xbf16>
    %141 = tpu.concatenate %138, %119, %140 in 3 : vector<1x16x16x128xbf16>, vector<1x16x16x128xbf16>, vector<1x16x16x128xbf16> -> vector<1x16x16x384xbf16>
    %142 = vector.shape_cast %141 : vector<1x16x16x384xbf16> to vector<256x384xbf16>
    %c1_78 = arith.constant 1 : index
    %c0_79 = arith.constant 0 : index
    %c0_80 = arith.constant 0 : index
    %143 = vector.load %arg7[%c1_78, %c0_79, %c0_80] : memref<3x384x64xbf16, #tpu.memory_space<vmem>>, vector<1x384x64xbf16>
    %144 = vector.shape_cast %143 : vector<1x384x64xbf16> to vector<384x64xbf16>
    %cst_81 = arith.constant dense<0.000000e+00> : vector<256x64xf32>
    %145 = tpu.matmul %142, %144, %cst_81 {dimension_numbers = #tpu.dot_dimension_numbers<[1], [0], [0], [1], [0, 0, 1, 1], [], []>} : vector<256x384xbf16>, vector<384x64xbf16>, vector<256x64xf32> -> vector<256x64xf32>
    %146 = arith.addf %136, %145 : vector<256x64xf32>
    %147 = vector.extract_strided_slice %119 {offsets = [0, 0, 1, 0], sizes = [1, 16, 15, 128], strides = [1, 1, 1, 1]} : vector<1x16x16x128xbf16> to vector<1x16x15x128xbf16>
    %148 = tpu.concatenate %147, %120 in 2 : vector<1x16x15x128xbf16>, vector<1x16x1x128xbf16> -> vector<1x16x16x128xbf16>
    %149 = vector.extract_strided_slice %148 {offsets = [0, 0, 0, 0], sizes = [1, 15, 16, 128], strides = [1, 1, 1, 1]} : vector<1x16x16x128xbf16> to vector<1x15x16x128xbf16>
    %150 = tpu.concatenate %121, %149 in 1 : vector<1x1x16x128xbf16>, vector<1x15x16x128xbf16> -> vector<1x16x16x128xbf16>
    %151 = vector.extract_strided_slice %148 {offsets = [0, 1, 0, 0], sizes = [1, 15, 16, 128], strides = [1, 1, 1, 1]} : vector<1x16x16x128xbf16> to vector<1x15x16x128xbf16>
    %152 = tpu.concatenate %151, %121 in 1 : vector<1x15x16x128xbf16>, vector<1x1x16x128xbf16> -> vector<1x16x16x128xbf16>
    %153 = tpu.concatenate %150, %148, %152 in 3 : vector<1x16x16x128xbf16>, vector<1x16x16x128xbf16>, vector<1x16x16x128xbf16> -> vector<1x16x16x384xbf16>
    %154 = vector.shape_cast %153 : vector<1x16x16x384xbf16> to vector<256x384xbf16>
    %c2_82 = arith.constant 2 : index
    %c0_83 = arith.constant 0 : index
    %c0_84 = arith.constant 0 : index
    %155 = vector.load %arg7[%c2_82, %c0_83, %c0_84] : memref<3x384x64xbf16, #tpu.memory_space<vmem>>, vector<1x384x64xbf16>
    %156 = vector.shape_cast %155 : vector<1x384x64xbf16> to vector<384x64xbf16>
    %cst_85 = arith.constant dense<0.000000e+00> : vector<256x64xf32>
    %157 = tpu.matmul %154, %156, %cst_85 {dimension_numbers = #tpu.dot_dimension_numbers<[1], [0], [0], [1], [0, 0, 1, 1], [], []>} : vector<256x384xbf16>, vector<384x64xbf16>, vector<256x64xf32> -> vector<256x64xf32>
    %158 = arith.addf %146, %157 : vector<256x64xf32>
    %cst_86 = arith.constant 0.000000e+00 : f32
    %159 = vector.broadcast %cst_86 : f32 to vector<256x64xf32>
    %160 = arith.maximumf %158, %159 : vector<256x64xf32>
    %161 = arith.truncf %160 : vector<256x64xf32> to vector<256x64xbf16>
    %162 = vector.shape_cast %161 : vector<256x64xbf16> to vector<1x16x16x64xbf16>
    %cst_87 = arith.constant 0.000000e+00 : bf16
    %163 = vector.broadcast %cst_87 : bf16 to vector<1x16x1x64xbf16>
    %cst_88 = arith.constant 0.000000e+00 : bf16
    %164 = vector.broadcast %cst_88 : bf16 to vector<1x1x16x64xbf16>
    %c0_89 = arith.constant 0 : index
    %c0_90 = arith.constant 0 : index
    %165 = vector.load %arg10[%c0_89, %c0_90] : memref<1x4xf32, #tpu.memory_space<vmem>>, vector<1x4xf32>
    %166 = vector.shape_cast %165 : vector<1x4xf32> to vector<1x4xf32>
    %167 = vector.broadcast %166 : vector<1x4xf32> to vector<256x4xf32>
    %168 = vector.extract_strided_slice %162 {offsets = [0, 0, 0, 0], sizes = [1, 16, 15, 64], strides = [1, 1, 1, 1]} : vector<1x16x16x64xbf16> to vector<1x16x15x64xbf16>
    %169 = tpu.concatenate %163, %168 in 2 : vector<1x16x1x64xbf16>, vector<1x16x15x64xbf16> -> vector<1x16x16x64xbf16>
    %170 = vector.extract_strided_slice %169 {offsets = [0, 0, 0, 0], sizes = [1, 15, 16, 64], strides = [1, 1, 1, 1]} : vector<1x16x16x64xbf16> to vector<1x15x16x64xbf16>
    %171 = tpu.concatenate %164, %170 in 1 : vector<1x1x16x64xbf16>, vector<1x15x16x64xbf16> -> vector<1x16x16x64xbf16>
    %172 = vector.shape_cast %171 : vector<1x16x16x64xbf16> to vector<256x64xbf16>
    %c0_91 = arith.constant 0 : index
    %c0_92 = arith.constant 0 : index
    %c0_93 = arith.constant 0 : index
    %c0_94 = arith.constant 0 : index
    %173 = vector.load %arg9[%c0_91, %c0_92, %c0_93, %c0_94] : memref<3x3x64x4xbf16, #tpu.memory_space<vmem>>, vector<1x1x64x4xbf16>
    %174 = vector.shape_cast %173 : vector<1x1x64x4xbf16> to vector<64x4xbf16>
    %cst_95 = arith.constant dense<0.000000e+00> : vector<256x4xf32>
    %175 = tpu.matmul %172, %174, %cst_95 {dimension_numbers = #tpu.dot_dimension_numbers<[1], [0], [0], [1], [0, 0, 1, 1], [], []>} : vector<256x64xbf16>, vector<64x4xbf16>, vector<256x4xf32> -> vector<256x4xf32>
    %176 = arith.addf %167, %175 : vector<256x4xf32>
    %177 = vector.shape_cast %169 : vector<1x16x16x64xbf16> to vector<256x64xbf16>
    %c1_96 = arith.constant 1 : index
    %c0_97 = arith.constant 0 : index
    %c0_98 = arith.constant 0 : index
    %c0_99 = arith.constant 0 : index
    %178 = vector.load %arg9[%c1_96, %c0_97, %c0_98, %c0_99] : memref<3x3x64x4xbf16, #tpu.memory_space<vmem>>, vector<1x1x64x4xbf16>
    %179 = vector.shape_cast %178 : vector<1x1x64x4xbf16> to vector<64x4xbf16>
    %cst_100 = arith.constant dense<0.000000e+00> : vector<256x4xf32>
    %180 = tpu.matmul %177, %179, %cst_100 {dimension_numbers = #tpu.dot_dimension_numbers<[1], [0], [0], [1], [0, 0, 1, 1], [], []>} : vector<256x64xbf16>, vector<64x4xbf16>, vector<256x4xf32> -> vector<256x4xf32>
    %181 = arith.addf %176, %180 : vector<256x4xf32>
    %182 = vector.extract_strided_slice %169 {offsets = [0, 1, 0, 0], sizes = [1, 15, 16, 64], strides = [1, 1, 1, 1]} : vector<1x16x16x64xbf16> to vector<1x15x16x64xbf16>
    %183 = tpu.concatenate %182, %164 in 1 : vector<1x15x16x64xbf16>, vector<1x1x16x64xbf16> -> vector<1x16x16x64xbf16>
    %184 = vector.shape_cast %183 : vector<1x16x16x64xbf16> to vector<256x64xbf16>
    %c2_101 = arith.constant 2 : index
    %c0_102 = arith.constant 0 : index
    %c0_103 = arith.constant 0 : index
    %c0_104 = arith.constant 0 : index
    %185 = vector.load %arg9[%c2_101, %c0_102, %c0_103, %c0_104] : memref<3x3x64x4xbf16, #tpu.memory_space<vmem>>, vector<1x1x64x4xbf16>
    %186 = vector.shape_cast %185 : vector<1x1x64x4xbf16> to vector<64x4xbf16>
    %cst_105 = arith.constant dense<0.000000e+00> : vector<256x4xf32>
    %187 = tpu.matmul %184, %186, %cst_105 {dimension_numbers = #tpu.dot_dimension_numbers<[1], [0], [0], [1], [0, 0, 1, 1], [], []>} : vector<256x64xbf16>, vector<64x4xbf16>, vector<256x4xf32> -> vector<256x4xf32>
    %188 = arith.addf %181, %187 : vector<256x4xf32>
    %189 = vector.extract_strided_slice %162 {offsets = [0, 0, 0, 0], sizes = [1, 15, 16, 64], strides = [1, 1, 1, 1]} : vector<1x16x16x64xbf16> to vector<1x15x16x64xbf16>
    %190 = tpu.concatenate %164, %189 in 1 : vector<1x1x16x64xbf16>, vector<1x15x16x64xbf16> -> vector<1x16x16x64xbf16>
    %191 = vector.shape_cast %190 : vector<1x16x16x64xbf16> to vector<256x64xbf16>
    %c0_106 = arith.constant 0 : index
    %c1_107 = arith.constant 1 : index
    %c0_108 = arith.constant 0 : index
    %c0_109 = arith.constant 0 : index
    %192 = vector.load %arg9[%c0_106, %c1_107, %c0_108, %c0_109] : memref<3x3x64x4xbf16, #tpu.memory_space<vmem>>, vector<1x1x64x4xbf16>
    %193 = vector.shape_cast %192 : vector<1x1x64x4xbf16> to vector<64x4xbf16>
    %cst_110 = arith.constant dense<0.000000e+00> : vector<256x4xf32>
    %194 = tpu.matmul %191, %193, %cst_110 {dimension_numbers = #tpu.dot_dimension_numbers<[1], [0], [0], [1], [0, 0, 1, 1], [], []>} : vector<256x64xbf16>, vector<64x4xbf16>, vector<256x4xf32> -> vector<256x4xf32>
    %195 = arith.addf %188, %194 : vector<256x4xf32>
    %196 = vector.shape_cast %162 : vector<1x16x16x64xbf16> to vector<256x64xbf16>
    %c1_111 = arith.constant 1 : index
    %c1_112 = arith.constant 1 : index
    %c0_113 = arith.constant 0 : index
    %c0_114 = arith.constant 0 : index
    %197 = vector.load %arg9[%c1_111, %c1_112, %c0_113, %c0_114] : memref<3x3x64x4xbf16, #tpu.memory_space<vmem>>, vector<1x1x64x4xbf16>
    %198 = vector.shape_cast %197 : vector<1x1x64x4xbf16> to vector<64x4xbf16>
    %cst_115 = arith.constant dense<0.000000e+00> : vector<256x4xf32>
    %199 = tpu.matmul %196, %198, %cst_115 {dimension_numbers = #tpu.dot_dimension_numbers<[1], [0], [0], [1], [0, 0, 1, 1], [], []>} : vector<256x64xbf16>, vector<64x4xbf16>, vector<256x4xf32> -> vector<256x4xf32>
    %200 = arith.addf %195, %199 : vector<256x4xf32>
    %201 = vector.extract_strided_slice %162 {offsets = [0, 1, 0, 0], sizes = [1, 15, 16, 64], strides = [1, 1, 1, 1]} : vector<1x16x16x64xbf16> to vector<1x15x16x64xbf16>
    %202 = tpu.concatenate %201, %164 in 1 : vector<1x15x16x64xbf16>, vector<1x1x16x64xbf16> -> vector<1x16x16x64xbf16>
    %203 = vector.shape_cast %202 : vector<1x16x16x64xbf16> to vector<256x64xbf16>
    %c2_116 = arith.constant 2 : index
    %c1_117 = arith.constant 1 : index
    %c0_118 = arith.constant 0 : index
    %c0_119 = arith.constant 0 : index
    %204 = vector.load %arg9[%c2_116, %c1_117, %c0_118, %c0_119] : memref<3x3x64x4xbf16, #tpu.memory_space<vmem>>, vector<1x1x64x4xbf16>
    %205 = vector.shape_cast %204 : vector<1x1x64x4xbf16> to vector<64x4xbf16>
    %cst_120 = arith.constant dense<0.000000e+00> : vector<256x4xf32>
    %206 = tpu.matmul %203, %205, %cst_120 {dimension_numbers = #tpu.dot_dimension_numbers<[1], [0], [0], [1], [0, 0, 1, 1], [], []>} : vector<256x64xbf16>, vector<64x4xbf16>, vector<256x4xf32> -> vector<256x4xf32>
    %207 = arith.addf %200, %206 : vector<256x4xf32>
    %208 = vector.extract_strided_slice %162 {offsets = [0, 0, 1, 0], sizes = [1, 16, 15, 64], strides = [1, 1, 1, 1]} : vector<1x16x16x64xbf16> to vector<1x16x15x64xbf16>
    %209 = tpu.concatenate %208, %163 in 2 : vector<1x16x15x64xbf16>, vector<1x16x1x64xbf16> -> vector<1x16x16x64xbf16>
    %210 = vector.extract_strided_slice %209 {offsets = [0, 0, 0, 0], sizes = [1, 15, 16, 64], strides = [1, 1, 1, 1]} : vector<1x16x16x64xbf16> to vector<1x15x16x64xbf16>
    %211 = tpu.concatenate %164, %210 in 1 : vector<1x1x16x64xbf16>, vector<1x15x16x64xbf16> -> vector<1x16x16x64xbf16>
    %212 = vector.shape_cast %211 : vector<1x16x16x64xbf16> to vector<256x64xbf16>
    %c0_121 = arith.constant 0 : index
    %c2_122 = arith.constant 2 : index
    %c0_123 = arith.constant 0 : index
    %c0_124 = arith.constant 0 : index
    %213 = vector.load %arg9[%c0_121, %c2_122, %c0_123, %c0_124] : memref<3x3x64x4xbf16, #tpu.memory_space<vmem>>, vector<1x1x64x4xbf16>
    %214 = vector.shape_cast %213 : vector<1x1x64x4xbf16> to vector<64x4xbf16>
    %cst_125 = arith.constant dense<0.000000e+00> : vector<256x4xf32>
    %215 = tpu.matmul %212, %214, %cst_125 {dimension_numbers = #tpu.dot_dimension_numbers<[1], [0], [0], [1], [0, 0, 1, 1], [], []>} : vector<256x64xbf16>, vector<64x4xbf16>, vector<256x4xf32> -> vector<256x4xf32>
    %216 = arith.addf %207, %215 : vector<256x4xf32>
    %217 = vector.shape_cast %209 : vector<1x16x16x64xbf16> to vector<256x64xbf16>
    %c1_126 = arith.constant 1 : index
    %c2_127 = arith.constant 2 : index
    %c0_128 = arith.constant 0 : index
    %c0_129 = arith.constant 0 : index
    %218 = vector.load %arg9[%c1_126, %c2_127, %c0_128, %c0_129] : memref<3x3x64x4xbf16, #tpu.memory_space<vmem>>, vector<1x1x64x4xbf16>
    %219 = vector.shape_cast %218 : vector<1x1x64x4xbf16> to vector<64x4xbf16>
    %cst_130 = arith.constant dense<0.000000e+00> : vector<256x4xf32>
    %220 = tpu.matmul %217, %219, %cst_130 {dimension_numbers = #tpu.dot_dimension_numbers<[1], [0], [0], [1], [0, 0, 1, 1], [], []>} : vector<256x64xbf16>, vector<64x4xbf16>, vector<256x4xf32> -> vector<256x4xf32>
    %221 = arith.addf %216, %220 : vector<256x4xf32>
    %222 = vector.extract_strided_slice %209 {offsets = [0, 1, 0, 0], sizes = [1, 15, 16, 64], strides = [1, 1, 1, 1]} : vector<1x16x16x64xbf16> to vector<1x15x16x64xbf16>
    %223 = tpu.concatenate %222, %164 in 1 : vector<1x15x16x64xbf16>, vector<1x1x16x64xbf16> -> vector<1x16x16x64xbf16>
    %224 = vector.shape_cast %223 : vector<1x16x16x64xbf16> to vector<256x64xbf16>
    %c2_131 = arith.constant 2 : index
    %c2_132 = arith.constant 2 : index
    %c0_133 = arith.constant 0 : index
    %c0_134 = arith.constant 0 : index
    %225 = vector.load %arg9[%c2_131, %c2_132, %c0_133, %c0_134] : memref<3x3x64x4xbf16, #tpu.memory_space<vmem>>, vector<1x1x64x4xbf16>
    %226 = vector.shape_cast %225 : vector<1x1x64x4xbf16> to vector<64x4xbf16>
    %cst_135 = arith.constant dense<0.000000e+00> : vector<256x4xf32>
    %227 = tpu.matmul %224, %226, %cst_135 {dimension_numbers = #tpu.dot_dimension_numbers<[1], [0], [0], [1], [0, 0, 1, 1], [], []>} : vector<256x64xbf16>, vector<64x4xbf16>, vector<256x4xf32> -> vector<256x4xf32>
    %228 = arith.addf %221, %227 : vector<256x4xf32>
    %cst_136 = arith.constant 0.000000e+00 : f32
    %229 = vector.broadcast %cst_136 : f32 to vector<256x4xf32>
    %230 = arith.maximumf %228, %229 : vector<256x4xf32>
    %231 = arith.truncf %230 : vector<256x4xf32> to vector<256x4xbf16>
    %232 = vector.shape_cast %231 : vector<256x4xbf16> to vector<1x16x16x4xbf16>
    %233 = vector.shape_cast %232 : vector<1x16x16x4xbf16> to vector<256x4xbf16>
    %c0_137 = arith.constant 0 : index
    %c0_138 = arith.constant 0 : index
    %234 = vector.load %arg11[%c0_137, %c0_138] : memref<4x4xbf16, #tpu.memory_space<vmem>>, vector<4x4xbf16>
    %cst_139 = arith.constant dense<0.000000e+00> : vector<256x4xf32>
    %235 = tpu.matmul %233, %234, %cst_139 {dimension_numbers = #tpu.dot_dimension_numbers<[1], [0], [0], [1], [0, 0, 1, 1], [], []>} : vector<256x4xbf16>, vector<4x4xbf16>, vector<256x4xf32> -> vector<256x4xf32>
    %c0_140 = arith.constant 0 : index
    %c0_141 = arith.constant 0 : index
    %236 = vector.load %arg12[%c0_140, %c0_141] : memref<1x4xf32, #tpu.memory_space<vmem>>, vector<1x4xf32>
    %237 = vector.broadcast %236 : vector<1x4xf32> to vector<256x4xf32>
    %238 = arith.addf %235, %237 : vector<256x4xf32>
    %239 = vector.shape_cast %238 : vector<256x4xf32> to vector<1x256x4xf32>
    %240 = vector.shape_cast %239 : vector<1x256x4xf32> to vector<256x4xf32>
    %241 = tpu.transpose %240, [1, 0] : vector<256x4xf32> -> vector<4x256xf32>
    %c0_142 = arith.constant 0 : index
    %c0_143 = arith.constant 0 : index
    %c0_144 = arith.constant 0 : index
    %242 = vector.load %arg13[%c0_142, %c0_143, %c0_144] : memref<1x4x256xf32, #tpu.memory_space<vmem>>, vector<1x4x256xf32>
    %243 = vector.shape_cast %242 : vector<1x4x256xf32> to vector<4x256xf32>
    %244 = vector.shape_cast %241 : vector<4x256xf32> to vector<1x4x256xf32>
    tpu.vector_store %arg13[%c0_142, %c0_143, %c0_144], %244 {strides = array<i32>} : memref<1x4x256xf32, #tpu.memory_space<vmem>>, vector<1x4x256xf32>,
    return
  }
  func.func @transform_0(%arg0: i32) -> (i32, i32, i32, i32) {
    %c0_i32 = arith.constant 0 : i32
    %c0_i32_0 = arith.constant 0 : i32
    %c0_i32_1 = arith.constant 0 : i32
    %c0_i32_2 = arith.constant 0 : i32
    return %arg0, %c0_i32, %c0_i32_0, %c0_i32_1 : i32, i32, i32, i32
  }
  func.func @transform_1(%arg0: i32) -> (i32, i32) {
    %c0_i32 = arith.constant 0 : i32
    %c0_i32_0 = arith.constant 0 : i32
    %c0_i32_1 = arith.constant 0 : i32
    return %c0_i32, %c0_i32_0 : i32, i32
  }
  func.func @transform_2(%arg0: i32) -> (i32, i32, i32, i32) {
    %c0_i32 = arith.constant 0 : i32
    %c0_i32_0 = arith.constant 0 : i32
    %c0_i32_1 = arith.constant 0 : i32
    %c0_i32_2 = arith.constant 0 : i32
    %c0_i32_3 = arith.constant 0 : i32
    return %c0_i32, %c0_i32_0, %c0_i32_1, %c0_i32_2 : i32, i32, i32, i32
  }
  func.func @transform_3(%arg0: i32) -> (i32, i32) {
    %c0_i32 = arith.constant 0 : i32
    %c0_i32_0 = arith.constant 0 : i32
    %c0_i32_1 = arith.constant 0 : i32
    return %c0_i32, %c0_i32_0 : i32, i32
  }
  func.func @transform_4(%arg0: i32) -> (i32, i32, i32) {
    %c0_i32 = arith.constant 0 : i32
    %c0_i32_0 = arith.constant 0 : i32
    %c0_i32_1 = arith.constant 0 : i32
    %c0_i32_2 = arith.constant 0 : i32
    return %c0_i32, %c0_i32_0, %c0_i32_1 : i32, i32, i32
  }
  func.func @transform_5(%arg0: i32) -> (i32, i32) {
    %c0_i32 = arith.constant 0 : i32
    %c0_i32_0 = arith.constant 0 : i32
    %c0_i32_1 = arith.constant 0 : i32
    return %c0_i32, %c0_i32_0 : i32, i32
  }
  func.func @transform_6(%arg0: i32) -> (i32, i32, i32) {
    %c0_i32 = arith.constant 0 : i32
    %c0_i32_0 = arith.constant 0 : i32
    %c0_i32_1 = arith.constant 0 : i32
    %c0_i32_2 = arith.constant 0 : i32
    return %c0_i32, %c0_i32_0, %c0_i32_1 : i32, i32, i32
  }
  func.func @transform_7(%arg0: i32) -> (i32, i32) {
    %c0_i32 = arith.constant 0 : i32
    %c0_i32_0 = arith.constant 0 : i32
    %c0_i32_1 = arith.constant 0 : i32
    return %c0_i32, %c0_i32_0 : i32, i32
  }
  func.func @transform_8(%arg0: i32) -> (i32, i32, i32, i32) {
    %c0_i32 = arith.constant 0 : i32
    %c0_i32_0 = arith.constant 0 : i32
    %c0_i32_1 = arith.constant 0 : i32
    %c0_i32_2 = arith.constant 0 : i32
    %c0_i32_3 = arith.constant 0 : i32
    return %c0_i32, %c0_i32_0, %c0_i32_1, %c0_i32_2 : i32, i32, i32, i32
  }
  func.func @transform_9(%arg0: i32) -> (i32, i32) {
    %c0_i32 = arith.constant 0 : i32
    %c0_i32_0 = arith.constant 0 : i32
    %c0_i32_1 = arith.constant 0 : i32
    return %c0_i32, %c0_i32_0 : i32, i32
  }
  func.func @transform_10(%arg0: i32) -> (i32, i32) {
    %c0_i32 = arith.constant 0 : i32
    %c0_i32_0 = arith.constant 0 : i32
    %c0_i32_1 = arith.constant 0 : i32
    return %c0_i32, %c0_i32_0 : i32, i32
  }
  func.func @transform_11(%arg0: i32) -> (i32, i32) {
    %c0_i32 = arith.constant 0 : i32
    %c0_i32_0 = arith.constant 0 : i32
    %c0_i32_1 = arith.constant 0 : i32
    return %c0_i32, %c0_i32_0 : i32, i32
  }
  func.func @transform_12(%arg0: i32) -> (i32, i32, i32) {
    %c0_i32 = arith.constant 0 : i32
    %c0_i32_0 = arith.constant 0 : i32
    %c0_i32_1 = arith.constant 0 : i32
    return %arg0, %c0_i32, %c0_i32_0 : i32, i32, i32
  }
}

</mosaic_0001>

<llo_original>
// kernel: tpu_custom_call.1
$region0: #{tpu_custom_call.1}
  #allocation0 [shape = 'u32[]', space=smem, size = 0x4, offset = 0x4, fixed_abs, tag = 'smem constant byte address 0x4 - core index']
  #allocation1 [shape = 'u32[144,128]{1,0:T(1,128)}', space=vmem, size = 0x12000, scoped, tag = 'internal scratch']
  %s0 = inlined_call_operand.hbm [shape: bf16[2,8,8,264], index: 0, kind: input, shape index: {}]
  %s1 = inlined_call_operand.vmem [shape: bf16[256,64], index: 1, kind: input, shape index: {}]
  %s2 = inlined_call_operand.hbm [shape: bf16[3,3,264,256], index: 2, kind: input, shape index: {}]
  %s3 = inlined_call_operand.hbm [shape: f32[1,256], index: 3, kind: input, shape index: {}]
  %s4 = inlined_call_operand.hbm [shape: bf16[3,768,128], index: 4, kind: input, shape index: {}]
  %s5 = inlined_call_operand.hbm [shape: f32[1,128], index: 5, kind: input, shape index: {}]
  %s6 = inlined_call_operand.vmem [shape: bf16[3,384,64], index: 6, kind: input, shape index: {}]
  %s7 = inlined_call_operand.hbm [shape: f32[1,64], index: 7, kind: input, shape index: {}]
  %s8 = inlined_call_operand.vmem [shape: bf16[3,3,64,4], index: 8, kind: input, shape index: {}]
  %s9 = inlined_call_operand.hbm [shape: f32[1,4], index: 9, kind: input, shape index: {}]
  %s10 = inlined_call_operand.hbm [shape: bf16[4,4], index: 10, kind: input, shape index: {}]
  %s11 = inlined_call_operand.hbm [shape: f32[1,4], index: 11, kind: input, shape index: {}]
  %s12 = inlined_call_operand.hbm [shape: f32[2,4,256], index: 12, kind: output, shape index: {}]
  %s13 = sld [smem:[#allocation0]]
  $region117: #{tpu_custom_call.1} parent=0
    _
  %s15 = ssub.s32 1, %s13
  %s16 = scalar_select 0, %s15, %s13
  $region1: #{tpu_custom_call.1} parent=0
    #allocation2 [shape = 'u8[98304]{0}', space=vmem, size = 0x18000, scoped, tag = 'input window, operand 0']
    #allocation3 [shape = 's32[2]{0}', space=sflag, size = 0x8, scoped, tag = 'scoped memory for tpu_custom_call.1']
    #allocation4 [shape = 's32[2]{0}', space=sflag, size = 0x8, scoped, tag = 'scoped memory for tpu_custom_call.1']
    #allocation5 [shape = 'u8[1216512]{0}', space=vmem, size = 0x129000, scoped, tag = 'input window, operand 2, single buffered']
    #allocation6 [shape = 's32[1]{0}', space=sflag, size = 0x4, scoped, tag = 'scoped memory for tpu_custom_call.1']
    #allocation7 [shape = 'u8[1024]{0}', space=vmem, size = 0x400, scoped, tag = 'input window, operand 3, single buffered']
    #allocation8 [shape = 'u8[589824]{0}', space=vmem, size = 0x90000, scoped, tag = 'input window, operand 4, single buffered']
    #allocation9 [shape = 's32[1]{0}', space=sflag, size = 0x4, scoped, tag = 'scoped memory for tpu_custom_call.1']
    #allocation10 [shape = 'u8[512]{0}', space=vmem, size = 0x400, scoped, tag = 'input window, operand 5, single buffered']
    #allocation11 [shape = 'u8[512]{0}', space=vmem, size = 0x400, scoped, tag = 'input window, operand 7, single buffered']
    #allocation12 [shape = 's32[1]{0}', space=sflag, size = 0x4, scoped, tag = 'scoped memory for tpu_custom_call.1']
    #allocation13 [shape = 'u8[512]{0}', space=vmem, size = 0x400, scoped, tag = 'input window, operand 9, single buffered']
    #allocation14 [shape = 'u8[1024]{0}', space=vmem, size = 0x400, scoped, tag = 'input window, operand 10, single buffered']
    #allocation15 [shape = 's32[1]{0}', space=sflag, size = 0x4, scoped, tag = 'scoped memory for tpu_custom_call.1']
    #allocation16 [shape = 'u8[512]{0}', space=vmem, size = 0x400, scoped, tag = 'input window, operand 11, single buffered']
    #allocation17 [shape = 'u8[8192]{0}', space=vmem, size = 0x2000, scoped, tag = 'output window, operand 0']
    %17 = vsyncpa [#allocation3], 0
    %s18 = scalar_lea.sflag [#allocation3], 1
    %19 = vsyncpa %s18, 0
    %20 = vsyncpa [#allocation6], 0
    %21 = vsyncpa [#allocation9], 0
    %22 = vsyncpa [#allocation12], 0
    %23 = vsyncpa [#allocation15], 0
    %24 = vsyncpa [#allocation4], 0
    %s25 = scalar_lea.sflag [#allocation4], 1
    %26 = vsyncpa %s25, 0
    loop: start=0, step=1, limit=4
    $region2: #{tpu_custom_call.1} parent=1 // loop_pre_header
      _
    $region3: #{tpu_custom_call.1} parent=1 // loop_header
      %s28 = sphi 0, %s32
      %p29 = scmp.ge.s32.totalorder %s28, 4
      %s38 = sphi 0, %s40
      %s41 = sphi 0, %s38
      %s42 = sphi 0, %s41
      %s58 = sphi 0, %s42
      %s62 = sphi 0, %s62
      %s64 = sphi 0, %s62
      %s65 = sphi 0, %s64
      %s79 = sphi 0, %s65
      %s83 = sphi 0, %s83
      %s85 = sphi 0, %s83
      %s86 = sphi 0, %s85
      %s100 = sphi 0, %s86
      %s104 = sphi 0, %s104
      %s106 = sphi 0, %s104
      %s107 = sphi 0, %s106
      %s121 = sphi 0, %s107
      %s125 = sphi 0, %s125
      %s127 = sphi 0, %s125
      %s128 = sphi 0, %s127
      %s142 = sphi 0, %s128
      %s146 = sphi 0, %s146
      %s148 = sphi 0, %s146
      %s149 = sphi 0, %s148
      %s163 = sphi 0, %s149
      %s167 = sphi 0, %s167
      %s169 = sphi 0, %s167
      %s170 = sphi 0, %s169
      %s184 = sphi 0, %s170
      %s188 = sphi 0, %s188
      %s190 = sphi 0, %s188
      %s191 = sphi 0, %s190
      %s205 = sphi 0, %s191
      %s209 = sphi 0, %s209
      %s211 = sphi 0, %s209
      %s212 = sphi 0, %s211
      %s226 = sphi 0, %s212
      %s230 = sphi 0, %s230
      %s232 = sphi 0, %s230
      %s233 = sphi 0, %s232
      %s247 = sphi 0, %s233
      %s251 = sphi 0, %s251
      %s253 = sphi 0, %s251
      %s254 = sphi 0, %s253
      %s268 = sphi 0, %s254
      %s272 = sphi 0, %s272
      %s274 = sphi 0, %s272
      %s275 = sphi 0, %s274
      %s289 = sphi 0, %s275
      %s295 = sphi 0, %s297
      %s298 = sphi 0, %s295
      %s299 = sphi 0, %s298
      %s315 = sphi 0, %s299
    $region4: #{tpu_custom_call.1} parent=1 // loop_header_branch
      %31 = sbr.rel (%p29) target = $region8
    $region5: #{tpu_custom_call.1} parent=1 // loop_body
      %s33 = ssub.s32 %s28, 1
      %s34 = ssub.s32 %s28, 2
      %s35 = sadd.s32 %s28, 1
      %s36 = ssub.s32 %s28, %s35
      %p37 = scmp.eq.s32.totalorder %s36, 0
      %s39 = sadd.s32 %s38, 1
      %s40 = scalar_select %p37, %s38, %s39
      %p43 = pneg %p37
      %p44 = scmp.eq.s32.totalorder %s28, 1
      %p45 = por %p43, %p44
      %p46 = scmp.ne.s32.totalorder %s38, %s41
      %p47 = scmp.eq.s32.totalorder %s28, 0
      %p48 = por %p46, %p47
      %p49 = scmp.ne.s32.totalorder %s38, %s41
      %p50 = scmp.eq.s32.totalorder %s33, 1
      %p51 = por %p49, %p50
      %p52 = scmp.ne.s32.totalorder %s41, %s42
      %p53 = scmp.eq.s32.totalorder %s33, 0
      %p54 = por %p52, %p53
      %p55 = scmp.ne.s32.totalorder %s41, %s42
      %p56 = scmp.eq.s32.totalorder %s34, 1
      %p57 = por %p55, %p56
      %p59 = scmp.ne.s32.totalorder %s42, %s58
      %p60 = scmp.eq.s32.totalorder %s34, 0
      %p61 = por %p59, %p60
      %s63 = sadd.s32 %s62, 1
      %p66 = scmp.eq.s32.totalorder %s28, 1
      %p67 = scmp.ne.s32.totalorder %s62, %s64
      %p68 = scmp.eq.s32.totalorder %s28, 0
      %p69 = por %p67, %p68
      %p70 = scmp.ne.s32.totalorder %s62, %s64
      %p71 = scmp.eq.s32.totalorder %s33, 1
      %p72 = por %p70, %p71
      %p73 = scmp.ne.s32.totalorder %s64, %s65
      %p74 = scmp.eq.s32.totalorder %s33, 0
      %p75 = por %p73, %p74
      %p76 = scmp.ne.s32.totalorder %s64, %s65
      %p77 = scmp.eq.s32.totalorder %s34, 1
      %p78 = por %p76, %p77
      %p80 = scmp.ne.s32.totalorder %s65, %s79
      %p81 = scmp.eq.s32.totalorder %s34, 0
      %p82 = por %p80, %p81
      %s84 = sadd.s32 %s83, 1
      %p87 = scmp.eq.s32.totalorder %s28, 1
      %p88 = scmp.ne.s32.totalorder %s83, %s85
      %p89 = scmp.eq.s32.totalorder %s28, 0
      %p90 = por %p88, %p89
      %p91 = scmp.ne.s32.totalorder %s83, %s85
      %p92 = scmp.eq.s32.totalorder %s33, 1
      %p93 = por %p91, %p92
      %p94 = scmp.ne.s32.totalorder %s85, %s86
      %p95 = scmp.eq.s32.totalorder %s33, 0
      %p96 = por %p94, %p95
      %p97 = scmp.ne.s32.totalorder %s85, %s86
      %p98 = scmp.eq.s32.totalorder %s34, 1
      %p99 = por %p97, %p98
      %p101 = scmp.ne.s32.totalorder %s86, %s100
      %p102 = scmp.eq.s32.totalorder %s34, 0
      %p103 = por %p101, %p102
      %s105 = sadd.s32 %s104, 1
      %p108 = scmp.eq.s32.totalorder %s28, 1
      %p109 = scmp.ne.s32.totalorder %s104, %s106
      %p110 = scmp.eq.s32.totalorder %s28, 0
      %p111 = por %p109, %p110
      %p112 = scmp.ne.s32.totalorder %s104, %s106
      %p113 = scmp.eq.s32.totalorder %s33, 1
      %p114 = por %p112, %p113
      %p115 = scmp.ne.s32.totalorder %s106, %s107
      %p116 = scmp.eq.s32.totalorder %s33, 0
      %p117 = por %p115, %p116
      %p118 = scmp.ne.s32.totalorder %s106, %s107
      %p119 = scmp.eq.s32.totalorder %s34, 1
      %p120 = por %p118, %p119
      %p122 = scmp.ne.s32.totalorder %s107, %s121
      %p123 = scmp.eq.s32.totalorder %s34, 0
      %p124 = por %p122, %p123
      %s126 = sadd.s32 %s125, 1
      %p129 = scmp.eq.s32.totalorder %s28, 1
      %p130 = scmp.ne.s32.totalorder %s125, %s127
      %p131 = scmp.eq.s32.totalorder %s28, 0
      %p132 = por %p130, %p131
      %p133 = scmp.ne.s32.totalorder %s125, %s127
      %p134 = scmp.eq.s32.totalorder %s33, 1
      %p135 = por %p133, %p134
      %p136 = scmp.ne.s32.totalorder %s127, %s128
      %p137 = scmp.eq.s32.totalorder %s33, 0
      %p138 = por %p136, %p137
      %p139 = scmp.ne.s32.totalorder %s127, %s128
      %p140 = scmp.eq.s32.totalorder %s34, 1
      %p141 = por %p139, %p140
      %p143 = scmp.ne.s32.totalorder %s128, %s142
      %p144 = scmp.eq.s32.totalorder %s34, 0
      %p145 = por %p143, %p144
      %s147 = sadd.s32 %s146, 1
      %p150 = scmp.eq.s32.totalorder %s28, 1
      %p151 = scmp.ne.s32.totalorder %s146, %s148
      %p152 = scmp.eq.s32.totalorder %s28, 0
      %p153 = por %p151, %p152
      %p154 = scmp.ne.s32.totalorder %s146, %s148
      %p155 = scmp.eq.s32.totalorder %s33, 1
      %p156 = por %p154, %p155
      %p157 = scmp.ne.s32.totalorder %s148, %s149
      %p158 = scmp.eq.s32.totalorder %s33, 0
      %p159 = por %p157, %p158
      %p160 = scmp.ne.s32.totalorder %s148, %s149
      %p161 = scmp.eq.s32.totalorder %s34, 1
      %p162 = por %p160, %p161
      %p164 = scmp.ne.s32.totalorder %s149, %s163
      %p165 = scmp.eq.s32.totalorder %s34, 0
      %p166 = por %p164, %p165
      %s168 = sadd.s32 %s167, 1
      %p171 = scmp.eq.s32.totalorder %s28, 1
      %p172 = scmp.ne.s32.totalorder %s167, %s169
      %p173 = scmp.eq.s32.totalorder %s28, 0
      %p174 = por %p172, %p173
      %p175 = scmp.ne.s32.totalorder %s167, %s169
      %p176 = scmp.eq.s32.totalorder %s33, 1
      %p177 = por %p175, %p176
      %p178 = scmp.ne.s32.totalorder %s169, %s170
      %p179 = scmp.eq.s32.totalorder %s33, 0
      %p180 = por %p178, %p179
      %p181 = scmp.ne.s32.totalorder %s169, %s170
      %p182 = scmp.eq.s32.totalorder %s34, 1
      %p183 = por %p181, %p182
      %p185 = scmp.ne.s32.totalorder %s170, %s184
      %p186 = scmp.eq.s32.totalorder %s34, 0
      %p187 = por %p185, %p186
      %s189 = sadd.s32 %s188, 1
      %p192 = scmp.eq.s32.totalorder %s28, 1
      %p193 = scmp.ne.s32.totalorder %s188, %s190
      %p194 = scmp.eq.s32.totalorder %s28, 0
      %p195 = por %p193, %p194
      %p196 = scmp.ne.s32.totalorder %s188, %s190
      %p197 = scmp.eq.s32.totalorder %s33, 1
      %p198 = por %p196, %p197
      %p199 = scmp.ne.s32.totalorder %s190, %s191
      %p200 = scmp.eq.s32.totalorder %s33, 0
      %p201 = por %p199, %p200
      %p202 = scmp.ne.s32.totalorder %s190, %s191
      %p203 = scmp.eq.s32.totalorder %s34, 1
      %p204 = por %p202, %p203
      %p206 = scmp.ne.s32.totalorder %s191, %s205
      %p207 = scmp.eq.s32.totalorder %s34, 0
      %p208 = por %p206, %p207
      %s210 = sadd.s32 %s209, 1
      %p213 = scmp.eq.s32.totalorder %s28, 1
      %p214 = scmp.ne.s32.totalorder %s209, %s211
      %p215 = scmp.eq.s32.totalorder %s28, 0
      %p216 = por %p214, %p215
      %p217 = scmp.ne.s32.totalorder %s209, %s211
      %p218 = scmp.eq.s32.totalorder %s33, 1
      %p219 = por %p217, %p218
      %p220 = scmp.ne.s32.totalorder %s211, %s212
      %p221 = scmp.eq.s32.totalorder %s33, 0
      %p222 = por %p220, %p221
      %p223 = scmp.ne.s32.totalorder %s211, %s212
      %p224 = scmp.eq.s32.totalorder %s34, 1
      %p225 = por %p223, %p224
      %p227 = scmp.ne.s32.totalorder %s212, %s226
      %p228 = scmp.eq.s32.totalorder %s34, 0
      %p229 = por %p227, %p228
      %s231 = sadd.s32 %s230, 1
      %p234 = scmp.eq.s32.totalorder %s28, 1
      %p235 = scmp.ne.s32.totalorder %s230, %s232
      %p236 = scmp.eq.s32.totalorder %s28, 0
      %p237 = por %p235, %p236
      %p238 = scmp.ne.s32.totalorder %s230, %s232
      %p239 = scmp.eq.s32.totalorder %s33, 1
      %p240 = por %p238, %p239
      %p241 = scmp.ne.s32.totalorder %s232, %s233
      %p242 = scmp.eq.s32.totalorder %s33, 0
      %p243 = por %p241, %p242
      %p244 = scmp.ne.s32.totalorder %s232, %s233
      %p245 = scmp.eq.s32.totalorder %s34, 1
      %p246 = por %p244, %p245
      %p248 = scmp.ne.s32.totalorder %s233, %s247
      %p249 = scmp.eq.s32.totalorder %s34, 0
      %p250 = por %p248, %p249
      %s252 = sadd.s32 %s251, 1
      %p255 = scmp.eq.s32.totalorder %s28, 1
      %p256 = scmp.ne.s32.totalorder %s251, %s253
      %p257 = scmp.eq.s32.totalorder %s28, 0
      %p258 = por %p256, %p257
      %p259 = scmp.ne.s32.totalorder %s251, %s253
      %p260 = scmp.eq.s32.totalorder %s33, 1
      %p261 = por %p259, %p260
      %p262 = scmp.ne.s32.totalorder %s253, %s254
      %p263 = scmp.eq.s32.totalorder %s33, 0
      %p264 = por %p262, %p263
      %p265 = scmp.ne.s32.totalorder %s253, %s254
      %p266 = scmp.eq.s32.totalorder %s34, 1
      %p267 = por %p265, %p266
      %p269 = scmp.ne.s32.totalorder %s254, %s268
      %p270 = scmp.eq.s32.totalorder %s34, 0
      %p271 = por %p269, %p270
      %s273 = sadd.s32 %s272, 1
      %p276 = scmp.eq.s32.totalorder %s28, 1
      %p277 = scmp.ne.s32.totalorder %s272, %s274
      %p278 = scmp.eq.s32.totalorder %s28, 0
      %p279 = por %p277, %p278
      %p280 = scmp.ne.s32.totalorder %s272, %s274
      %p281 = scmp.eq.s32.totalorder %s33, 1
      %p282 = por %p280, %p281
      %p283 = scmp.ne.s32.totalorder %s274, %s275
      %p284 = scmp.eq.s32.totalorder %s33, 0
      %p285 = por %p283, %p284
      %p286 = scmp.ne.s32.totalorder %s274, %s275
      %p287 = scmp.eq.s32.totalorder %s34, 1
      %p288 = por %p286, %p287
      %p290 = scmp.ne.s32.totalorder %s275, %s289
      %p291 = scmp.eq.s32.totalorder %s34, 0
      %p292 = por %p290, %p291
      %s293 = ssub.s32 %s28, %s35
      %p294 = scmp.eq.s32.totalorder %s293, 0
      %s296 = sadd.s32 %s295, 1
      %s297 = scalar_select %p294, %s295, %s296
      %p300 = pneg %p294
      %p301 = scmp.eq.s32.totalorder %s28, 1
      %p302 = por %p300, %p301
      %p303 = scmp.ne.s32.totalorder %s295, %s298
      %p304 = scmp.eq.s32.totalorder %s28, 0
      %p305 = por %p303, %p304
      %p306 = scmp.ne.s32.totalorder %s295, %s298
      %p307 = scmp.eq.s32.totalorder %s33, 1
      %p308 = por %p306, %p307
      %p309 = scmp.ne.s32.totalorder %s298, %s299
      %p310 = scmp.eq.s32.totalorder %s33, 0
      %p311 = por %p309, %p310
      %p312 = scmp.ne.s32.totalorder %s298, %s299
      %p313 = scmp.eq.s32.totalorder %s34, 1
      %p314 = por %p312, %p313
      %p316 = scmp.ne.s32.totalorder %s299, %s315
      %p317 = scmp.eq.s32.totalorder %s34, 0
      %p318 = por %p316, %p317
      %p319 = scmp.le.s32.totalorder 1, %s28
      %p320 = scmp.lt.s32.totalorder %s28, 3
      %p321 = pnand %p319, %p320
      %p322 = pneg %p321
      // Predicated region
      $region9: #{tpu_custom_call.1} parent=5 // pred_check
        _
      $region10: #{tpu_custom_call.1} parent=5 // pred_check_branch
        %324 = sbr.rel (%p321) target = $region12
      $region11: #{tpu_custom_call.1} parent=5 // pred_region
        %s325 = ssub.s32 %s28, 1
        // Predicated region
        $region13: #{tpu_custom_call.1} parent=11 // pred_check
          %p326 = pneg %p75
        $region14: #{tpu_custom_call.1} parent=11 // pred_check_branch
          %328 = sbr.rel (%p326) target = $region16
        $region15: #{tpu_custom_call.1} parent=11 // pred_region
          _
        $region16: #{tpu_custom_call.1} parent=11 // pred_fallthru
          _
        // Predicated region
        $region17: #{tpu_custom_call.1} parent=11 // pred_check
          %p329 = pneg %p96
        $region18: #{tpu_custom_call.1} parent=11 // pred_check_branch
          %331 = sbr.rel (%p329) target = $region20
        $region19: #{tpu_custom_call.1} parent=11 // pred_region
          %s333 = ssub.s32 38016, 38016
          %334 = vsyncadd [#allocation6], %s333
          %s335 = sshll.u32 [#allocation5], 4
          %s336 = int_to_ptr.vmem [resolvable:$true] %s335
          %341 = dma.hbm_to_vmem [thread:$0]  %s2, 38016, %s336, [#allocation6], 128, 128, 8
        $region20: #{tpu_custom_call.1} parent=11 // pred_fallthru
          _
        // Predicated region
        $region21: #{tpu_custom_call.1} parent=11 // pred_check
          %p342 = pneg %p117
        $region22: #{tpu_custom_call.1} parent=11 // pred_check_branch
          %344 = sbr.rel (%p342) target = $region24
        $region23: #{tpu_custom_call.1} parent=11 // pred_region
          %s346 = ssub.s32 32, 32
          %347 = vsyncadd [#allocation6], %s346
          %s349 = sshll.u32 [#allocation7], 4
          %s350 = int_to_ptr.vmem [resolvable:$true] %s349
          %352 = dma.hbm_to_vmem [thread:$0]  %s3, 32, %s350, [#allocation6]
        $region24: #{tpu_custom_call.1} parent=11 // pred_fallthru
          _
        // Predicated region
        $region25: #{tpu_custom_call.1} parent=11 // pred_check
          %p353 = pneg %p138
        $region26: #{tpu_custom_call.1} parent=11 // pred_check_branch
          %355 = sbr.rel (%p353) target = $region28
        $region27: #{tpu_custom_call.1} parent=11 // pred_region
          %s357 = ssub.s32 18432, 18432
          %358 = vsyncadd [#allocation9], %s357
          %s359 = sshll.u32 [#allocation8], 4
          %s360 = int_to_ptr.vmem [resolvable:$true] %s359
          %365 = dma.hbm_to_vmem [thread:$0]  %s4, 18432, %s360, [#allocation9], 64, 64, 4
        $region28: #{tpu_custom_call.1} parent=11 // pred_fallthru
          _
        // Predicated region
        $region29: #{tpu_custom_call.1} parent=11 // pred_check
          %p366 = pneg %p159
        $region30: #{tpu_custom_call.1} parent=11 // pred_check_branch
          %368 = sbr.rel (%p366) target = $region32
        $region31: #{tpu_custom_call.1} parent=11 // pred_region
          %s370 = ssub.s32 16, 16
          %371 = vsyncadd [#allocation9], %s370
          %s373 = sshll.u32 [#allocation10], 4
          %s374 = int_to_ptr.vmem [resolvable:$true] %s373
          %376 = dma.hbm_to_vmem [thread:$0]  %s5, 16, %s374, [#allocation9]
        $region32: #{tpu_custom_call.1} parent=11 // pred_fallthru
          _
        // Predicated region
        $region33: #{tpu_custom_call.1} parent=11 // pred_check
          %p377 = pneg %p180
        $region34: #{tpu_custom_call.1} parent=11 // pred_check_branch
          %379 = sbr.rel (%p377) target = $region36
        $region35: #{tpu_custom_call.1} parent=11 // pred_region
          _
        $region36: #{tpu_custom_call.1} parent=11 // pred_fallthru
          _
        // Predicated region
        $region37: #{tpu_custom_call.1} parent=11 // pred_check
          %p380 = pneg %p201
        $region38: #{tpu_custom_call.1} parent=11 // pred_check_branch
          %382 = sbr.rel (%p380) target = $region40
        $region39: #{tpu_custom_call.1} parent=11 // pred_region
          %s384 = ssub.s32 16, 16
          %385 = vsyncadd [#allocation12], %s384
          %s387 = sshll.u32 [#allocation11], 4
          %s388 = int_to_ptr.vmem [resolvable:$true] %s387
          %390 = dma.hbm_to_vmem [thread:$0]  %s7, 16, %s388, [#allocation12]
        $region40: #{tpu_custom_call.1} parent=11 // pred_fallthru
          _
        // Predicated region
        $region41: #{tpu_custom_call.1} parent=11 // pred_check
          %p391 = pneg %p222
        $region42: #{tpu_custom_call.1} parent=11 // pred_check_branch
          %393 = sbr.rel (%p391) target = $region44
        $region43: #{tpu_custom_call.1} parent=11 // pred_region
          _
        $region44: #{tpu_custom_call.1} parent=11 // pred_fallthru
          _
        // Predicated region
        $region45: #{tpu_custom_call.1} parent=11 // pred_check
          %p394 = pneg %p243
        $region46: #{tpu_custom_call.1} parent=11 // pred_check_branch
          %396 = sbr.rel (%p394) target = $region48
        $region47: #{tpu_custom_call.1} parent=11 // pred_region
          %s398 = ssub.s32 16, 16
          %399 = vsyncadd [#allocation12], %s398
          %s401 = sshll.u32 [#allocation13], 4
          %s402 = int_to_ptr.vmem [resolvable:$true] %s401
          %404 = dma.hbm_to_vmem [thread:$0]  %s9, 16, %s402, [#allocation12]
        $region48: #{tpu_custom_call.1} parent=11 // pred_fallthru
          _
        // Predicated region
        $region49: #{tpu_custom_call.1} parent=11 // pred_check
          %p405 = pneg %p264
        $region50: #{tpu_custom_call.1} parent=11 // pred_check_branch
          %407 = sbr.rel (%p405) target = $region52
        $region51: #{tpu_custom_call.1} parent=11 // pred_region
          %s409 = ssub.s32 32, 32
          %410 = vsyncadd [#allocation15], %s409
          %s412 = sshll.u32 [#allocation14], 4
          %s413 = int_to_ptr.vmem [resolvable:$true] %s412
          %415 = dma.hbm_to_vmem [thread:$0]  %s10, 32, %s413, [#allocation15]
        $region52: #{tpu_custom_call.1} parent=11 // pred_fallthru
          _
        // Predicated region
        $region53: #{tpu_custom_call.1} parent=11 // pred_check
          %p416 = pneg %p285
        $region54: #{tpu_custom_call.1} parent=11 // pred_check_branch
          %418 = sbr.rel (%p416) target = $region56
        $region55: #{tpu_custom_call.1} parent=11 // pred_region
          %s420 = ssub.s32 16, 16
          %421 = vsyncadd [#allocation15], %s420
          %s423 = sshll.u32 [#allocation16], 4
          %s424 = int_to_ptr.vmem [resolvable:$true] %s423
          %426 = dma.hbm_to_vmem [thread:$0]  %s11, 16, %s424, [#allocation15]
        $region56: #{tpu_custom_call.1} parent=11 // pred_fallthru
          _
      $region12: #{tpu_custom_call.1} parent=5 // pred_fallthru
        _
      %p427 = scmp.lt.s32.totalorder %s28, 2
      // Predicated region
      $region57: #{tpu_custom_call.1} parent=5 // pred_check
        %p428 = pneg %p427
      $region58: #{tpu_custom_call.1} parent=5 // pred_check_branch
        %430 = sbr.rel (%p428) target = $region60
      $region59: #{tpu_custom_call.1} parent=5 // pred_region
        // Predicated region
        $region61: #{tpu_custom_call.1} parent=59 // pred_check
          %p431 = pneg %p48
        $region62: #{tpu_custom_call.1} parent=59 // pred_check_branch
          %433 = sbr.rel (%p431) target = $region64
        $region63: #{tpu_custom_call.1} parent=59 // pred_region
          %s434 = sand.u32 %s38, 1
          %s435 = scalar_lea.sflag [#allocation3], %s434
          %s436 = sand.u32 %s38, 1
          %s437 = smul.addr %s436, 96
          %s438 = scalar_lea.vmem [#allocation2], %s437
          %s440 = ssub.s32 1536, 1536
          %441 = vsyncadd %s435, %s440
          %s442 = smul.addr %s28, 24
          %s443 = smul.addr %s442, 64
          %s444 = scalar_lea.hbm %s0, %s443
          %s445 = sshll.u32 %s438, 4
          %s446 = int_to_ptr.vmem [resolvable:$true] %s445
          %451 = dma.hbm_to_vmem [thread:$0]  %s444, 1536, %s446, %s435, 192, 192, 12
        $region64: #{tpu_custom_call.1} parent=59 // pred_fallthru
          _
      $region60: #{tpu_custom_call.1} parent=5 // pred_fallthru
        _
      %p452 = scmp.le.s32.totalorder 1, %s28
      %p453 = scmp.lt.s32.totalorder %s28, 3
      %p454 = pnand %p452, %p453
      %p455 = pneg %p454
      // Predicated region
      $region65: #{tpu_custom_call.1} parent=5 // pred_check
        _
      $region66: #{tpu_custom_call.1} parent=5 // pred_check_branch
        %457 = sbr.rel (%p454) target = $region68
      $region67: #{tpu_custom_call.1} parent=5 // pred_region
        %s458 = ssub.s32 %s28, 1
        %s459 = sand.u32 %s41, 1
        %s460 = scalar_lea.sflag [#allocation3], %s459
        %s461 = sand.u32 %s41, 1
        %s462 = smul.addr %s461, 96
        %s463 = scalar_lea.vmem [#allocation2], %s462
        // Predicated region
        $region69: #{tpu_custom_call.1} parent=67 // pred_check
          %p464 = pneg %p54
        $region70: #{tpu_custom_call.1} parent=67 // pred_check_branch
          %466 = sbr.rel (%p464) target = $region72
        $region71: #{tpu_custom_call.1} parent=67 // pred_region
          %467 = dma.done %s460, 1536
        $region72: #{tpu_custom_call.1} parent=67 // pred_fallthru
          _
        // Predicated region
        $region73: #{tpu_custom_call.1} parent=67 // pred_check
          %p468 = pneg %p96
        $region74: #{tpu_custom_call.1} parent=67 // pred_check_branch
          %470 = sbr.rel (%p468) target = $region76
        $region75: #{tpu_custom_call.1} parent=67 // pred_region
          %471 = dma.done [#allocation6], 38016
        $region76: #{tpu_custom_call.1} parent=67 // pred_fallthru
          _
        // Predicated region
        $region77: #{tpu_custom_call.1} parent=67 // pred_check
          %p472 = pneg %p117
        $region78: #{tpu_custom_call.1} parent=67 // pred_check_branch
          %474 = sbr.rel (%p472) target = $region80
        $region79: #{tpu_custom_call.1} parent=67 // pred_region
          %475 = dma.done [#allocation6], 32
        $region80: #{tpu_custom_call.1} parent=67 // pred_fallthru
          _
        // Predicated region
        $region81: #{tpu_custom_call.1} parent=67 // pred_check
          %p476 = pneg %p138
        $region82: #{tpu_custom_call.1} parent=67 // pred_check_branch
          %478 = sbr.rel (%p476) target = $region84
        $region83: #{tpu_custom_call.1} parent=67 // pred_region
          %479 = dma.done [#allocation9], 18432
        $region84: #{tpu_custom_call.1} parent=67 // pred_fallthru
          _
        // Predicated region
        $region85: #{tpu_custom_call.1} parent=67 // pred_check
          %p480 = pneg %p159
        $region86: #{tpu_custom_call.1} parent=67 // pred_check_branch
          %482 = sbr.rel (%p480) target = $region88
        $region87: #{tpu_custom_call.1} parent=67 // pred_region
          %483 = dma.done [#allocation9], 16
        $region88: #{tpu_custom_call.1} parent=67 // pred_fallthru
          _
        // Predicated region
        $region89: #{tpu_custom_call.1} parent=67 // pred_check
          %p484 = pneg %p201
        $region90: #{tpu_custom_call.1} parent=67 // pred_check_branch
          %486 = sbr.rel (%p484) target = $region92
        $region91: #{tpu_custom_call.1} parent=67 // pred_region
          %487 = dma.done [#allocation12], 16
        $region92: #{tpu_custom_call.1} parent=67 // pred_fallthru
          _
        // Predicated region
        $region93: #{tpu_custom_call.1} parent=67 // pred_check
          %p488 = pneg %p243
        $region94: #{tpu_custom_call.1} parent=67 // pred_check_branch
          %490 = sbr.rel (%p488) target = $region96
        $region95: #{tpu_custom_call.1} parent=67 // pred_region
          %491 = dma.done [#allocation12], 16
        $region96: #{tpu_custom_call.1} parent=67 // pred_fallthru
          _
        // Predicated region
        $region97: #{tpu_custom_call.1} parent=67 // pred_check
          %p492 = pneg %p264
        $region98: #{tpu_custom_call.1} parent=67 // pred_check_branch
          %494 = sbr.rel (%p492) target = $region100
        $region99: #{tpu_custom_call.1} parent=67 // pred_region
          %495 = dma.done [#allocation15], 32
        $region100: #{tpu_custom_call.1} parent=67 // pred_fallthru
          _
        // Predicated region
        $region101: #{tpu_custom_call.1} parent=67 // pred_check
          %p496 = pneg %p285
        $region102: #{tpu_custom_call.1} parent=67 // pred_check_branch
          %498 = sbr.rel (%p496) target = $region104
        $region103: #{tpu_custom_call.1} parent=67 // pred_region
          %499 = dma.done [#allocation15], 16
        $region104: #{tpu_custom_call.1} parent=67 // pred_fallthru
          _
        %s500 = sand.u32 %s41, 1
        %s501 = scalar_lea.sflag [#allocation3], %s500
        %s502 = sand.u32 %s41, 1
        %s503 = smul.addr %s502, 96
        %s504 = scalar_lea.vmem [#allocation2], %s503
        %p505 = pneg %p54
        %p506 = pneg %p51
        %p507 = pneg %p75
        %p508 = pneg %p72
        %p509 = pneg %p96
        %p510 = pneg %p93
        %p511 = pneg %p117
        %p512 = pneg %p114
        %p513 = pneg %p138
        %p514 = pneg %p135
        %p515 = pneg %p159
        %p516 = pneg %p156
        %p517 = pneg %p180
        %p518 = pneg %p177
        %p519 = pneg %p201
        %p520 = pneg %p198
        %p521 = pneg %p222
        %p522 = pneg %p219
        %p523 = pneg %p243
        %p524 = pneg %p240
        %p525 = pneg %p264
        %p526 = pneg %p261
        %p527 = pneg %p285
        %p528 = pneg %p282
        %p529 = pneg %p311
        %p530 = pneg %p308
        %s531 = sand.u32 %s298, 1
        %s532 = scalar_lea.sflag [#allocation4], %s531
        %s533 = sand.u32 %s298, 1
        %s534 = smul.addr %s533, 8
        %s535 = scalar_lea.vmem [#allocation17], %s534
        %v537 = vld [vmem:[%s463] sm:$0xff]
        %v538 = vld [vmem:[%s463 + $0x8] sm:$0xf]
        %v539 = vld [vmem:[%s463 + $0xc] sm:$0xff]
        %v540 = vld [vmem:[%s463 + $0x14] sm:$0xf]
        %v541 = vld [vmem:[%s463 + $0x18] sm:$0xff]
        %v542 = vld [vmem:[%s463 + $0x20] sm:$0xf]
        %v543 = vld [vmem:[%s463 + $0x24] sm:$0xff]
        %v544 = vld [vmem:[%s463 + $0x2c] sm:$0xf]
        %v545 = vld [vmem:[%s463 + $0x30] sm:$0xff]
        %v546 = vld [vmem:[%s463 + $0x38] sm:$0xf]
        %v547 = vld [vmem:[%s463 + $0x3c] sm:$0xff]
        %v548 = vld [vmem:[%s463 + $0x44] sm:$0xf]
        %v549 = vld [vmem:[%s463 + $0x48] sm:$0xff]
        %v550 = vld [vmem:[%s463 + $0x50] sm:$0xf]
        %v551 = vld [vmem:[%s463 + $0x54] sm:$0xff]
        %v552 = vld [vmem:[%s463 + $0x5c] sm:$0xf]
        %v553 = vld [vmem:[#allocation7] sm:$0x3]
        %v555 = vlaneseq
        %v556 = vshrl.u32 %v555, 7
        %v557 = vsub.s32 0, %v556
        %v558 = vrot.slane %v553, %v557
        %v559 = vlaneseq
        %v560 = vshrl.u32 %v559, 7
        %v561 = vsub.s32 1, %v560
        %v562 = vrot.slane %v553, %v561
        %v581 = vunpack.c.l.b16 %v537
        %v582 = vunpack.c.h.b16 %v537
        %v583 = vunpack.c.l.b16 %v538
        %v584 = vunpack.c.l.b16 %v539
        %v585 = vunpack.c.h.b16 %v539
        %v586 = vunpack.c.l.b16 %v540
        %v587 = vunpack.c.l.b16 %v541
        %v588 = vunpack.c.h.b16 %v541
        %v589 = vunpack.c.l.b16 %v542
        %v590 = vunpack.c.l.b16 %v543
        %v591 = vunpack.c.h.b16 %v543
        %v592 = vunpack.c.l.b16 %v544
        %v593 = vunpack.c.l.b16 %v545
        %v594 = vunpack.c.h.b16 %v545
        %v595 = vunpack.c.l.b16 %v546
        %v596 = vunpack.c.l.b16 %v547
        %v597 = vunpack.c.h.b16 %v547
        %v598 = vunpack.c.l.b16 %v548
        %v599 = vunpack.c.l.b16 %v549
        %v600 = vunpack.c.h.b16 %v549
        %v601 = vunpack.c.l.b16 %v550
        %v602 = vunpack.c.l.b16 %v551
        %v603 = vunpack.c.h.b16 %v551
        %v604 = vunpack.c.l.b16 %v552
        %v605 = vpack.c.b16 %v581, %v581
        %v606 = vpack.c.b16 %v582, %v582
        %v607 = vpack.c.b16 %v583, %v583
        %v608 = vpack.c.b16 %v584, %v584
        %v609 = vpack.c.b16 %v585, %v585
        %v610 = vpack.c.b16 %v586, %v586
        %v611 = vpack.c.b16 %v587, %v587
        %v612 = vpack.c.b16 %v588, %v588
        %v613 = vpack.c.b16 %v589, %v589
        %v614 = vpack.c.b16 %v590, %v590
        %v615 = vpack.c.b16 %v591, %v591
        %v616 = vpack.c.b16 %v592, %v592
        %v617 = vpack.c.b16 %v593, %v593
        %v618 = vpack.c.b16 %v594, %v594
        %v619 = vpack.c.b16 %v595, %v595
        %v620 = vpack.c.b16 %v596, %v596
        %v621 = vpack.c.b16 %v597, %v597
        %v622 = vpack.c.b16 %v598, %v598
        %v623 = vpack.c.b16 %v599, %v599
        %v624 = vpack.c.b16 %v600, %v600
        %v625 = vpack.c.b16 %v601, %v601
        %v626 = vpack.c.b16 %v602, %v602
        %v627 = vpack.c.b16 %v603, %v603
        %v628 = vpack.c.b16 %v604, %v604
        %v630 = vshrl.u32 %v605, 16
        %v632 = vrot.slane %v630, 7
        %v633 = vshll.u32 %v605, 16
        %v635 = vor.u32 %v632, %v633
        %v637 = vshrl.u32 %v606, 16
        %v639 = vrot.slane %v637, 7
        %v640 = vshll.u32 %v606, 16
        %v642 = vor.u32 %v639, %v640
        %v644 = vshrl.u32 %v607, 16
        %v646 = vrot.slane %v644, 7
        %v647 = vshll.u32 %v607, 16
        %v649 = vor.u32 %v646, %v647
        %v651 = vshrl.u32 %v608, 16
        %v653 = vrot.slane %v651, 7
        %v654 = vshll.u32 %v608, 16
        %v656 = vor.u32 %v653, %v654
        %v658 = vshrl.u32 %v609, 16
        %v660 = vrot.slane %v658, 7
        %v661 = vshll.u32 %v609, 16
        %v663 = vor.u32 %v660, %v661
        %v665 = vshrl.u32 %v610, 16
        %v667 = vrot.slane %v665, 7
        %v668 = vshll.u32 %v610, 16
        %v670 = vor.u32 %v667, %v668
        %v672 = vshrl.u32 %v611, 16
        %v674 = vrot.slane %v672, 7
        %v675 = vshll.u32 %v611, 16
        %v677 = vor.u32 %v674, %v675
        %v679 = vshrl.u32 %v612, 16
        %v681 = vrot.slane %v679, 7
        %v682 = vshll.u32 %v612, 16
        %v684 = vor.u32 %v681, %v682
        %v686 = vshrl.u32 %v613, 16
        %v688 = vrot.slane %v686, 7
        %v689 = vshll.u32 %v613, 16
        %v691 = vor.u32 %v688, %v689
        %v693 = vshrl.u32 %v614, 16
        %v695 = vrot.slane %v693, 7
        %v696 = vshll.u32 %v614, 16
        %v698 = vor.u32 %v695, %v696
        %v700 = vshrl.u32 %v615, 16
        %v702 = vrot.slane %v700, 7
        %v703 = vshll.u32 %v615, 16
        %v705 = vor.u32 %v702, %v703
        %v707 = vshrl.u32 %v616, 16
        %v709 = vrot.slane %v707, 7
        %v710 = vshll.u32 %v616, 16
        %v712 = vor.u32 %v709, %v710
        %v714 = vshrl.u32 %v617, 16
        %v716 = vrot.slane %v714, 7
        %v717 = vshll.u32 %v617, 16
        %v719 = vor.u32 %v716, %v717
        %v721 = vshrl.u32 %v618, 16
        %v723 = vrot.slane %v721, 7
        %v724 = vshll.u32 %v618, 16
        %v726 = vor.u32 %v723, %v724
        %v728 = vshrl.u32 %v619, 16
        %v730 = vrot.slane %v728, 7
        %v731 = vshll.u32 %v619, 16
        %v733 = vor.u32 %v730, %v731
        %v735 = vshrl.u32 %v620, 16
        %v737 = vrot.slane %v735, 7
        %v738 = vshll.u32 %v620, 16
        %v740 = vor.u32 %v737, %v738
        %v742 = vshrl.u32 %v621, 16
        %v744 = vrot.slane %v742, 7
        %v745 = vshll.u32 %v621, 16
        %v747 = vor.u32 %v744, %v745
        %v749 = vshrl.u32 %v622, 16
        %v751 = vrot.slane %v749, 7
        %v752 = vshll.u32 %v622, 16
        %v754 = vor.u32 %v751, %v752
        %v756 = vshrl.u32 %v623, 16
        %v758 = vrot.slane %v756, 7
        %v759 = vshll.u32 %v623, 16
        %v761 = vor.u32 %v758, %v759
        %v763 = vshrl.u32 %v624, 16
        %v765 = vrot.slane %v763, 7
        %v766 = vshll.u32 %v624, 16
        %v768 = vor.u32 %v765, %v766
        %v770 = vshrl.u32 %v625, 16
        %v772 = vrot.slane %v770, 7
        %v773 = vshll.u32 %v625, 16
        %v775 = vor.u32 %v772, %v773
        %v777 = vshrl.u32 %v626, 16
        %v779 = vrot.slane %v777, 7
        %v780 = vshll.u32 %v626, 16
        %v782 = vor.u32 %v779, %v780
        %v784 = vshrl.u32 %v627, 16
        %v786 = vrot.slane %v784, 7
        %v787 = vshll.u32 %v627, 16
        %v789 = vor.u32 %v786, %v787
        %v791 = vshrl.u32 %v628, 16
        %v793 = vrot.slane %v791, 7
        %v794 = vshll.u32 %v628, 16
        %v796 = vor.u32 %v793, %v794
        %vm821 = vcmask 1040384
        %vm822 = vsmask.f32 256
        %vm823 = vmand %vm821, %vm822
        %v824 = vsel %vm823, 0, %v635
        %v825 = vsel %vm823, 0, %v642
        %v826 = vsel %vm823, 0, %v649
        %v827 = vsel %vm823, 0, %v656
        %v828 = vsel %vm823, 0, %v663
        %v829 = vsel %vm823, 0, %v670
        %v830 = vsel %vm823, 0, %v677
        %v831 = vsel %vm823, 0, %v684
        %v832 = vsel %vm823, 0, %v691
        %v833 = vsel %vm823, 0, %v698
        %v834 = vsel %vm823, 0, %v705
        %v835 = vsel %vm823, 0, %v712
        %v836 = vsel %vm823, 0, %v719
        %v837 = vsel %vm823, 0, %v726
        %v838 = vsel %vm823, 0, %v733
        %v839 = vsel %vm823, 0, %v740
        %v840 = vsel %vm823, 0, %v747
        %v841 = vsel %vm823, 0, %v754
        %v842 = vsel %vm823, 0, %v761
        %v843 = vsel %vm823, 0, %v768
        %v844 = vsel %vm823, 0, %v775
        %v845 = vsel %vm823, 0, %v782
        %v846 = vsel %vm823, 0, %v789
        %v847 = vsel %vm823, 0, %v796
        %v870 = vunpack.c.l.b16 0
        %v871 = vunpack.c.l.b16 %v824
        %v872 = vunpack.c.l.b16 %v825
        %v873 = vunpack.c.l.b16 %v826
        %v874 = vunpack.c.l.b16 %v827
        %v875 = vunpack.c.l.b16 %v828
        %v876 = vunpack.c.l.b16 %v829
        %v877 = vunpack.c.l.b16 %v830
        %v878 = vunpack.c.l.b16 %v831
        %v879 = vunpack.c.l.b16 %v832
        %v880 = vunpack.c.l.b16 %v833
        %v881 = vunpack.c.l.b16 %v834
        %v882 = vunpack.c.l.b16 %v835
        %v883 = vunpack.c.l.b16 %v836
        %v884 = vunpack.c.l.b16 %v837
        %v885 = vunpack.c.l.b16 %v838
        %v886 = vunpack.c.l.b16 %v839
        %v887 = vunpack.c.l.b16 %v840
        %v888 = vunpack.c.l.b16 %v841
        %v889 = vunpack.c.l.b16 %v842
        %v890 = vunpack.c.l.b16 %v843
        %v891 = vunpack.c.l.b16 %v844
        %v892 = vld [vmem:[#allocation5] sm:$0xff]
        %v893 = vld [vmem:[#allocation5 + $0x8] sm:$0xff]
        %v894 = vld [vmem:[#allocation5 + $0x10] sm:$0xff]
        %v895 = vld [vmem:[#allocation5 + $0x18] sm:$0xff]
        %v896 = vld [vmem:[#allocation5 + $0x20] sm:$0xff]
        %v897 = vld [vmem:[#allocation5 + $0x28] sm:$0xff]
        %v898 = vld [vmem:[#allocation5 + $0x30] sm:$0xff]
        %v899 = vld [vmem:[#allocation5 + $0x38] sm:$0xff]
        %v900 = vld [vmem:[#allocation5 + $0x40] sm:$0xff]
        %v901 = vld [vmem:[#allocation5 + $0x48] sm:$0xff]
        %v902 = vld [vmem:[#allocation5 + $0x50] sm:$0xff]
        %v903 = vld [vmem:[#allocation5 + $0x58] sm:$0xff]
        %v904 = vld [vmem:[#allocation5 + $0x60] sm:$0xff]
        %v905 = vld [vmem:[#allocation5 + $0x68] sm:$0xff]
        %v906 = vld [vmem:[#allocation5 + $0x70] sm:$0xff]
        %v907 = vld [vmem:[#allocation5 + $0x78] sm:$0xff]
        %v908 = vld [vmem:[#allocation5 + $0x80] sm:$0xff]
        %v909 = vld [vmem:[#allocation5 + $0x88] sm:$0xff]
        %v910 = vld [vmem:[#allocation5 + $0x90] sm:$0xff]
        %v911 = vld [vmem:[#allocation5 + $0x98] sm:$0xff]
        %v912 = vld [vmem:[#allocation5 + $0xa0] sm:$0xff]
        %v913 = vld [vmem:[#allocation5 + $0xa8] sm:$0xff]
        %v914 = vld [vmem:[#allocation5 + $0xb0] sm:$0xff]
        %v915 = vld [vmem:[#allocation5 + $0xb8] sm:$0xff]
        %v916 = vld [vmem:[#allocation5 + $0xc0] sm:$0xff]
        %v917 = vld [vmem:[#allocation5 + $0xc8] sm:$0xff]
        %v918 = vld [vmem:[#allocation5 + $0xd0] sm:$0xff]
        %v919 = vld [vmem:[#allocation5 + $0xd8] sm:$0xff]
        %v920 = vld [vmem:[#allocation5 + $0xe0] sm:$0xff]
        %v921 = vld [vmem:[#allocation5 + $0xe8] sm:$0xff]
        %v922 = vld [vmem:[#allocation5 + $0xf0] sm:$0xff]
        %v923 = vld [vmem:[#allocation5 + $0xf8] sm:$0xff]
        %v924 = vld [vmem:[#allocation5 + $0x100] sm:$0xff]
        %v925 = vpack.c.b16 %v871, %v870
        %v926 = vpack.c.b16 %v872, %v870
        %v927 = vpack.c.b16 %v873, %v870
        %v928 = vpack.c.b16 %v877, %v874
        %v929 = vpack.c.b16 %v878, %v875
        %v930 = vpack.c.b16 %v879, %v876
        %v931 = vpack.c.b16 %v883, %v880
        %v932 = vpack.c.b16 %v884, %v881
        %v933 = vpack.c.b16 %v885, %v882
        %v934 = vpack.c.b16 %v889, %v886
        %v935 = vpack.c.b16 %v890, %v887
        %v936 = vpack.c.b16 %v891, %v888
        %v978 = vunpack.c.l.b16 %v892
        %v979 = vunpack.c.h.b16 %v892
        %v980 = vunpack.c.l.b16 %v893
        %v981 = vunpack.c.h.b16 %v893
        %v982 = vunpack.c.l.b16 %v894
        %v983 = vunpack.c.h.b16 %v894
        %v984 = vunpack.c.l.b16 %v895
        %v985 = vunpack.c.h.b16 %v895
        %v986 = vunpack.c.l.b16 %v896
        %v987 = vunpack.c.h.b16 %v896
        %v988 = vunpack.c.l.b16 %v897
        %v989 = vunpack.c.h.b16 %v897
        %v990 = vunpack.c.l.b16 %v898
        %v991 = vunpack.c.h.b16 %v898
        %v992 = vunpack.c.l.b16 %v899
        %v993 = vunpack.c.h.b16 %v899
        %v994 = vunpack.c.l.b16 %v900
        %v995 = vunpack.c.h.b16 %v900
        %v996 = vunpack.c.l.b16 %v901
        %v997 = vunpack.c.h.b16 %v901
        %v998 = vunpack.c.l.b16 %v902
        %v999 = vunpack.c.h.b16 %v902
        %v1000 = vunpack.c.l.b16 %v903
        %v1001 = vunpack.c.h.b16 %v903
        %v1002 = vunpack.c.l.b16 %v904
        %v1003 = vunpack.c.h.b16 %v904
        %v1004 = vunpack.c.l.b16 %v905
        %v1005 = vunpack.c.h.b16 %v905
        %v1006 = vunpack.c.l.b16 %v906
        %v1007 = vunpack.c.h.b16 %v906
        %v1008 = vunpack.c.l.b16 %v907
        %v1009 = vunpack.c.h.b16 %v907
        %v1010 = vunpack.c.l.b16 %v908
        %v1011 = vunpack.c.h.b16 %v908
        %v1012 = vunpack.c.l.b16 %v909
        %v1013 = vunpack.c.h.b16 %v909
        %v1014 = vunpack.c.l.b16 %v910
        %v1015 = vunpack.c.h.b16 %v910
        %v1016 = vunpack.c.l.b16 %v911
        %v1017 = vunpack.c.h.b16 %v911
        %v1018 = vunpack.c.l.b16 %v912
        %v1019 = vunpack.c.h.b16 %v912
        %v1020 = vunpack.c.l.b16 %v913
        %v1021 = vunpack.c.h.b16 %v913
        %v1022 = vunpack.c.l.b16 %v914
        %v1023 = vunpack.c.h.b16 %v914
        %v1024 = vunpack.c.l.b16 %v915
        %v1025 = vunpack.c.h.b16 %v915
        %v1026 = vunpack.c.l.b16 %v916
        %v1027 = vunpack.c.h.b16 %v916
        %v1028 = vunpack.c.l.b16 %v917
        %v1029 = vunpack.c.h.b16 %v917
        %v1030 = vunpack.c.l.b16 %v918
        %v1031 = vunpack.c.h.b16 %v918
        %v1032 = vunpack.c.l.b16 %v919
        %v1033 = vunpack.c.h.b16 %v919
        %v1034 = vunpack.c.l.b16 %v920
        %v1035 = vunpack.c.h.b16 %v920
        %v1036 = vunpack.c.l.b16 %v921
        %v1037 = vunpack.c.h.b16 %v921
        %v1038 = vunpack.c.l.b16 %v922
        %v1039 = vunpack.c.h.b16 %v922
        %v1040 = vunpack.c.l.b16 %v923
        %v1041 = vunpack.c.h.b16 %v923
        %v1042 = vunpack.c.l.b16 %v924
        %v1043 = vunpack.c.h.b16 %v924
        %v1044 = vpack.c.b16 %v980, %v978
        %v1045 = vpack.c.b16 %v981, %v979
        %v1046 = vpack.c.b16 %v984, %v982
        %v1047 = vpack.c.b16 %v985, %v983
        %v1048 = vpack.c.b16 %v988, %v986
        %v1049 = vpack.c.b16 %v989, %v987
        %v1050 = vpack.c.b16 %v992, %v990
        %v1051 = vpack.c.b16 %v993, %v991
        %v1052 = vpack.c.b16 %v996, %v994
        %v1053 = vpack.c.b16 %v997, %v995
        %v1054 = vpack.c.b16 %v1000, %v998
        %v1055 = vpack.c.b16 %v1001, %v999
        %v1056 = vpack.c.b16 %v1004, %v1002
        %v1057 = vpack.c.b16 %v1005, %v1003
        %v1058 = vpack.c.b16 %v1008, %v1006
        %v1059 = vpack.c.b16 %v1009, %v1007
        %v1060 = vpack.c.b16 %v1012, %v1010
        %v1061 = vpack.c.b16 %v1013, %v1011
        %v1062 = vpack.c.b16 %v1016, %v1014
        %v1063 = vpack.c.b16 %v1017, %v1015
        %v1064 = vpack.c.b16 %v1020, %v1018
        %v1065 = vpack.c.b16 %v1021, %v1019
        %v1066 = vpack.c.b16 %v1024, %v1022
        %v1067 = vpack.c.b16 %v1025, %v1023
        %v1068 = vpack.c.b16 %v1028, %v1026
        %v1069 = vpack.c.b16 %v1029, %v1027
        %v1070 = vpack.c.b16 %v1032, %v1030
        %v1071 = vpack.c.b16 %v1033, %v1031
        %v1072 = vpack.c.b16 %v1036, %v1034
        %v1073 = vpack.c.b16 %v1037, %v1035
        %v1074 = vpack.c.b16 %v1040, %v1038
        %v1075 = vpack.c.b16 %v1041, %v1039
        %v1076 = vpack.c.b16 %v1042, %v1042
        %v1077 = vpack.c.b16 %v1043, %v1043
        %vm1110 = vcmask 64512
        %v1112 = vsel %vm1110, %v927, 0
        %v1115 = vsel %vm1110, %v930, 0
        %v1118 = vsel %vm1110, %v933, 0
        %v1121 = vsel %vm1110, %v936, 0
        %vm1123 = vcmask 1043456
        %v1125 = vsel %vm1123, %v1076, 0
        %v1128 = vsel %vm1123, %v1077, 0
        %1130 = vmatprep.subr.bf16.mxu0 %v1045
        %1131 = vmatpush1.bf16.msra.mxu0 %v1044
        %1132 = vmatprep.subr.bf16.mxu0 %v1047
        %1133 = vmatpush1.bf16.msra.mxu0 %v1046
        %1134 = vmatprep.subr.bf16.mxu0 %v1049
        %1135 = vmatpush1.bf16.msra.mxu0 %v1048
        %1136 = vmatprep.subr.bf16.mxu0 %v1051
        %1137 = vmatpush1.bf16.msra.mxu0 %v1050
        %1138 = vmatprep.subr.bf16.mxu0 %v1053
        %1139 = vmatpush1.bf16.msra.mxu0 %v1052
        %1140 = vmatprep.subr.bf16.mxu0 %v1055
        %1141 = vmatpush1.bf16.msra.mxu0 %v1054
        %1142 = vmatprep.subr.bf16.mxu0 %v1057
        %1143 = vmatpush1.bf16.msra.mxu0 %v1056
        %1144 = vmatprep.subr.bf16.mxu0 %v1059
        %1145 = vmatpush1.bf16.msra.mxu0 %v1058
        %1146 = vmatprep.subr.bf16.mxu0 %v1061
        %1147 = vmatpush1.bf16.msra.mxu0 %v1060
        %1148 = vmatprep.subr.bf16.mxu0 %v1063
        %1149 = vmatpush1.bf16.msra.mxu0 %v1062
        %1150 = vmatprep.subr.bf16.mxu0 %v1065
        %1151 = vmatpush1.bf16.msra.mxu0 %v1064
        %1152 = vmatprep.subr.bf16.mxu0 %v1067
        %1153 = vmatpush1.bf16.msra.mxu0 %v1066
        %1154 = vmatprep.subr.bf16.mxu0 %v1069
        %1155 = vmatpush1.bf16.msra.mxu0 %v1068
        %1156 = vmatprep.subr.bf16.mxu0 %v1071
        %1157 = vmatpush1.bf16.msra.mxu0 %v1070
        %1158 = vmatprep.subr.bf16.mxu0 %v1073
        %1159 = vmatpush1.bf16.msra.mxu0 %v1072
        %1160 = vmatprep.subr.bf16.mxu0 %v1075
        %1161 = vmatpush1.bf16.msra.mxu0 %v1074
        %1162 = vmatprep.mubr.bf16.mxu0 %v926
        %1163 = vmatmul.mubr.bf16.gmra.mrb[0].mxu0 %v925
        %v1164 = vpop.f32.mrb[0].mxu0
        %v1165 = vadd.f32 0.0, %v1164
        %v1166 = vpop.f32.mrb[0].mxu0
        %v1167 = vadd.f32 0.0, %v1166
        %v1168 = vpop.f32.mrb[0].mxu0
        %v1169 = vadd.f32 0.0, %v1168
        %v1170 = vpop.f32.mrb[0].mxu0
        %v1171 = vadd.f32 0.0, %v1170
        %1172 = vmatprep.mubr.bf16.mxu0 %v929
        %1173 = vmatmul.mubr.bf16.gmra.mrb[0].mxu0 %v928
        %v1174 = vpop.f32.mrb[0].mxu0
        %v1175 = vadd.f32 0.0, %v1174
        %v1176 = vpop.f32.mrb[0].mxu0
        %v1177 = vadd.f32 0.0, %v1176
        %v1178 = vpop.f32.mrb[0].mxu0
        %v1179 = vadd.f32 0.0, %v1178
        %v1180 = vpop.f32.mrb[0].mxu0
        %v1181 = vadd.f32 0.0, %v1180
        %1182 = vmatprep.mubr.bf16.mxu0 %v932
        %1183 = vmatmul.mubr.bf16.gmra.mrb[0].mxu0 %v931
        %v1184 = vpop.f32.mrb[0].mxu0
        %v1185 = vadd.f32 0.0, %v1184
        %v1186 = vpop.f32.mrb[0].mxu0
        %v1187 = vadd.f32 0.0, %v1186
        %v1188 = vpop.f32.mrb[0].mxu0
        %v1189 = vadd.f32 0.0, %v1188
        %v1190 = vpop.f32.mrb[0].mxu0
        %v1191 = vadd.f32 0.0, %v1190
        %1192 = vmatprep.mubr.bf16.mxu0 %v935
        %1193 = vmatmul.mubr.bf16.gmra.mrb[0].mxu0 %v934
        %v1194 = vpop.f32.mrb[0].mxu0
        %v1195 = vadd.f32 0.0, %v1194
        %v1196 = vpop.f32.mrb[0].mxu0
        %v1197 = vadd.f32 0.0, %v1196
        %v1198 = vpop.f32.mrb[0].mxu0
        %v1199 = vadd.f32 0.0, %v1198
        %v1200 = vpop.f32.mrb[0].mxu0
        %v1201 = vadd.f32 0.0, %v1200
        %1202 = vdwg.mxu0
        %1203 = vmatprep.subr.bf16.mxu0 %v1128
        %1204 = vmatpush1.bf16.msra.mxu0 %v1125
        %1205 = vmatprep.subr.bf16.mxu0 0
        %1206 = vmatpush1.bf16.msra.mxu0 0
        %1207 = vmatprep.subr.bf16.mxu0 0
        %1208 = vmatpush1.bf16.msra.mxu0 0
        %1209 = vmatprep.subr.bf16.mxu0 0
        %1210 = vmatpush1.bf16.msra.mxu0 0
        %1211 = vmatprep.subr.bf16.mxu0 0
        %1212 = vmatpush1.bf16.msra.mxu0 0
        %1213 = vmatprep.subr.bf16.mxu0 0
        %1214 = vmatpush1.bf16.msra.mxu0 0
        %1215 = vmatprep.subr.bf16.mxu0 0
        %1216 = vmatpush1.bf16.msra.mxu0 0
        %1217 = vmatprep.subr.bf16.mxu0 0
        %1218 = vmatpush1.bf16.msra.mxu0 0
        %1219 = vmatprep.subr.bf16.mxu0 0
        %1220 = vmatpush1.bf16.msra.mxu0 0
        %1221 = vmatprep.subr.bf16.mxu0 0
        %1222 = vmatpush1.bf16.msra.mxu0 0
        %1223 = vmatprep.subr.bf16.mxu0 0
        %1224 = vmatpush1.bf16.msra.mxu0 0
        %1225 = vmatprep.subr.bf16.mxu0 0
        %1226 = vmatpush1.bf16.msra.mxu0 0
        %1227 = vmatprep.subr.bf16.mxu0 0
        %1228 = vmatpush1.bf16.msra.mxu0 0
        %1229 = vmatprep.subr.bf16.mxu0 0
        %1230 = vmatpush1.bf16.msra.mxu0 0
        %1231 = vmatprep.subr.bf16.mxu0 0
        %1232 = vmatpush1.bf16.msra.mxu0 0
        %1233 = vmatprep.subr.bf16.mxu0 0
        %1234 = vmatpush1.bf16.msra.mxu0 0
        %1235 = vmatprep.mubr.bf16.mxu0 0
        %1236 = vmatmul.mubr.bf16.gmra.mrb[0].mxu0 %v1112
        %v1237 = vpop.f32.mrb[0].mxu0
        %v1238 = vadd.f32 %v1165, %v1237
        %v1239 = vpop.f32.mrb[0].mxu0
        %v1240 = vadd.f32 %v1167, %v1239
        %v1241 = vpop.f32.mrb[0].mxu0
        %v1242 = vadd.f32 %v1169, %v1241
        %v1243 = vpop.f32.mrb[0].mxu0
        %v1244 = vadd.f32 %v1171, %v1243
        %1245 = vmatprep.mubr.bf16.mxu0 0
        %1246 = vmatmul.mubr.bf16.gmra.mrb[0].mxu0 %v1115
        %v1247 = vpop.f32.mrb[0].mxu0
        %v1248 = vadd.f32 %v1175, %v1247
        %v1249 = vpop.f32.mrb[0].mxu0
        %v1250 = vadd.f32 %v1177, %v1249
        %v1251 = vpop.f32.mrb[0].mxu0
        %v1252 = vadd.f32 %v1179, %v1251
        %v1253 = vpop.f32.mrb[0].mxu0
        %v1254 = vadd.f32 %v1181, %v1253
        %1255 = vmatprep.mubr.bf16.mxu0 0
        %1256 = vmatmul.mubr.bf16.gmra.mrb[0].mxu0 %v1118
        %v1257 = vpop.f32.mrb[0].mxu0
        %v1258 = vadd.f32 %v1185, %v1257
        %v1259 = vpop.f32.mrb[0].mxu0
        %v1260 = vadd.f32 %v1187, %v1259
        %v1261 = vpop.f32.mrb[0].mxu0
        %v1262 = vadd.f32 %v1189, %v1261
        %v1263 = vpop.f32.mrb[0].mxu0
        %v1264 = vadd.f32 %v1191, %v1263
        %1265 = vmatprep.mubr.bf16.mxu0 0
        %1266 = vmatmul.mubr.bf16.gmra.mrb[0].mxu0 %v1121
        %v1267 = vpop.f32.mrb[0].mxu0
        %v1268 = vadd.f32 %v1195, %v1267
        %v1269 = vpop.f32.mrb[0].mxu0
        %v1270 = vadd.f32 %v1197, %v1269
        %v1271 = vpop.f32.mrb[0].mxu0
        %v1272 = vadd.f32 %v1199, %v1271
        %v1273 = vpop.f32.mrb[0].mxu0
        %v1274 = vadd.f32 %v1201, %v1273
        %1275 = vdwg.mxu0
        %v1276 = vadd.f32 %v558, %v1238
        %v1277 = vadd.f32 %v562, %v1240
        %v1278 = vadd.f32 %v558, %v1242
        %v1279 = vadd.f32 %v562, %v1244
        %v1280 = vadd.f32 %v558, %v1248
        %v1281 = vadd.f32 %v562, %v1250
        %v1282 = vadd.f32 %v558, %v1252
        %v1283 = vadd.f32 %v562, %v1254
        %v1284 = vadd.f32 %v558, %v1258
        %v1285 = vadd.f32 %v562, %v1260
        %v1286 = vadd.f32 %v558, %v1262
        %v1287 = vadd.f32 %v562, %v1264
        %v1288 = vadd.f32 %v558, %v1268
        %v1289 = vadd.f32 %v562, %v1270
        %v1290 = vadd.f32 %v558, %v1272
        %v1291 = vadd.f32 %v562, %v1274
        %v1295 = vunpack.c.l.b16 %v845
        %v1296 = vunpack.c.l.b16 %v846
        %v1297 = vunpack.c.l.b16 %v847
        %s1298 = scalar_lea.vmem [#allocation5], 792
        %v1299 = vld [vmem:[%s1298] sm:$0xff]
        %v1300 = vld [vmem:[%s1298 + $0x8] sm:$0xff]
        %v1301 = vld [vmem:[%s1298 + $0x10] sm:$0xff]
        %v1302 = vld [vmem:[%s1298 + $0x18] sm:$0xff]
        %v1303 = vld [vmem:[%s1298 + $0x20] sm:$0xff]
        %v1304 = vld [vmem:[%s1298 + $0x28] sm:$0xff]
        %v1305 = vld [vmem:[%s1298 + $0x30] sm:$0xff]
        %v1306 = vld [vmem:[%s1298 + $0x38] sm:$0xff]
        %v1307 = vld [vmem:[%s1298 + $0x40] sm:$0xff]
        %v1308 = vld [vmem:[%s1298 + $0x48] sm:$0xff]
        %v1309 = vld [vmem:[%s1298 + $0x50] sm:$0xff]
        %v1310 = vld [vmem:[%s1298 + $0x58] sm:$0xff]
        %v1311 = vld [vmem:[%s1298 + $0x60] sm:$0xff]
        %v1312 = vld [vmem:[%s1298 + $0x68] sm:$0xff]
        %v1313 = vld [vmem:[%s1298 + $0x70] sm:$0xff]
        %v1314 = vld [vmem:[%s1298 + $0x78] sm:$0xff]
        %v1315 = vld [vmem:[%s1298 + $0x80] sm:$0xff]
        %v1316 = vld [vmem:[%s1298 + $0x88] sm:$0xff]
        %v1317 = vld [vmem:[%s1298 + $0x90] sm:$0xff]
        %v1318 = vld [vmem:[%s1298 + $0x98] sm:$0xff]
        %v1319 = vld [vmem:[%s1298 + $0xa0] sm:$0xff]
        %v1320 = vld [vmem:[%s1298 + $0xa8] sm:$0xff]
        %v1321 = vld [vmem:[%s1298 + $0xb0] sm:$0xff]
        %v1322 = vld [vmem:[%s1298 + $0xb8] sm:$0xff]
        %v1323 = vld [vmem:[%s1298 + $0xc0] sm:$0xff]
        %v1324 = vld [vmem:[%s1298 + $0xc8] sm:$0xff]
        %v1325 = vld [vmem:[%s1298 + $0xd0] sm:$0xff]
        %v1326 = vld [vmem:[%s1298 + $0xd8] sm:$0xff]
        %v1327 = vld [vmem:[%s1298 + $0xe0] sm:$0xff]
        %v1328 = vld [vmem:[%s1298 + $0xe8] sm:$0xff]
        %v1329 = vld [vmem:[%s1298 + $0xf0] sm:$0xff]
        %v1330 = vld [vmem:[%s1298 + $0xf8] sm:$0xff]
        %v1331 = vld [vmem:[%s1298 + $0x100] sm:$0xff]
        %v1332 = vpack.c.b16 %v874, %v871
        %v1333 = vpack.c.b16 %v875, %v872
        %v1334 = vpack.c.b16 %v876, %v873
        %v1335 = vpack.c.b16 %v880, %v877
        %v1336 = vpack.c.b16 %v881, %v878
        %v1337 = vpack.c.b16 %v882, %v879
        %v1338 = vpack.c.b16 %v886, %v883
        %v1339 = vpack.c.b16 %v887, %v884
        %v1340 = vpack.c.b16 %v888, %v885
        %v1341 = vpack.c.b16 %v1295, %v889
        %v1342 = vpack.c.b16 %v1296, %v890
        %v1343 = vpack.c.b16 %v1297, %v891
        %v1385 = vunpack.c.l.b16 %v1299
        %v1386 = vunpack.c.h.b16 %v1299
        %v1387 = vunpack.c.l.b16 %v1300
        %v1388 = vunpack.c.h.b16 %v1300
        %v1389 = vunpack.c.l.b16 %v1301
        %v1390 = vunpack.c.h.b16 %v1301
        %v1391 = vunpack.c.l.b16 %v1302
        %v1392 = vunpack.c.h.b16 %v1302
        %v1393 = vunpack.c.l.b16 %v1303
        %v1394 = vunpack.c.h.b16 %v1303
        %v1395 = vunpack.c.l.b16 %v1304
        %v1396 = vunpack.c.h.b16 %v1304
        %v1397 = vunpack.c.l.b16 %v1305
        %v1398 = vunpack.c.h.b16 %v1305
        %v1399 = vunpack.c.l.b16 %v1306
        %v1400 = vunpack.c.h.b16 %v1306
        %v1401 = vunpack.c.l.b16 %v1307
        %v1402 = vunpack.c.h.b16 %v1307
        %v1403 = vunpack.c.l.b16 %v1308
        %v1404 = vunpack.c.h.b16 %v1308
        %v1405 = vunpack.c.l.b16 %v1309
        %v1406 = vunpack.c.h.b16 %v1309
        %v1407 = vunpack.c.l.b16 %v1310
        %v1408 = vunpack.c.h.b16 %v1310
        %v1409 = vunpack.c.l.b16 %v1311
        %v1410 = vunpack.c.h.b16 %v1311
        %v1411 = vunpack.c.l.b16 %v1312
        %v1412 = vunpack.c.h.b16 %v1312
        %v1413 = vunpack.c.l.b16 %v1313
        %v1414 = vunpack.c.h.b16 %v1313
        %v1415 = vunpack.c.l.b16 %v1314
        %v1416 = vunpack.c.h.b16 %v1314
        %v1417 = vunpack.c.l.b16 %v1315
        %v1418 = vunpack.c.h.b16 %v1315
        %v1419 = vunpack.c.l.b16 %v1316
        %v1420 = vunpack.c.h.b16 %v1316
        %v1421 = vunpack.c.l.b16 %v1317
        %v1422 = vunpack.c.h.b16 %v1317
        %v1423 = vunpack.c.l.b16 %v1318
        %v1424 = vunpack.c.h.b16 %v1318
        %v1425 = vunpack.c.l.b16 %v1319
        %v1426 = vunpack.c.h.b16 %v1319
        %v1427 = vunpack.c.l.b16 %v1320
        %v1428 = vunpack.c.h.b16 %v1320
        %v1429 = vunpack.c.l.b16 %v1321
        %v1430 = vunpack.c.h.b16 %v1321
        %v1431 = vunpack.c.l.b16 %v1322
        %v1432 = vunpack.c.h.b16 %v1322
        %v1433 = vunpack.c.l.b16 %v1323
        %v1434 = vunpack.c.h.b16 %v1323
        %v1435 = vunpack.c.l.b16 %v1324
        %v1436 = vunpack.c.h.b16 %v1324
        %v1437 = vunpack.c.l.b16 %v1325
        %v1438 = vunpack.c.h.b16 %v1325
        %v1439 = vunpack.c.l.b16 %v1326
        %v1440 = vunpack.c.h.b16 %v1326
        %v1441 = vunpack.c.l.b16 %v1327
        %v1442 = vunpack.c.h.b16 %v1327
        %v1443 = vunpack.c.l.b16 %v1328
        %v1444 = vunpack.c.h.b16 %v1328
        %v1445 = vunpack.c.l.b16 %v1329
        %v1446 = vunpack.c.h.b16 %v1329
        %v1447 = vunpack.c.l.b16 %v1330
        %v1448 = vunpack.c.h.b16 %v1330
        %v1449 = vunpack.c.l.b16 %v1331
        %v1450 = vunpack.c.h.b16 %v1331
        %v1451 = vpack.c.b16 %v1387, %v1385
        %v1452 = vpack.c.b16 %v1388, %v1386
        %v1453 = vpack.c.b16 %v1391, %v1389
        %v1454 = vpack.c.b16 %v1392, %v1390
        %v1455 = vpack.c.b16 %v1395, %v1393
        %v1456 = vpack.c.b16 %v1396, %v1394
        %v1457 = vpack.c.b16 %v1399, %v1397
        %v1458 = vpack.c.b16 %v1400, %v1398
        %v1459 = vpack.c.b16 %v1403, %v1401
        %v1460 = vpack.c.b16 %v1404, %v1402
        %v1461 = vpack.c.b16 %v1407, %v1405
        %v1462 = vpack.c.b16 %v1408, %v1406
        %v1463 = vpack.c.b16 %v1411, %v1409
        %v1464 = vpack.c.b16 %v1412, %v1410
        %v1465 = vpack.c.b16 %v1415, %v1413
        %v1466 = vpack.c.b16 %v1416, %v1414
        %v1467 = vpack.c.b16 %v1419, %v1417
        %v1468 = vpack.c.b16 %v1420, %v1418
        %v1469 = vpack.c.b16 %v1423, %v1421
        %v1470 = vpack.c.b16 %v1424, %v1422
        %v1471 = vpack.c.b16 %v1427, %v1425
        %v1472 = vpack.c.b16 %v1428, %v1426
        %v1473 = vpack.c.b16 %v1431, %v1429
        %v1474 = vpack.c.b16 %v1432, %v1430
        %v1475 = vpack.c.b16 %v1435, %v1433
        %v1476 = vpack.c.b16 %v1436, %v1434
        %v1477 = vpack.c.b16 %v1439, %v1437
        %v1478 = vpack.c.b16 %v1440, %v1438
        %v1479 = vpack.c.b16 %v1443, %v1441
        %v1480 = vpack.c.b16 %v1444, %v1442
        %v1481 = vpack.c.b16 %v1447, %v1445
        %v1482 = vpack.c.b16 %v1448, %v1446
        %v1483 = vpack.c.b16 %v1449, %v1449
        %v1484 = vpack.c.b16 %v1450, %v1450
        %v1518 = vsel %vm1110, %v1334, 0
        %v1521 = vsel %vm1110, %v1337, 0
        %v1524 = vsel %vm1110, %v1340, 0
        %v1527 = vsel %vm1110, %v1343, 0
        %v1530 = vsel %vm1123, %v1483, 0
        %v1533 = vsel %vm1123, %v1484, 0
        %1535 = vmatprep.subr.bf16.mxu0 %v1452
        %1536 = vmatpush1.bf16.msra.mxu0 %v1451
        %1537 = vmatprep.subr.bf16.mxu0 %v1454
        %1538 = vmatpush1.bf16.msra.mxu0 %v1453
        %1539 = vmatprep.subr.bf16.mxu0 %v1456
        %1540 = vmatpush1.bf16.msra.mxu0 %v1455
        %1541 = vmatprep.subr.bf16.mxu0 %v1458
        %1542 = vmatpush1.bf16.msra.mxu0 %v1457
        %1543 = vmatprep.subr.bf16.mxu0 %v1460
        %1544 = vmatpush1.bf16.msra.mxu0 %v1459
        %1545 = vmatprep.subr.bf16.mxu0 %v1462
        %1546 = vmatpush1.bf16.msra.mxu0 %v1461
        %1547 = vmatprep.subr.bf16.mxu0 %v1464
        %1548 = vmatpush1.bf16.msra.mxu0 %v1463
        %1549 = vmatprep.subr.bf16.mxu0 %v1466
        %1550 = vmatpush1.bf16.msra.mxu0 %v1465
        %1551 = vmatprep.subr.bf16.mxu0 %v1468
        %1552 = vmatpush1.bf16.msra.mxu0 %v1467
        %1553 = vmatprep.subr.bf16.mxu0 %v1470
        %1554 = vmatpush1.bf16.msra.mxu0 %v1469
        %1555 = vmatprep.subr.bf16.mxu0 %v1472
        %1556 = vmatpush1.bf16.msra.mxu0 %v1471
        %1557 = vmatprep.subr.bf16.mxu0 %v1474
        %1558 = vmatpush1.bf16.msra.mxu0 %v1473
        %1559 = vmatprep.subr.bf16.mxu0 %v1476
        %1560 = vmatpush1.bf16.msra.mxu0 %v1475
        %1561 = vmatprep.subr.bf16.mxu0 %v1478
        %1562 = vmatpush1.bf16.msra.mxu0 %v1477
        %1563 = vmatprep.subr.bf16.mxu0 %v1480
        %1564 = vmatpush1.bf16.msra.mxu0 %v1479
        %1565 = vmatprep.subr.bf16.mxu0 %v1482
        %1566 = vmatpush1.bf16.msra.mxu0 %v1481
        %1567 = vmatprep.mubr.bf16.mxu0 %v1333
        %1568 = vmatmul.mubr.bf16.gmra.mrb[0].mxu0 %v1332
        %v1569 = vpop.f32.mrb[0].mxu0
        %v1570 = vadd.f32 0.0, %v1569
        %v1571 = vpop.f32.mrb[0].mxu0
        %v1572 = vadd.f32 0.0, %v1571
        %v1573 = vpop.f32.mrb[0].mxu0
        %v1574 = vadd.f32 0.0, %v1573
        %v1575 = vpop.f32.mrb[0].mxu0
        %v1576 = vadd.f32 0.0, %v1575
        %1577 = vmatprep.mubr.bf16.mxu0 %v1336
        %1578 = vmatmul.mubr.bf16.gmra.mrb[0].mxu0 %v1335
        %v1579 = vpop.f32.mrb[0].mxu0
        %v1580 = vadd.f32 0.0, %v1579
        %v1581 = vpop.f32.mrb[0].mxu0
        %v1582 = vadd.f32 0.0, %v1581
        %v1583 = vpop.f32.mrb[0].mxu0
        %v1584 = vadd.f32 0.0, %v1583
        %v1585 = vpop.f32.mrb[0].mxu0
        %v1586 = vadd.f32 0.0, %v1585
        %1587 = vmatprep.mubr.bf16.mxu0 %v1339
        %1588 = vmatmul.mubr.bf16.gmra.mrb[0].mxu0 %v1338
        %v1589 = vpop.f32.mrb[0].mxu0
        %v1590 = vadd.f32 0.0, %v1589
        %v1591 = vpop.f32.mrb[0].mxu0
        %v1592 = vadd.f32 0.0, %v1591
        %v1593 = vpop.f32.mrb[0].mxu0
        %v1594 = vadd.f32 0.0, %v1593
        %v1595 = vpop.f32.mrb[0].mxu0
        %v1596 = vadd.f32 0.0, %v1595
        %1597 = vmatprep.mubr.bf16.mxu0 %v1342
        %1598 = vmatmul.mubr.bf16.gmra.mrb[0].mxu0 %v1341
        %v1599 = vpop.f32.mrb[0].mxu0
        %v1600 = vadd.f32 0.0, %v1599
        %v1601 = vpop.f32.mrb[0].mxu0
        %v1602 = vadd.f32 0.0, %v1601
        %v1603 = vpop.f32.mrb[0].mxu0
        %v1604 = vadd.f32 0.0, %v1603
        %v1605 = vpop.f32.mrb[0].mxu0
        %v1606 = vadd.f32 0.0, %v1605
        %1607 = vdwg.mxu0
        %1608 = vmatprep.subr.bf16.mxu0 %v1533
        %1609 = vmatpush1.bf16.msra.mxu0 %v1530
        %1610 = vmatprep.subr.bf16.mxu0 0
        %1611 = vmatpush1.bf16.msra.mxu0 0
        %1612 = vmatprep.subr.bf16.mxu0 0
        %1613 = vmatpush1.bf16.msra.mxu0 0
        %1614 = vmatprep.subr.bf16.mxu0 0
        %1615 = vmatpush1.bf16.msra.mxu0 0
        %1616 = vmatprep.subr.bf16.mxu0 0
        %1617 = vmatpush1.bf16.msra.mxu0 0
        %1618 = vmatprep.subr.bf16.mxu0 0
        %1619 = vmatpush1.bf16.msra.mxu0 0
        %1620 = vmatprep.subr.bf16.mxu0 0
        %1621 = vmatpush1.bf16.msra.mxu0 0
        %1622 = vmatprep.subr.bf16.mxu0 0
        %1623 = vmatpush1.bf16.msra.mxu0 0
        %1624 = vmatprep.subr.bf16.mxu0 0
        %1625 = vmatpush1.bf16.msra.mxu0 0
        %1626 = vmatprep.subr.bf16.mxu0 0
        %1627 = vmatpush1.bf16.msra.mxu0 0
        %1628 = vmatprep.subr.bf16.mxu0 0
        %1629 = vmatpush1.bf16.msra.mxu0 0
        %1630 = vmatprep.subr.bf16.mxu0 0
        %1631 = vmatpush1.bf16.msra.mxu0 0
        %1632 = vmatprep.subr.bf16.mxu0 0
        %1633 = vmatpush1.bf16.msra.mxu0 0
        %1634 = vmatprep.subr.bf16.mxu0 0
        %1635 = vmatpush1.bf16.msra.mxu0 0
        %1636 = vmatprep.subr.bf16.mxu0 0
        %1637 = vmatpush1.bf16.msra.mxu0 0
        %1638 = vmatprep.subr.bf16.mxu0 0
        %1639 = vmatpush1.bf16.msra.mxu0 0
        %1640 = vmatprep.mubr.bf16.mxu0 0
        %1641 = vmatmul.mubr.bf16.gmra.mrb[0].mxu0 %v1518
        %v1642 = vpop.f32.mrb[0].mxu0
        %v1643 = vadd.f32 %v1570, %v1642
        %v1644 = vpop.f32.mrb[0].mxu0
        %v1645 = vadd.f32 %v1572, %v1644
        %v1646 = vpop.f32.mrb[0].mxu0
        %v1647 = vadd.f32 %v1574, %v1646
        %v1648 = vpop.f32.mrb[0].mxu0
        %v1649 = vadd.f32 %v1576, %v1648
        %1650 = vmatprep.mubr.bf16.mxu0 0
        %1651 = vmatmul.mubr.bf16.gmra.mrb[0].mxu0 %v1521
        %v1652 = vpop.f32.mrb[0].mxu0
        %v1653 = vadd.f32 %v1580, %v1652
        %v1654 = vpop.f32.mrb[0].mxu0
        %v1655 = vadd.f32 %v1582, %v1654
        %v1656 = vpop.f32.mrb[0].mxu0
        %v1657 = vadd.f32 %v1584, %v1656
        %v1658 = vpop.f32.mrb[0].mxu0
        %v1659 = vadd.f32 %v1586, %v1658
        %1660 = vmatprep.mubr.bf16.mxu0 0
        %1661 = vmatmul.mubr.bf16.gmra.mrb[0].mxu0 %v1524
        %v1662 = vpop.f32.mrb[0].mxu0
        %v1663 = vadd.f32 %v1590, %v1662
        %v1664 = vpop.f32.mrb[0].mxu0
        %v1665 = vadd.f32 %v1592, %v1664
        %v1666 = vpop.f32.mrb[0].mxu0
        %v1667 = vadd.f32 %v1594, %v1666
        %v1668 = vpop.f32.mrb[0].mxu0
        %v1669 = vadd.f32 %v1596, %v1668
        %1670 = vmatprep.mubr.bf16.mxu0 0
        %1671 = vmatmul.mubr.bf16.gmra.mrb[0].mxu0 %v1527
        %v1672 = vpop.f32.mrb[0].mxu0
        %v1673 = vadd.f32 %v1600, %v1672
        %v1674 = vpop.f32.mrb[0].mxu0
        %v1675 = vadd.f32 %v1602, %v1674
        %v1676 = vpop.f32.mrb[0].mxu0
        %v1677 = vadd.f32 %v1604, %v1676
        %v1678 = vpop.f32.mrb[0].mxu0
        %v1679 = vadd.f32 %v1606, %v1678
        %1680 = vdwg.mxu0
        %v1681 = vadd.f32 %v1276, %v1643
        %v1682 = vadd.f32 %v1277, %v1645
        %v1683 = vadd.f32 %v1278, %v1647
        %v1684 = vadd.f32 %v1279, %v1649
        %v1685 = vadd.f32 %v1280, %v1653
        %v1686 = vadd.f32 %v1281, %v1655
        %v1687 = vadd.f32 %v1282, %v1657
        %v1688 = vadd.f32 %v1283, %v1659
        %v1689 = vadd.f32 %v1284, %v1663
        %v1690 = vadd.f32 %v1285, %v1665
        %v1691 = vadd.f32 %v1286, %v1667
        %v1692 = vadd.f32 %v1287, %v1669
        %v1693 = vadd.f32 %v1288, %v1673
        %v1694 = vadd.f32 %v1289, %v1675
        %v1695 = vadd.f32 %v1290, %v1677
        %v1696 = vadd.f32 %v1291, %v1679
        %s1697 = scalar_lea.vmem [#allocation5], 1584
        %v1698 = vld [vmem:[%s1697] sm:$0xff]
        %v1699 = vld [vmem:[%s1697 + $0x8] sm:$0xff]
        %v1700 = vld [vmem:[%s1697 + $0x10] sm:$0xff]
        %v1701 = vld [vmem:[%s1697 + $0x18] sm:$0xff]
        %v1702 = vld [vmem:[%s1697 + $0x20] sm:$0xff]
        %v1703 = vld [vmem:[%s1697 + $0x28] sm:$0xff]
        %v1704 = vld [vmem:[%s1697 + $0x30] sm:$0xff]
        %v1705 = vld [vmem:[%s1697 + $0x38] sm:$0xff]
        %v1706 = vld [vmem:[%s1697 + $0x40] sm:$0xff]
        %v1707 = vld [vmem:[%s1697 + $0x48] sm:$0xff]
        %v1708 = vld [vmem:[%s1697 + $0x50] sm:$0xff]
        %v1709 = vld [vmem:[%s1697 + $0x58] sm:$0xff]
        %v1710 = vld [vmem:[%s1697 + $0x60] sm:$0xff]
        %v1711 = vld [vmem:[%s1697 + $0x68] sm:$0xff]
        %v1712 = vld [vmem:[%s1697 + $0x70] sm:$0xff]
        %v1713 = vld [vmem:[%s1697 + $0x78] sm:$0xff]
        %v1714 = vld [vmem:[%s1697 + $0x80] sm:$0xff]
        %v1715 = vld [vmem:[%s1697 + $0x88] sm:$0xff]
        %v1716 = vld [vmem:[%s1697 + $0x90] sm:$0xff]
        %v1717 = vld [vmem:[%s1697 + $0x98] sm:$0xff]
        %v1718 = vld [vmem:[%s1697 + $0xa0] sm:$0xff]
        %v1719 = vld [vmem:[%s1697 + $0xa8] sm:$0xff]
        %v1720 = vld [vmem:[%s1697 + $0xb0] sm:$0xff]
        %v1721 = vld [vmem:[%s1697 + $0xb8] sm:$0xff]
        %v1722 = vld [vmem:[%s1697 + $0xc0] sm:$0xff]
        %v1723 = vld [vmem:[%s1697 + $0xc8] sm:$0xff]
        %v1724 = vld [vmem:[%s1697 + $0xd0] sm:$0xff]
        %v1725 = vld [vmem:[%s1697 + $0xd8] sm:$0xff]
        %v1726 = vld [vmem:[%s1697 + $0xe0] sm:$0xff]
        %v1727 = vld [vmem:[%s1697 + $0xe8] sm:$0xff]
        %v1728 = vld [vmem:[%s1697 + $0xf0] sm:$0xff]
        %v1729 = vld [vmem:[%s1697 + $0xf8] sm:$0xff]
        %v1730 = vld [vmem:[%s1697 + $0x100] sm:$0xff]
        %v1731 = vpack.c.b16 %v870, %v1295
        %v1732 = vpack.c.b16 %v870, %v1296
        %v1733 = vpack.c.b16 %v870, %v1297
        %v1769 = vunpack.c.l.b16 %v1698
        %v1770 = vunpack.c.h.b16 %v1698
        %v1771 = vunpack.c.l.b16 %v1699
        %v1772 = vunpack.c.h.b16 %v1699
        %v1773 = vunpack.c.l.b16 %v1700
        %v1774 = vunpack.c.h.b16 %v1700
        %v1775 = vunpack.c.l.b16 %v1701
        %v1776 = vunpack.c.h.b16 %v1701
        %v1777 = vunpack.c.l.b16 %v1702
        %v1778 = vunpack.c.h.b16 %v1702
        %v1779 = vunpack.c.l.b16 %v1703
        %v1780 = vunpack.c.h.b16 %v1703
        %v1781 = vunpack.c.l.b16 %v1704
        %v1782 = vunpack.c.h.b16 %v1704
        %v1783 = vunpack.c.l.b16 %v1705
        %v1784 = vunpack.c.h.b16 %v1705
        %v1785 = vunpack.c.l.b16 %v1706
        %v1786 = vunpack.c.h.b16 %v1706
        %v1787 = vunpack.c.l.b16 %v1707
        %v1788 = vunpack.c.h.b16 %v1707
        %v1789 = vunpack.c.l.b16 %v1708
        %v1790 = vunpack.c.h.b16 %v1708
        %v1791 = vunpack.c.l.b16 %v1709
        %v1792 = vunpack.c.h.b16 %v1709
        %v1793 = vunpack.c.l.b16 %v1710
        %v1794 = vunpack.c.h.b16 %v1710
        %v1795 = vunpack.c.l.b16 %v1711
        %v1796 = vunpack.c.h.b16 %v1711
        %v1797 = vunpack.c.l.b16 %v1712
        %v1798 = vunpack.c.h.b16 %v1712
        %v1799 = vunpack.c.l.b16 %v1713
        %v1800 = vunpack.c.h.b16 %v1713
        %v1801 = vunpack.c.l.b16 %v1714
        %v1802 = vunpack.c.h.b16 %v1714
        %v1803 = vunpack.c.l.b16 %v1715
        %v1804 = vunpack.c.h.b16 %v1715
        %v1805 = vunpack.c.l.b16 %v1716
        %v1806 = vunpack.c.h.b16 %v1716
        %v1807 = vunpack.c.l.b16 %v1717
        %v1808 = vunpack.c.h.b16 %v1717
        %v1809 = vunpack.c.l.b16 %v1718
        %v1810 = vunpack.c.h.b16 %v1718
        %v1811 = vunpack.c.l.b16 %v1719
        %v1812 = vunpack.c.h.b16 %v1719
        %v1813 = vunpack.c.l.b16 %v1720
        %v1814 = vunpack.c.h.b16 %v1720
        %v1815 = vunpack.c.l.b16 %v1721
        %v1816 = vunpack.c.h.b16 %v1721
        %v1817 = vunpack.c.l.b16 %v1722
        %v1818 = vunpack.c.h.b16 %v1722
        %v1819 = vunpack.c.l.b16 %v1723
        %v1820 = vunpack.c.h.b16 %v1723
        %v1821 = vunpack.c.l.b16 %v1724
        %v1822 = vunpack.c.h.b16 %v1724
        %v1823 = vunpack.c.l.b16 %v1725
        %v1824 = vunpack.c.h.b16 %v1725
        %v1825 = vunpack.c.l.b16 %v1726
        %v1826 = vunpack.c.h.b16 %v1726
        %v1827 = vunpack.c.l.b16 %v1727
        %v1828 = vunpack.c.h.b16 %v1727
        %v1829 = vunpack.c.l.b16 %v1728
        %v1830 = vunpack.c.h.b16 %v1728
        %v1831 = vunpack.c.l.b16 %v1729
        %v1832 = vunpack.c.h.b16 %v1729
        %v1833 = vunpack.c.l.b16 %v1730
        %v1834 = vunpack.c.h.b16 %v1730
        %v1835 = vpack.c.b16 %v1771, %v1769
        %v1836 = vpack.c.b16 %v1772, %v1770
        %v1837 = vpack.c.b16 %v1775, %v1773
        %v1838 = vpack.c.b16 %v1776, %v1774
        %v1839 = vpack.c.b16 %v1779, %v1777
        %v1840 = vpack.c.b16 %v1780, %v1778
        %v1841 = vpack.c.b16 %v1783, %v1781
        %v1842 = vpack.c.b16 %v1784, %v1782
        %v1843 = vpack.c.b16 %v1787, %v1785
        %v1844 = vpack.c.b16 %v1788, %v1786
        %v1845 = vpack.c.b16 %v1791, %v1789
        %v1846 = vpack.c.b16 %v1792, %v1790
        %v1847 = vpack.c.b16 %v1795, %v1793
        %v1848 = vpack.c.b16 %v1796, %v1794
        %v1849 = vpack.c.b16 %v1799, %v1797
        %v1850 = vpack.c.b16 %v1800, %v1798
        %v1851 = vpack.c.b16 %v1803, %v1801
        %v1852 = vpack.c.b16 %v1804, %v1802
        %v1853 = vpack.c.b16 %v1807, %v1805
        %v1854 = vpack.c.b16 %v1808, %v1806
        %v1855 = vpack.c.b16 %v1811, %v1809
        %v1856 = vpack.c.b16 %v1812, %v1810
        %v1857 = vpack.c.b16 %v1815, %v1813
        %v1858 = vpack.c.b16 %v1816, %v1814
        %v1859 = vpack.c.b16 %v1819, %v1817
        %v1860 = vpack.c.b16 %v1820, %v1818
        %v1861 = vpack.c.b16 %v1823, %v1821
        %v1862 = vpack.c.b16 %v1824, %v1822
        %v1863 = vpack.c.b16 %v1827, %v1825
        %v1864 = vpack.c.b16 %v1828, %v1826
        %v1865 = vpack.c.b16 %v1831, %v1829
        %v1866 = vpack.c.b16 %v1832, %v1830
        %v1867 = vpack.c.b16 %v1833, %v1833
        %v1868 = vpack.c.b16 %v1834, %v1834
        %v1902 = vsel %vm1110, %v1733, 0
        %v1905 = vsel %vm1123, %v1867, 0
        %v1908 = vsel %vm1123, %v1868, 0
        %1910 = vmatprep.subr.bf16.mxu0 %v1836
        %1911 = vmatpush1.bf16.msra.mxu0 %v1835
        %1912 = vmatprep.subr.bf16.mxu0 %v1838
        %1913 = vmatpush1.bf16.msra.mxu0 %v1837
        %1914 = vmatprep.subr.bf16.mxu0 %v1840
        %1915 = vmatpush1.bf16.msra.mxu0 %v1839
        %1916 = vmatprep.subr.bf16.mxu0 %v1842
        %1917 = vmatpush1.bf16.msra.mxu0 %v1841
        %1918 = vmatprep.subr.bf16.mxu0 %v1844
        %1919 = vmatpush1.bf16.msra.mxu0 %v1843
        %1920 = vmatprep.subr.bf16.mxu0 %v1846
        %1921 = vmatpush1.bf16.msra.mxu0 %v1845
        %1922 = vmatprep.subr.bf16.mxu0 %v1848
        %1923 = vmatpush1.bf16.msra.mxu0 %v1847
        %1924 = vmatprep.subr.bf16.mxu0 %v1850
        %1925 = vmatpush1.bf16.msra.mxu0 %v1849
        %1926 = vmatprep.subr.bf16.mxu0 %v1852
        %1927 = vmatpush1.bf16.msra.mxu0 %v1851
        %1928 = vmatprep.subr.bf16.mxu0 %v1854
        %1929 = vmatpush1.bf16.msra.mxu0 %v1853
        %1930 = vmatprep.subr.bf16.mxu0 %v1856
        %1931 = vmatpush1.bf16.msra.mxu0 %v1855
        %1932 = vmatprep.subr.bf16.mxu0 %v1858
        %1933 = vmatpush1.bf16.msra.mxu0 %v1857
        %1934 = vmatprep.subr.bf16.mxu0 %v1860
        %1935 = vmatpush1.bf16.msra.mxu0 %v1859
        %1936 = vmatprep.subr.bf16.mxu0 %v1862
        %1937 = vmatpush1.bf16.msra.mxu0 %v1861
        %1938 = vmatprep.subr.bf16.mxu0 %v1864
        %1939 = vmatpush1.bf16.msra.mxu0 %v1863
        %1940 = vmatprep.subr.bf16.mxu0 %v1866
        %1941 = vmatpush1.bf16.msra.mxu0 %v1865
        %1942 = vmatprep.mubr.bf16.mxu0 %v929
        %1943 = vmatmul.mubr.bf16.gmra.mrb[0].mxu0 %v928
        %v1944 = vpop.f32.mrb[0].mxu0
        %v1945 = vadd.f32 0.0, %v1944
        %v1946 = vpop.f32.mrb[0].mxu0
        %v1947 = vadd.f32 0.0, %v1946
        %v1948 = vpop.f32.mrb[0].mxu0
        %v1949 = vadd.f32 0.0, %v1948
        %v1950 = vpop.f32.mrb[0].mxu0
        %v1951 = vadd.f32 0.0, %v1950
        %1952 = vmatprep.mubr.bf16.mxu0 %v932
        %1953 = vmatmul.mubr.bf16.gmra.mrb[0].mxu0 %v931
        %v1954 = vpop.f32.mrb[0].mxu0
        %v1955 = vadd.f32 0.0, %v1954
        %v1956 = vpop.f32.mrb[0].mxu0
        %v1957 = vadd.f32 0.0, %v1956
        %v1958 = vpop.f32.mrb[0].mxu0
        %v1959 = vadd.f32 0.0, %v1958
        %v1960 = vpop.f32.mrb[0].mxu0
        %v1961 = vadd.f32 0.0, %v1960
        %1962 = vmatprep.mubr.bf16.mxu0 %v935
        %1963 = vmatmul.mubr.bf16.gmra.mrb[0].mxu0 %v934
        %v1964 = vpop.f32.mrb[0].mxu0
        %v1965 = vadd.f32 0.0, %v1964
        %v1966 = vpop.f32.mrb[0].mxu0
        %v1967 = vadd.f32 0.0, %v1966
        %v1968 = vpop.f32.mrb[0].mxu0
        %v1969 = vadd.f32 0.0, %v1968
        %v1970 = vpop.f32.mrb[0].mxu0
        %v1971 = vadd.f32 0.0, %v1970
        %1972 = vmatprep.mubr.bf16.mxu0 %v1732
        %1973 = vmatmul.mubr.bf16.gmra.mrb[0].mxu0 %v1731
        %v1974 = vpop.f32.mrb[0].mxu0
        %v1975 = vadd.f32 0.0, %v1974
        %v1976 = vpop.f32.mrb[0].mxu0
        %v1977 = vadd.f32 0.0, %v1976
        %v1978 = vpop.f32.mrb[0].mxu0
        %v1979 = vadd.f32 0.0, %v1978
        %v1980 = vpop.f32.mrb[0].mxu0
        %v1981 = vadd.f32 0.0, %v1980
        %1982 = vdwg.mxu0
        %1983 = vmatprep.subr.bf16.mxu0 %v1908
        %1984 = vmatpush1.bf16.msra.mxu0 %v1905
        %1985 = vmatprep.subr.bf16.mxu0 0
        %1986 = vmatpush1.bf16.msra.mxu0 0
        %1987 = vmatprep.subr.bf16.mxu0 0
        %1988 = vmatpush1.bf16.msra.mxu0 0
        %1989 = vmatprep.subr.bf16.mxu0 0
        %1990 = vmatpush1.bf16.msra.mxu0 0
        %1991 = vmatprep.subr.bf16.mxu0 0
        %1992 = vmatpush1.bf16.msra.mxu0 0
        %1993 = vmatprep.subr.bf16.mxu0 0
        %1994 = vmatpush1.bf16.msra.mxu0 0
        %1995 = vmatprep.subr.bf16.mxu0 0
        %1996 = vmatpush1.bf16.msra.mxu0 0
        %1997 = vmatprep.subr.bf16.mxu0 0
        %1998 = vmatpush1.bf16.msra.mxu0 0
        %1999 = vmatprep.subr.bf16.mxu0 0
        %2000 = vmatpush1.bf16.msra.mxu0 0
        %2001 = vmatprep.subr.bf16.mxu0 0
        %2002 = vmatpush1.bf16.msra.mxu0 0
        %2003 = vmatprep.subr.bf16.mxu0 0
        %2004 = vmatpush1.bf16.msra.mxu0 0
        %2005 = vmatprep.subr.bf16.mxu0 0
        %2006 = vmatpush1.bf16.msra.mxu0 0
        %2007 = vmatprep.subr.bf16.mxu0 0
        %2008 = vmatpush1.bf16.msra.mxu0 0
        %2009 = vmatprep.subr.bf16.mxu0 0
        %2010 = vmatpush1.bf16.msra.mxu0 0
        %2011 = vmatprep.subr.bf16.mxu0 0
        %2012 = vmatpush1.bf16.msra.mxu0 0
        %2013 = vmatprep.subr.bf16.mxu0 0
        %2014 = vmatpush1.bf16.msra.mxu0 0
        %2015 = vmatprep.mubr.bf16.mxu0 0
        %2016 = vmatmul.mubr.bf16.gmra.mrb[0].mxu0 %v1115
        %v2017 = vpop.f32.mrb[0].mxu0
        %v2018 = vadd.f32 %v1945, %v2017
        %v2019 = vpop.f32.mrb[0].mxu0
        %v2020 = vadd.f32 %v1947, %v2019
        %v2021 = vpop.f32.mrb[0].mxu0
        %v2022 = vadd.f32 %v1949, %v2021
        %v2023 = vpop.f32.mrb[0].mxu0
        %v2024 = vadd.f32 %v1951, %v2023
        %2025 = vmatprep.mubr.bf16.mxu0 0
        %2026 = vmatmul.mubr.bf16.gmra.mrb[0].mxu0 %v1118
        %v2027 = vpop.f32.mrb[0].mxu0
        %v2028 = vadd.f32 %v1955, %v2027
        %v2029 = vpop.f32.mrb[0].mxu0
        %v2030 = vadd.f32 %v1957, %v2029
        %v2031 = vpop.f32.mrb[0].mxu0
        %v2032 = vadd.f32 %v1959, %v2031
        %v2033 = vpop.f32.mrb[0].mxu0
        %v2034 = vadd.f32 %v1961, %v2033
        %2035 = vmatprep.mubr.bf16.mxu0 0
        %2036 = vmatmul.mubr.bf16.gmra.mrb[0].mxu0 %v1121
        %v2037 = vpop.f32.mrb[0].mxu0
        %v2038 = vadd.f32 %v1965, %v2037
        %v2039 = vpop.f32.mrb[0].mxu0
        %v2040 = vadd.f32 %v1967, %v2039
        %v2041 = vpop.f32.mrb[0].mxu0
        %v2042 = vadd.f32 %v1969, %v2041
        %v2043 = vpop.f32.mrb[0].mxu0
        %v2044 = vadd.f32 %v1971, %v2043
        %2045 = vmatprep.mubr.bf16.mxu0 0
        %2046 = vmatmul.mubr.bf16.gmra.mrb[0].mxu0 %v1902
        %v2047 = vpop.f32.mrb[0].mxu0
        %v2048 = vadd.f32 %v1975, %v2047
        %v2049 = vpop.f32.mrb[0].mxu0
        %v2050 = vadd.f32 %v1977, %v2049
        %v2051 = vpop.f32.mrb[0].mxu0
        %v2052 = vadd.f32 %v1979, %v2051
        %v2053 = vpop.f32.mrb[0].mxu0
        %v2054 = vadd.f32 %v1981, %v2053
        %2055 = vdwg.mxu0
        %v2056 = vadd.f32 %v1681, %v2018
        %v2057 = vadd.f32 %v1682, %v2020
        %v2058 = vadd.f32 %v1683, %v2022
        %v2059 = vadd.f32 %v1684, %v2024
        %v2060 = vadd.f32 %v1685, %v2028
        %v2061 = vadd.f32 %v1686, %v2030
        %v2062 = vadd.f32 %v1687, %v2032
        %v2063 = vadd.f32 %v1688, %v2034
        %v2064 = vadd.f32 %v1689, %v2038
        %v2065 = vadd.f32 %v1690, %v2040
        %v2066 = vadd.f32 %v1691, %v2042
        %v2067 = vadd.f32 %v1692, %v2044
        %v2068 = vadd.f32 %v1693, %v2048
        %v2069 = vadd.f32 %v1694, %v2050
        %v2070 = vadd.f32 %v1695, %v2052
        %v2071 = vadd.f32 %v1696, %v2054
        %s2072 = scalar_lea.vmem [#allocation5], 264
        %v2073 = vld [vmem:[%s2072] sm:$0xff]
        %v2074 = vld [vmem:[%s2072 + $0x8] sm:$0xff]
        %v2075 = vld [vmem:[%s2072 + $0x10] sm:$0xff]
        %v2076 = vld [vmem:[%s2072 + $0x18] sm:$0xff]
        %v2077 = vld [vmem:[%s2072 + $0x20] sm:$0xff]
        %v2078 = vld [vmem:[%s2072 + $0x28] sm:$0xff]
        %v2079 = vld [vmem:[%s2072 + $0x30] sm:$0xff]
        %v2080 = vld [vmem:[%s2072 + $0x38] sm:$0xff]
        %v2081 = vld [vmem:[%s2072 + $0x40] sm:$0xff]
        %v2082 = vld [vmem:[%s2072 + $0x48] sm:$0xff]
        %v2083 = vld [vmem:[%s2072 + $0x50] sm:$0xff]
        %v2084 = vld [vmem:[%s2072 + $0x58] sm:$0xff]
        %v2085 = vld [vmem:[%s2072 + $0x60] sm:$0xff]
        %v2086 = vld [vmem:[%s2072 + $0x68] sm:$0xff]
        %v2087 = vld [vmem:[%s2072 + $0x70] sm:$0xff]
        %v2088 = vld [vmem:[%s2072 + $0x78] sm:$0xff]
        %v2089 = vld [vmem:[%s2072 + $0x80] sm:$0xff]
        %v2090 = vld [vmem:[%s2072 + $0x88] sm:$0xff]
        %v2091 = vld [vmem:[%s2072 + $0x90] sm:$0xff]
        %v2092 = vld [vmem:[%s2072 + $0x98] sm:$0xff]
        %v2093 = vld [vmem:[%s2072 + $0xa0] sm:$0xff]
        %v2094 = vld [vmem:[%s2072 + $0xa8] sm:$0xff]
        %v2095 = vld [vmem:[%s2072 + $0xb0] sm:$0xff]
        %v2096 = vld [vmem:[%s2072 + $0xb8] sm:$0xff]
        %v2097 = vld [vmem:[%s2072 + $0xc0] sm:$0xff]
        %v2098 = vld [vmem:[%s2072 + $0xc8] sm:$0xff]
        %v2099 = vld [vmem:[%s2072 + $0xd0] sm:$0xff]
        %v2100 = vld [vmem:[%s2072 + $0xd8] sm:$0xff]
        %v2101 = vld [vmem:[%s2072 + $0xe0] sm:$0xff]
        %v2102 = vld [vmem:[%s2072 + $0xe8] sm:$0xff]
        %v2103 = vld [vmem:[%s2072 + $0xf0] sm:$0xff]
        %v2104 = vld [vmem:[%s2072 + $0xf8] sm:$0xff]
        %v2105 = vld [vmem:[%s2072 + $0x100] sm:$0xff]
        %v2106 = vpack.c.b16 %v581, %v870
        %v2107 = vpack.c.b16 %v582, %v870
        %v2108 = vpack.c.b16 %v583, %v870
        %v2109 = vpack.c.b16 %v587, %v584
        %v2110 = vpack.c.b16 %v588, %v585
        %v2111 = vpack.c.b16 %v589, %v586
        %v2112 = vpack.c.b16 %v593, %v590
        %v2113 = vpack.c.b16 %v594, %v591
        %v2114 = vpack.c.b16 %v595, %v592
        %v2115 = vpack.c.b16 %v599, %v596
        %v2116 = vpack.c.b16 %v600, %v597
        %v2117 = vpack.c.b16 %v601, %v598
        %v2159 = vunpack.c.l.b16 %v2073
        %v2160 = vunpack.c.h.b16 %v2073
        %v2161 = vunpack.c.l.b16 %v2074
        %v2162 = vunpack.c.h.b16 %v2074
        %v2163 = vunpack.c.l.b16 %v2075
        %v2164 = vunpack.c.h.b16 %v2075
        %v2165 = vunpack.c.l.b16 %v2076
        %v2166 = vunpack.c.h.b16 %v2076
        %v2167 = vunpack.c.l.b16 %v2077
        %v2168 = vunpack.c.h.b16 %v2077
        %v2169 = vunpack.c.l.b16 %v2078
        %v2170 = vunpack.c.h.b16 %v2078
        %v2171 = vunpack.c.l.b16 %v2079
        %v2172 = vunpack.c.h.b16 %v2079
        %v2173 = vunpack.c.l.b16 %v2080
        %v2174 = vunpack.c.h.b16 %v2080
        %v2175 = vunpack.c.l.b16 %v2081
        %v2176 = vunpack.c.h.b16 %v2081
        %v2177 = vunpack.c.l.b16 %v2082
        %v2178 = vunpack.c.h.b16 %v2082
        %v2179 = vunpack.c.l.b16 %v2083
        %v2180 = vunpack.c.h.b16 %v2083
        %v2181 = vunpack.c.l.b16 %v2084
        %v2182 = vunpack.c.h.b16 %v2084
        %v2183 = vunpack.c.l.b16 %v2085
        %v2184 = vunpack.c.h.b16 %v2085
        %v2185 = vunpack.c.l.b16 %v2086
        %v2186 = vunpack.c.h.b16 %v2086
        %v2187 = vunpack.c.l.b16 %v2087
        %v2188 = vunpack.c.h.b16 %v2087
        %v2189 = vunpack.c.l.b16 %v2088
        %v2190 = vunpack.c.h.b16 %v2088
        %v2191 = vunpack.c.l.b16 %v2089
        %v2192 = vunpack.c.h.b16 %v2089
        %v2193 = vunpack.c.l.b16 %v2090
        %v2194 = vunpack.c.h.b16 %v2090
        %v2195 = vunpack.c.l.b16 %v2091
        %v2196 = vunpack.c.h.b16 %v2091
        %v2197 = vunpack.c.l.b16 %v2092
        %v2198 = vunpack.c.h.b16 %v2092
        %v2199 = vunpack.c.l.b16 %v2093
        %v2200 = vunpack.c.h.b16 %v2093
        %v2201 = vunpack.c.l.b16 %v2094
        %v2202 = vunpack.c.h.b16 %v2094
        %v2203 = vunpack.c.l.b16 %v2095
        %v2204 = vunpack.c.h.b16 %v2095
        %v2205 = vunpack.c.l.b16 %v2096
        %v2206 = vunpack.c.h.b16 %v2096
        %v2207 = vunpack.c.l.b16 %v2097
        %v2208 = vunpack.c.h.b16 %v2097
        %v2209 = vunpack.c.l.b16 %v2098
        %v2210 = vunpack.c.h.b16 %v2098
        %v2211 = vunpack.c.l.b16 %v2099
        %v2212 = vunpack.c.h.b16 %v2099
        %v2213 = vunpack.c.l.b16 %v2100
        %v2214 = vunpack.c.h.b16 %v2100
        %v2215 = vunpack.c.l.b16 %v2101
        %v2216 = vunpack.c.h.b16 %v2101
        %v2217 = vunpack.c.l.b16 %v2102
        %v2218 = vunpack.c.h.b16 %v2102
        %v2219 = vunpack.c.l.b16 %v2103
        %v2220 = vunpack.c.h.b16 %v2103
        %v2221 = vunpack.c.l.b16 %v2104
        %v2222 = vunpack.c.h.b16 %v2104
        %v2223 = vunpack.c.l.b16 %v2105
        %v2224 = vunpack.c.h.b16 %v2105
        %v2225 = vpack.c.b16 %v2161, %v2159
        %v2226 = vpack.c.b16 %v2162, %v2160
        %v2227 = vpack.c.b16 %v2165, %v2163
        %v2228 = vpack.c.b16 %v2166, %v2164
        %v2229 = vpack.c.b16 %v2169, %v2167
        %v2230 = vpack.c.b16 %v2170, %v2168
        %v2231 = vpack.c.b16 %v2173, %v2171
        %v2232 = vpack.c.b16 %v2174, %v2172
        %v2233 = vpack.c.b16 %v2177, %v2175
        %v2234 = vpack.c.b16 %v2178, %v2176
        %v2235 = vpack.c.b16 %v2181, %v2179
        %v2236 = vpack.c.b16 %v2182, %v2180
        %v2237 = vpack.c.b16 %v2185, %v2183
        %v2238 = vpack.c.b16 %v2186, %v2184
        %v2239 = vpack.c.b16 %v2189, %v2187
        %v2240 = vpack.c.b16 %v2190, %v2188
        %v2241 = vpack.c.b16 %v2193, %v2191
        %v2242 = vpack.c.b16 %v2194, %v2192
        %v2243 = vpack.c.b16 %v2197, %v2195
        %v2244 = vpack.c.b16 %v2198, %v2196
        %v2245 = vpack.c.b16 %v2201, %v2199
        %v2246 = vpack.c.b16 %v2202, %v2200
        %v2247 = vpack.c.b16 %v2205, %v2203
        %v2248 = vpack.c.b16 %v2206, %v2204
        %v2249 = vpack.c.b16 %v2209, %v2207
        %v2250 = vpack.c.b16 %v2210, %v2208
        %v2251 = vpack.c.b16 %v2213, %v2211
        %v2252 = vpack.c.b16 %v2214, %v2212
        %v2253 = vpack.c.b16 %v2217, %v2215
        %v2254 = vpack.c.b16 %v2218, %v2216
        %v2255 = vpack.c.b16 %v2221, %v2219
        %v2256 = vpack.c.b16 %v2222, %v2220
        %v2257 = vpack.c.b16 %v2223, %v2223
        %v2258 = vpack.c.b16 %v2224, %v2224
        %v2292 = vsel %vm1110, %v2108, 0
        %v2295 = vsel %vm1110, %v2111, 0
        %v2298 = vsel %vm1110, %v2114, 0
        %v2301 = vsel %vm1110, %v2117, 0
        %v2304 = vsel %vm1123, %v2257, 0
        %v2307 = vsel %vm1123, %v2258, 0
        %2309 = vmatprep.subr.bf16.mxu0 %v2226
        %2310 = vmatpush1.bf16.msra.mxu0 %v2225
        %2311 = vmatprep.subr.bf16.mxu0 %v2228
        %2312 = vmatpush1.bf16.msra.mxu0 %v2227
        %2313 = vmatprep.subr.bf16.mxu0 %v2230
        %2314 = vmatpush1.bf16.msra.mxu0 %v2229
        %2315 = vmatprep.subr.bf16.mxu0 %v2232
        %2316 = vmatpush1.bf16.msra.mxu0 %v2231
        %2317 = vmatprep.subr.bf16.mxu0 %v2234
        %2318 = vmatpush1.bf16.msra.mxu0 %v2233
        %2319 = vmatprep.subr.bf16.mxu0 %v2236
        %2320 = vmatpush1.bf16.msra.mxu0 %v2235
        %2321 = vmatprep.subr.bf16.mxu0 %v2238
        %2322 = vmatpush1.bf16.msra.mxu0 %v2237
        %2323 = vmatprep.subr.bf16.mxu0 %v2240
        %2324 = vmatpush1.bf16.msra.mxu0 %v2239
        %2325 = vmatprep.subr.bf16.mxu0 %v2242
        %2326 = vmatpush1.bf16.msra.mxu0 %v2241
        %2327 = vmatprep.subr.bf16.mxu0 %v2244
        %2328 = vmatpush1.bf16.msra.mxu0 %v2243
        %2329 = vmatprep.subr.bf16.mxu0 %v2246
        %2330 = vmatpush1.bf16.msra.mxu0 %v2245
        %2331 = vmatprep.subr.bf16.mxu0 %v2248
        %2332 = vmatpush1.bf16.msra.mxu0 %v2247
        %2333 = vmatprep.subr.bf16.mxu0 %v2250
        %2334 = vmatpush1.bf16.msra.mxu0 %v2249
        %2335 = vmatprep.subr.bf16.mxu0 %v2252
        %2336 = vmatpush1.bf16.msra.mxu0 %v2251
        %2337 = vmatprep.subr.bf16.mxu0 %v2254
        %2338 = vmatpush1.bf16.msra.mxu0 %v2253
        %2339 = vmatprep.subr.bf16.mxu0 %v2256
        %2340 = vmatpush1.bf16.msra.mxu0 %v2255
        %2341 = vmatprep.mubr.bf16.mxu0 %v2107
        %2342 = vmatmul.mubr.bf16.gmra.mrb[0].mxu0 %v2106
        %v2343 = vpop.f32.mrb[0].mxu0
        %v2344 = vadd.f32 0.0, %v2343
        %v2345 = vpop.f32.mrb[0].mxu0
        %v2346 = vadd.f32 0.0, %v2345
        %v2347 = vpop.f32.mrb[0].mxu0
        %v2348 = vadd.f32 0.0, %v2347
        %v2349 = vpop.f32.mrb[0].mxu0
        %v2350 = vadd.f32 0.0, %v2349
        %2351 = vmatprep.mubr.bf16.mxu0 %v2110
        %2352 = vmatmul.mubr.bf16.gmra.mrb[0].mxu0 %v2109
        %v2353 = vpop.f32.mrb[0].mxu0
        %v2354 = vadd.f32 0.0, %v2353
        %v2355 = vpop.f32.mrb[0].mxu0
        %v2356 = vadd.f32 0.0, %v2355
        %v2357 = vpop.f32.mrb[0].mxu0
        %v2358 = vadd.f32 0.0, %v2357
        %v2359 = vpop.f32.mrb[0].mxu0
        %v2360 = vadd.f32 0.0, %v2359
        %2361 = vmatprep.mubr.bf16.mxu0 %v2113
        %2362 = vmatmul.mubr.bf16.gmra.mrb[0].mxu0 %v2112
        %v2363 = vpop.f32.mrb[0].mxu0
        %v2364 = vadd.f32 0.0, %v2363
        %v2365 = vpop.f32.mrb[0].mxu0
        %v2366 = vadd.f32 0.0, %v2365
        %v2367 = vpop.f32.mrb[0].mxu0
        %v2368 = vadd.f32 0.0, %v2367
        %v2369 = vpop.f32.mrb[0].mxu0
        %v2370 = vadd.f32 0.0, %v2369
        %2371 = vmatprep.mubr.bf16.mxu0 %v2116
        %2372 = vmatmul.mubr.bf16.gmra.mrb[0].mxu0 %v2115
        %v2373 = vpop.f32.mrb[0].mxu0
        %v2374 = vadd.f32 0.0, %v2373
        %v2375 = vpop.f32.mrb[0].mxu0
        %v2376 = vadd.f32 0.0, %v2375
        %v2377 = vpop.f32.mrb[0].mxu0
        %v2378 = vadd.f32 0.0, %v2377
        %v2379 = vpop.f32.mrb[0].mxu0
        %v2380 = vadd.f32 0.0, %v2379
        %2381 = vdwg.mxu0
        %2382 = vmatprep.subr.bf16.mxu0 %v2307
        %2383 = vmatpush1.bf16.msra.mxu0 %v2304
        %2384 = vmatprep.subr.bf16.mxu0 0
        %2385 = vmatpush1.bf16.msra.mxu0 0
        %2386 = vmatprep.subr.bf16.mxu0 0
        %2387 = vmatpush1.bf16.msra.mxu0 0
        %2388 = vmatprep.subr.bf16.mxu0 0
        %2389 = vmatpush1.bf16.msra.mxu0 0
        %2390 = vmatprep.subr.bf16.mxu0 0
        %2391 = vmatpush1.bf16.msra.mxu0 0
        %2392 = vmatprep.subr.bf16.mxu0 0
        %2393 = vmatpush1.bf16.msra.mxu0 0
        %2394 = vmatprep.subr.bf16.mxu0 0
        %2395 = vmatpush1.bf16.msra.mxu0 0
        %2396 = vmatprep.subr.bf16.mxu0 0
        %2397 = vmatpush1.bf16.msra.mxu0 0
        %2398 = vmatprep.subr.bf16.mxu0 0
        %2399 = vmatpush1.bf16.msra.mxu0 0
        %2400 = vmatprep.subr.bf16.mxu0 0
        %2401 = vmatpush1.bf16.msra.mxu0 0
        %2402 = vmatprep.subr.bf16.mxu0 0
        %2403 = vmatpush1.bf16.msra.mxu0 0
        %2404 = vmatprep.subr.bf16.mxu0 0
        %2405 = vmatpush1.bf16.msra.mxu0 0
        %2406 = vmatprep.subr.bf16.mxu0 0
        %2407 = vmatpush1.bf16.msra.mxu0 0
        %2408 = vmatprep.subr.bf16.mxu0 0
        %2409 = vmatpush1.bf16.msra.mxu0 0
        %2410 = vmatprep.subr.bf16.mxu0 0
        %2411 = vmatpush1.bf16.msra.mxu0 0
        %2412 = vmatprep.subr.bf16.mxu0 0
        %2413 = vmatpush1.bf16.msra.mxu0 0
        %2414 = vmatprep.mubr.bf16.mxu0 0
        %2415 = vmatmul.mubr.bf16.gmra.mrb[0].mxu0 %v2292
        %v2416 = vpop.f32.mrb[0].mxu0
        %v2417 = vadd.f32 %v2344, %v2416
        %v2418 = vpop.f32.mrb[0].mxu0
        %v2419 = vadd.f32 %v2346, %v2418
        %v2420 = vpop.f32.mrb[0].mxu0
        %v2421 = vadd.f32 %v2348, %v2420
        %v2422 = vpop.f32.mrb[0].mxu0
        %v2423 = vadd.f32 %v2350, %v2422
        %2424 = vmatprep.mubr.bf16.mxu0 0
        %2425 = vmatmul.mubr.bf16.gmra.mrb[0].mxu0 %v2295
        %v2426 = vpop.f32.mrb[0].mxu0
        %v2427 = vadd.f32 %v2354, %v2426
        %v2428 = vpop.f32.mrb[0].mxu0
        %v2429 = vadd.f32 %v2356, %v2428
        %v2430 = vpop.f32.mrb[0].mxu0
        %v2431 = vadd.f32 %v2358, %v2430
        %v2432 = vpop.f32.mrb[0].mxu0
        %v2433 = vadd.f32 %v2360, %v2432
        %2434 = vmatprep.mubr.bf16.mxu0 0
        %2435 = vmatmul.mubr.bf16.gmra.mrb[0].mxu0 %v2298
        %v2436 = vpop.f32.mrb[0].mxu0
        %v2437 = vadd.f32 %v2364, %v2436
        %v2438 = vpop.f32.mrb[0].mxu0
        %v2439 = vadd.f32 %v2366, %v2438
        %v2440 = vpop.f32.mrb[0].mxu0
        %v2441 = vadd.f32 %v2368, %v2440
        %v2442 = vpop.f32.mrb[0].mxu0
        %v2443 = vadd.f32 %v2370, %v2442
        %2444 = vmatprep.mubr.bf16.mxu0 0
        %2445 = vmatmul.mubr.bf16.gmra.mrb[0].mxu0 %v2301
        %v2446 = vpop.f32.mrb[0].mxu0
        %v2447 = vadd.f32 %v2374, %v2446
        %v2448 = vpop.f32.mrb[0].mxu0
        %v2449 = vadd.f32 %v2376, %v2448
        %v2450 = vpop.f32.mrb[0].mxu0
        %v2451 = vadd.f32 %v2378, %v2450
        %v2452 = vpop.f32.mrb[0].mxu0
        %v2453 = vadd.f32 %v2380, %v2452
        %2454 = vdwg.mxu0
        %v2455 = vadd.f32 %v2056, %v2417
        %v2456 = vadd.f32 %v2057, %v2419
        %v2457 = vadd.f32 %v2058, %v2421
        %v2458 = vadd.f32 %v2059, %v2423
        %v2459 = vadd.f32 %v2060, %v2427
        %v2460 = vadd.f32 %v2061, %v2429
        %v2461 = vadd.f32 %v2062, %v2431
        %v2462 = vadd.f32 %v2063, %v2433
        %v2463 = vadd.f32 %v2064, %v2437
        %v2464 = vadd.f32 %v2065, %v2439
        %v2465 = vadd.f32 %v2066, %v2441
        %v2466 = vadd.f32 %v2067, %v2443
        %v2467 = vadd.f32 %v2068, %v2447
        %v2468 = vadd.f32 %v2069, %v2449
        %v2469 = vadd.f32 %v2070, %v2451
        %v2470 = vadd.f32 %v2071, %v2453
        %s2471 = scalar_lea.vmem [#allocation5], 1056
        %v2472 = vld [vmem:[%s2471] sm:$0xff]
        %v2473 = vld [vmem:[%s2471 + $0x8] sm:$0xff]
        %v2474 = vld [vmem:[%s2471 + $0x10] sm:$0xff]
        %v2475 = vld [vmem:[%s2471 + $0x18] sm:$0xff]
        %v2476 = vld [vmem:[%s2471 + $0x20] sm:$0xff]
        %v2477 = vld [vmem:[%s2471 + $0x28] sm:$0xff]
        %v2478 = vld [vmem:[%s2471 + $0x30] sm:$0xff]
        %v2479 = vld [vmem:[%s2471 + $0x38] sm:$0xff]
        %v2480 = vld [vmem:[%s2471 + $0x40] sm:$0xff]
        %v2481 = vld [vmem:[%s2471 + $0x48] sm:$0xff]
        %v2482 = vld [vmem:[%s2471 + $0x50] sm:$0xff]
        %v2483 = vld [vmem:[%s2471 + $0x58] sm:$0xff]
        %v2484 = vld [vmem:[%s2471 + $0x60] sm:$0xff]
        %v2485 = vld [vmem:[%s2471 + $0x68] sm:$0xff]
        %v2486 = vld [vmem:[%s2471 + $0x70] sm:$0xff]
        %v2487 = vld [vmem:[%s2471 + $0x78] sm:$0xff]
        %v2488 = vld [vmem:[%s2471 + $0x80] sm:$0xff]
        %v2489 = vld [vmem:[%s2471 + $0x88] sm:$0xff]
        %v2490 = vld [vmem:[%s2471 + $0x90] sm:$0xff]
        %v2491 = vld [vmem:[%s2471 + $0x98] sm:$0xff]
        %v2492 = vld [vmem:[%s2471 + $0xa0] sm:$0xff]
        %v2493 = vld [vmem:[%s2471 + $0xa8] sm:$0xff]
        %v2494 = vld [vmem:[%s2471 + $0xb0] sm:$0xff]
        %v2495 = vld [vmem:[%s2471 + $0xb8] sm:$0xff]
        %v2496 = vld [vmem:[%s2471 + $0xc0] sm:$0xff]
        %v2497 = vld [vmem:[%s2471 + $0xc8] sm:$0xff]
        %v2498 = vld [vmem:[%s2471 + $0xd0] sm:$0xff]
        %v2499 = vld [vmem:[%s2471 + $0xd8] sm:$0xff]
        %v2500 = vld [vmem:[%s2471 + $0xe0] sm:$0xff]
        %v2501 = vld [vmem:[%s2471 + $0xe8] sm:$0xff]
        %v2502 = vld [vmem:[%s2471 + $0xf0] sm:$0xff]
        %v2503 = vld [vmem:[%s2471 + $0xf8] sm:$0xff]
        %v2504 = vld [vmem:[%s2471 + $0x100] sm:$0xff]
        %v2505 = vpack.c.b16 %v584, %v581
        %v2506 = vpack.c.b16 %v585, %v582
        %v2507 = vpack.c.b16 %v586, %v583
        %v2508 = vpack.c.b16 %v590, %v587
        %v2509 = vpack.c.b16 %v591, %v588
        %v2510 = vpack.c.b16 %v592, %v589
        %v2511 = vpack.c.b16 %v596, %v593
        %v2512 = vpack.c.b16 %v597, %v594
        %v2513 = vpack.c.b16 %v598, %v595
        %v2514 = vpack.c.b16 %v602, %v599
        %v2515 = vpack.c.b16 %v603, %v600
        %v2516 = vpack.c.b16 %v604, %v601
        %v2558 = vunpack.c.l.b16 %v2472
        %v2559 = vunpack.c.h.b16 %v2472
        %v2560 = vunpack.c.l.b16 %v2473
        %v2561 = vunpack.c.h.b16 %v2473
        %v2562 = vunpack.c.l.b16 %v2474
        %v2563 = vunpack.c.h.b16 %v2474
        %v2564 = vunpack.c.l.b16 %v2475
        %v2565 = vunpack.c.h.b16 %v2475
        %v2566 = vunpack.c.l.b16 %v2476
        %v2567 = vunpack.c.h.b16 %v2476
        %v2568 = vunpack.c.l.b16 %v2477
        %v2569 = vunpack.c.h.b16 %v2477
        %v2570 = vunpack.c.l.b16 %v2478
        %v2571 = vunpack.c.h.b16 %v2478
        %v2572 = vunpack.c.l.b16 %v2479
        %v2573 = vunpack.c.h.b16 %v2479
        %v2574 = vunpack.c.l.b16 %v2480
        %v2575 = vunpack.c.h.b16 %v2480
        %v2576 = vunpack.c.l.b16 %v2481
        %v2577 = vunpack.c.h.b16 %v2481
        %v2578 = vunpack.c.l.b16 %v2482
        %v2579 = vunpack.c.h.b16 %v2482
        %v2580 = vunpack.c.l.b16 %v2483
        %v2581 = vunpack.c.h.b16 %v2483
        %v2582 = vunpack.c.l.b16 %v2484
        %v2583 = vunpack.c.h.b16 %v2484
        %v2584 = vunpack.c.l.b16 %v2485
        %v2585 = vunpack.c.h.b16 %v2485
        %v2586 = vunpack.c.l.b16 %v2486
        %v2587 = vunpack.c.h.b16 %v2486
        %v2588 = vunpack.c.l.b16 %v2487
        %v2589 = vunpack.c.h.b16 %v2487
        %v2590 = vunpack.c.l.b16 %v2488
        %v2591 = vunpack.c.h.b16 %v2488
        %v2592 = vunpack.c.l.b16 %v2489
        %v2593 = vunpack.c.h.b16 %v2489
        %v2594 = vunpack.c.l.b16 %v2490
        %v2595 = vunpack.c.h.b16 %v2490
        %v2596 = vunpack.c.l.b16 %v2491
        %v2597 = vunpack.c.h.b16 %v2491
        %v2598 = vunpack.c.l.b16 %v2492
        %v2599 = vunpack.c.h.b16 %v2492
        %v2600 = vunpack.c.l.b16 %v2493
        %v2601 = vunpack.c.h.b16 %v2493
        %v2602 = vunpack.c.l.b16 %v2494
        %v2603 = vunpack.c.h.b16 %v2494
        %v2604 = vunpack.c.l.b16 %v2495
        %v2605 = vunpack.c.h.b16 %v2495
        %v2606 = vunpack.c.l.b16 %v2496
        %v2607 = vunpack.c.h.b16 %v2496
        %v2608 = vunpack.c.l.b16 %v2497
        %v2609 = vunpack.c.h.b16 %v2497
        %v2610 = vunpack.c.l.b16 %v2498
        %v2611 = vunpack.c.h.b16 %v2498
        %v2612 = vunpack.c.l.b16 %v2499
        %v2613 = vunpack.c.h.b16 %v2499
        %v2614 = vunpack.c.l.b16 %v2500
        %v2615 = vunpack.c.h.b16 %v2500
        %v2616 = vunpack.c.l.b16 %v2501
        %v2617 = vunpack.c.h.b16 %v2501
        %v2618 = vunpack.c.l.b16 %v2502
        %v2619 = vunpack.c.h.b16 %v2502
        %v2620 = vunpack.c.l.b16 %v2503
        %v2621 = vunpack.c.h.b16 %v2503
        %v2622 = vunpack.c.l.b16 %v2504
        %v2623 = vunpack.c.h.b16 %v2504
        %v2624 = vpack.c.b16 %v2560, %v2558
        %v2625 = vpack.c.b16 %v2561, %v2559
        %v2626 = vpack.c.b16 %v2564, %v2562
        %v2627 = vpack.c.b16 %v2565, %v2563
        %v2628 = vpack.c.b16 %v2568, %v2566
        %v2629 = vpack.c.b16 %v2569, %v2567
        %v2630 = vpack.c.b16 %v2572, %v2570
        %v2631 = vpack.c.b16 %v2573, %v2571
        %v2632 = vpack.c.b16 %v2576, %v2574
        %v2633 = vpack.c.b16 %v2577, %v2575
        %v2634 = vpack.c.b16 %v2580, %v2578
        %v2635 = vpack.c.b16 %v2581, %v2579
        %v2636 = vpack.c.b16 %v2584, %v2582
        %v2637 = vpack.c.b16 %v2585, %v2583
        %v2638 = vpack.c.b16 %v2588, %v2586
        %v2639 = vpack.c.b16 %v2589, %v2587
        %v2640 = vpack.c.b16 %v2592, %v2590
        %v2641 = vpack.c.b16 %v2593, %v2591
        %v2642 = vpack.c.b16 %v2596, %v2594
        %v2643 = vpack.c.b16 %v2597, %v2595
        %v2644 = vpack.c.b16 %v2600, %v2598
        %v2645 = vpack.c.b16 %v2601, %v2599
        %v2646 = vpack.c.b16 %v2604, %v2602
        %v2647 = vpack.c.b16 %v2605, %v2603
        %v2648 = vpack.c.b16 %v2608, %v2606
        %v2649 = vpack.c.b16 %v2609, %v2607
        %v2650 = vpack.c.b16 %v2612, %v2610
        %v2651 = vpack.c.b16 %v2613, %v2611
        %v2652 = vpack.c.b16 %v2616, %v2614
        %v2653 = vpack.c.b16 %v2617, %v2615
        %v2654 = vpack.c.b16 %v2620, %v2618
        %v2655 = vpack.c.b16 %v2621, %v2619
        %v2656 = vpack.c.b16 %v2622, %v2622
        %v2657 = vpack.c.b16 %v2623, %v2623
        %v2691 = vsel %vm1110, %v2507, 0
        %v2694 = vsel %vm1110, %v2510, 0
        %v2697 = vsel %vm1110, %v2513, 0
        %v2700 = vsel %vm1110, %v2516, 0
        %v2703 = vsel %vm1123, %v2656, 0
        %v2706 = vsel %vm1123, %v2657, 0
        %2708 = vmatprep.subr.bf16.mxu0 %v2625
        %2709 = vmatpush1.bf16.msra.mxu0 %v2624
        %2710 = vmatprep.subr.bf16.mxu0 %v2627
        %2711 = vmatpush1.bf16.msra.mxu0 %v2626
        %2712 = vmatprep.subr.bf16.mxu0 %v2629
        %2713 = vmatpush1.bf16.msra.mxu0 %v2628
        %2714 = vmatprep.subr.bf16.mxu0 %v2631
        %2715 = vmatpush1.bf16.msra.mxu0 %v2630
        %2716 = vmatprep.subr.bf16.mxu0 %v2633
        %2717 = vmatpush1.bf16.msra.mxu0 %v2632
        %2718 = vmatprep.subr.bf16.mxu0 %v2635
        %2719 = vmatpush1.bf16.msra.mxu0 %v2634
        %2720 = vmatprep.subr.bf16.mxu0 %v2637
        %2721 = vmatpush1.bf16.msra.mxu0 %v2636
        %2722 = vmatprep.subr.bf16.mxu0 %v2639
        %2723 = vmatpush1.bf16.msra.mxu0 %v2638
        %2724 = vmatprep.subr.bf16.mxu0 %v2641
        %2725 = vmatpush1.bf16.msra.mxu0 %v2640
        %2726 = vmatprep.subr.bf16.mxu0 %v2643
        %2727 = vmatpush1.bf16.msra.mxu0 %v2642
        %2728 = vmatprep.subr.bf16.mxu0 %v2645
        %2729 = vmatpush1.bf16.msra.mxu0 %v2644
        %2730 = vmatprep.subr.bf16.mxu0 %v2647
        %2731 = vmatpush1.bf16.msra.mxu0 %v2646
        %2732 = vmatprep.subr.bf16.mxu0 %v2649
        %2733 = vmatpush1.bf16.msra.mxu0 %v2648
        %2734 = vmatprep.subr.bf16.mxu0 %v2651
        %2735 = vmatpush1.bf16.msra.mxu0 %v2650
        %2736 = vmatprep.subr.bf16.mxu0 %v2653
        %2737 = vmatpush1.bf16.msra.mxu0 %v2652
        %2738 = vmatprep.subr.bf16.mxu0 %v2655
        %2739 = vmatpush1.bf16.msra.mxu0 %v2654
        %2740 = vmatprep.mubr.bf16.mxu0 %v2506
        %2741 = vmatmul.mubr.bf16.gmra.mrb[0].mxu0 %v2505
        %v2742 = vpop.f32.mrb[0].mxu0
        %v2743 = vadd.f32 0.0, %v2742
        %v2744 = vpop.f32.mrb[0].mxu0
        %v2745 = vadd.f32 0.0, %v2744
        %v2746 = vpop.f32.mrb[0].mxu0
        %v2747 = vadd.f32 0.0, %v2746
        %v2748 = vpop.f32.mrb[0].mxu0
        %v2749 = vadd.f32 0.0, %v2748
        %2750 = vmatprep.mubr.bf16.mxu0 %v2509
        %2751 = vmatmul.mubr.bf16.gmra.mrb[0].mxu0 %v2508
        %v2752 = vpop.f32.mrb[0].mxu0
        %v2753 = vadd.f32 0.0, %v2752
        %v2754 = vpop.f32.mrb[0].mxu0
        %v2755 = vadd.f32 0.0, %v2754
        %v2756 = vpop.f32.mrb[0].mxu0
        %v2757 = vadd.f32 0.0, %v2756
        %v2758 = vpop.f32.mrb[0].mxu0
        %v2759 = vadd.f32 0.0, %v2758
        %2760 = vmatprep.mubr.bf16.mxu0 %v2512
        %2761 = vmatmul.mubr.bf16.gmra.mrb[0].mxu0 %v2511
        %v2762 = vpop.f32.mrb[0].mxu0
        %v2763 = vadd.f32 0.0, %v2762
        %v2764 = vpop.f32.mrb[0].mxu0
        %v2765 = vadd.f32 0.0, %v2764
        %v2766 = vpop.f32.mrb[0].mxu0
        %v2767 = vadd.f32 0.0, %v2766
        %v2768 = vpop.f32.mrb[0].mxu0
        %v2769 = vadd.f32 0.0, %v2768
        %2770 = vmatprep.mubr.bf16.mxu0 %v2515
        %2771 = vmatmul.mubr.bf16.gmra.mrb[0].mxu0 %v2514
        %v2772 = vpop.f32.mrb[0].mxu0
        %v2773 = vadd.f32 0.0, %v2772
        %v2774 = vpop.f32.mrb[0].mxu0
        %v2775 = vadd.f32 0.0, %v2774
        %v2776 = vpop.f32.mrb[0].mxu0
        %v2777 = vadd.f32 0.0, %v2776
        %v2778 = vpop.f32.mrb[0].mxu0
        %v2779 = vadd.f32 0.0, %v2778
        %2780 = vdwg.mxu0
        %2781 = vmatprep.subr.bf16.mxu0 %v2706
        %2782 = vmatpush1.bf16.msra.mxu0 %v2703
        %2783 = vmatprep.subr.bf16.mxu0 0
        %2784 = vmatpush1.bf16.msra.mxu0 0
        %2785 = vmatprep.subr.bf16.mxu0 0
        %2786 = vmatpush1.bf16.msra.mxu0 0
        %2787 = vmatprep.subr.bf16.mxu0 0
        %2788 = vmatpush1.bf16.msra.mxu0 0
        %2789 = vmatprep.subr.bf16.mxu0 0
        %2790 = vmatpush1.bf16.msra.mxu0 0
        %2791 = vmatprep.subr.bf16.mxu0 0
        %2792 = vmatpush1.bf16.msra.mxu0 0
        %2793 = vmatprep.subr.bf16.mxu0 0
        %2794 = vmatpush1.bf16.msra.mxu0 0
        %2795 = vmatprep.subr.bf16.mxu0 0
        %2796 = vmatpush1.bf16.msra.mxu0 0
        %2797 = vmatprep.subr.bf16.mxu0 0
        %2798 = vmatpush1.bf16.msra.mxu0 0
        %2799 = vmatprep.subr.bf16.mxu0 0
        %2800 = vmatpush1.bf16.msra.mxu0 0
        %2801 = vmatprep.subr.bf16.mxu0 0
        %2802 = vmatpush1.bf16.msra.mxu0 0
        %2803 = vmatprep.subr.bf16.mxu0 0
        %2804 = vmatpush1.bf16.msra.mxu0 0
        %2805 = vmatprep.subr.bf16.mxu0 0
        %2806 = vmatpush1.bf16.msra.mxu0 0
        %2807 = vmatprep.subr.bf16.mxu0 0
        %2808 = vmatpush1.bf16.msra.mxu0 0
        %2809 = vmatprep.subr.bf16.mxu0 0
        %2810 = vmatpush1.bf16.msra.mxu0 0
        %2811 = vmatprep.subr.bf16.mxu0 0
        %2812 = vmatpush1.bf16.msra.mxu0 0
        %2813 = vmatprep.mubr.bf16.mxu0 0
        %2814 = vmatmul.mubr.bf16.gmra.mrb[0].mxu0 %v2691
        %v2815 = vpop.f32.mrb[0].mxu0
        %v2816 = vadd.f32 %v2743, %v2815
        %v2817 = vpop.f32.mrb[0].mxu0
        %v2818 = vadd.f32 %v2745, %v2817
        %v2819 = vpop.f32.mrb[0].mxu0
        %v2820 = vadd.f32 %v2747, %v2819
        %v2821 = vpop.f32.mrb[0].mxu0
        %v2822 = vadd.f32 %v2749, %v2821
        %2823 = vmatprep.mubr.bf16.mxu0 0
        %2824 = vmatmul.mubr.bf16.gmra.mrb[0].mxu0 %v2694
        %v2825 = vpop.f32.mrb[0].mxu0
        %v2826 = vadd.f32 %v2753, %v2825
        %v2827 = vpop.f32.mrb[0].mxu0
        %v2828 = vadd.f32 %v2755, %v2827
        %v2829 = vpop.f32.mrb[0].mxu0
        %v2830 = vadd.f32 %v2757, %v2829
        %v2831 = vpop.f32.mrb[0].mxu0
        %v2832 = vadd.f32 %v2759, %v2831
        %2833 = vmatprep.mubr.bf16.mxu0 0
        %2834 = vmatmul.mubr.bf16.gmra.mrb[0].mxu0 %v2697
        %v2835 = vpop.f32.mrb[0].mxu0
        %v2836 = vadd.f32 %v2763, %v2835
        %v2837 = vpop.f32.mrb[0].mxu0
        %v2838 = vadd.f32 %v2765, %v2837
        %v2839 = vpop.f32.mrb[0].mxu0
        %v2840 = vadd.f32 %v2767, %v2839
        %v2841 = vpop.f32.mrb[0].mxu0
        %v2842 = vadd.f32 %v2769, %v2841
        %2843 = vmatprep.mubr.bf16.mxu0 0
        %2844 = vmatmul.mubr.bf16.gmra.mrb[0].mxu0 %v2700
        %v2845 = vpop.f32.mrb[0].mxu0
        %v2846 = vadd.f32 %v2773, %v2845
        %v2847 = vpop.f32.mrb[0].mxu0
        %v2848 = vadd.f32 %v2775, %v2847
        %v2849 = vpop.f32.mrb[0].mxu0
        %v2850 = vadd.f32 %v2777, %v2849
        %v2851 = vpop.f32.mrb[0].mxu0
        %v2852 = vadd.f32 %v2779, %v2851
        %2853 = vdwg.mxu0
        %v2854 = vadd.f32 %v2455, %v2816
        %v2855 = vadd.f32 %v2456, %v2818
        %v2856 = vadd.f32 %v2457, %v2820
        %v2857 = vadd.f32 %v2458, %v2822
        %v2858 = vadd.f32 %v2459, %v2826
        %v2859 = vadd.f32 %v2460, %v2828
        %v2860 = vadd.f32 %v2461, %v2830
        %v2861 = vadd.f32 %v2462, %v2832
        %v2862 = vadd.f32 %v2463, %v2836
        %v2863 = vadd.f32 %v2464, %v2838
        %v2864 = vadd.f32 %v2465, %v2840
        %v2865 = vadd.f32 %v2466, %v2842
        %v2866 = vadd.f32 %v2467, %v2846
        %v2867 = vadd.f32 %v2468, %v2848
        %v2868 = vadd.f32 %v2469, %v2850
        %v2869 = vadd.f32 %v2470, %v2852
        %s2870 = scalar_lea.vmem [#allocation5], 1848
        %v2871 = vld [vmem:[%s2870] sm:$0xff]
        %v2872 = vld [vmem:[%s2870 + $0x8] sm:$0xff]
        %v2873 = vld [vmem:[%s2870 + $0x10] sm:$0xff]
        %v2874 = vld [vmem:[%s2870 + $0x18] sm:$0xff]
        %v2875 = vld [vmem:[%s2870 + $0x20] sm:$0xff]
        %v2876 = vld [vmem:[%s2870 + $0x28] sm:$0xff]
        %v2877 = vld [vmem:[%s2870 + $0x30] sm:$0xff]
        %v2878 = vld [vmem:[%s2870 + $0x38] sm:$0xff]
        %v2879 = vld [vmem:[%s2870 + $0x40] sm:$0xff]
        %v2880 = vld [vmem:[%s2870 + $0x48] sm:$0xff]
        %v2881 = vld [vmem:[%s2870 + $0x50] sm:$0xff]
        %v2882 = vld [vmem:[%s2870 + $0x58] sm:$0xff]
        %v2883 = vld [vmem:[%s2870 + $0x60] sm:$0xff]
        %v2884 = vld [vmem:[%s2870 + $0x68] sm:$0xff]
        %v2885 = vld [vmem:[%s2870 + $0x70] sm:$0xff]
        %v2886 = vld [vmem:[%s2870 + $0x78] sm:$0xff]
        %v2887 = vld [vmem:[%s2870 + $0x80] sm:$0xff]
        %v2888 = vld [vmem:[%s2870 + $0x88] sm:$0xff]
        %v2889 = vld [vmem:[%s2870 + $0x90] sm:$0xff]
        %v2890 = vld [vmem:[%s2870 + $0x98] sm:$0xff]
        %v2891 = vld [vmem:[%s2870 + $0xa0] sm:$0xff]
        %v2892 = vld [vmem:[%s2870 + $0xa8] sm:$0xff]
        %v2893 = vld [vmem:[%s2870 + $0xb0] sm:$0xff]
        %v2894 = vld [vmem:[%s2870 + $0xb8] sm:$0xff]
        %v2895 = vld [vmem:[%s2870 + $0xc0] sm:$0xff]
        %v2896 = vld [vmem:[%s2870 + $0xc8] sm:$0xff]
        %v2897 = vld [vmem:[%s2870 + $0xd0] sm:$0xff]
        %v2898 = vld [vmem:[%s2870 + $0xd8] sm:$0xff]
        %v2899 = vld [vmem:[%s2870 + $0xe0] sm:$0xff]
        %v2900 = vld [vmem:[%s2870 + $0xe8] sm:$0xff]
        %v2901 = vld [vmem:[%s2870 + $0xf0] sm:$0xff]
        %v2902 = vld [vmem:[%s2870 + $0xf8] sm:$0xff]
        %v2903 = vld [vmem:[%s2870 + $0x100] sm:$0xff]
        %v2904 = vunpack.c.h.b16 0
        %v2905 = vpack.c.b16 %v870, %v602
        %v2906 = vpack.c.b16 %v2904, %v603
        %v2907 = vpack.c.b16 %v870, %v604
        %v2943 = vunpack.c.l.b16 %v2871
        %v2944 = vunpack.c.h.b16 %v2871
        %v2945 = vunpack.c.l.b16 %v2872
        %v2946 = vunpack.c.h.b16 %v2872
        %v2947 = vunpack.c.l.b16 %v2873
        %v2948 = vunpack.c.h.b16 %v2873
        %v2949 = vunpack.c.l.b16 %v2874
        %v2950 = vunpack.c.h.b16 %v2874
        %v2951 = vunpack.c.l.b16 %v2875
        %v2952 = vunpack.c.h.b16 %v2875
        %v2953 = vunpack.c.l.b16 %v2876
        %v2954 = vunpack.c.h.b16 %v2876
        %v2955 = vunpack.c.l.b16 %v2877
        %v2956 = vunpack.c.h.b16 %v2877
        %v2957 = vunpack.c.l.b16 %v2878
        %v2958 = vunpack.c.h.b16 %v2878
        %v2959 = vunpack.c.l.b16 %v2879
        %v2960 = vunpack.c.h.b16 %v2879
        %v2961 = vunpack.c.l.b16 %v2880
        %v2962 = vunpack.c.h.b16 %v2880
        %v2963 = vunpack.c.l.b16 %v2881
        %v2964 = vunpack.c.h.b16 %v2881
        %v2965 = vunpack.c.l.b16 %v2882
        %v2966 = vunpack.c.h.b16 %v2882
        %v2967 = vunpack.c.l.b16 %v2883
        %v2968 = vunpack.c.h.b16 %v2883
        %v2969 = vunpack.c.l.b16 %v2884
        %v2970 = vunpack.c.h.b16 %v2884
        %v2971 = vunpack.c.l.b16 %v2885
        %v2972 = vunpack.c.h.b16 %v2885
        %v2973 = vunpack.c.l.b16 %v2886
        %v2974 = vunpack.c.h.b16 %v2886
        %v2975 = vunpack.c.l.b16 %v2887
        %v2976 = vunpack.c.h.b16 %v2887
        %v2977 = vunpack.c.l.b16 %v2888
        %v2978 = vunpack.c.h.b16 %v2888
        %v2979 = vunpack.c.l.b16 %v2889
        %v2980 = vunpack.c.h.b16 %v2889
        %v2981 = vunpack.c.l.b16 %v2890
        %v2982 = vunpack.c.h.b16 %v2890
        %v2983 = vunpack.c.l.b16 %v2891
        %v2984 = vunpack.c.h.b16 %v2891
        %v2985 = vunpack.c.l.b16 %v2892
        %v2986 = vunpack.c.h.b16 %v2892
        %v2987 = vunpack.c.l.b16 %v2893
        %v2988 = vunpack.c.h.b16 %v2893
        %v2989 = vunpack.c.l.b16 %v2894
        %v2990 = vunpack.c.h.b16 %v2894
        %v2991 = vunpack.c.l.b16 %v2895
        %v2992 = vunpack.c.h.b16 %v2895
        %v2993 = vunpack.c.l.b16 %v2896
        %v2994 = vunpack.c.h.b16 %v2896
        %v2995 = vunpack.c.l.b16 %v2897
        %v2996 = vunpack.c.h.b16 %v2897
        %v2997 = vunpack.c.l.b16 %v2898
        %v2998 = vunpack.c.h.b16 %v2898
        %v2999 = vunpack.c.l.b16 %v2899
        %v3000 = vunpack.c.h.b16 %v2899
        %v3001 = vunpack.c.l.b16 %v2900
        %v3002 = vunpack.c.h.b16 %v2900
        %v3003 = vunpack.c.l.b16 %v2901
        %v3004 = vunpack.c.h.b16 %v2901
        %v3005 = vunpack.c.l.b16 %v2902
        %v3006 = vunpack.c.h.b16 %v2902
        %v3007 = vunpack.c.l.b16 %v2903
        %v3008 = vunpack.c.h.b16 %v2903
        %v3009 = vpack.c.b16 %v2945, %v2943
        %v3010 = vpack.c.b16 %v2946, %v2944
        %v3011 = vpack.c.b16 %v2949, %v2947
        %v3012 = vpack.c.b16 %v2950, %v2948
        %v3013 = vpack.c.b16 %v2953, %v2951
        %v3014 = vpack.c.b16 %v2954, %v2952
        %v3015 = vpack.c.b16 %v2957, %v2955
        %v3016 = vpack.c.b16 %v2958, %v2956
        %v3017 = vpack.c.b16 %v2961, %v2959
        %v3018 = vpack.c.b16 %v2962, %v2960
        %v3019 = vpack.c.b16 %v2965, %v2963
        %v3020 = vpack.c.b16 %v2966, %v2964
        %v3021 = vpack.c.b16 %v2969, %v2967
        %v3022 = vpack.c.b16 %v2970, %v2968
        %v3023 = vpack.c.b16 %v2973, %v2971
        %v3024 = vpack.c.b16 %v2974, %v2972
        %v3025 = vpack.c.b16 %v2977, %v2975
        %v3026 = vpack.c.b16 %v2978, %v2976
        %v3027 = vpack.c.b16 %v2981, %v2979
        %v3028 = vpack.c.b16 %v2982, %v2980
        %v3029 = vpack.c.b16 %v2985, %v2983
        %v3030 = vpack.c.b16 %v2986, %v2984
        %v3031 = vpack.c.b16 %v2989, %v2987
        %v3032 = vpack.c.b16 %v2990, %v2988
        %v3033 = vpack.c.b16 %v2993, %v2991
        %v3034 = vpack.c.b16 %v2994, %v2992
        %v3035 = vpack.c.b16 %v2997, %v2995
        %v3036 = vpack.c.b16 %v2998, %v2996
        %v3037 = vpack.c.b16 %v3001, %v2999
        %v3038 = vpack.c.b16 %v3002, %v3000
        %v3039 = vpack.c.b16 %v3005, %v3003
        %v3040 = vpack.c.b16 %v3006, %v3004
        %v3041 = vpack.c.b16 %v3007, %v3007
        %v3042 = vpack.c.b16 %v3008, %v3008
        %v3076 = vsel %vm1110, %v2907, 0
        %v3079 = vsel %vm1123, %v3041, 0
        %v3082 = vsel %vm1123, %v3042, 0
        %3084 = vmatprep.subr.bf16.mxu0 %v3010
        %3085 = vmatpush1.bf16.msra.mxu0 %v3009
        %3086 = vmatprep.subr.bf16.mxu0 %v3012
        %3087 = vmatpush1.bf16.msra.mxu0 %v3011
        %3088 = vmatprep.subr.bf16.mxu0 %v3014
        %3089 = vmatpush1.bf16.msra.mxu0 %v3013
        %3090 = vmatprep.subr.bf16.mxu0 %v3016
        %3091 = vmatpush1.bf16.msra.mxu0 %v3015
        %3092 = vmatprep.subr.bf16.mxu0 %v3018
        %3093 = vmatpush1.bf16.msra.mxu0 %v3017
        %3094 = vmatprep.subr.bf16.mxu0 %v3020
        %3095 = vmatpush1.bf16.msra.mxu0 %v3019
        %3096 = vmatprep.subr.bf16.mxu0 %v3022
        %3097 = vmatpush1.bf16.msra.mxu0 %v3021
        %3098 = vmatprep.subr.bf16.mxu0 %v3024
        %3099 = vmatpush1.bf16.msra.mxu0 %v3023
        %3100 = vmatprep.subr.bf16.mxu0 %v3026
        %3101 = vmatpush1.bf16.msra.mxu0 %v3025
        %3102 = vmatprep.subr.bf16.mxu0 %v3028
        %3103 = vmatpush1.bf16.msra.mxu0 %v3027
        %3104 = vmatprep.subr.bf16.mxu0 %v3030
        %3105 = vmatpush1.bf16.msra.mxu0 %v3029
        %3106 = vmatprep.subr.bf16.mxu0 %v3032
        %3107 = vmatpush1.bf16.msra.mxu0 %v3031
        %3108 = vmatprep.subr.bf16.mxu0 %v3034
        %3109 = vmatpush1.bf16.msra.mxu0 %v3033
        %3110 = vmatprep.subr.bf16.mxu0 %v3036
        %3111 = vmatpush1.bf16.msra.mxu0 %v3035
        %3112 = vmatprep.subr.bf16.mxu0 %v3038
        %3113 = vmatpush1.bf16.msra.mxu0 %v3037
        %3114 = vmatprep.subr.bf16.mxu0 %v3040
        %3115 = vmatpush1.bf16.msra.mxu0 %v3039
        %3116 = vmatprep.mubr.bf16.mxu0 %v2110
        %3117 = vmatmul.mubr.bf16.gmra.mrb[0].mxu0 %v2109
        %v3118 = vpop.f32.mrb[0].mxu0
        %v3119 = vadd.f32 0.0, %v3118
        %v3120 = vpop.f32.mrb[0].mxu0
        %v3121 = vadd.f32 0.0, %v3120
        %v3122 = vpop.f32.mrb[0].mxu0
        %v3123 = vadd.f32 0.0, %v3122
        %v3124 = vpop.f32.mrb[0].mxu0
        %v3125 = vadd.f32 0.0, %v3124
        %3126 = vmatprep.mubr.bf16.mxu0 %v2113
        %3127 = vmatmul.mubr.bf16.gmra.mrb[0].mxu0 %v2112
        %v3128 = vpop.f32.mrb[0].mxu0
        %v3129 = vadd.f32 0.0, %v3128
        %v3130 = vpop.f32.mrb[0].mxu0
        %v3131 = vadd.f32 0.0, %v3130
        %v3132 = vpop.f32.mrb[0].mxu0
        %v3133 = vadd.f32 0.0, %v3132
        %v3134 = vpop.f32.mrb[0].mxu0
        %v3135 = vadd.f32 0.0, %v3134
        %3136 = vmatprep.mubr.bf16.mxu0 %v2116
        %3137 = vmatmul.mubr.bf16.gmra.mrb[0].mxu0 %v2115
        %v3138 = vpop.f32.mrb[0].mxu0
        %v3139 = vadd.f32 0.0, %v3138
        %v3140 = vpop.f32.mrb[0].mxu0
        %v3141 = vadd.f32 0.0, %v3140
        %v3142 = vpop.f32.mrb[0].mxu0
        %v3143 = vadd.f32 0.0, %v3142
        %v3144 = vpop.f32.mrb[0].mxu0
        %v3145 = vadd.f32 0.0, %v3144
        %3146 = vmatprep.mubr.bf16.mxu0 %v2906
        %3147 = vmatmul.mubr.bf16.gmra.mrb[0].mxu0 %v2905
        %v3148 = vpop.f32.mrb[0].mxu0
        %v3149 = vadd.f32 0.0, %v3148
        %v3150 = vpop.f32.mrb[0].mxu0
        %v3151 = vadd.f32 0.0, %v3150
        %v3152 = vpop.f32.mrb[0].mxu0
        %v3153 = vadd.f32 0.0, %v3152
        %v3154 = vpop.f32.mrb[0].mxu0
        %v3155 = vadd.f32 0.0, %v3154
        %3156 = vdwg.mxu0
        %3157 = vmatprep.subr.bf16.mxu0 %v3082
        %3158 = vmatpush1.bf16.msra.mxu0 %v3079
        %3159 = vmatprep.subr.bf16.mxu0 0
        %3160 = vmatpush1.bf16.msra.mxu0 0
        %3161 = vmatprep.subr.bf16.mxu0 0
        %3162 = vmatpush1.bf16.msra.mxu0 0
        %3163 = vmatprep.subr.bf16.mxu0 0
        %3164 = vmatpush1.bf16.msra.mxu0 0
        %3165 = vmatprep.subr.bf16.mxu0 0
        %3166 = vmatpush1.bf16.msra.mxu0 0
        %3167 = vmatprep.subr.bf16.mxu0 0
        %3168 = vmatpush1.bf16.msra.mxu0 0
        %3169 = vmatprep.subr.bf16.mxu0 0
        %3170 = vmatpush1.bf16.msra.mxu0 0
        %3171 = vmatprep.subr.bf16.mxu0 0
        %3172 = vmatpush1.bf16.msra.mxu0 0
        %3173 = vmatprep.subr.bf16.mxu0 0
        %3174 = vmatpush1.bf16.msra.mxu0 0
        %3175 = vmatprep.subr.bf16.mxu0 0
        %3176 = vmatpush1.bf16.msra.mxu0 0
        %3177 = vmatprep.subr.bf16.mxu0 0
        %3178 = vmatpush1.bf16.msra.mxu0 0
        %3179 = vmatprep.subr.bf16.mxu0 0
        %3180 = vmatpush1.bf16.msra.mxu0 0
        %3181 = vmatprep.subr.bf16.mxu0 0
        %3182 = vmatpush1.bf16.msra.mxu0 0
        %3183 = vmatprep.subr.bf16.mxu0 0
        %3184 = vmatpush1.bf16.msra.mxu0 0
        %3185 = vmatprep.subr.bf16.mxu0 0
        %3186 = vmatpush1.bf16.msra.mxu0 0
        %3187 = vmatprep.subr.bf16.mxu0 0
        %3188 = vmatpush1.bf16.msra.mxu0 0
        %3189 = vmatprep.mubr.bf16.mxu0 0
        %3190 = vmatmul.mubr.bf16.gmra.mrb[0].mxu0 %v2295
        %v3191 = vpop.f32.mrb[0].mxu0
        %v3192 = vadd.f32 %v3119, %v3191
        %v3193 = vpop.f32.mrb[0].mxu0
        %v3194 = vadd.f32 %v3121, %v3193
        %v3195 = vpop.f32.mrb[0].mxu0
        %v3196 = vadd.f32 %v3123, %v3195
        %v3197 = vpop.f32.mrb[0].mxu0
        %v3198 = vadd.f32 %v3125, %v3197
        %3199 = vmatprep.mubr.bf16.mxu0 0
        %3200 = vmatmul.mubr.bf16.gmra.mrb[0].mxu0 %v2298
        %v3201 = vpop.f32.mrb[0].mxu0
        %v3202 = vadd.f32 %v3129, %v3201
        %v3203 = vpop.f32.mrb[0].mxu0
        %v3204 = vadd.f32 %v3131, %v3203
        %v3205 = vpop.f32.mrb[0].mxu0
        %v3206 = vadd.f32 %v3133, %v3205
        %v3207 = vpop.f32.mrb[0].mxu0
        %v3208 = vadd.f32 %v3135, %v3207
        %3209 = vmatprep.mubr.bf16.mxu0 0
        %3210 = vmatmul.mubr.bf16.gmra.mrb[0].mxu0 %v2301
        %v3211 = vpop.f32.mrb[0].mxu0
        %v3212 = vadd.f32 %v3139, %v3211
        %v3213 = vpop.f32.mrb[0].mxu0
        %v3214 = vadd.f32 %v3141, %v3213
        %v3215 = vpop.f32.mrb[0].mxu0
        %v3216 = vadd.f32 %v3143, %v3215
        %v3217 = vpop.f32.mrb[0].mxu0
        %v3218 = vadd.f32 %v3145, %v3217
        %3219 = vmatprep.mubr.bf16.mxu0 0
        %3220 = vmatmul.mubr.bf16.gmra.mrb[0].mxu0 %v3076
        %v3221 = vpop.f32.mrb[0].mxu0
        %v3222 = vadd.f32 %v3149, %v3221
        %v3223 = vpop.f32.mrb[0].mxu0
        %v3224 = vadd.f32 %v3151, %v3223
        %v3225 = vpop.f32.mrb[0].mxu0
        %v3226 = vadd.f32 %v3153, %v3225
        %v3227 = vpop.f32.mrb[0].mxu0
        %v3228 = vadd.f32 %v3155, %v3227
        %3229 = vdwg.mxu0
        %v3230 = vadd.f32 %v2854, %v3192
        %v3231 = vadd.f32 %v2855, %v3194
        %v3232 = vadd.f32 %v2856, %v3196
        %v3233 = vadd.f32 %v2857, %v3198
        %v3234 = vadd.f32 %v2858, %v3202
        %v3235 = vadd.f32 %v2859, %v3204
        %v3236 = vadd.f32 %v2860, %v3206
        %v3237 = vadd.f32 %v2861, %v3208
        %v3238 = vadd.f32 %v2862, %v3212
        %v3239 = vadd.f32 %v2863, %v3214
        %v3240 = vadd.f32 %v2864, %v3216
        %v3241 = vadd.f32 %v2865, %v3218
        %v3242 = vadd.f32 %v2866, %v3222
        %v3243 = vadd.f32 %v2867, %v3224
        %v3244 = vadd.f32 %v2868, %v3226
        %v3245 = vadd.f32 %v2869, %v3228
        %v3246 = vrot.slane %v633, 1
        %v3247 = vor.u32 %v630, %v3246
        %v3248 = vrot.slane %v640, 1
        %v3249 = vor.u32 %v637, %v3248
        %v3250 = vrot.slane %v647, 1
        %v3251 = vor.u32 %v644, %v3250
        %v3252 = vrot.slane %v654, 1
        %v3253 = vor.u32 %v651, %v3252
        %v3254 = vrot.slane %v661, 1
        %v3255 = vor.u32 %v658, %v3254
        %v3256 = vrot.slane %v668, 1
        %v3257 = vor.u32 %v665, %v3256
        %v3258 = vrot.slane %v675, 1
        %v3259 = vor.u32 %v672, %v3258
        %v3260 = vrot.slane %v682, 1
        %v3261 = vor.u32 %v679, %v3260
        %v3262 = vrot.slane %v689, 1
        %v3263 = vor.u32 %v686, %v3262
        %v3264 = vrot.slane %v696, 1
        %v3265 = vor.u32 %v693, %v3264
        %v3266 = vrot.slane %v703, 1
        %v3267 = vor.u32 %v700, %v3266
        %v3268 = vrot.slane %v710, 1
        %v3269 = vor.u32 %v707, %v3268
        %v3270 = vrot.slane %v717, 1
        %v3271 = vor.u32 %v714, %v3270
        %v3272 = vrot.slane %v724, 1
        %v3273 = vor.u32 %v721, %v3272
        %v3274 = vrot.slane %v731, 1
        %v3275 = vor.u32 %v728, %v3274
        %v3276 = vrot.slane %v738, 1
        %v3277 = vor.u32 %v735, %v3276
        %v3278 = vrot.slane %v745, 1
        %v3279 = vor.u32 %v742, %v3278
        %v3280 = vrot.slane %v752, 1
        %v3281 = vor.u32 %v749, %v3280
        %v3282 = vrot.slane %v759, 1
        %v3283 = vor.u32 %v756, %v3282
        %v3284 = vrot.slane %v766, 1
        %v3285 = vor.u32 %v763, %v3284
        %v3286 = vrot.slane %v773, 1
        %v3287 = vor.u32 %v770, %v3286
        %v3288 = vrot.slane %v780, 1
        %v3289 = vor.u32 %v777, %v3288
        %v3290 = vrot.slane %v787, 1
        %v3291 = vor.u32 %v784, %v3290
        %v3292 = vrot.slane %v794, 1
        %v3293 = vor.u32 %v791, %v3292
        %vm3318 = vcmask 1043456
        %vm3319 = vsmask.f32 3328
        %vm3320 = vmand %vm3318, %vm3319
        %v3321 = vsel %vm3320, %v3247, 0
        %v3322 = vsel %vm3320, %v3249, 0
        %v3323 = vsel %vm3320, %v3251, 0
        %v3324 = vsel %vm3320, %v3253, 0
        %v3325 = vsel %vm3320, %v3255, 0
        %v3326 = vsel %vm3320, %v3257, 0
        %v3327 = vsel %vm3320, %v3259, 0
        %v3328 = vsel %vm3320, %v3261, 0
        %v3329 = vsel %vm3320, %v3263, 0
        %v3330 = vsel %vm3320, %v3265, 0
        %v3331 = vsel %vm3320, %v3267, 0
        %v3332 = vsel %vm3320, %v3269, 0
        %v3333 = vsel %vm3320, %v3271, 0
        %v3334 = vsel %vm3320, %v3273, 0
        %v3335 = vsel %vm3320, %v3275, 0
        %v3336 = vsel %vm3320, %v3277, 0
        %v3337 = vsel %vm3320, %v3279, 0
        %v3338 = vsel %vm3320, %v3281, 0
        %v3339 = vsel %vm3320, %v3283, 0
        %v3340 = vsel %vm3320, %v3285, 0
        %v3341 = vsel %vm3320, %v3287, 0
        %v3342 = vsel %vm3320, %v3289, 0
        %v3343 = vsel %vm3320, %v3291, 0
        %v3344 = vsel %vm3320, %v3293, 0
        %v3366 = vunpack.c.l.b16 %v3321
        %v3367 = vunpack.c.l.b16 %v3322
        %v3368 = vunpack.c.l.b16 %v3323
        %v3369 = vunpack.c.l.b16 %v3324
        %v3370 = vunpack.c.l.b16 %v3325
        %v3371 = vunpack.c.l.b16 %v3326
        %v3372 = vunpack.c.l.b16 %v3327
        %v3373 = vunpack.c.l.b16 %v3328
        %v3374 = vunpack.c.l.b16 %v3329
        %v3375 = vunpack.c.l.b16 %v3330
        %v3376 = vunpack.c.l.b16 %v3331
        %v3377 = vunpack.c.l.b16 %v3332
        %v3378 = vunpack.c.l.b16 %v3333
        %v3379 = vunpack.c.l.b16 %v3334
        %v3380 = vunpack.c.l.b16 %v3335
        %v3381 = vunpack.c.l.b16 %v3336
        %v3382 = vunpack.c.l.b16 %v3337
        %v3383 = vunpack.c.l.b16 %v3338
        %v3384 = vunpack.c.l.b16 %v3339
        %v3385 = vunpack.c.l.b16 %v3340
        %v3386 = vunpack.c.l.b16 %v3341
        %s3387 = scalar_lea.vmem [#allocation5], 528
        %v3388 = vld [vmem:[%s3387] sm:$0xff]
        %v3389 = vld [vmem:[%s3387 + $0x8] sm:$0xff]
        %v3390 = vld [vmem:[%s3387 + $0x10] sm:$0xff]
        %v3391 = vld [vmem:[%s3387 + $0x18] sm:$0xff]
        %v3392 = vld [vmem:[%s3387 + $0x20] sm:$0xff]
        %v3393 = vld [vmem:[%s3387 + $0x28] sm:$0xff]
        %v3394 = vld [vmem:[%s3387 + $0x30] sm:$0xff]
        %v3395 = vld [vmem:[%s3387 + $0x38] sm:$0xff]
        %v3396 = vld [vmem:[%s3387 + $0x40] sm:$0xff]
        %v3397 = vld [vmem:[%s3387 + $0x48] sm:$0xff]
        %v3398 = vld [vmem:[%s3387 + $0x50] sm:$0xff]
        %v3399 = vld [vmem:[%s3387 + $0x58] sm:$0xff]
        %v3400 = vld [vmem:[%s3387 + $0x60] sm:$0xff]
        %v3401 = vld [vmem:[%s3387 + $0x68] sm:$0xff]
        %v3402 = vld [vmem:[%s3387 + $0x70] sm:$0xff]
        %v3403 = vld [vmem:[%s3387 + $0x78] sm:$0xff]
        %v3404 = vld [vmem:[%s3387 + $0x80] sm:$0xff]
        %v3405 = vld [vmem:[%s3387 + $0x88] sm:$0xff]
        %v3406 = vld [vmem:[%s3387 + $0x90] sm:$0xff]
        %v3407 = vld [vmem:[%s3387 + $0x98] sm:$0xff]
        %v3408 = vld [vmem:[%s3387 + $0xa0] sm:$0xff]
        %v3409 = vld [vmem:[%s3387 + $0xa8] sm:$0xff]
        %v3410 = vld [vmem:[%s3387 + $0xb0] sm:$0xff]
        %v3411 = vld [vmem:[%s3387 + $0xb8] sm:$0xff]
        %v3412 = vld [vmem:[%s3387 + $0xc0] sm:$0xff]
        %v3413 = vld [vmem:[%s3387 + $0xc8] sm:$0xff]
        %v3414 = vld [vmem:[%s3387 + $0xd0] sm:$0xff]
        %v3415 = vld [vmem:[%s3387 + $0xd8] sm:$0xff]
        %v3416 = vld [vmem:[%s3387 + $0xe0] sm:$0xff]
        %v3417 = vld [vmem:[%s3387 + $0xe8] sm:$0xff]
        %v3418 = vld [vmem:[%s3387 + $0xf0] sm:$0xff]
        %v3419 = vld [vmem:[%s3387 + $0xf8] sm:$0xff]
        %v3420 = vld [vmem:[%s3387 + $0x100] sm:$0xff]
        %v3421 = vpack.c.b16 %v3366, %v870
        %v3422 = vpack.c.b16 %v3367, %v870
        %v3423 = vpack.c.b16 %v3368, %v870
        %v3424 = vpack.c.b16 %v3372, %v3369
        %v3425 = vpack.c.b16 %v3373, %v3370
        %v3426 = vpack.c.b16 %v3374, %v3371
        %v3427 = vpack.c.b16 %v3378, %v3375
        %v3428 = vpack.c.b16 %v3379, %v3376
        %v3429 = vpack.c.b16 %v3380, %v3377
        %v3430 = vpack.c.b16 %v3384, %v3381
        %v3431 = vpack.c.b16 %v3385, %v3382
        %v3432 = vpack.c.b16 %v3386, %v3383
        %v3474 = vunpack.c.l.b16 %v3388
        %v3475 = vunpack.c.h.b16 %v3388
        %v3476 = vunpack.c.l.b16 %v3389
        %v3477 = vunpack.c.h.b16 %v3389
        %v3478 = vunpack.c.l.b16 %v3390
        %v3479 = vunpack.c.h.b16 %v3390
        %v3480 = vunpack.c.l.b16 %v3391
        %v3481 = vunpack.c.h.b16 %v3391
        %v3482 = vunpack.c.l.b16 %v3392
        %v3483 = vunpack.c.h.b16 %v3392
        %v3484 = vunpack.c.l.b16 %v3393
        %v3485 = vunpack.c.h.b16 %v3393
        %v3486 = vunpack.c.l.b16 %v3394
        %v3487 = vunpack.c.h.b16 %v3394
        %v3488 = vunpack.c.l.b16 %v3395
        %v3489 = vunpack.c.h.b16 %v3395
        %v3490 = vunpack.c.l.b16 %v3396
        %v3491 = vunpack.c.h.b16 %v3396
        %v3492 = vunpack.c.l.b16 %v3397
        %v3493 = vunpack.c.h.b16 %v3397
        %v3494 = vunpack.c.l.b16 %v3398
        %v3495 = vunpack.c.h.b16 %v3398
        %v3496 = vunpack.c.l.b16 %v3399
        %v3497 = vunpack.c.h.b16 %v3399
        %v3498 = vunpack.c.l.b16 %v3400
        %v3499 = vunpack.c.h.b16 %v3400
        %v3500 = vunpack.c.l.b16 %v3401
        %v3501 = vunpack.c.h.b16 %v3401
        %v3502 = vunpack.c.l.b16 %v3402
        %v3503 = vunpack.c.h.b16 %v3402
        %v3504 = vunpack.c.l.b16 %v3403
        %v3505 = vunpack.c.h.b16 %v3403
        %v3506 = vunpack.c.l.b16 %v3404
        %v3507 = vunpack.c.h.b16 %v3404
        %v3508 = vunpack.c.l.b16 %v3405
        %v3509 = vunpack.c.h.b16 %v3405
        %v3510 = vunpack.c.l.b16 %v3406
        %v3511 = vunpack.c.h.b16 %v3406
        %v3512 = vunpack.c.l.b16 %v3407
        %v3513 = vunpack.c.h.b16 %v3407
        %v3514 = vunpack.c.l.b16 %v3408
        %v3515 = vunpack.c.h.b16 %v3408
        %v3516 = vunpack.c.l.b16 %v3409
        %v3517 = vunpack.c.h.b16 %v3409
        %v3518 = vunpack.c.l.b16 %v3410
        %v3519 = vunpack.c.h.b16 %v3410
        %v3520 = vunpack.c.l.b16 %v3411
        %v3521 = vunpack.c.h.b16 %v3411
        %v3522 = vunpack.c.l.b16 %v3412
        %v3523 = vunpack.c.h.b16 %v3412
        %v3524 = vunpack.c.l.b16 %v3413
        %v3525 = vunpack.c.h.b16 %v3413
        %v3526 = vunpack.c.l.b16 %v3414
        %v3527 = vunpack.c.h.b16 %v3414
        %v3528 = vunpack.c.l.b16 %v3415
        %v3529 = vunpack.c.h.b16 %v3415
        %v3530 = vunpack.c.l.b16 %v3416
        %v3531 = vunpack.c.h.b16 %v3416
        %v3532 = vunpack.c.l.b16 %v3417
        %v3533 = vunpack.c.h.b16 %v3417
        %v3534 = vunpack.c.l.b16 %v3418
        %v3535 = vunpack.c.h.b16 %v3418
        %v3536 = vunpack.c.l.b16 %v3419
        %v3537 = vunpack.c.h.b16 %v3419
        %v3538 = vunpack.c.l.b16 %v3420
        %v3539 = vunpack.c.h.b16 %v3420
        %v3540 = vpack.c.b16 %v3476, %v3474
        %v3541 = vpack.c.b16 %v3477, %v3475
        %v3542 = vpack.c.b16 %v3480, %v3478
        %v3543 = vpack.c.b16 %v3481, %v3479
        %v3544 = vpack.c.b16 %v3484, %v3482
        %v3545 = vpack.c.b16 %v3485, %v3483
        %v3546 = vpack.c.b16 %v3488, %v3486
        %v3547 = vpack.c.b16 %v3489, %v3487
        %v3548 = vpack.c.b16 %v3492, %v3490
        %v3549 = vpack.c.b16 %v3493, %v3491
        %v3550 = vpack.c.b16 %v3496, %v3494
        %v3551 = vpack.c.b16 %v3497, %v3495
        %v3552 = vpack.c.b16 %v3500, %v3498
        %v3553 = vpack.c.b16 %v3501, %v3499
        %v3554 = vpack.c.b16 %v3504, %v3502
        %v3555 = vpack.c.b16 %v3505, %v3503
        %v3556 = vpack.c.b16 %v3508, %v3506
        %v3557 = vpack.c.b16 %v3509, %v3507
        %v3558 = vpack.c.b16 %v3512, %v3510
        %v3559 = vpack.c.b16 %v3513, %v3511
        %v3560 = vpack.c.b16 %v3516, %v3514
        %v3561 = vpack.c.b16 %v3517, %v3515
        %v3562 = vpack.c.b16 %v3520, %v3518
        %v3563 = vpack.c.b16 %v3521, %v3519
        %v3564 = vpack.c.b16 %v3524, %v3522
        %v3565 = vpack.c.b16 %v3525, %v3523
        %v3566 = vpack.c.b16 %v3528, %v3526
        %v3567 = vpack.c.b16 %v3529, %v3527
        %v3568 = vpack.c.b16 %v3532, %v3530
        %v3569 = vpack.c.b16 %v3533, %v3531
        %v3570 = vpack.c.b16 %v3536, %v3534
        %v3571 = vpack.c.b16 %v3537, %v3535
        %v3572 = vpack.c.b16 %v3538, %v3538
        %v3573 = vpack.c.b16 %v3539, %v3539
        %v3607 = vsel %vm1110, %v3423, 0
        %v3610 = vsel %vm1110, %v3426, 0
        %v3613 = vsel %vm1110, %v3429, 0
        %v3616 = vsel %vm1110, %v3432, 0
        %v3619 = vsel %vm1123, %v3572, 0
        %v3622 = vsel %vm1123, %v3573, 0
        %3624 = vmatprep.subr.bf16.mxu0 %v3541
        %3625 = vmatpush1.bf16.msra.mxu0 %v3540
        %3626 = vmatprep.subr.bf16.mxu0 %v3543
        %3627 = vmatpush1.bf16.msra.mxu0 %v3542
        %3628 = vmatprep.subr.bf16.mxu0 %v3545
        %3629 = vmatpush1.bf16.msra.mxu0 %v3544
        %3630 = vmatprep.subr.bf16.mxu0 %v3547
        %3631 = vmatpush1.bf16.msra.mxu0 %v3546
        %3632 = vmatprep.subr.bf16.mxu0 %v3549
        %3633 = vmatpush1.bf16.msra.mxu0 %v3548
        %3634 = vmatprep.subr.bf16.mxu0 %v3551
        %3635 = vmatpush1.bf16.msra.mxu0 %v3550
        %3636 = vmatprep.subr.bf16.mxu0 %v3553
        %3637 = vmatpush1.bf16.msra.mxu0 %v3552
        %3638 = vmatprep.subr.bf16.mxu0 %v3555
        %3639 = vmatpush1.bf16.msra.mxu0 %v3554
        %3640 = vmatprep.subr.bf16.mxu0 %v3557
        %3641 = vmatpush1.bf16.msra.mxu0 %v3556
        %3642 = vmatprep.subr.bf16.mxu0 %v3559
        %3643 = vmatpush1.bf16.msra.mxu0 %v3558
        %3644 = vmatprep.subr.bf16.mxu0 %v3561
        %3645 = vmatpush1.bf16.msra.mxu0 %v3560
        %3646 = vmatprep.subr.bf16.mxu0 %v3563
        %3647 = vmatpush1.bf16.msra.mxu0 %v3562
        %3648 = vmatprep.subr.bf16.mxu0 %v3565
        %3649 = vmatpush1.bf16.msra.mxu0 %v3564
        %3650 = vmatprep.subr.bf16.mxu0 %v3567
        %3651 = vmatpush1.bf16.msra.mxu0 %v3566
        %3652 = vmatprep.subr.bf16.mxu0 %v3569
        %3653 = vmatpush1.bf16.msra.mxu0 %v3568
        %3654 = vmatprep.subr.bf16.mxu0 %v3571
        %3655 = vmatpush1.bf16.msra.mxu0 %v3570
        %3656 = vmatprep.mubr.bf16.mxu0 %v3422
        %3657 = vmatmul.mubr.bf16.gmra.mrb[0].mxu0 %v3421
        %v3658 = vpop.f32.mrb[0].mxu0
        %v3659 = vadd.f32 0.0, %v3658
        %v3660 = vpop.f32.mrb[0].mxu0
        %v3661 = vadd.f32 0.0, %v3660
        %v3662 = vpop.f32.mrb[0].mxu0
        %v3663 = vadd.f32 0.0, %v3662
        %v3664 = vpop.f32.mrb[0].mxu0
        %v3665 = vadd.f32 0.0, %v3664
        %3666 = vmatprep.mubr.bf16.mxu0 %v3425
        %3667 = vmatmul.mubr.bf16.gmra.mrb[0].mxu0 %v3424
        %v3668 = vpop.f32.mrb[0].mxu0
        %v3669 = vadd.f32 0.0, %v3668
        %v3670 = vpop.f32.mrb[0].mxu0
        %v3671 = vadd.f32 0.0, %v3670
        %v3672 = vpop.f32.mrb[0].mxu0
        %v3673 = vadd.f32 0.0, %v3672
        %v3674 = vpop.f32.mrb[0].mxu0
        %v3675 = vadd.f32 0.0, %v3674
        %3676 = vmatprep.mubr.bf16.mxu0 %v3428
        %3677 = vmatmul.mubr.bf16.gmra.mrb[0].mxu0 %v3427
        %v3678 = vpop.f32.mrb[0].mxu0
        %v3679 = vadd.f32 0.0, %v3678
        %v3680 = vpop.f32.mrb[0].mxu0
        %v3681 = vadd.f32 0.0, %v3680
        %v3682 = vpop.f32.mrb[0].mxu0
        %v3683 = vadd.f32 0.0, %v3682
        %v3684 = vpop.f32.mrb[0].mxu0
        %v3685 = vadd.f32 0.0, %v3684
        %3686 = vmatprep.mubr.bf16.mxu0 %v3431
        %3687 = vmatmul.mubr.bf16.gmra.mrb[0].mxu0 %v3430
        %v3688 = vpop.f32.mrb[0].mxu0
        %v3689 = vadd.f32 0.0, %v3688
        %v3690 = vpop.f32.mrb[0].mxu0
        %v3691 = vadd.f32 0.0, %v3690
        %v3692 = vpop.f32.mrb[0].mxu0
        %v3693 = vadd.f32 0.0, %v3692
        %v3694 = vpop.f32.mrb[0].mxu0
        %v3695 = vadd.f32 0.0, %v3694
        %3696 = vdwg.mxu0
        %3697 = vmatprep.subr.bf16.mxu0 %v3622
        %3698 = vmatpush1.bf16.msra.mxu0 %v3619
        %3699 = vmatprep.subr.bf16.mxu0 0
        %3700 = vmatpush1.bf16.msra.mxu0 0
        %3701 = vmatprep.subr.bf16.mxu0 0
        %3702 = vmatpush1.bf16.msra.mxu0 0
        %3703 = vmatprep.subr.bf16.mxu0 0
        %3704 = vmatpush1.bf16.msra.mxu0 0
        %3705 = vmatprep.subr.bf16.mxu0 0
        %3706 = vmatpush1.bf16.msra.mxu0 0
        %3707 = vmatprep.subr.bf16.mxu0 0
        %3708 = vmatpush1.bf16.msra.mxu0 0
        %3709 = vmatprep.subr.bf16.mxu0 0
        %3710 = vmatpush1.bf16.msra.mxu0 0
        %3711 = vmatprep.subr.bf16.mxu0 0
        %3712 = vmatpush1.bf16.msra.mxu0 0
        %3713 = vmatprep.subr.bf16.mxu0 0
        %3714 = vmatpush1.bf16.msra.mxu0 0
        %3715 = vmatprep.subr.bf16.mxu0 0
        %3716 = vmatpush1.bf16.msra.mxu0 0
        %3717 = vmatprep.subr.bf16.mxu0 0
        %3718 = vmatpush1.bf16.msra.mxu0 0
        %3719 = vmatprep.subr.bf16.mxu0 0
        %3720 = vmatpush1.bf16.msra.mxu0 0
        %3721 = vmatprep.subr.bf16.mxu0 0
        %3722 = vmatpush1.bf16.msra.mxu0 0
        %3723 = vmatprep.subr.bf16.mxu0 0
        %3724 = vmatpush1.bf16.msra.mxu0 0
        %3725 = vmatprep.subr.bf16.mxu0 0
        %3726 = vmatpush1.bf16.msra.mxu0 0
        %3727 = vmatprep.subr.bf16.mxu0 0
        %3728 = vmatpush1.bf16.msra.mxu0 0
        %3729 = vmatprep.mubr.bf16.mxu0 0
        %3730 = vmatmul.mubr.bf16.gmra.mrb[0].mxu0 %v3607
        %v3731 = vpop.f32.mrb[0].mxu0
        %v3732 = vadd.f32 %v3659, %v3731
        %v3733 = vpop.f32.mrb[0].mxu0
        %v3734 = vadd.f32 %v3661, %v3733
        %v3735 = vpop.f32.mrb[0].mxu0
        %v3736 = vadd.f32 %v3663, %v3735
        %v3737 = vpop.f32.mrb[0].mxu0
        %v3738 = vadd.f32 %v3665, %v3737
        %3739 = vmatprep.mubr.bf16.mxu0 0
        %3740 = vmatmul.mubr.bf16.gmra.mrb[0].mxu0 %v3610
        %v3741 = vpop.f32.mrb[0].mxu0
        %v3742 = vadd.f32 %v3669, %v3741
        %v3743 = vpop.f32.mrb[0].mxu0
        %v3744 = vadd.f32 %v3671, %v3743
        %v3745 = vpop.f32.mrb[0].mxu0
        %v3746 = vadd.f32 %v3673, %v3745
        %v3747 = vpop.f32.mrb[0].mxu0
        %v3748 = vadd.f32 %v3675, %v3747
        %3749 = vmatprep.mubr.bf16.mxu0 0
        %3750 = vmatmul.mubr.bf16.gmra.mrb[0].mxu0 %v3613
        %v3751 = vpop.f32.mrb[0].mxu0
        %v3752 = vadd.f32 %v3679, %v3751
        %v3753 = vpop.f32.mrb[0].mxu0
        %v3754 = vadd.f32 %v3681, %v3753
        %v3755 = vpop.f32.mrb[0].mxu0
        %v3756 = vadd.f32 %v3683, %v3755
        %v3757 = vpop.f32.mrb[0].mxu0
        %v3758 = vadd.f32 %v3685, %v3757
        %3759 = vmatprep.mubr.bf16.mxu0 0
        %3760 = vmatmul.mubr.bf16.gmra.mrb[0].mxu0 %v3616
        %v3761 = vpop.f32.mrb[0].mxu0
        %v3762 = vadd.f32 %v3689, %v3761
        %v3763 = vpop.f32.mrb[0].mxu0
        %v3764 = vadd.f32 %v3691, %v3763
        %v3765 = vpop.f32.mrb[0].mxu0
        %v3766 = vadd.f32 %v3693, %v3765
        %v3767 = vpop.f32.mrb[0].mxu0
        %v3768 = vadd.f32 %v3695, %v3767
        %3769 = vdwg.mxu0
        %v3770 = vadd.f32 %v3230, %v3732
        %v3771 = vadd.f32 %v3231, %v3734
        %v3772 = vadd.f32 %v3232, %v3736
        %v3773 = vadd.f32 %v3233, %v3738
        %v3774 = vadd.f32 %v3234, %v3742
        %v3775 = vadd.f32 %v3235, %v3744
        %v3776 = vadd.f32 %v3236, %v3746
        %v3777 = vadd.f32 %v3237, %v3748
        %v3778 = vadd.f32 %v3238, %v3752
        %v3779 = vadd.f32 %v3239, %v3754
        %v3780 = vadd.f32 %v3240, %v3756
        %v3781 = vadd.f32 %v3241, %v3758
        %v3782 = vadd.f32 %v3242, %v3762
        %v3783 = vadd.f32 %v3243, %v3764
        %v3784 = vadd.f32 %v3244, %v3766
        %v3785 = vadd.f32 %v3245, %v3768
        %v3789 = vunpack.c.l.b16 %v3342
        %v3790 = vunpack.c.l.b16 %v3343
        %v3791 = vunpack.c.l.b16 %v3344
        %s3792 = scalar_lea.vmem [#allocation5], 1320
        %v3793 = vld [vmem:[%s3792] sm:$0xff]
        %v3794 = vld [vmem:[%s3792 + $0x8] sm:$0xff]
        %v3795 = vld [vmem:[%s3792 + $0x10] sm:$0xff]
        %v3796 = vld [vmem:[%s3792 + $0x18] sm:$0xff]
        %v3797 = vld [vmem:[%s3792 + $0x20] sm:$0xff]
        %v3798 = vld [vmem:[%s3792 + $0x28] sm:$0xff]
        %v3799 = vld [vmem:[%s3792 + $0x30] sm:$0xff]
        %v3800 = vld [vmem:[%s3792 + $0x38] sm:$0xff]
        %v3801 = vld [vmem:[%s3792 + $0x40] sm:$0xff]
        %v3802 = vld [vmem:[%s3792 + $0x48] sm:$0xff]
        %v3803 = vld [vmem:[%s3792 + $0x50] sm:$0xff]
        %v3804 = vld [vmem:[%s3792 + $0x58] sm:$0xff]
        %v3805 = vld [vmem:[%s3792 + $0x60] sm:$0xff]
        %v3806 = vld [vmem:[%s3792 + $0x68] sm:$0xff]
        %v3807 = vld [vmem:[%s3792 + $0x70] sm:$0xff]
        %v3808 = vld [vmem:[%s3792 + $0x78] sm:$0xff]
        %v3809 = vld [vmem:[%s3792 + $0x80] sm:$0xff]
        %v3810 = vld [vmem:[%s3792 + $0x88] sm:$0xff]
        %v3811 = vld [vmem:[%s3792 + $0x90] sm:$0xff]
        %v3812 = vld [vmem:[%s3792 + $0x98] sm:$0xff]
        %v3813 = vld [vmem:[%s3792 + $0xa0] sm:$0xff]
        %v3814 = vld [vmem:[%s3792 + $0xa8] sm:$0xff]
        %v3815 = vld [vmem:[%s3792 + $0xb0] sm:$0xff]
        %v3816 = vld [vmem:[%s3792 + $0xb8] sm:$0xff]
        %v3817 = vld [vmem:[%s3792 + $0xc0] sm:$0xff]
        %v3818 = vld [vmem:[%s3792 + $0xc8] sm:$0xff]
        %v3819 = vld [vmem:[%s3792 + $0xd0] sm:$0xff]
        %v3820 = vld [vmem:[%s3792 + $0xd8] sm:$0xff]
        %v3821 = vld [vmem:[%s3792 + $0xe0] sm:$0xff]
        %v3822 = vld [vmem:[%s3792 + $0xe8] sm:$0xff]
        %v3823 = vld [vmem:[%s3792 + $0xf0] sm:$0xff]
        %v3824 = vld [vmem:[%s3792 + $0xf8] sm:$0xff]
        %v3825 = vld [vmem:[%s3792 + $0x100] sm:$0xff]
        %v3826 = vpack.c.b16 %v3369, %v3366
        %v3827 = vpack.c.b16 %v3370, %v3367
        %v3828 = vpack.c.b16 %v3371, %v3368
        %v3829 = vpack.c.b16 %v3375, %v3372
        %v3830 = vpack.c.b16 %v3376, %v3373
        %v3831 = vpack.c.b16 %v3377, %v3374
        %v3832 = vpack.c.b16 %v3381, %v3378
        %v3833 = vpack.c.b16 %v3382, %v3379
        %v3834 = vpack.c.b16 %v3383, %v3380
        %v3835 = vpack.c.b16 %v3789, %v3384
        %v3836 = vpack.c.b16 %v3790, %v3385
        %v3837 = vpack.c.b16 %v3791, %v3386
        %v3879 = vunpack.c.l.b16 %v3793
        %v3880 = vunpack.c.h.b16 %v3793
        %v3881 = vunpack.c.l.b16 %v3794
        %v3882 = vunpack.c.h.b16 %v3794
        %v3883 = vunpack.c.l.b16 %v3795
        %v3884 = vunpack.c.h.b16 %v3795
        %v3885 = vunpack.c.l.b16 %v3796
        %v3886 = vunpack.c.h.b16 %v3796
        %v3887 = vunpack.c.l.b16 %v3797
        %v3888 = vunpack.c.h.b16 %v3797
        %v3889 = vunpack.c.l.b16 %v3798
        %v3890 = vunpack.c.h.b16 %v3798
        %v3891 = vunpack.c.l.b16 %v3799
        %v3892 = vunpack.c.h.b16 %v3799
        %v3893 = vunpack.c.l.b16 %v3800
        %v3894 = vunpack.c.h.b16 %v3800
        %v3895 = vunpack.c.l.b16 %v3801
        %v3896 = vunpack.c.h.b16 %v3801
        %v3897 = vunpack.c.l.b16 %v3802
        %v3898 = vunpack.c.h.b16 %v3802
        %v3899 = vunpack.c.l.b16 %v3803
        %v3900 = vunpack.c.h.b16 %v3803
        %v3901 = vunpack.c.l.b16 %v3804
        %v3902 = vunpack.c.h.b16 %v3804
        %v3903 = vunpack.c.l.b16 %v3805
        %v3904 = vunpack.c.h.b16 %v3805
        %v3905 = vunpack.c.l.b16 %v3806
        %v3906 = vunpack.c.h.b16 %v3806
        %v3907 = vunpack.c.l.b16 %v3807
        %v3908 = vunpack.c.h.b16 %v3807
        %v3909 = vunpack.c.l.b16 %v3808
        %v3910 = vunpack.c.h.b16 %v3808
        %v3911 = vunpack.c.l.b16 %v3809
        %v3912 = vunpack.c.h.b16 %v3809
        %v3913 = vunpack.c.l.b16 %v3810
        %v3914 = vunpack.c.h.b16 %v3810
        %v3915 = vunpack.c.l.b16 %v3811
        %v3916 = vunpack.c.h.b16 %v3811
        %v3917 = vunpack.c.l.b16 %v3812
        %v3918 = vunpack.c.h.b16 %v3812
        %v3919 = vunpack.c.l.b16 %v3813
        %v3920 = vunpack.c.h.b16 %v3813
        %v3921 = vunpack.c.l.b16 %v3814
        %v3922 = vunpack.c.h.b16 %v3814
        %v3923 = vunpack.c.l.b16 %v3815
        %v3924 = vunpack.c.h.b16 %v3815
        %v3925 = vunpack.c.l.b16 %v3816
        %v3926 = vunpack.c.h.b16 %v3816
        %v3927 = vunpack.c.l.b16 %v3817
        %v3928 = vunpack.c.h.b16 %v3817
        %v3929 = vunpack.c.l.b16 %v3818
        %v3930 = vunpack.c.h.b16 %v3818
        %v3931 = vunpack.c.l.b16 %v3819
        %v3932 = vunpack.c.h.b16 %v3819
        %v3933 = vunpack.c.l.b16 %v3820
        %v3934 = vunpack.c.h.b16 %v3820
        %v3935 = vunpack.c.l.b16 %v3821
        %v3936 = vunpack.c.h.b16 %v3821
        %v3937 = vunpack.c.l.b16 %v3822
        %v3938 = vunpack.c.h.b16 %v3822
        %v3939 = vunpack.c.l.b16 %v3823
        %v3940 = vunpack.c.h.b16 %v3823
        %v3941 = vunpack.c.l.b16 %v3824
        %v3942 = vunpack.c.h.b16 %v3824
        %v3943 = vunpack.c.l.b16 %v3825
        %v3944 = vunpack.c.h.b16 %v3825
        %v3945 = vpack.c.b16 %v3881, %v3879
        %v3946 = vpack.c.b16 %v3882, %v3880
        %v3947 = vpack.c.b16 %v3885, %v3883
        %v3948 = vpack.c.b16 %v3886, %v3884
        %v3949 = vpack.c.b16 %v3889, %v3887
        %v3950 = vpack.c.b16 %v3890, %v3888
        %v3951 = vpack.c.b16 %v3893, %v3891
        %v3952 = vpack.c.b16 %v3894, %v3892
        %v3953 = vpack.c.b16 %v3897, %v3895
        %v3954 = vpack.c.b16 %v3898, %v3896
        %v3955 = vpack.c.b16 %v3901, %v3899
        %v3956 = vpack.c.b16 %v3902, %v3900
        %v3957 = vpack.c.b16 %v3905, %v3903
        %v3958 = vpack.c.b16 %v3906, %v3904
        %v3959 = vpack.c.b16 %v3909, %v3907
        %v3960 = vpack.c.b16 %v3910, %v3908
        %v3961 = vpack.c.b16 %v3913, %v3911
        %v3962 = vpack.c.b16 %v3914, %v3912
        %v3963 = vpack.c.b16 %v3917, %v3915
        %v3964 = vpack.c.b16 %v3918, %v3916
        %v3965 = vpack.c.b16 %v3921, %v3919
        %v3966 = vpack.c.b16 %v3922, %v3920
        %v3967 = vpack.c.b16 %v3925, %v3923
        %v3968 = vpack.c.b16 %v3926, %v3924
        %v3969 = vpack.c.b16 %v3929, %v3927
        %v3970 = vpack.c.b16 %v3930, %v3928
        %v3971 = vpack.c.b16 %v3933, %v3931
        %v3972 = vpack.c.b16 %v3934, %v3932
        %v3973 = vpack.c.b16 %v3937, %v3935
        %v3974 = vpack.c.b16 %v3938, %v3936
        %v3975 = vpack.c.b16 %v3941, %v3939
        %v3976 = vpack.c.b16 %v3942, %v3940
        %v3977 = vpack.c.b16 %v3943, %v3943
        %v3978 = vpack.c.b16 %v3944, %v3944
        %v4012 = vsel %vm1110, %v3828, 0
        %v4015 = vsel %vm1110, %v3831, 0
        %v4018 = vsel %vm1110, %v3834, 0
        %v4021 = vsel %vm1110, %v3837, 0
        %v4024 = vsel %vm1123, %v3977, 0
        %v4027 = vsel %vm1123, %v3978, 0
        %4029 = vmatprep.subr.bf16.mxu0 %v3946
        %4030 = vmatpush1.bf16.msra.mxu0 %v3945
        %4031 = vmatprep.subr.bf16.mxu0 %v3948
        %4032 = vmatpush1.bf16.msra.mxu0 %v3947
        %4033 = vmatprep.subr.bf16.mxu0 %v3950
        %4034 = vmatpush1.bf16.msra.mxu0 %v3949
        %4035 = vmatprep.subr.bf16.mxu0 %v3952
        %4036 = vmatpush1.bf16.msra.mxu0 %v3951
        %4037 = vmatprep.subr.bf16.mxu0 %v3954
        %4038 = vmatpush1.bf16.msra.mxu0 %v3953
        %4039 = vmatprep.subr.bf16.mxu0 %v3956
        %4040 = vmatpush1.bf16.msra.mxu0 %v3955
        %4041 = vmatprep.subr.bf16.mxu0 %v3958
        %4042 = vmatpush1.bf16.msra.mxu0 %v3957
        %4043 = vmatprep.subr.bf16.mxu0 %v3960
        %4044 = vmatpush1.bf16.msra.mxu0 %v3959
        %4045 = vmatprep.subr.bf16.mxu0 %v3962
        %4046 = vmatpush1.bf16.msra.mxu0 %v3961
        %4047 = vmatprep.subr.bf16.mxu0 %v3964
        %4048 = vmatpush1.bf16.msra.mxu0 %v3963
        %4049 = vmatprep.subr.bf16.mxu0 %v3966
        %4050 = vmatpush1.bf16.msra.mxu0 %v3965
        %4051 = vmatprep.subr.bf16.mxu0 %v3968
        %4052 = vmatpush1.bf16.msra.mxu0 %v3967
        %4053 = vmatprep.subr.bf16.mxu0 %v3970
        %4054 = vmatpush1.bf16.msra.mxu0 %v3969
        %4055 = vmatprep.subr.bf16.mxu0 %v3972
        %4056 = vmatpush1.bf16.msra.mxu0 %v3971
        %4057 = vmatprep.subr.bf16.mxu0 %v3974
        %4058 = vmatpush1.bf16.msra.mxu0 %v3973
        %4059 = vmatprep.subr.bf16.mxu0 %v3976
        %4060 = vmatpush1.bf16.msra.mxu0 %v3975
        %4061 = vmatprep.mubr.bf16.mxu0 %v3827
        %4062 = vmatmul.mubr.bf16.gmra.mrb[0].mxu0 %v3826
        %v4063 = vpop.f32.mrb[0].mxu0
        %v4064 = vadd.f32 0.0, %v4063
        %v4065 = vpop.f32.mrb[0].mxu0
        %v4066 = vadd.f32 0.0, %v4065
        %v4067 = vpop.f32.mrb[0].mxu0
        %v4068 = vadd.f32 0.0, %v4067
        %v4069 = vpop.f32.mrb[0].mxu0
        %v4070 = vadd.f32 0.0, %v4069
        %4071 = vmatprep.mubr.bf16.mxu0 %v3830
        %4072 = vmatmul.mubr.bf16.gmra.mrb[0].mxu0 %v3829
        %v4073 = vpop.f32.mrb[0].mxu0
        %v4074 = vadd.f32 0.0, %v4073
        %v4075 = vpop.f32.mrb[0].mxu0
        %v4076 = vadd.f32 0.0, %v4075
        %v4077 = vpop.f32.mrb[0].mxu0
        %v4078 = vadd.f32 0.0, %v4077
        %v4079 = vpop.f32.mrb[0].mxu0
        %v4080 = vadd.f32 0.0, %v4079
        %4081 = vmatprep.mubr.bf16.mxu0 %v3833
        %4082 = vmatmul.mubr.bf16.gmra.mrb[0].mxu0 %v3832
        %v4083 = vpop.f32.mrb[0].mxu0
        %v4084 = vadd.f32 0.0, %v4083
        %v4085 = vpop.f32.mrb[0].mxu0
        %v4086 = vadd.f32 0.0, %v4085
        %v4087 = vpop.f32.mrb[0].mxu0
        %v4088 = vadd.f32 0.0, %v4087
        %v4089 = vpop.f32.mrb[0].mxu0
        %v4090 = vadd.f32 0.0, %v4089
        %4091 = vmatprep.mubr.bf16.mxu0 %v3836
        %4092 = vmatmul.mubr.bf16.gmra.mrb[0].mxu0 %v3835
        %v4093 = vpop.f32.mrb[0].mxu0
        %v4094 = vadd.f32 0.0, %v4093
        %v4095 = vpop.f32.mrb[0].mxu0
        %v4096 = vadd.f32 0.0, %v4095
        %v4097 = vpop.f32.mrb[0].mxu0
        %v4098 = vadd.f32 0.0, %v4097
        %v4099 = vpop.f32.mrb[0].mxu0
        %v4100 = vadd.f32 0.0, %v4099
        %4101 = vdwg.mxu0
        %4102 = vmatprep.subr.bf16.mxu0 %v4027
        %4103 = vmatpush1.bf16.msra.mxu0 %v4024
        %4104 = vmatprep.subr.bf16.mxu0 0
        %4105 = vmatpush1.bf16.msra.mxu0 0
        %4106 = vmatprep.subr.bf16.mxu0 0
        %4107 = vmatpush1.bf16.msra.mxu0 0
        %4108 = vmatprep.subr.bf16.mxu0 0
        %4109 = vmatpush1.bf16.msra.mxu0 0
        %4110 = vmatprep.subr.bf16.mxu0 0
        %4111 = vmatpush1.bf16.msra.mxu0 0
        %4112 = vmatprep.subr.bf16.mxu0 0
        %4113 = vmatpush1.bf16.msra.mxu0 0
        %4114 = vmatprep.subr.bf16.mxu0 0
        %4115 = vmatpush1.bf16.msra.mxu0 0
        %4116 = vmatprep.subr.bf16.mxu0 0
        %4117 = vmatpush1.bf16.msra.mxu0 0
        %4118 = vmatprep.subr.bf16.mxu0 0
        %4119 = vmatpush1.bf16.msra.mxu0 0
        %4120 = vmatprep.subr.bf16.mxu0 0
        %4121 = vmatpush1.bf16.msra.mxu0 0
        %4122 = vmatprep.subr.bf16.mxu0 0
        %4123 = vmatpush1.bf16.msra.mxu0 0
        %4124 = vmatprep.subr.bf16.mxu0 0
        %4125 = vmatpush1.bf16.msra.mxu0 0
        %4126 = vmatprep.subr.bf16.mxu0 0
        %4127 = vmatpush1.bf16.msra.mxu0 0
        %4128 = vmatprep.subr.bf16.mxu0 0
        %4129 = vmatpush1.bf16.msra.mxu0 0
        %4130 = vmatprep.subr.bf16.mxu0 0
        %4131 = vmatpush1.bf16.msra.mxu0 0
        %4132 = vmatprep.subr.bf16.mxu0 0
        %4133 = vmatpush1.bf16.msra.mxu0 0
        %4134 = vmatprep.mubr.bf16.mxu0 0
        %4135 = vmatmul.mubr.bf16.gmra.mrb[0].mxu0 %v4012
        %v4136 = vpop.f32.mrb[0].mxu0
        %v4137 = vadd.f32 %v4064, %v4136
        %v4138 = vpop.f32.mrb[0].mxu0
        %v4139 = vadd.f32 %v4066, %v4138
        %v4140 = vpop.f32.mrb[0].mxu0
        %v4141 = vadd.f32 %v4068, %v4140
        %v4142 = vpop.f32.mrb[0].mxu0
        %v4143 = vadd.f32 %v4070, %v4142
        %4144 = vmatprep.mubr.bf16.mxu0 0
        %4145 = vmatmul.mubr.bf16.gmra.mrb[0].mxu0 %v4015
        %v4146 = vpop.f32.mrb[0].mxu0
        %v4147 = vadd.f32 %v4074, %v4146
        %v4148 = vpop.f32.mrb[0].mxu0
        %v4149 = vadd.f32 %v4076, %v4148
        %v4150 = vpop.f32.mrb[0].mxu0
        %v4151 = vadd.f32 %v4078, %v4150
        %v4152 = vpop.f32.mrb[0].mxu0
        %v4153 = vadd.f32 %v4080, %v4152
        %4154 = vmatprep.mubr.bf16.mxu0 0
        %4155 = vmatmul.mubr.bf16.gmra.mrb[0].mxu0 %v4018
        %v4156 = vpop.f32.mrb[0].mxu0
        %v4157 = vadd.f32 %v4084, %v4156
        %v4158 = vpop.f32.mrb[0].mxu0
        %v4159 = vadd.f32 %v4086, %v4158
        %v4160 = vpop.f32.mrb[0].mxu0
        %v4161 = vadd.f32 %v4088, %v4160
        %v4162 = vpop.f32.mrb[0].mxu0
        %v4163 = vadd.f32 %v4090, %v4162
        %4164 = vmatprep.mubr.bf16.mxu0 0
        %4165 = vmatmul.mubr.bf16.gmra.mrb[0].mxu0 %v4021
        %v4166 = vpop.f32.mrb[0].mxu0
        %v4167 = vadd.f32 %v4094, %v4166
        %v4168 = vpop.f32.mrb[0].mxu0
        %v4169 = vadd.f32 %v4096, %v4168
        %v4170 = vpop.f32.mrb[0].mxu0
        %v4171 = vadd.f32 %v4098, %v4170
        %v4172 = vpop.f32.mrb[0].mxu0
        %v4173 = vadd.f32 %v4100, %v4172
        %4174 = vdwg.mxu0
        %v4175 = vadd.f32 %v3770, %v4137
        %v4176 = vadd.f32 %v3771, %v4139
        %v4177 = vadd.f32 %v3772, %v4141
        %v4178 = vadd.f32 %v3773, %v4143
        %v4179 = vadd.f32 %v3774, %v4147
        %v4180 = vadd.f32 %v3775, %v4149
        %v4181 = vadd.f32 %v3776, %v4151
        %v4182 = vadd.f32 %v3777, %v4153
        %v4183 = vadd.f32 %v3778, %v4157
        %v4184 = vadd.f32 %v3779, %v4159
        %v4185 = vadd.f32 %v3780, %v4161
        %v4186 = vadd.f32 %v3781, %v4163
        %v4187 = vadd.f32 %v3782, %v4167
        %v4188 = vadd.f32 %v3783, %v4169
        %v4189 = vadd.f32 %v3784, %v4171
        %v4190 = vadd.f32 %v3785, %v4173
        %s4191 = scalar_lea.vmem [#allocation5], 2112
        %v4192 = vld [vmem:[%s4191] sm:$0xff]
        %v4193 = vld [vmem:[%s4191 + $0x8] sm:$0xff]
        %v4194 = vld [vmem:[%s4191 + $0x10] sm:$0xff]
        %v4195 = vld [vmem:[%s4191 + $0x18] sm:$0xff]
        %v4196 = vld [vmem:[%s4191 + $0x20] sm:$0xff]
        %v4197 = vld [vmem:[%s4191 + $0x28] sm:$0xff]
        %v4198 = vld [vmem:[%s4191 + $0x30] sm:$0xff]
        %v4199 = vld [vmem:[%s4191 + $0x38] sm:$0xff]
        %v4200 = vld [vmem:[%s4191 + $0x40] sm:$0xff]
        %v4201 = vld [vmem:[%s4191 + $0x48] sm:$0xff]
        %v4202 = vld [vmem:[%s4191 + $0x50] sm:$0xff]
        %v4203 = vld [vmem:[%s4191 + $0x58] sm:$0xff]
        %v4204 = vld [vmem:[%s4191 + $0x60] sm:$0xff]
        %v4205 = vld [vmem:[%s4191 + $0x68] sm:$0xff]
        %v4206 = vld [vmem:[%s4191 + $0x70] sm:$0xff]
        %v4207 = vld [vmem:[%s4191 + $0x78] sm:$0xff]
        %v4208 = vld [vmem:[%s4191 + $0x80] sm:$0xff]
        %v4209 = vld [vmem:[%s4191 + $0x88] sm:$0xff]
        %v4210 = vld [vmem:[%s4191 + $0x90] sm:$0xff]
        %v4211 = vld [vmem:[%s4191 + $0x98] sm:$0xff]
        %v4212 = vld [vmem:[%s4191 + $0xa0] sm:$0xff]
        %v4213 = vld [vmem:[%s4191 + $0xa8] sm:$0xff]
        %v4214 = vld [vmem:[%s4191 + $0xb0] sm:$0xff]
        %v4215 = vld [vmem:[%s4191 + $0xb8] sm:$0xff]
        %v4216 = vld [vmem:[%s4191 + $0xc0] sm:$0xff]
        %v4217 = vld [vmem:[%s4191 + $0xc8] sm:$0xff]
        %v4218 = vld [vmem:[%s4191 + $0xd0] sm:$0xff]
        %v4219 = vld [vmem:[%s4191 + $0xd8] sm:$0xff]
        %v4220 = vld [vmem:[%s4191 + $0xe0] sm:$0xff]
        %v4221 = vld [vmem:[%s4191 + $0xe8] sm:$0xff]
        %v4222 = vld [vmem:[%s4191 + $0xf0] sm:$0xff]
        %v4223 = vld [vmem:[%s4191 + $0xf8] sm:$0xff]
        %v4224 = vld [vmem:[%s4191 + $0x100] sm:$0xff]
        %v4225 = vpack.c.b16 %v870, %v3789
        %v4226 = vpack.c.b16 %v870, %v3790
        %v4227 = vpack.c.b16 %v870, %v3791
        %v4263 = vunpack.c.l.b16 %v4192
        %v4264 = vunpack.c.h.b16 %v4192
        %v4265 = vunpack.c.l.b16 %v4193
        %v4266 = vunpack.c.h.b16 %v4193
        %v4267 = vunpack.c.l.b16 %v4194
        %v4268 = vunpack.c.h.b16 %v4194
        %v4269 = vunpack.c.l.b16 %v4195
        %v4270 = vunpack.c.h.b16 %v4195
        %v4271 = vunpack.c.l.b16 %v4196
        %v4272 = vunpack.c.h.b16 %v4196
        %v4273 = vunpack.c.l.b16 %v4197
        %v4274 = vunpack.c.h.b16 %v4197
        %v4275 = vunpack.c.l.b16 %v4198
        %v4276 = vunpack.c.h.b16 %v4198
        %v4277 = vunpack.c.l.b16 %v4199
        %v4278 = vunpack.c.h.b16 %v4199
        %v4279 = vunpack.c.l.b16 %v4200
        %v4280 = vunpack.c.h.b16 %v4200
        %v4281 = vunpack.c.l.b16 %v4201
        %v4282 = vunpack.c.h.b16 %v4201
        %v4283 = vunpack.c.l.b16 %v4202
        %v4284 = vunpack.c.h.b16 %v4202
        %v4285 = vunpack.c.l.b16 %v4203
        %v4286 = vunpack.c.h.b16 %v4203
        %v4287 = vunpack.c.l.b16 %v4204
        %v4288 = vunpack.c.h.b16 %v4204
        %v4289 = vunpack.c.l.b16 %v4205
        %v4290 = vunpack.c.h.b16 %v4205
        %v4291 = vunpack.c.l.b16 %v4206
        %v4292 = vunpack.c.h.b16 %v4206
        %v4293 = vunpack.c.l.b16 %v4207
        %v4294 = vunpack.c.h.b16 %v4207
        %v4295 = vunpack.c.l.b16 %v4208
        %v4296 = vunpack.c.h.b16 %v4208
        %v4297 = vunpack.c.l.b16 %v4209
        %v4298 = vunpack.c.h.b16 %v4209
        %v4299 = vunpack.c.l.b16 %v4210
        %v4300 = vunpack.c.h.b16 %v4210
        %v4301 = vunpack.c.l.b16 %v4211
        %v4302 = vunpack.c.h.b16 %v4211
        %v4303 = vunpack.c.l.b16 %v4212
        %v4304 = vunpack.c.h.b16 %v4212
        %v4305 = vunpack.c.l.b16 %v4213
        %v4306 = vunpack.c.h.b16 %v4213
        %v4307 = vunpack.c.l.b16 %v4214
        %v4308 = vunpack.c.h.b16 %v4214
        %v4309 = vunpack.c.l.b16 %v4215
        %v4310 = vunpack.c.h.b16 %v4215
        %v4311 = vunpack.c.l.b16 %v4216
        %v4312 = vunpack.c.h.b16 %v4216
        %v4313 = vunpack.c.l.b16 %v4217
        %v4314 = vunpack.c.h.b16 %v4217
        %v4315 = vunpack.c.l.b16 %v4218
        %v4316 = vunpack.c.h.b16 %v4218
        %v4317 = vunpack.c.l.b16 %v4219
        %v4318 = vunpack.c.h.b16 %v4219
        %v4319 = vunpack.c.l.b16 %v4220
        %v4320 = vunpack.c.h.b16 %v4220
        %v4321 = vunpack.c.l.b16 %v4221
        %v4322 = vunpack.c.h.b16 %v4221
        %v4323 = vunpack.c.l.b16 %v4222
        %v4324 = vunpack.c.h.b16 %v4222
        %v4325 = vunpack.c.l.b16 %v4223
        %v4326 = vunpack.c.h.b16 %v4223
        %v4327 = vunpack.c.l.b16 %v4224
        %v4328 = vunpack.c.h.b16 %v4224
        %v4329 = vpack.c.b16 %v4265, %v4263
        %v4330 = vpack.c.b16 %v4266, %v4264
        %v4331 = vpack.c.b16 %v4269, %v4267
        %v4332 = vpack.c.b16 %v4270, %v4268
        %v4333 = vpack.c.b16 %v4273, %v4271
        %v4334 = vpack.c.b16 %v4274, %v4272
        %v4335 = vpack.c.b16 %v4277, %v4275
        %v4336 = vpack.c.b16 %v4278, %v4276
        %v4337 = vpack.c.b16 %v4281, %v4279
        %v4338 = vpack.c.b16 %v4282, %v4280
        %v4339 = vpack.c.b16 %v4285, %v4283
        %v4340 = vpack.c.b16 %v4286, %v4284
        %v4341 = vpack.c.b16 %v4289, %v4287
        %v4342 = vpack.c.b16 %v4290, %v4288
        %v4343 = vpack.c.b16 %v4293, %v4291
        %v4344 = vpack.c.b16 %v4294, %v4292
        %v4345 = vpack.c.b16 %v4297, %v4295
        %v4346 = vpack.c.b16 %v4298, %v4296
        %v4347 = vpack.c.b16 %v4301, %v4299
        %v4348 = vpack.c.b16 %v4302, %v4300
        %v4349 = vpack.c.b16 %v4305, %v4303
        %v4350 = vpack.c.b16 %v4306, %v4304
        %v4351 = vpack.c.b16 %v4309, %v4307
        %v4352 = vpack.c.b16 %v4310, %v4308
        %v4353 = vpack.c.b16 %v4313, %v4311
        %v4354 = vpack.c.b16 %v4314, %v4312
        %v4355 = vpack.c.b16 %v4317, %v4315
        %v4356 = vpack.c.b16 %v4318, %v4316
        %v4357 = vpack.c.b16 %v4321, %v4319
        %v4358 = vpack.c.b16 %v4322, %v4320
        %v4359 = vpack.c.b16 %v4325, %v4323
        %v4360 = vpack.c.b16 %v4326, %v4324
        %v4361 = vpack.c.b16 %v4327, %v4327
        %v4362 = vpack.c.b16 %v4328, %v4328
        %v4396 = vsel %vm1110, %v4227, 0
        %v4399 = vsel %vm1123, %v4361, 0
        %v4402 = vsel %vm1123, %v4362, 0
        %4404 = vmatprep.subr.bf16.mxu0 %v4330
        %4405 = vmatpush1.bf16.msra.mxu0 %v4329
        %4406 = vmatprep.subr.bf16.mxu0 %v4332
        %4407 = vmatpush1.bf16.msra.mxu0 %v4331
        %4408 = vmatprep.subr.bf16.mxu0 %v4334
        %4409 = vmatpush1.bf16.msra.mxu0 %v4333
        %4410 = vmatprep.subr.bf16.mxu0 %v4336
        %4411 = vmatpush1.bf16.msra.mxu0 %v4335
        %4412 = vmatprep.subr.bf16.mxu0 %v4338
        %4413 = vmatpush1.bf16.msra.mxu0 %v4337
        %4414 = vmatprep.subr.bf16.mxu0 %v4340
        %4415 = vmatpush1.bf16.msra.mxu0 %v4339
        %4416 = vmatprep.subr.bf16.mxu0 %v4342
        %4417 = vmatpush1.bf16.msra.mxu0 %v4341
        %4418 = vmatprep.subr.bf16.mxu0 %v4344
        %4419 = vmatpush1.bf16.msra.mxu0 %v4343
        %4420 = vmatprep.subr.bf16.mxu0 %v4346
        %4421 = vmatpush1.bf16.msra.mxu0 %v4345
        %4422 = vmatprep.subr.bf16.mxu0 %v4348
        %4423 = vmatpush1.bf16.msra.mxu0 %v4347
        %4424 = vmatprep.subr.bf16.mxu0 %v4350
        %4425 = vmatpush1.bf16.msra.mxu0 %v4349
        %4426 = vmatprep.subr.bf16.mxu0 %v4352
        %4427 = vmatpush1.bf16.msra.mxu0 %v4351
        %4428 = vmatprep.subr.bf16.mxu0 %v4354
        %4429 = vmatpush1.bf16.msra.mxu0 %v4353
        %4430 = vmatprep.subr.bf16.mxu0 %v4356
        %4431 = vmatpush1.bf16.msra.mxu0 %v4355
        %4432 = vmatprep.subr.bf16.mxu0 %v4358
        %4433 = vmatpush1.bf16.msra.mxu0 %v4357
        %4434 = vmatprep.subr.bf16.mxu0 %v4360
        %4435 = vmatpush1.bf16.msra.mxu0 %v4359
        %4436 = vmatprep.mubr.bf16.mxu0 %v3425
        %4437 = vmatmul.mubr.bf16.gmra.mrb[0].mxu0 %v3424
        %v4438 = vpop.f32.mrb[0].mxu0
        %v4439 = vadd.f32 0.0, %v4438
        %v4440 = vpop.f32.mrb[0].mxu0
        %v4441 = vadd.f32 0.0, %v4440
        %v4442 = vpop.f32.mrb[0].mxu0
        %v4443 = vadd.f32 0.0, %v4442
        %v4444 = vpop.f32.mrb[0].mxu0
        %v4445 = vadd.f32 0.0, %v4444
        %4446 = vmatprep.mubr.bf16.mxu0 %v3428
        %4447 = vmatmul.mubr.bf16.gmra.mrb[0].mxu0 %v3427
        %v4448 = vpop.f32.mrb[0].mxu0
        %v4449 = vadd.f32 0.0, %v4448
        %v4450 = vpop.f32.mrb[0].mxu0
        %v4451 = vadd.f32 0.0, %v4450
        %v4452 = vpop.f32.mrb[0].mxu0
        %v4453 = vadd.f32 0.0, %v4452
        %v4454 = vpop.f32.mrb[0].mxu0
        %v4455 = vadd.f32 0.0, %v4454
        %4456 = vmatprep.mubr.bf16.mxu0 %v3431
        %4457 = vmatmul.mubr.bf16.gmra.mrb[0].mxu0 %v3430
        %v4458 = vpop.f32.mrb[0].mxu0
        %v4459 = vadd.f32 0.0, %v4458
        %v4460 = vpop.f32.mrb[0].mxu0
        %v4461 = vadd.f32 0.0, %v4460
        %v4462 = vpop.f32.mrb[0].mxu0
        %v4463 = vadd.f32 0.0, %v4462
        %v4464 = vpop.f32.mrb[0].mxu0
        %v4465 = vadd.f32 0.0, %v4464
        %4466 = vmatprep.mubr.bf16.mxu0 %v4226
        %4467 = vmatmul.mubr.bf16.gmra.mrb[0].mxu0 %v4225
        %v4468 = vpop.f32.mrb[0].mxu0
        %v4469 = vadd.f32 0.0, %v4468
        %v4470 = vpop.f32.mrb[0].mxu0
        %v4471 = vadd.f32 0.0, %v4470
        %v4472 = vpop.f32.mrb[0].mxu0
        %v4473 = vadd.f32 0.0, %v4472
        %v4474 = vpop.f32.mrb[0].mxu0
        %v4475 = vadd.f32 0.0, %v4474
        %4476 = vdwg.mxu0
        %4477 = vmatprep.subr.bf16.mxu0 %v4402
        %4478 = vmatpush1.bf16.msra.mxu0 %v4399
        %4479 = vmatprep.subr.bf16.mxu0 0
        %4480 = vmatpush1.bf16.msra.mxu0 0
        %4481 = vmatprep.subr.bf16.mxu0 0
        %4482 = vmatpush1.bf16.msra.mxu0 0
        %4483 = vmatprep.subr.bf16.mxu0 0
        %4484 = vmatpush1.bf16.msra.mxu0 0
        %4485 = vmatprep.subr.bf16.mxu0 0
        %4486 = vmatpush1.bf16.msra.mxu0 0
        %4487 = vmatprep.subr.bf16.mxu0 0
        %4488 = vmatpush1.bf16.msra.mxu0 0
        %4489 = vmatprep.subr.bf16.mxu0 0
        %4490 = vmatpush1.bf16.msra.mxu0 0
        %4491 = vmatprep.subr.bf16.mxu0 0
        %4492 = vmatpush1.bf16.msra.mxu0 0
        %4493 = vmatprep.subr.bf16.mxu0 0
        %4494 = vmatpush1.bf16.msra.mxu0 0
        %4495 = vmatprep.subr.bf16.mxu0 0
        %4496 = vmatpush1.bf16.msra.mxu0 0
        %4497 = vmatprep.subr.bf16.mxu0 0
        %4498 = vmatpush1.bf16.msra.mxu0 0
        %4499 = vmatprep.subr.bf16.mxu0 0
        %4500 = vmatpush1.bf16.msra.mxu0 0
        %4501 = vmatprep.subr.bf16.mxu0 0
        %4502 = vmatpush1.bf16.msra.mxu0 0
        %4503 = vmatprep.subr.bf16.mxu0 0
        %4504 = vmatpush1.bf16.msra.mxu0 0
        %4505 = vmatprep.subr.bf16.mxu0 0
        %4506 = vmatpush1.bf16.msra.mxu0 0
        %4507 = vmatprep.subr.bf16.mxu0 0
        %4508 = vmatpush1.bf16.msra.mxu0 0
        %4509 = vmatprep.mubr.bf16.mxu0 0
        %4510 = vmatmul.mubr.bf16.gmra.mrb[0].mxu0 %v3610
        %v4511 = vpop.f32.mrb[0].mxu0
        %v4512 = vadd.f32 %v4439, %v4511
        %v4513 = vpop.f32.mrb[0].mxu0
        %v4514 = vadd.f32 %v4441, %v4513
        %v4515 = vpop.f32.mrb[0].mxu0
        %v4516 = vadd.f32 %v4443, %v4515
        %v4517 = vpop.f32.mrb[0].mxu0
        %v4518 = vadd.f32 %v4445, %v4517
        %4519 = vmatprep.mubr.bf16.mxu0 0
        %4520 = vmatmul.mubr.bf16.gmra.mrb[0].mxu0 %v3613
        %v4521 = vpop.f32.mrb[0].mxu0
        %v4522 = vadd.f32 %v4449, %v4521
        %v4523 = vpop.f32.mrb[0].mxu0
        %v4524 = vadd.f32 %v4451, %v4523
        %v4525 = vpop.f32.mrb[0].mxu0
        %v4526 = vadd.f32 %v4453, %v4525
        %v4527 = vpop.f32.mrb[0].mxu0
        %v4528 = vadd.f32 %v4455, %v4527
        %4529 = vmatprep.mubr.bf16.mxu0 0
        %4530 = vmatmul.mubr.bf16.gmra.mrb[0].mxu0 %v3616
        %v4531 = vpop.f32.mrb[0].mxu0
        %v4532 = vadd.f32 %v4459, %v4531
        %v4533 = vpop.f32.mrb[0].mxu0
        %v4534 = vadd.f32 %v4461, %v4533
        %v4535 = vpop.f32.mrb[0].mxu0
        %v4536 = vadd.f32 %v4463, %v4535
        %v4537 = vpop.f32.mrb[0].mxu0
        %v4538 = vadd.f32 %v4465, %v4537
        %4539 = vmatprep.mubr.bf16.mxu0 0
        %4540 = vmatmul.mubr.bf16.gmra.mrb[0].mxu0 %v4396
        %v4541 = vpop.f32.mrb[0].mxu0
        %v4542 = vadd.f32 %v4469, %v4541
        %v4543 = vpop.f32.mrb[0].mxu0
        %v4544 = vadd.f32 %v4471, %v4543
        %v4545 = vpop.f32.mrb[0].mxu0
        %v4546 = vadd.f32 %v4473, %v4545
        %v4547 = vpop.f32.mrb[0].mxu0
        %v4548 = vadd.f32 %v4475, %v4547
        %4549 = vdwg.mxu0
        %v4550 = vadd.f32 %v4175, %v4512
        %v4551 = vadd.f32 %v4176, %v4514
        %v4552 = vadd.f32 %v4177, %v4516
        %v4553 = vadd.f32 %v4178, %v4518
        %v4554 = vadd.f32 %v4179, %v4522
        %v4555 = vadd.f32 %v4180, %v4524
        %v4556 = vadd.f32 %v4181, %v4526
        %v4557 = vadd.f32 %v4182, %v4528
        %v4558 = vadd.f32 %v4183, %v4532
        %v4559 = vadd.f32 %v4184, %v4534
        %v4560 = vadd.f32 %v4185, %v4536
        %v4561 = vadd.f32 %v4186, %v4538
        %v4562 = vadd.f32 %v4187, %v4542
        %v4563 = vadd.f32 %v4188, %v4544
        %v4564 = vadd.f32 %v4189, %v4546
        %v4565 = vadd.f32 %v4190, %v4548
        %v4566 = vmax.f32 %v4550, 0.0
        %v4567 = vmax.f32 %v4551, 0.0
        %v4568 = vmax.f32 %v4552, 0.0
        %v4569 = vmax.f32 %v4553, 0.0
        %v4570 = vmax.f32 %v4554, 0.0
        %v4571 = vmax.f32 %v4555, 0.0
        %v4572 = vmax.f32 %v4556, 0.0
        %v4573 = vmax.f32 %v4557, 0.0
        %v4574 = vmax.f32 %v4558, 0.0
        %v4575 = vmax.f32 %v4559, 0.0
        %v4576 = vmax.f32 %v4560, 0.0
        %v4577 = vmax.f32 %v4561, 0.0
        %v4578 = vmax.f32 %v4562, 0.0
        %v4579 = vmax.f32 %v4563, 0.0
        %v4580 = vmax.f32 %v4564, 0.0
        %v4581 = vmax.f32 %v4565, 0.0
        %v4582 = vpack.c.bf16 %v4568, %v4566
        %v4583 = vpack.c.bf16 %v4569, %v4567
        %v4584 = vpack.c.bf16 %v4572, %v4570
        %v4585 = vpack.c.bf16 %v4573, %v4571
        %v4586 = vpack.c.bf16 %v4576, %v4574
        %v4587 = vpack.c.bf16 %v4577, %v4575
        %v4588 = vpack.c.bf16 %v4580, %v4578
        %v4589 = vpack.c.bf16 %v4581, %v4579
        %v4598 = vunpack.c.l.b16 %v4582
        %v4599 = vunpack.c.l.b16 %v4583
        %v4600 = vunpack.c.h.b16 %v4582
        %v4601 = vunpack.c.h.b16 %v4583
        %v4602 = vunpack.c.l.b16 %v4584
        %v4603 = vunpack.c.l.b16 %v4585
        %v4604 = vunpack.c.h.b16 %v4584
        %v4605 = vunpack.c.h.b16 %v4585
        %v4606 = vunpack.c.l.b16 %v4586
        %v4607 = vunpack.c.l.b16 %v4587
        %v4608 = vunpack.c.h.b16 %v4586
        %v4609 = vunpack.c.h.b16 %v4587
        %v4610 = vunpack.c.l.b16 %v4588
        %v4611 = vunpack.c.l.b16 %v4589
        %v4612 = vunpack.c.h.b16 %v4588
        %v4613 = vunpack.c.h.b16 %v4589
        %v4614 = vld [vmem:[#allocation10] sm:$0x1]
        %v4616 = vlaneseq
        %v4617 = vshrl.u32 %v4616, 7
        %v4618 = vsub.s32 0, %v4617
        %v4619 = vrot.slane %v4614, %v4618
        %v4621 = vpack.c.b16 %v4598, %v4598
        %v4622 = vpack.c.b16 %v4599, %v4599
        %v4623 = vpack.c.b16 %v4600, %v4600
        %v4624 = vpack.c.b16 %v4601, %v4601
        %v4625 = vpack.c.b16 %v4602, %v4602
        %v4626 = vpack.c.b16 %v4603, %v4603
        %v4627 = vpack.c.b16 %v4604, %v4604
        %v4628 = vpack.c.b16 %v4605, %v4605
        %v4629 = vpack.c.b16 %v4606, %v4606
        %v4630 = vpack.c.b16 %v4607, %v4607
        %v4631 = vpack.c.b16 %v4608, %v4608
        %v4632 = vpack.c.b16 %v4609, %v4609
        %v4633 = vpack.c.b16 %v4610, %v4610
        %v4634 = vpack.c.b16 %v4611, %v4611
        %v4635 = vpack.c.b16 %v4612, %v4612
        %v4636 = vpack.c.b16 %v4613, %v4613
        %v4638 = vshrl.u32 %v4621, 16
        %v4640 = vrot.slane %v4638, 7
        %v4641 = vshll.u32 %v4621, 16
        %v4643 = vor.u32 %v4640, %v4641
        %v4645 = vshrl.u32 %v4622, 16
        %v4647 = vrot.slane %v4645, 7
        %v4648 = vshll.u32 %v4622, 16
        %v4650 = vor.u32 %v4647, %v4648
        %v4652 = vshrl.u32 %v4623, 16
        %v4654 = vrot.slane %v4652, 7
        %v4655 = vshll.u32 %v4623, 16
        %v4657 = vor.u32 %v4654, %v4655
        %v4659 = vshrl.u32 %v4624, 16
        %v4661 = vrot.slane %v4659, 7
        %v4662 = vshll.u32 %v4624, 16
        %v4664 = vor.u32 %v4661, %v4662
        %v4666 = vshrl.u32 %v4625, 16
        %v4668 = vrot.slane %v4666, 7
        %v4669 = vshll.u32 %v4625, 16
        %v4671 = vor.u32 %v4668, %v4669
        %v4673 = vshrl.u32 %v4626, 16
        %v4675 = vrot.slane %v4673, 7
        %v4676 = vshll.u32 %v4626, 16
        %v4678 = vor.u32 %v4675, %v4676
        %v4680 = vshrl.u32 %v4627, 16
        %v4682 = vrot.slane %v4680, 7
        %v4683 = vshll.u32 %v4627, 16
        %v4685 = vor.u32 %v4682, %v4683
        %v4687 = vshrl.u32 %v4628, 16
        %v4689 = vrot.slane %v4687, 7
        %v4690 = vshll.u32 %v4628, 16
        %v4692 = vor.u32 %v4689, %v4690
        %v4694 = vshrl.u32 %v4629, 16
        %v4696 = vrot.slane %v4694, 7
        %v4697 = vshll.u32 %v4629, 16
        %v4699 = vor.u32 %v4696, %v4697
        %v4701 = vshrl.u32 %v4630, 16
        %v4703 = vrot.slane %v4701, 7
        %v4704 = vshll.u32 %v4630, 16
        %v4706 = vor.u32 %v4703, %v4704
        %v4708 = vshrl.u32 %v4631, 16
        %v4710 = vrot.slane %v4708, 7
        %v4711 = vshll.u32 %v4631, 16
        %v4713 = vor.u32 %v4710, %v4711
        %v4715 = vshrl.u32 %v4632, 16
        %v4717 = vrot.slane %v4715, 7
        %v4718 = vshll.u32 %v4632, 16
        %v4720 = vor.u32 %v4717, %v4718
        %v4722 = vshrl.u32 %v4633, 16
        %v4724 = vrot.slane %v4722, 7
        %v4725 = vshll.u32 %v4633, 16
        %v4727 = vor.u32 %v4724, %v4725
        %v4729 = vshrl.u32 %v4634, 16
        %v4731 = vrot.slane %v4729, 7
        %v4732 = vshll.u32 %v4634, 16
        %v4734 = vor.u32 %v4731, %v4732
        %v4736 = vshrl.u32 %v4635, 16
        %v4738 = vrot.slane %v4736, 7
        %v4739 = vshll.u32 %v4635, 16
        %v4741 = vor.u32 %v4738, %v4739
        %v4743 = vshrl.u32 %v4636, 16
        %v4745 = vrot.slane %v4743, 7
        %v4746 = vshll.u32 %v4636, 16
        %v4748 = vor.u32 %v4745, %v4746
        %v4765 = vsel %vm823, 0, %v4643
        %v4766 = vsel %vm823, 0, %v4650
        %v4767 = vsel %vm823, 0, %v4657
        %v4768 = vsel %vm823, 0, %v4664
        %v4769 = vsel %vm823, 0, %v4671
        %v4770 = vsel %vm823, 0, %v4678
        %v4771 = vsel %vm823, 0, %v4685
        %v4772 = vsel %vm823, 0, %v4692
        %v4773 = vsel %vm823, 0, %v4699
        %v4774 = vsel %vm823, 0, %v4706
        %v4775 = vsel %vm823, 0, %v4713
        %v4776 = vsel %vm823, 0, %v4720
        %v4777 = vsel %vm823, 0, %v4727
        %v4778 = vsel %vm823, 0, %v4734
        %v4779 = vsel %vm823, 0, %v4741
        %v4780 = vsel %vm823, 0, %v4748
        %v4797 = vunpack.c.l.b16 %v4765
        %v4798 = vunpack.c.l.b16 %v4766
        %v4799 = vunpack.c.l.b16 %v4767
        %v4800 = vunpack.c.l.b16 %v4768
        %v4801 = vunpack.c.l.b16 %v4769
        %v4802 = vunpack.c.l.b16 %v4770
        %v4803 = vunpack.c.l.b16 %v4771
        %v4804 = vunpack.c.l.b16 %v4772
        %v4805 = vunpack.c.l.b16 %v4773
        %v4806 = vunpack.c.l.b16 %v4774
        %v4807 = vunpack.c.l.b16 %v4775
        %v4808 = vunpack.c.l.b16 %v4776
        %v4809 = vunpack.c.l.b16 %v4777
        %v4810 = vunpack.c.l.b16 %v4778
        %v4811 = vunpack.c.l.b16 %v4779
        %v4812 = vunpack.c.l.b16 %v4780
        %v4813 = vld [vmem:[#allocation8] sm:$0xf]
        %v4814 = vld [vmem:[#allocation8 + $0x4] sm:$0xf]
        %v4815 = vld [vmem:[#allocation8 + $0x8] sm:$0xf]
        %v4816 = vld [vmem:[#allocation8 + $0xc] sm:$0xf]
        %v4817 = vld [vmem:[#allocation8 + $0x10] sm:$0xf]
        %v4818 = vld [vmem:[#allocation8 + $0x14] sm:$0xf]
        %v4819 = vld [vmem:[#allocation8 + $0x18] sm:$0xf]
        %v4820 = vld [vmem:[#allocation8 + $0x1c] sm:$0xf]
        %v4821 = vld [vmem:[#allocation8 + $0x20] sm:$0xf]
        %v4822 = vld [vmem:[#allocation8 + $0x24] sm:$0xf]
        %v4823 = vld [vmem:[#allocation8 + $0x28] sm:$0xf]
        %v4824 = vld [vmem:[#allocation8 + $0x2c] sm:$0xf]
        %v4825 = vld [vmem:[#allocation8 + $0x30] sm:$0xf]
        %v4826 = vld [vmem:[#allocation8 + $0x34] sm:$0xf]
        %v4827 = vld [vmem:[#allocation8 + $0x38] sm:$0xf]
        %v4828 = vld [vmem:[#allocation8 + $0x3c] sm:$0xf]
        %v4829 = vld [vmem:[#allocation8 + $0x40] sm:$0xf]
        %v4830 = vld [vmem:[#allocation8 + $0x44] sm:$0xf]
        %v4831 = vld [vmem:[#allocation8 + $0x48] sm:$0xf]
        %v4832 = vld [vmem:[#allocation8 + $0x4c] sm:$0xf]
        %v4833 = vld [vmem:[#allocation8 + $0x50] sm:$0xf]
        %v4834 = vld [vmem:[#allocation8 + $0x54] sm:$0xf]
        %v4835 = vld [vmem:[#allocation8 + $0x58] sm:$0xf]
        %v4836 = vld [vmem:[#allocation8 + $0x5c] sm:$0xf]
        %v4837 = vld [vmem:[#allocation8 + $0x60] sm:$0xf]
        %v4838 = vld [vmem:[#allocation8 + $0x64] sm:$0xf]
        %v4839 = vld [vmem:[#allocation8 + $0x68] sm:$0xf]
        %v4840 = vld [vmem:[#allocation8 + $0x6c] sm:$0xf]
        %v4841 = vld [vmem:[#allocation8 + $0x70] sm:$0xf]
        %v4842 = vld [vmem:[#allocation8 + $0x74] sm:$0xf]
        %v4843 = vld [vmem:[#allocation8 + $0x78] sm:$0xf]
        %v4844 = vld [vmem:[#allocation8 + $0x7c] sm:$0xf]
        %v4845 = vld [vmem:[#allocation8 + $0x80] sm:$0xf]
        %v4846 = vld [vmem:[#allocation8 + $0x84] sm:$0xf]
        %v4847 = vld [vmem:[#allocation8 + $0x88] sm:$0xf]
        %v4848 = vld [vmem:[#allocation8 + $0x8c] sm:$0xf]
        %v4849 = vld [vmem:[#allocation8 + $0x90] sm:$0xf]
        %v4850 = vld [vmem:[#allocation8 + $0x94] sm:$0xf]
        %v4851 = vld [vmem:[#allocation8 + $0x98] sm:$0xf]
        %v4852 = vld [vmem:[#allocation8 + $0x9c] sm:$0xf]
        %v4853 = vld [vmem:[#allocation8 + $0xa0] sm:$0xf]
        %v4854 = vld [vmem:[#allocation8 + $0xa4] sm:$0xf]
        %v4855 = vld [vmem:[#allocation8 + $0xa8] sm:$0xf]
        %v4856 = vld [vmem:[#allocation8 + $0xac] sm:$0xf]
        %v4857 = vld [vmem:[#allocation8 + $0xb0] sm:$0xf]
        %v4858 = vld [vmem:[#allocation8 + $0xb4] sm:$0xf]
        %v4859 = vld [vmem:[#allocation8 + $0xb8] sm:$0xf]
        %v4860 = vld [vmem:[#allocation8 + $0xbc] sm:$0xf]
        %v4861 = vld [vmem:[#allocation8 + $0xc0] sm:$0xf]
        %v4862 = vld [vmem:[#allocation8 + $0xc4] sm:$0xf]
        %v4863 = vld [vmem:[#allocation8 + $0xc8] sm:$0xf]
        %v4864 = vld [vmem:[#allocation8 + $0xcc] sm:$0xf]
        %v4865 = vld [vmem:[#allocation8 + $0xd0] sm:$0xf]
        %v4866 = vld [vmem:[#allocation8 + $0xd4] sm:$0xf]
        %v4867 = vld [vmem:[#allocation8 + $0xd8] sm:$0xf]
        %v4868 = vld [vmem:[#allocation8 + $0xdc] sm:$0xf]
        %v4869 = vld [vmem:[#allocation8 + $0xe0] sm:$0xf]
        %v4870 = vld [vmem:[#allocation8 + $0xe4] sm:$0xf]
        %v4871 = vld [vmem:[#allocation8 + $0xe8] sm:$0xf]
        %v4872 = vld [vmem:[#allocation8 + $0xec] sm:$0xf]
        %v4873 = vld [vmem:[#allocation8 + $0xf0] sm:$0xf]
        %v4874 = vld [vmem:[#allocation8 + $0xf4] sm:$0xf]
        %v4875 = vld [vmem:[#allocation8 + $0xf8] sm:$0xf]
        %v4876 = vld [vmem:[#allocation8 + $0xfc] sm:$0xf]
        %v4877 = vld [vmem:[#allocation8 + $0x100] sm:$0xf]
        %v4878 = vld [vmem:[#allocation8 + $0x104] sm:$0xf]
        %v4879 = vld [vmem:[#allocation8 + $0x108] sm:$0xf]
        %v4880 = vld [vmem:[#allocation8 + $0x10c] sm:$0xf]
        %v4881 = vld [vmem:[#allocation8 + $0x110] sm:$0xf]
        %v4882 = vld [vmem:[#allocation8 + $0x114] sm:$0xf]
        %v4883 = vld [vmem:[#allocation8 + $0x118] sm:$0xf]
        %v4884 = vld [vmem:[#allocation8 + $0x11c] sm:$0xf]
        %v4885 = vld [vmem:[#allocation8 + $0x120] sm:$0xf]
        %v4886 = vld [vmem:[#allocation8 + $0x124] sm:$0xf]
        %v4887 = vld [vmem:[#allocation8 + $0x128] sm:$0xf]
        %v4888 = vld [vmem:[#allocation8 + $0x12c] sm:$0xf]
        %v4889 = vld [vmem:[#allocation8 + $0x130] sm:$0xf]
        %v4890 = vld [vmem:[#allocation8 + $0x134] sm:$0xf]
        %v4891 = vld [vmem:[#allocation8 + $0x138] sm:$0xf]
        %v4892 = vld [vmem:[#allocation8 + $0x13c] sm:$0xf]
        %v4893 = vld [vmem:[#allocation8 + $0x140] sm:$0xf]
        %v4894 = vld [vmem:[#allocation8 + $0x144] sm:$0xf]
        %v4895 = vld [vmem:[#allocation8 + $0x148] sm:$0xf]
        %v4896 = vld [vmem:[#allocation8 + $0x14c] sm:$0xf]
        %v4897 = vld [vmem:[#allocation8 + $0x150] sm:$0xf]
        %v4898 = vld [vmem:[#allocation8 + $0x154] sm:$0xf]
        %v4899 = vld [vmem:[#allocation8 + $0x158] sm:$0xf]
        %v4900 = vld [vmem:[#allocation8 + $0x15c] sm:$0xf]
        %v4901 = vld [vmem:[#allocation8 + $0x160] sm:$0xf]
        %v4902 = vld [vmem:[#allocation8 + $0x164] sm:$0xf]
        %v4903 = vld [vmem:[#allocation8 + $0x168] sm:$0xf]
        %v4904 = vld [vmem:[#allocation8 + $0x16c] sm:$0xf]
        %v4905 = vld [vmem:[#allocation8 + $0x170] sm:$0xf]
        %v4906 = vld [vmem:[#allocation8 + $0x174] sm:$0xf]
        %v4907 = vld [vmem:[#allocation8 + $0x178] sm:$0xf]
        %v4908 = vld [vmem:[#allocation8 + $0x17c] sm:$0xf]
        %v4909 = vpack.c.b16 %v4797, %v870
        %v4910 = vpack.c.b16 %v4798, %v870
        %v4911 = vpack.c.b16 %v4799, %v4797
        %v4912 = vpack.c.b16 %v4800, %v4798
        %v4913 = vpack.c.b16 %v4801, %v4799
        %v4914 = vpack.c.b16 %v4802, %v4800
        %v4915 = vpack.c.b16 %v4803, %v4801
        %v4916 = vpack.c.b16 %v4804, %v4802
        %v4917 = vpack.c.b16 %v4805, %v4803
        %v4918 = vpack.c.b16 %v4806, %v4804
        %v4919 = vpack.c.b16 %v4807, %v4805
        %v4920 = vpack.c.b16 %v4808, %v4806
        %v4921 = vpack.c.b16 %v4809, %v4807
        %v4922 = vpack.c.b16 %v4810, %v4808
        %v4923 = vpack.c.b16 %v4811, %v4809
        %v4924 = vpack.c.b16 %v4812, %v4810
        %v4925 = vpack.c.b16 %v870, %v4811
        %v4926 = vpack.c.b16 %v870, %v4812
        %v5041 = vunpack.c.l.b16 %v4813
        %v5042 = vunpack.c.l.b16 %v4814
        %v5043 = vunpack.c.l.b16 %v4815
        %v5044 = vunpack.c.l.b16 %v4816
        %v5045 = vunpack.c.l.b16 %v4817
        %v5046 = vunpack.c.l.b16 %v4818
        %v5047 = vunpack.c.l.b16 %v4819
        %v5048 = vunpack.c.l.b16 %v4820
        %v5049 = vunpack.c.l.b16 %v4821
        %v5050 = vunpack.c.l.b16 %v4822
        %v5051 = vunpack.c.l.b16 %v4823
        %v5052 = vunpack.c.l.b16 %v4824
        %v5053 = vunpack.c.l.b16 %v4825
        %v5054 = vunpack.c.l.b16 %v4826
        %v5055 = vunpack.c.l.b16 %v4827
        %v5056 = vunpack.c.l.b16 %v4828
        %v5057 = vunpack.c.l.b16 %v4829
        %v5058 = vunpack.c.l.b16 %v4830
        %v5059 = vunpack.c.l.b16 %v4831
        %v5060 = vunpack.c.l.b16 %v4832
        %v5061 = vunpack.c.l.b16 %v4833
        %v5062 = vunpack.c.l.b16 %v4834
        %v5063 = vunpack.c.l.b16 %v4835
        %v5064 = vunpack.c.l.b16 %v4836
        %v5065 = vunpack.c.l.b16 %v4837
        %v5066 = vunpack.c.l.b16 %v4838
        %v5067 = vunpack.c.l.b16 %v4839
        %v5068 = vunpack.c.l.b16 %v4840
        %v5069 = vunpack.c.l.b16 %v4841
        %v5070 = vunpack.c.l.b16 %v4842
        %v5071 = vunpack.c.l.b16 %v4843
        %v5072 = vunpack.c.l.b16 %v4844
        %v5073 = vunpack.c.l.b16 %v4845
        %v5074 = vunpack.c.l.b16 %v4846
        %v5075 = vunpack.c.l.b16 %v4847
        %v5076 = vunpack.c.l.b16 %v4848
        %v5077 = vunpack.c.l.b16 %v4849
        %v5078 = vunpack.c.l.b16 %v4850
        %v5079 = vunpack.c.l.b16 %v4851
        %v5080 = vunpack.c.l.b16 %v4852
        %v5081 = vunpack.c.l.b16 %v4853
        %v5082 = vunpack.c.l.b16 %v4854
        %v5083 = vunpack.c.l.b16 %v4855
        %v5084 = vunpack.c.l.b16 %v4856
        %v5085 = vunpack.c.l.b16 %v4857
        %v5086 = vunpack.c.l.b16 %v4858
        %v5087 = vunpack.c.l.b16 %v4859
        %v5088 = vunpack.c.l.b16 %v4860
        %v5089 = vunpack.c.l.b16 %v4861
        %v5090 = vunpack.c.l.b16 %v4862
        %v5091 = vunpack.c.l.b16 %v4863
        %v5092 = vunpack.c.l.b16 %v4864
        %v5093 = vunpack.c.l.b16 %v4865
        %v5094 = vunpack.c.l.b16 %v4866
        %v5095 = vunpack.c.l.b16 %v4867
        %v5096 = vunpack.c.l.b16 %v4868
        %v5097 = vunpack.c.l.b16 %v4869
        %v5098 = vunpack.c.l.b16 %v4870
        %v5099 = vunpack.c.l.b16 %v4871
        %v5100 = vunpack.c.l.b16 %v4872
        %v5101 = vunpack.c.l.b16 %v4873
        %v5102 = vunpack.c.l.b16 %v4874
        %v5103 = vunpack.c.l.b16 %v4875
        %v5104 = vunpack.c.l.b16 %v4876
        %v5105 = vunpack.c.l.b16 %v4877
        %v5106 = vunpack.c.l.b16 %v4878
        %v5107 = vunpack.c.l.b16 %v4879
        %v5108 = vunpack.c.l.b16 %v4880
        %v5109 = vunpack.c.l.b16 %v4881
        %v5110 = vunpack.c.l.b16 %v4882
        %v5111 = vunpack.c.l.b16 %v4883
        %v5112 = vunpack.c.l.b16 %v4884
        %v5113 = vunpack.c.l.b16 %v4885
        %v5114 = vunpack.c.l.b16 %v4886
        %v5115 = vunpack.c.l.b16 %v4887
        %v5116 = vunpack.c.l.b16 %v4888
        %v5117 = vunpack.c.l.b16 %v4889
        %v5118 = vunpack.c.l.b16 %v4890
        %v5119 = vunpack.c.l.b16 %v4891
        %v5120 = vunpack.c.l.b16 %v4892
        %v5121 = vunpack.c.l.b16 %v4893
        %v5122 = vunpack.c.l.b16 %v4894
        %v5123 = vunpack.c.l.b16 %v4895
        %v5124 = vunpack.c.l.b16 %v4896
        %v5125 = vunpack.c.l.b16 %v4897
        %v5126 = vunpack.c.l.b16 %v4898
        %v5127 = vunpack.c.l.b16 %v4899
        %v5128 = vunpack.c.l.b16 %v4900
        %v5129 = vunpack.c.l.b16 %v4901
        %v5130 = vunpack.c.l.b16 %v4902
        %v5131 = vunpack.c.l.b16 %v4903
        %v5132 = vunpack.c.l.b16 %v4904
        %v5133 = vunpack.c.l.b16 %v4905
        %v5134 = vunpack.c.l.b16 %v4906
        %v5135 = vunpack.c.l.b16 %v4907
        %v5136 = vunpack.c.l.b16 %v4908
        %v5137 = vpack.c.b16 %v5042, %v5041
        %v5138 = vpack.c.b16 %v5044, %v5043
        %v5139 = vpack.c.b16 %v5046, %v5045
        %v5140 = vpack.c.b16 %v5048, %v5047
        %v5141 = vpack.c.b16 %v5050, %v5049
        %v5142 = vpack.c.b16 %v5052, %v5051
        %v5143 = vpack.c.b16 %v5054, %v5053
        %v5144 = vpack.c.b16 %v5056, %v5055
        %v5145 = vpack.c.b16 %v5058, %v5057
        %v5146 = vpack.c.b16 %v5060, %v5059
        %v5147 = vpack.c.b16 %v5062, %v5061
        %v5148 = vpack.c.b16 %v5064, %v5063
        %v5149 = vpack.c.b16 %v5066, %v5065
        %v5150 = vpack.c.b16 %v5068, %v5067
        %v5151 = vpack.c.b16 %v5070, %v5069
        %v5152 = vpack.c.b16 %v5072, %v5071
        %v5153 = vpack.c.b16 %v5074, %v5073
        %v5154 = vpack.c.b16 %v5076, %v5075
        %v5155 = vpack.c.b16 %v5078, %v5077
        %v5156 = vpack.c.b16 %v5080, %v5079
        %v5157 = vpack.c.b16 %v5082, %v5081
        %v5158 = vpack.c.b16 %v5084, %v5083
        %v5159 = vpack.c.b16 %v5086, %v5085
        %v5160 = vpack.c.b16 %v5088, %v5087
        %v5161 = vpack.c.b16 %v5090, %v5089
        %v5162 = vpack.c.b16 %v5092, %v5091
        %v5163 = vpack.c.b16 %v5094, %v5093
        %v5164 = vpack.c.b16 %v5096, %v5095
        %v5165 = vpack.c.b16 %v5098, %v5097
        %v5166 = vpack.c.b16 %v5100, %v5099
        %v5167 = vpack.c.b16 %v5102, %v5101
        %v5168 = vpack.c.b16 %v5104, %v5103
        %v5169 = vpack.c.b16 %v5106, %v5105
        %v5170 = vpack.c.b16 %v5108, %v5107
        %v5171 = vpack.c.b16 %v5110, %v5109
        %v5172 = vpack.c.b16 %v5112, %v5111
        %v5173 = vpack.c.b16 %v5114, %v5113
        %v5174 = vpack.c.b16 %v5116, %v5115
        %v5175 = vpack.c.b16 %v5118, %v5117
        %v5176 = vpack.c.b16 %v5120, %v5119
        %v5177 = vpack.c.b16 %v5122, %v5121
        %v5178 = vpack.c.b16 %v5124, %v5123
        %v5179 = vpack.c.b16 %v5126, %v5125
        %v5180 = vpack.c.b16 %v5128, %v5127
        %v5181 = vpack.c.b16 %v5130, %v5129
        %v5182 = vpack.c.b16 %v5132, %v5131
        %v5183 = vpack.c.b16 %v5134, %v5133
        %v5184 = vpack.c.b16 %v5136, %v5135
        %5233 = vmatprep.subr.bf16.mxu0 0
        %5234 = vmatpush1.bf16.msra.mxu0 %v5137
        %5235 = vmatprep.subr.bf16.mxu0 0
        %5236 = vmatpush1.bf16.msra.mxu0 %v5138
        %5237 = vmatprep.subr.bf16.mxu0 0
        %5238 = vmatpush1.bf16.msra.mxu0 %v5139
        %5239 = vmatprep.subr.bf16.mxu0 0
        %5240 = vmatpush1.bf16.msra.mxu0 %v5140
        %5241 = vmatprep.subr.bf16.mxu0 0
        %5242 = vmatpush1.bf16.msra.mxu0 %v5141
        %5243 = vmatprep.subr.bf16.mxu0 0
        %5244 = vmatpush1.bf16.msra.mxu0 %v5142
        %5245 = vmatprep.subr.bf16.mxu0 0
        %5246 = vmatpush1.bf16.msra.mxu0 %v5143
        %5247 = vmatprep.subr.bf16.mxu0 0
        %5248 = vmatpush1.bf16.msra.mxu0 %v5144
        %5249 = vmatprep.subr.bf16.mxu0 0
        %5250 = vmatpush1.bf16.msra.mxu0 %v5145
        %5251 = vmatprep.subr.bf16.mxu0 0
        %5252 = vmatpush1.bf16.msra.mxu0 %v5146
        %5253 = vmatprep.subr.bf16.mxu0 0
        %5254 = vmatpush1.bf16.msra.mxu0 %v5147
        %5255 = vmatprep.subr.bf16.mxu0 0
        %5256 = vmatpush1.bf16.msra.mxu0 %v5148
        %5257 = vmatprep.subr.bf16.mxu0 0
        %5258 = vmatpush1.bf16.msra.mxu0 %v5149
        %5259 = vmatprep.subr.bf16.mxu0 0
        %5260 = vmatpush1.bf16.msra.mxu0 %v5150
        %5261 = vmatprep.subr.bf16.mxu0 0
        %5262 = vmatpush1.bf16.msra.mxu0 %v5151
        %5263 = vmatprep.subr.bf16.mxu0 0
        %5264 = vmatpush1.bf16.msra.mxu0 %v5152
        %5265 = vmatprep.mubr.bf16.mxu0 %v4910
        %5266 = vmatmul.mubr.bf16.gmra.mrb[0].mxu0 %v4909
        %v5267 = vpop.f32.mrb[0].mxu0
        %v5268 = vadd.f32 0.0, %v5267
        %v5269 = vpop.f32.mrb[0].mxu0
        %v5270 = vpop.f32.mrb[0].mxu0
        %v5271 = vadd.f32 0.0, %v5270
        %v5272 = vpop.f32.mrb[0].mxu0
        %5273 = vmatprep.mubr.bf16.mxu0 %v4914
        %5274 = vmatmul.mubr.bf16.gmra.mrb[0].mxu0 %v4913
        %v5275 = vpop.f32.mrb[0].mxu0
        %v5276 = vadd.f32 0.0, %v5275
        %v5277 = vpop.f32.mrb[0].mxu0
        %v5278 = vpop.f32.mrb[0].mxu0
        %v5279 = vadd.f32 0.0, %v5278
        %v5280 = vpop.f32.mrb[0].mxu0
        %5281 = vmatprep.mubr.bf16.mxu0 %v4918
        %5282 = vmatmul.mubr.bf16.gmra.mrb[0].mxu0 %v4917
        %v5283 = vpop.f32.mrb[0].mxu0
        %v5284 = vadd.f32 0.0, %v5283
        %v5285 = vpop.f32.mrb[0].mxu0
        %v5286 = vpop.f32.mrb[0].mxu0
        %v5287 = vadd.f32 0.0, %v5286
        %v5288 = vpop.f32.mrb[0].mxu0
        %5289 = vmatprep.mubr.bf16.mxu0 %v4922
        %5290 = vmatmul.mubr.bf16.gmra.mrb[0].mxu0 %v4921
        %v5291 = vpop.f32.mrb[0].mxu0
        %v5292 = vadd.f32 0.0, %v5291
        %v5293 = vpop.f32.mrb[0].mxu0
        %v5294 = vpop.f32.mrb[0].mxu0
        %v5295 = vadd.f32 0.0, %v5294
        %v5296 = vpop.f32.mrb[0].mxu0
        %5297 = vdwg.mxu0
        %5298 = vmatprep.subr.bf16.mxu0 0
        %5299 = vmatpush1.bf16.msra.mxu0 %v5153
        %5300 = vmatprep.subr.bf16.mxu0 0
        %5301 = vmatpush1.bf16.msra.mxu0 %v5154
        %5302 = vmatprep.subr.bf16.mxu0 0
        %5303 = vmatpush1.bf16.msra.mxu0 %v5155
        %5304 = vmatprep.subr.bf16.mxu0 0
        %5305 = vmatpush1.bf16.msra.mxu0 %v5156
        %5306 = vmatprep.subr.bf16.mxu0 0
        %5307 = vmatpush1.bf16.msra.mxu0 %v5157
        %5308 = vmatprep.subr.bf16.mxu0 0
        %5309 = vmatpush1.bf16.msra.mxu0 %v5158
        %5310 = vmatprep.subr.bf16.mxu0 0
        %5311 = vmatpush1.bf16.msra.mxu0 %v5159
        %5312 = vmatprep.subr.bf16.mxu0 0
        %5313 = vmatpush1.bf16.msra.mxu0 %v5160
        %5314 = vmatprep.subr.bf16.mxu0 0
        %5315 = vmatpush1.bf16.msra.mxu0 %v5161
        %5316 = vmatprep.subr.bf16.mxu0 0
        %5317 = vmatpush1.bf16.msra.mxu0 %v5162
        %5318 = vmatprep.subr.bf16.mxu0 0
        %5319 = vmatpush1.bf16.msra.mxu0 %v5163
        %5320 = vmatprep.subr.bf16.mxu0 0
        %5321 = vmatpush1.bf16.msra.mxu0 %v5164
        %5322 = vmatprep.subr.bf16.mxu0 0
        %5323 = vmatpush1.bf16.msra.mxu0 %v5165
        %5324 = vmatprep.subr.bf16.mxu0 0
        %5325 = vmatpush1.bf16.msra.mxu0 %v5166
        %5326 = vmatprep.subr.bf16.mxu0 0
        %5327 = vmatpush1.bf16.msra.mxu0 %v5167
        %5328 = vmatprep.subr.bf16.mxu0 0
        %5329 = vmatpush1.bf16.msra.mxu0 %v5168
        %5330 = vmatprep.mubr.bf16.mxu0 %v4912
        %5331 = vmatmul.mubr.bf16.gmra.mrb[0].mxu0 %v4911
        %v5332 = vpop.f32.mrb[0].mxu0
        %v5333 = vadd.f32 %v5268, %v5332
        %v5334 = vpop.f32.mrb[0].mxu0
        %v5335 = vpop.f32.mrb[0].mxu0
        %v5336 = vadd.f32 %v5271, %v5335
        %v5337 = vpop.f32.mrb[0].mxu0
        %5338 = vmatprep.mubr.bf16.mxu0 %v4916
        %5339 = vmatmul.mubr.bf16.gmra.mrb[0].mxu0 %v4915
        %v5340 = vpop.f32.mrb[0].mxu0
        %v5341 = vadd.f32 %v5276, %v5340
        %v5342 = vpop.f32.mrb[0].mxu0
        %v5343 = vpop.f32.mrb[0].mxu0
        %v5344 = vadd.f32 %v5279, %v5343
        %v5345 = vpop.f32.mrb[0].mxu0
        %5346 = vmatprep.mubr.bf16.mxu0 %v4920
        %5347 = vmatmul.mubr.bf16.gmra.mrb[0].mxu0 %v4919
        %v5348 = vpop.f32.mrb[0].mxu0
        %v5349 = vadd.f32 %v5284, %v5348
        %v5350 = vpop.f32.mrb[0].mxu0
        %v5351 = vpop.f32.mrb[0].mxu0
        %v5352 = vadd.f32 %v5287, %v5351
        %v5353 = vpop.f32.mrb[0].mxu0
        %5354 = vmatprep.mubr.bf16.mxu0 %v4924
        %5355 = vmatmul.mubr.bf16.gmra.mrb[0].mxu0 %v4923
        %v5356 = vpop.f32.mrb[0].mxu0
        %v5357 = vadd.f32 %v5292, %v5356
        %v5358 = vpop.f32.mrb[0].mxu0
        %v5359 = vpop.f32.mrb[0].mxu0
        %v5360 = vadd.f32 %v5295, %v5359
        %v5361 = vpop.f32.mrb[0].mxu0
        %5362 = vdwg.mxu0
        %5363 = vmatprep.subr.bf16.mxu0 0
        %5364 = vmatpush1.bf16.msra.mxu0 %v5169
        %5365 = vmatprep.subr.bf16.mxu0 0
        %5366 = vmatpush1.bf16.msra.mxu0 %v5170
        %5367 = vmatprep.subr.bf16.mxu0 0
        %5368 = vmatpush1.bf16.msra.mxu0 %v5171
        %5369 = vmatprep.subr.bf16.mxu0 0
        %5370 = vmatpush1.bf16.msra.mxu0 %v5172
        %5371 = vmatprep.subr.bf16.mxu0 0
        %5372 = vmatpush1.bf16.msra.mxu0 %v5173
        %5373 = vmatprep.subr.bf16.mxu0 0
        %5374 = vmatpush1.bf16.msra.mxu0 %v5174
        %5375 = vmatprep.subr.bf16.mxu0 0
        %5376 = vmatpush1.bf16.msra.mxu0 %v5175
        %5377 = vmatprep.subr.bf16.mxu0 0
        %5378 = vmatpush1.bf16.msra.mxu0 %v5176
        %5379 = vmatprep.subr.bf16.mxu0 0
        %5380 = vmatpush1.bf16.msra.mxu0 %v5177
        %5381 = vmatprep.subr.bf16.mxu0 0
        %5382 = vmatpush1.bf16.msra.mxu0 %v5178
        %5383 = vmatprep.subr.bf16.mxu0 0
        %5384 = vmatpush1.bf16.msra.mxu0 %v5179
        %5385 = vmatprep.subr.bf16.mxu0 0
        %5386 = vmatpush1.bf16.msra.mxu0 %v5180
        %5387 = vmatprep.subr.bf16.mxu0 0
        %5388 = vmatpush1.bf16.msra.mxu0 %v5181
        %5389 = vmatprep.subr.bf16.mxu0 0
        %5390 = vmatpush1.bf16.msra.mxu0 %v5182
        %5391 = vmatprep.subr.bf16.mxu0 0
        %5392 = vmatpush1.bf16.msra.mxu0 %v5183
        %5393 = vmatprep.subr.bf16.mxu0 0
        %5394 = vmatpush1.bf16.msra.mxu0 %v5184
        %5395 = vmatprep.mubr.bf16.mxu0 %v4914
        %5396 = vmatmul.mubr.bf16.gmra.mrb[0].mxu0 %v4913
        %v5397 = vpop.f32.mrb[0].mxu0
        %v5398 = vadd.f32 %v5333, %v5397
        %v5399 = vpop.f32.mrb[0].mxu0
        %v5400 = vpop.f32.mrb[0].mxu0
        %v5401 = vadd.f32 %v5336, %v5400
        %v5402 = vpop.f32.mrb[0].mxu0
        %5403 = vmatprep.mubr.bf16.mxu0 %v4918
        %5404 = vmatmul.mubr.bf16.gmra.mrb[0].mxu0 %v4917
        %v5405 = vpop.f32.mrb[0].mxu0
        %v5406 = vadd.f32 %v5341, %v5405
        %v5407 = vpop.f32.mrb[0].mxu0
        %v5408 = vpop.f32.mrb[0].mxu0
        %v5409 = vadd.f32 %v5344, %v5408
        %v5410 = vpop.f32.mrb[0].mxu0
        %5411 = vmatprep.mubr.bf16.mxu0 %v4922
        %5412 = vmatmul.mubr.bf16.gmra.mrb[0].mxu0 %v4921
        %v5413 = vpop.f32.mrb[0].mxu0
        %v5414 = vadd.f32 %v5349, %v5413
        %v5415 = vpop.f32.mrb[0].mxu0
        %v5416 = vpop.f32.mrb[0].mxu0
        %v5417 = vadd.f32 %v5352, %v5416
        %v5418 = vpop.f32.mrb[0].mxu0
        %5419 = vmatprep.mubr.bf16.mxu0 %v4926
        %5420 = vmatmul.mubr.bf16.gmra.mrb[0].mxu0 %v4925
        %v5421 = vpop.f32.mrb[0].mxu0
        %v5422 = vadd.f32 %v5357, %v5421
        %v5423 = vpop.f32.mrb[0].mxu0
        %v5424 = vpop.f32.mrb[0].mxu0
        %v5425 = vadd.f32 %v5360, %v5424
        %v5426 = vpop.f32.mrb[0].mxu0
        %5427 = vdwg.mxu0
        %v5428 = vadd.f32 %v4619, %v5398
        %v5429 = vadd.f32 %v4619, %v5401
        %v5430 = vadd.f32 %v4619, %v5406
        %v5431 = vadd.f32 %v4619, %v5409
        %v5432 = vadd.f32 %v4619, %v5414
        %v5433 = vadd.f32 %v4619, %v5417
        %v5434 = vadd.f32 %v4619, %v5422
        %v5435 = vadd.f32 %v4619, %v5425
        %s5436 = scalar_lea.vmem [#allocation8], 384
        %v5437 = vld [vmem:[%s5436] sm:$0xf]
        %v5438 = vld [vmem:[%s5436 + $0x4] sm:$0xf]
        %v5439 = vld [vmem:[%s5436 + $0x8] sm:$0xf]
        %v5440 = vld [vmem:[%s5436 + $0xc] sm:$0xf]
        %v5441 = vld [vmem:[%s5436 + $0x10] sm:$0xf]
        %v5442 = vld [vmem:[%s5436 + $0x14] sm:$0xf]
        %v5443 = vld [vmem:[%s5436 + $0x18] sm:$0xf]
        %v5444 = vld [vmem:[%s5436 + $0x1c] sm:$0xf]
        %v5445 = vld [vmem:[%s5436 + $0x20] sm:$0xf]
        %v5446 = vld [vmem:[%s5436 + $0x24] sm:$0xf]
        %v5447 = vld [vmem:[%s5436 + $0x28] sm:$0xf]
        %v5448 = vld [vmem:[%s5436 + $0x2c] sm:$0xf]
        %v5449 = vld [vmem:[%s5436 + $0x30] sm:$0xf]
        %v5450 = vld [vmem:[%s5436 + $0x34] sm:$0xf]
        %v5451 = vld [vmem:[%s5436 + $0x38] sm:$0xf]
        %v5452 = vld [vmem:[%s5436 + $0x3c] sm:$0xf]
        %v5453 = vld [vmem:[%s5436 + $0x40] sm:$0xf]
        %v5454 = vld [vmem:[%s5436 + $0x44] sm:$0xf]
        %v5455 = vld [vmem:[%s5436 + $0x48] sm:$0xf]
        %v5456 = vld [vmem:[%s5436 + $0x4c] sm:$0xf]
        %v5457 = vld [vmem:[%s5436 + $0x50] sm:$0xf]
        %v5458 = vld [vmem:[%s5436 + $0x54] sm:$0xf]
        %v5459 = vld [vmem:[%s5436 + $0x58] sm:$0xf]
        %v5460 = vld [vmem:[%s5436 + $0x5c] sm:$0xf]
        %v5461 = vld [vmem:[%s5436 + $0x60] sm:$0xf]
        %v5462 = vld [vmem:[%s5436 + $0x64] sm:$0xf]
        %v5463 = vld [vmem:[%s5436 + $0x68] sm:$0xf]
        %v5464 = vld [vmem:[%s5436 + $0x6c] sm:$0xf]
        %v5465 = vld [vmem:[%s5436 + $0x70] sm:$0xf]
        %v5466 = vld [vmem:[%s5436 + $0x74] sm:$0xf]
        %v5467 = vld [vmem:[%s5436 + $0x78] sm:$0xf]
        %v5468 = vld [vmem:[%s5436 + $0x7c] sm:$0xf]
        %v5469 = vld [vmem:[%s5436 + $0x80] sm:$0xf]
        %v5470 = vld [vmem:[%s5436 + $0x84] sm:$0xf]
        %v5471 = vld [vmem:[%s5436 + $0x88] sm:$0xf]
        %v5472 = vld [vmem:[%s5436 + $0x8c] sm:$0xf]
        %v5473 = vld [vmem:[%s5436 + $0x90] sm:$0xf]
        %v5474 = vld [vmem:[%s5436 + $0x94] sm:$0xf]
        %v5475 = vld [vmem:[%s5436 + $0x98] sm:$0xf]
        %v5476 = vld [vmem:[%s5436 + $0x9c] sm:$0xf]
        %v5477 = vld [vmem:[%s5436 + $0xa0] sm:$0xf]
        %v5478 = vld [vmem:[%s5436 + $0xa4] sm:$0xf]
        %v5479 = vld [vmem:[%s5436 + $0xa8] sm:$0xf]
        %v5480 = vld [vmem:[%s5436 + $0xac] sm:$0xf]
        %v5481 = vld [vmem:[%s5436 + $0xb0] sm:$0xf]
        %v5482 = vld [vmem:[%s5436 + $0xb4] sm:$0xf]
        %v5483 = vld [vmem:[%s5436 + $0xb8] sm:$0xf]
        %v5484 = vld [vmem:[%s5436 + $0xbc] sm:$0xf]
        %v5485 = vld [vmem:[%s5436 + $0xc0] sm:$0xf]
        %v5486 = vld [vmem:[%s5436 + $0xc4] sm:$0xf]
        %v5487 = vld [vmem:[%s5436 + $0xc8] sm:$0xf]
        %v5488 = vld [vmem:[%s5436 + $0xcc] sm:$0xf]
        %v5489 = vld [vmem:[%s5436 + $0xd0] sm:$0xf]
        %v5490 = vld [vmem:[%s5436 + $0xd4] sm:$0xf]
        %v5491 = vld [vmem:[%s5436 + $0xd8] sm:$0xf]
        %v5492 = vld [vmem:[%s5436 + $0xdc] sm:$0xf]
        %v5493 = vld [vmem:[%s5436 + $0xe0] sm:$0xf]
        %v5494 = vld [vmem:[%s5436 + $0xe4] sm:$0xf]
        %v5495 = vld [vmem:[%s5436 + $0xe8] sm:$0xf]
        %v5496 = vld [vmem:[%s5436 + $0xec] sm:$0xf]
        %v5497 = vld [vmem:[%s5436 + $0xf0] sm:$0xf]
        %v5498 = vld [vmem:[%s5436 + $0xf4] sm:$0xf]
        %v5499 = vld [vmem:[%s5436 + $0xf8] sm:$0xf]
        %v5500 = vld [vmem:[%s5436 + $0xfc] sm:$0xf]
        %v5501 = vld [vmem:[%s5436 + $0x100] sm:$0xf]
        %v5502 = vld [vmem:[%s5436 + $0x104] sm:$0xf]
        %v5503 = vld [vmem:[%s5436 + $0x108] sm:$0xf]
        %v5504 = vld [vmem:[%s5436 + $0x10c] sm:$0xf]
        %v5505 = vld [vmem:[%s5436 + $0x110] sm:$0xf]
        %v5506 = vld [vmem:[%s5436 + $0x114] sm:$0xf]
        %v5507 = vld [vmem:[%s5436 + $0x118] sm:$0xf]
        %v5508 = vld [vmem:[%s5436 + $0x11c] sm:$0xf]
        %v5509 = vld [vmem:[%s5436 + $0x120] sm:$0xf]
        %v5510 = vld [vmem:[%s5436 + $0x124] sm:$0xf]
        %v5511 = vld [vmem:[%s5436 + $0x128] sm:$0xf]
        %v5512 = vld [vmem:[%s5436 + $0x12c] sm:$0xf]
        %v5513 = vld [vmem:[%s5436 + $0x130] sm:$0xf]
        %v5514 = vld [vmem:[%s5436 + $0x134] sm:$0xf]
        %v5515 = vld [vmem:[%s5436 + $0x138] sm:$0xf]
        %v5516 = vld [vmem:[%s5436 + $0x13c] sm:$0xf]
        %v5517 = vld [vmem:[%s5436 + $0x140] sm:$0xf]
        %v5518 = vld [vmem:[%s5436 + $0x144] sm:$0xf]
        %v5519 = vld [vmem:[%s5436 + $0x148] sm:$0xf]
        %v5520 = vld [vmem:[%s5436 + $0x14c] sm:$0xf]
        %v5521 = vld [vmem:[%s5436 + $0x150] sm:$0xf]
        %v5522 = vld [vmem:[%s5436 + $0x154] sm:$0xf]
        %v5523 = vld [vmem:[%s5436 + $0x158] sm:$0xf]
        %v5524 = vld [vmem:[%s5436 + $0x15c] sm:$0xf]
        %v5525 = vld [vmem:[%s5436 + $0x160] sm:$0xf]
        %v5526 = vld [vmem:[%s5436 + $0x164] sm:$0xf]
        %v5527 = vld [vmem:[%s5436 + $0x168] sm:$0xf]
        %v5528 = vld [vmem:[%s5436 + $0x16c] sm:$0xf]
        %v5529 = vld [vmem:[%s5436 + $0x170] sm:$0xf]
        %v5530 = vld [vmem:[%s5436 + $0x174] sm:$0xf]
        %v5531 = vld [vmem:[%s5436 + $0x178] sm:$0xf]
        %v5532 = vld [vmem:[%s5436 + $0x17c] sm:$0xf]
        %v5533 = vpack.c.b16 %v4598, %v870
        %v5534 = vpack.c.b16 %v4599, %v870
        %v5535 = vpack.c.b16 %v4600, %v4598
        %v5536 = vpack.c.b16 %v4601, %v4599
        %v5537 = vpack.c.b16 %v4602, %v4600
        %v5538 = vpack.c.b16 %v4603, %v4601
        %v5539 = vpack.c.b16 %v4604, %v4602
        %v5540 = vpack.c.b16 %v4605, %v4603
        %v5541 = vpack.c.b16 %v4606, %v4604
        %v5542 = vpack.c.b16 %v4607, %v4605
        %v5543 = vpack.c.b16 %v4608, %v4606
        %v5544 = vpack.c.b16 %v4609, %v4607
        %v5545 = vpack.c.b16 %v4610, %v4608
        %v5546 = vpack.c.b16 %v4611, %v4609
        %v5547 = vpack.c.b16 %v4612, %v4610
        %v5548 = vpack.c.b16 %v4613, %v4611
        %v5549 = vpack.c.b16 %v870, %v4612
        %v5550 = vpack.c.b16 %v2904, %v4613
        %v5665 = vunpack.c.l.b16 %v5437
        %v5666 = vunpack.c.l.b16 %v5438
        %v5667 = vunpack.c.l.b16 %v5439
        %v5668 = vunpack.c.l.b16 %v5440
        %v5669 = vunpack.c.l.b16 %v5441
        %v5670 = vunpack.c.l.b16 %v5442
        %v5671 = vunpack.c.l.b16 %v5443
        %v5672 = vunpack.c.l.b16 %v5444
        %v5673 = vunpack.c.l.b16 %v5445
        %v5674 = vunpack.c.l.b16 %v5446
        %v5675 = vunpack.c.l.b16 %v5447
        %v5676 = vunpack.c.l.b16 %v5448
        %v5677 = vunpack.c.l.b16 %v5449
        %v5678 = vunpack.c.l.b16 %v5450
        %v5679 = vunpack.c.l.b16 %v5451
        %v5680 = vunpack.c.l.b16 %v5452
        %v5681 = vunpack.c.l.b16 %v5453
        %v5682 = vunpack.c.l.b16 %v5454
        %v5683 = vunpack.c.l.b16 %v5455
        %v5684 = vunpack.c.l.b16 %v5456
        %v5685 = vunpack.c.l.b16 %v5457
        %v5686 = vunpack.c.l.b16 %v5458
        %v5687 = vunpack.c.l.b16 %v5459
        %v5688 = vunpack.c.l.b16 %v5460
        %v5689 = vunpack.c.l.b16 %v5461
        %v5690 = vunpack.c.l.b16 %v5462
        %v5691 = vunpack.c.l.b16 %v5463
        %v5692 = vunpack.c.l.b16 %v5464
        %v5693 = vunpack.c.l.b16 %v5465
        %v5694 = vunpack.c.l.b16 %v5466
        %v5695 = vunpack.c.l.b16 %v5467
        %v5696 = vunpack.c.l.b16 %v5468
        %v5697 = vunpack.c.l.b16 %v5469
        %v5698 = vunpack.c.l.b16 %v5470
        %v5699 = vunpack.c.l.b16 %v5471
        %v5700 = vunpack.c.l.b16 %v5472
        %v5701 = vunpack.c.l.b16 %v5473
        %v5702 = vunpack.c.l.b16 %v5474
        %v5703 = vunpack.c.l.b16 %v5475
        %v5704 = vunpack.c.l.b16 %v5476
        %v5705 = vunpack.c.l.b16 %v5477
        %v5706 = vunpack.c.l.b16 %v5478
        %v5707 = vunpack.c.l.b16 %v5479
        %v5708 = vunpack.c.l.b16 %v5480
        %v5709 = vunpack.c.l.b16 %v5481
        %v5710 = vunpack.c.l.b16 %v5482
        %v5711 = vunpack.c.l.b16 %v5483
        %v5712 = vunpack.c.l.b16 %v5484
        %v5713 = vunpack.c.l.b16 %v5485
        %v5714 = vunpack.c.l.b16 %v5486
        %v5715 = vunpack.c.l.b16 %v5487
        %v5716 = vunpack.c.l.b16 %v5488
        %v5717 = vunpack.c.l.b16 %v5489
        %v5718 = vunpack.c.l.b16 %v5490
        %v5719 = vunpack.c.l.b16 %v5491
        %v5720 = vunpack.c.l.b16 %v5492
        %v5721 = vunpack.c.l.b16 %v5493
        %v5722 = vunpack.c.l.b16 %v5494
        %v5723 = vunpack.c.l.b16 %v5495
        %v5724 = vunpack.c.l.b16 %v5496
        %v5725 = vunpack.c.l.b16 %v5497
        %v5726 = vunpack.c.l.b16 %v5498
        %v5727 = vunpack.c.l.b16 %v5499
        %v5728 = vunpack.c.l.b16 %v5500
        %v5729 = vunpack.c.l.b16 %v5501
        %v5730 = vunpack.c.l.b16 %v5502
        %v5731 = vunpack.c.l.b16 %v5503
        %v5732 = vunpack.c.l.b16 %v5504
        %v5733 = vunpack.c.l.b16 %v5505
        %v5734 = vunpack.c.l.b16 %v5506
        %v5735 = vunpack.c.l.b16 %v5507
        %v5736 = vunpack.c.l.b16 %v5508
        %v5737 = vunpack.c.l.b16 %v5509
        %v5738 = vunpack.c.l.b16 %v5510
        %v5739 = vunpack.c.l.b16 %v5511
        %v5740 = vunpack.c.l.b16 %v5512
        %v5741 = vunpack.c.l.b16 %v5513
        %v5742 = vunpack.c.l.b16 %v5514
        %v5743 = vunpack.c.l.b16 %v5515
        %v5744 = vunpack.c.l.b16 %v5516
        %v5745 = vunpack.c.l.b16 %v5517
        %v5746 = vunpack.c.l.b16 %v5518
        %v5747 = vunpack.c.l.b16 %v5519
        %v5748 = vunpack.c.l.b16 %v5520
        %v5749 = vunpack.c.l.b16 %v5521
        %v5750 = vunpack.c.l.b16 %v5522
        %v5751 = vunpack.c.l.b16 %v5523
        %v5752 = vunpack.c.l.b16 %v5524
        %v5753 = vunpack.c.l.b16 %v5525
        %v5754 = vunpack.c.l.b16 %v5526
        %v5755 = vunpack.c.l.b16 %v5527
        %v5756 = vunpack.c.l.b16 %v5528
        %v5757 = vunpack.c.l.b16 %v5529
        %v5758 = vunpack.c.l.b16 %v5530
        %v5759 = vunpack.c.l.b16 %v5531
        %v5760 = vunpack.c.l.b16 %v5532
        %v5761 = vpack.c.b16 %v5666, %v5665
        %v5762 = vpack.c.b16 %v5668, %v5667
        %v5763 = vpack.c.b16 %v5670, %v5669
        %v5764 = vpack.c.b16 %v5672, %v5671
        %v5765 = vpack.c.b16 %v5674, %v5673
        %v5766 = vpack.c.b16 %v5676, %v5675
        %v5767 = vpack.c.b16 %v5678, %v5677
        %v5768 = vpack.c.b16 %v5680, %v5679
        %v5769 = vpack.c.b16 %v5682, %v5681
        %v5770 = vpack.c.b16 %v5684, %v5683
        %v5771 = vpack.c.b16 %v5686, %v5685
        %v5772 = vpack.c.b16 %v5688, %v5687
        %v5773 = vpack.c.b16 %v5690, %v5689
        %v5774 = vpack.c.b16 %v5692, %v5691
        %v5775 = vpack.c.b16 %v5694, %v5693
        %v5776 = vpack.c.b16 %v5696, %v5695
        %v5777 = vpack.c.b16 %v5698, %v5697
        %v5778 = vpack.c.b16 %v5700, %v5699
        %v5779 = vpack.c.b16 %v5702, %v5701
        %v5780 = vpack.c.b16 %v5704, %v5703
        %v5781 = vpack.c.b16 %v5706, %v5705
        %v5782 = vpack.c.b16 %v5708, %v5707
        %v5783 = vpack.c.b16 %v5710, %v5709
        %v5784 = vpack.c.b16 %v5712, %v5711
        %v5785 = vpack.c.b16 %v5714, %v5713
        %v5786 = vpack.c.b16 %v5716, %v5715
        %v5787 = vpack.c.b16 %v5718, %v5717
        %v5788 = vpack.c.b16 %v5720, %v5719
        %v5789 = vpack.c.b16 %v5722, %v5721
        %v5790 = vpack.c.b16 %v5724, %v5723
        %v5791 = vpack.c.b16 %v5726, %v5725
        %v5792 = vpack.c.b16 %v5728, %v5727
        %v5793 = vpack.c.b16 %v5730, %v5729
        %v5794 = vpack.c.b16 %v5732, %v5731
        %v5795 = vpack.c.b16 %v5734, %v5733
        %v5796 = vpack.c.b16 %v5736, %v5735
        %v5797 = vpack.c.b16 %v5738, %v5737
        %v5798 = vpack.c.b16 %v5740, %v5739
        %v5799 = vpack.c.b16 %v5742, %v5741
        %v5800 = vpack.c.b16 %v5744, %v5743
        %v5801 = vpack.c.b16 %v5746, %v5745
        %v5802 = vpack.c.b16 %v5748, %v5747
        %v5803 = vpack.c.b16 %v5750, %v5749
        %v5804 = vpack.c.b16 %v5752, %v5751
        %v5805 = vpack.c.b16 %v5754, %v5753
        %v5806 = vpack.c.b16 %v5756, %v5755
        %v5807 = vpack.c.b16 %v5758, %v5757
        %v5808 = vpack.c.b16 %v5760, %v5759
        %5857 = vmatprep.subr.bf16.mxu0 0
        %5858 = vmatpush1.bf16.msra.mxu0 %v5761
        %5859 = vmatprep.subr.bf16.mxu0 0
        %5860 = vmatpush1.bf16.msra.mxu0 %v5762
        %5861 = vmatprep.subr.bf16.mxu0 0
        %5862 = vmatpush1.bf16.msra.mxu0 %v5763
        %5863 = vmatprep.subr.bf16.mxu0 0
        %5864 = vmatpush1.bf16.msra.mxu0 %v5764
        %5865 = vmatprep.subr.bf16.mxu0 0
        %5866 = vmatpush1.bf16.msra.mxu0 %v5765
        %5867 = vmatprep.subr.bf16.mxu0 0
        %5868 = vmatpush1.bf16.msra.mxu0 %v5766
        %5869 = vmatprep.subr.bf16.mxu0 0
        %5870 = vmatpush1.bf16.msra.mxu0 %v5767
        %5871 = vmatprep.subr.bf16.mxu0 0
        %5872 = vmatpush1.bf16.msra.mxu0 %v5768
        %5873 = vmatprep.subr.bf16.mxu0 0
        %5874 = vmatpush1.bf16.msra.mxu0 %v5769
        %5875 = vmatprep.subr.bf16.mxu0 0
        %5876 = vmatpush1.bf16.msra.mxu0 %v5770
        %5877 = vmatprep.subr.bf16.mxu0 0
        %5878 = vmatpush1.bf16.msra.mxu0 %v5771
        %5879 = vmatprep.subr.bf16.mxu0 0
        %5880 = vmatpush1.bf16.msra.mxu0 %v5772
        %5881 = vmatprep.subr.bf16.mxu0 0
        %5882 = vmatpush1.bf16.msra.mxu0 %v5773
        %5883 = vmatprep.subr.bf16.mxu0 0
        %5884 = vmatpush1.bf16.msra.mxu0 %v5774
        %5885 = vmatprep.subr.bf16.mxu0 0
        %5886 = vmatpush1.bf16.msra.mxu0 %v5775
        %5887 = vmatprep.subr.bf16.mxu0 0
        %5888 = vmatpush1.bf16.msra.mxu0 %v5776
        %5889 = vmatprep.mubr.bf16.mxu0 %v5534
        %5890 = vmatmul.mubr.bf16.gmra.mrb[0].mxu0 %v5533
        %v5891 = vpop.f32.mrb[0].mxu0
        %v5892 = vadd.f32 0.0, %v5891
        %v5893 = vpop.f32.mrb[0].mxu0
        %v5894 = vpop.f32.mrb[0].mxu0
        %v5895 = vadd.f32 0.0, %v5894
        %v5896 = vpop.f32.mrb[0].mxu0
        %5897 = vmatprep.mubr.bf16.mxu0 %v5538
        %5898 = vmatmul.mubr.bf16.gmra.mrb[0].mxu0 %v5537
        %v5899 = vpop.f32.mrb[0].mxu0
        %v5900 = vadd.f32 0.0, %v5899
        %v5901 = vpop.f32.mrb[0].mxu0
        %v5902 = vpop.f32.mrb[0].mxu0
        %v5903 = vadd.f32 0.0, %v5902
        %v5904 = vpop.f32.mrb[0].mxu0
        %5905 = vmatprep.mubr.bf16.mxu0 %v5542
        %5906 = vmatmul.mubr.bf16.gmra.mrb[0].mxu0 %v5541
        %v5907 = vpop.f32.mrb[0].mxu0
        %v5908 = vadd.f32 0.0, %v5907
        %v5909 = vpop.f32.mrb[0].mxu0
        %v5910 = vpop.f32.mrb[0].mxu0
        %v5911 = vadd.f32 0.0, %v5910
        %v5912 = vpop.f32.mrb[0].mxu0
        %5913 = vmatprep.mubr.bf16.mxu0 %v5546
        %5914 = vmatmul.mubr.bf16.gmra.mrb[0].mxu0 %v5545
        %v5915 = vpop.f32.mrb[0].mxu0
        %v5916 = vadd.f32 0.0, %v5915
        %v5917 = vpop.f32.mrb[0].mxu0
        %v5918 = vpop.f32.mrb[0].mxu0
        %v5919 = vadd.f32 0.0, %v5918
        %v5920 = vpop.f32.mrb[0].mxu0
        %5921 = vdwg.mxu0
        %5922 = vmatprep.subr.bf16.mxu0 0
        %5923 = vmatpush1.bf16.msra.mxu0 %v5777
        %5924 = vmatprep.subr.bf16.mxu0 0
        %5925 = vmatpush1.bf16.msra.mxu0 %v5778
        %5926 = vmatprep.subr.bf16.mxu0 0
        %5927 = vmatpush1.bf16.msra.mxu0 %v5779
        %5928 = vmatprep.subr.bf16.mxu0 0
        %5929 = vmatpush1.bf16.msra.mxu0 %v5780
        %5930 = vmatprep.subr.bf16.mxu0 0
        %5931 = vmatpush1.bf16.msra.mxu0 %v5781
        %5932 = vmatprep.subr.bf16.mxu0 0
        %5933 = vmatpush1.bf16.msra.mxu0 %v5782
        %5934 = vmatprep.subr.bf16.mxu0 0
        %5935 = vmatpush1.bf16.msra.mxu0 %v5783
        %5936 = vmatprep.subr.bf16.mxu0 0
        %5937 = vmatpush1.bf16.msra.mxu0 %v5784
        %5938 = vmatprep.subr.bf16.mxu0 0
        %5939 = vmatpush1.bf16.msra.mxu0 %v5785
        %5940 = vmatprep.subr.bf16.mxu0 0
        %5941 = vmatpush1.bf16.msra.mxu0 %v5786
        %5942 = vmatprep.subr.bf16.mxu0 0
        %5943 = vmatpush1.bf16.msra.mxu0 %v5787
        %5944 = vmatprep.subr.bf16.mxu0 0
        %5945 = vmatpush1.bf16.msra.mxu0 %v5788
        %5946 = vmatprep.subr.bf16.mxu0 0
        %5947 = vmatpush1.bf16.msra.mxu0 %v5789
        %5948 = vmatprep.subr.bf16.mxu0 0
        %5949 = vmatpush1.bf16.msra.mxu0 %v5790
        %5950 = vmatprep.subr.bf16.mxu0 0
        %5951 = vmatpush1.bf16.msra.mxu0 %v5791
        %5952 = vmatprep.subr.bf16.mxu0 0
        %5953 = vmatpush1.bf16.msra.mxu0 %v5792
        %5954 = vmatprep.mubr.bf16.mxu0 %v5536
        %5955 = vmatmul.mubr.bf16.gmra.mrb[0].mxu0 %v5535
        %v5956 = vpop.f32.mrb[0].mxu0
        %v5957 = vadd.f32 %v5892, %v5956
        %v5958 = vpop.f32.mrb[0].mxu0
        %v5959 = vpop.f32.mrb[0].mxu0
        %v5960 = vadd.f32 %v5895, %v5959
        %v5961 = vpop.f32.mrb[0].mxu0
        %5962 = vmatprep.mubr.bf16.mxu0 %v5540
        %5963 = vmatmul.mubr.bf16.gmra.mrb[0].mxu0 %v5539
        %v5964 = vpop.f32.mrb[0].mxu0
        %v5965 = vadd.f32 %v5900, %v5964
        %v5966 = vpop.f32.mrb[0].mxu0
        %v5967 = vpop.f32.mrb[0].mxu0
        %v5968 = vadd.f32 %v5903, %v5967
        %v5969 = vpop.f32.mrb[0].mxu0
        %5970 = vmatprep.mubr.bf16.mxu0 %v5544
        %5971 = vmatmul.mubr.bf16.gmra.mrb[0].mxu0 %v5543
        %v5972 = vpop.f32.mrb[0].mxu0
        %v5973 = vadd.f32 %v5908, %v5972
        %v5974 = vpop.f32.mrb[0].mxu0
        %v5975 = vpop.f32.mrb[0].mxu0
        %v5976 = vadd.f32 %v5911, %v5975
        %v5977 = vpop.f32.mrb[0].mxu0
        %5978 = vmatprep.mubr.bf16.mxu0 %v5548
        %5979 = vmatmul.mubr.bf16.gmra.mrb[0].mxu0 %v5547
        %v5980 = vpop.f32.mrb[0].mxu0
        %v5981 = vadd.f32 %v5916, %v5980
        %v5982 = vpop.f32.mrb[0].mxu0
        %v5983 = vpop.f32.mrb[0].mxu0
        %v5984 = vadd.f32 %v5919, %v5983
        %v5985 = vpop.f32.mrb[0].mxu0
        %5986 = vdwg.mxu0
        %5987 = vmatprep.subr.bf16.mxu0 0
        %5988 = vmatpush1.bf16.msra.mxu0 %v5793
        %5989 = vmatprep.subr.bf16.mxu0 0
        %5990 = vmatpush1.bf16.msra.mxu0 %v5794
        %5991 = vmatprep.subr.bf16.mxu0 0
        %5992 = vmatpush1.bf16.msra.mxu0 %v5795
        %5993 = vmatprep.subr.bf16.mxu0 0
        %5994 = vmatpush1.bf16.msra.mxu0 %v5796
        %5995 = vmatprep.subr.bf16.mxu0 0
        %5996 = vmatpush1.bf16.msra.mxu0 %v5797
        %5997 = vmatprep.subr.bf16.mxu0 0
        %5998 = vmatpush1.bf16.msra.mxu0 %v5798
        %5999 = vmatprep.subr.bf16.mxu0 0
        %6000 = vmatpush1.bf16.msra.mxu0 %v5799
        %6001 = vmatprep.subr.bf16.mxu0 0
        %6002 = vmatpush1.bf16.msra.mxu0 %v5800
        %6003 = vmatprep.subr.bf16.mxu0 0
        %6004 = vmatpush1.bf16.msra.mxu0 %v5801
        %6005 = vmatprep.subr.bf16.mxu0 0
        %6006 = vmatpush1.bf16.msra.mxu0 %v5802
        %6007 = vmatprep.subr.bf16.mxu0 0
        %6008 = vmatpush1.bf16.msra.mxu0 %v5803
        %6009 = vmatprep.subr.bf16.mxu0 0
        %6010 = vmatpush1.bf16.msra.mxu0 %v5804
        %6011 = vmatprep.subr.bf16.mxu0 0
        %6012 = vmatpush1.bf16.msra.mxu0 %v5805
        %6013 = vmatprep.subr.bf16.mxu0 0
        %6014 = vmatpush1.bf16.msra.mxu0 %v5806
        %6015 = vmatprep.subr.bf16.mxu0 0
        %6016 = vmatpush1.bf16.msra.mxu0 %v5807
        %6017 = vmatprep.subr.bf16.mxu0 0
        %6018 = vmatpush1.bf16.msra.mxu0 %v5808
        %6019 = vmatprep.mubr.bf16.mxu0 %v5538
        %6020 = vmatmul.mubr.bf16.gmra.mrb[0].mxu0 %v5537
        %v6021 = vpop.f32.mrb[0].mxu0
        %v6022 = vadd.f32 %v5957, %v6021
        %v6023 = vpop.f32.mrb[0].mxu0
        %v6024 = vpop.f32.mrb[0].mxu0
        %v6025 = vadd.f32 %v5960, %v6024
        %v6026 = vpop.f32.mrb[0].mxu0
        %6027 = vmatprep.mubr.bf16.mxu0 %v5542
        %6028 = vmatmul.mubr.bf16.gmra.mrb[0].mxu0 %v5541
        %v6029 = vpop.f32.mrb[0].mxu0
        %v6030 = vadd.f32 %v5965, %v6029
        %v6031 = vpop.f32.mrb[0].mxu0
        %v6032 = vpop.f32.mrb[0].mxu0
        %v6033 = vadd.f32 %v5968, %v6032
        %v6034 = vpop.f32.mrb[0].mxu0
        %6035 = vmatprep.mubr.bf16.mxu0 %v5546
        %6036 = vmatmul.mubr.bf16.gmra.mrb[0].mxu0 %v5545
        %v6037 = vpop.f32.mrb[0].mxu0
        %v6038 = vadd.f32 %v5973, %v6037
        %v6039 = vpop.f32.mrb[0].mxu0
        %v6040 = vpop.f32.mrb[0].mxu0
        %v6041 = vadd.f32 %v5976, %v6040
        %v6042 = vpop.f32.mrb[0].mxu0
        %6043 = vmatprep.mubr.bf16.mxu0 %v5550
        %6044 = vmatmul.mubr.bf16.gmra.mrb[0].mxu0 %v5549
        %v6045 = vpop.f32.mrb[0].mxu0
        %v6046 = vadd.f32 %v5981, %v6045
        %v6047 = vpop.f32.mrb[0].mxu0
        %v6048 = vpop.f32.mrb[0].mxu0
        %v6049 = vadd.f32 %v5984, %v6048
        %v6050 = vpop.f32.mrb[0].mxu0
        %6051 = vdwg.mxu0
        %v6052 = vadd.f32 %v5428, %v6022
        %v6053 = vadd.f32 %v5429, %v6025
        %v6054 = vadd.f32 %v5430, %v6030
        %v6055 = vadd.f32 %v5431, %v6033
        %v6056 = vadd.f32 %v5432, %v6038
        %v6057 = vadd.f32 %v5433, %v6041
        %v6058 = vadd.f32 %v5434, %v6046
        %v6059 = vadd.f32 %v5435, %v6049
        %v6060 = vrot.slane %v4641, 1
        %v6061 = vor.u32 %v4638, %v6060
        %v6062 = vrot.slane %v4648, 1
        %v6063 = vor.u32 %v4645, %v6062
        %v6064 = vrot.slane %v4655, 1
        %v6065 = vor.u32 %v4652, %v6064
        %v6066 = vrot.slane %v4662, 1
        %v6067 = vor.u32 %v4659, %v6066
        %v6068 = vrot.slane %v4669, 1
        %v6069 = vor.u32 %v4666, %v6068
        %v6070 = vrot.slane %v4676, 1
        %v6071 = vor.u32 %v4673, %v6070
        %v6072 = vrot.slane %v4683, 1
        %v6073 = vor.u32 %v4680, %v6072
        %v6074 = vrot.slane %v4690, 1
        %v6075 = vor.u32 %v4687, %v6074
        %v6076 = vrot.slane %v4697, 1
        %v6077 = vor.u32 %v4694, %v6076
        %v6078 = vrot.slane %v4704, 1
        %v6079 = vor.u32 %v4701, %v6078
        %v6080 = vrot.slane %v4711, 1
        %v6081 = vor.u32 %v4708, %v6080
        %v6082 = vrot.slane %v4718, 1
        %v6083 = vor.u32 %v4715, %v6082
        %v6084 = vrot.slane %v4725, 1
        %v6085 = vor.u32 %v4722, %v6084
        %v6086 = vrot.slane %v4732, 1
        %v6087 = vor.u32 %v4729, %v6086
        %v6088 = vrot.slane %v4739, 1
        %v6089 = vor.u32 %v4736, %v6088
        %v6090 = vrot.slane %v4746, 1
        %v6091 = vor.u32 %v4743, %v6090
        %v6108 = vsel %vm3320, %v6061, 0
        %v6109 = vsel %vm3320, %v6063, 0
        %v6110 = vsel %vm3320, %v6065, 0
        %v6111 = vsel %vm3320, %v6067, 0
        %v6112 = vsel %vm3320, %v6069, 0
        %v6113 = vsel %vm3320, %v6071, 0
        %v6114 = vsel %vm3320, %v6073, 0
        %v6115 = vsel %vm3320, %v6075, 0
        %v6116 = vsel %vm3320, %v6077, 0
        %v6117 = vsel %vm3320, %v6079, 0
        %v6118 = vsel %vm3320, %v6081, 0
        %v6119 = vsel %vm3320, %v6083, 0
        %v6120 = vsel %vm3320, %v6085, 0
        %v6121 = vsel %vm3320, %v6087, 0
        %v6122 = vsel %vm3320, %v6089, 0
        %v6123 = vsel %vm3320, %v6091, 0
        %v6140 = vunpack.c.l.b16 %v6108
        %v6141 = vunpack.c.l.b16 %v6109
        %v6142 = vunpack.c.l.b16 %v6110
        %v6143 = vunpack.c.l.b16 %v6111
        %v6144 = vunpack.c.l.b16 %v6112
        %v6145 = vunpack.c.l.b16 %v6113
        %v6146 = vunpack.c.l.b16 %v6114
        %v6147 = vunpack.c.l.b16 %v6115
        %v6148 = vunpack.c.l.b16 %v6116
        %v6149 = vunpack.c.l.b16 %v6117
        %v6150 = vunpack.c.l.b16 %v6118
        %v6151 = vunpack.c.l.b16 %v6119
        %v6152 = vunpack.c.l.b16 %v6120
        %v6153 = vunpack.c.l.b16 %v6121
        %v6154 = vunpack.c.l.b16 %v6122
        %v6155 = vunpack.c.l.b16 %v6123
        %s6156 = scalar_lea.vmem [#allocation8], 768
        %v6157 = vld [vmem:[%s6156] sm:$0xf]
        %v6158 = vld [vmem:[%s6156 + $0x4] sm:$0xf]
        %v6159 = vld [vmem:[%s6156 + $0x8] sm:$0xf]
        %v6160 = vld [vmem:[%s6156 + $0xc] sm:$0xf]
        %v6161 = vld [vmem:[%s6156 + $0x10] sm:$0xf]
        %v6162 = vld [vmem:[%s6156 + $0x14] sm:$0xf]
        %v6163 = vld [vmem:[%s6156 + $0x18] sm:$0xf]
        %v6164 = vld [vmem:[%s6156 + $0x1c] sm:$0xf]
        %v6165 = vld [vmem:[%s6156 + $0x20] sm:$0xf]
        %v6166 = vld [vmem:[%s6156 + $0x24] sm:$0xf]
        %v6167 = vld [vmem:[%s6156 + $0x28] sm:$0xf]
        %v6168 = vld [vmem:[%s6156 + $0x2c] sm:$0xf]
        %v6169 = vld [vmem:[%s6156 + $0x30] sm:$0xf]
        %v6170 = vld [vmem:[%s6156 + $0x34] sm:$0xf]
        %v6171 = vld [vmem:[%s6156 + $0x38] sm:$0xf]
        %v6172 = vld [vmem:[%s6156 + $0x3c] sm:$0xf]
        %v6173 = vld [vmem:[%s6156 + $0x40] sm:$0xf]
        %v6174 = vld [vmem:[%s6156 + $0x44] sm:$0xf]
        %v6175 = vld [vmem:[%s6156 + $0x48] sm:$0xf]
        %v6176 = vld [vmem:[%s6156 + $0x4c] sm:$0xf]
        %v6177 = vld [vmem:[%s6156 + $0x50] sm:$0xf]
        %v6178 = vld [vmem:[%s6156 + $0x54] sm:$0xf]
        %v6179 = vld [vmem:[%s6156 + $0x58] sm:$0xf]
        %v6180 = vld [vmem:[%s6156 + $0x5c] sm:$0xf]
        %v6181 = vld [vmem:[%s6156 + $0x60] sm:$0xf]
        %v6182 = vld [vmem:[%s6156 + $0x64] sm:$0xf]
        %v6183 = vld [vmem:[%s6156 + $0x68] sm:$0xf]
        %v6184 = vld [vmem:[%s6156 + $0x6c] sm:$0xf]
        %v6185 = vld [vmem:[%s6156 + $0x70] sm:$0xf]
        %v6186 = vld [vmem:[%s6156 + $0x74] sm:$0xf]
        %v6187 = vld [vmem:[%s6156 + $0x78] sm:$0xf]
        %v6188 = vld [vmem:[%s6156 + $0x7c] sm:$0xf]
        %v6189 = vld [vmem:[%s6156 + $0x80] sm:$0xf]
        %v6190 = vld [vmem:[%s6156 + $0x84] sm:$0xf]
        %v6191 = vld [vmem:[%s6156 + $0x88] sm:$0xf]
        %v6192 = vld [vmem:[%s6156 + $0x8c] sm:$0xf]
        %v6193 = vld [vmem:[%s6156 + $0x90] sm:$0xf]
        %v6194 = vld [vmem:[%s6156 + $0x94] sm:$0xf]
        %v6195 = vld [vmem:[%s6156 + $0x98] sm:$0xf]
        %v6196 = vld [vmem:[%s6156 + $0x9c] sm:$0xf]
        %v6197 = vld [vmem:[%s6156 + $0xa0] sm:$0xf]
        %v6198 = vld [vmem:[%s6156 + $0xa4] sm:$0xf]
        %v6199 = vld [vmem:[%s6156 + $0xa8] sm:$0xf]
        %v6200 = vld [vmem:[%s6156 + $0xac] sm:$0xf]
        %v6201 = vld [vmem:[%s6156 + $0xb0] sm:$0xf]
        %v6202 = vld [vmem:[%s6156 + $0xb4] sm:$0xf]
        %v6203 = vld [vmem:[%s6156 + $0xb8] sm:$0xf]
        %v6204 = vld [vmem:[%s6156 + $0xbc] sm:$0xf]
        %v6205 = vld [vmem:[%s6156 + $0xc0] sm:$0xf]
        %v6206 = vld [vmem:[%s6156 + $0xc4] sm:$0xf]
        %v6207 = vld [vmem:[%s6156 + $0xc8] sm:$0xf]
        %v6208 = vld [vmem:[%s6156 + $0xcc] sm:$0xf]
        %v6209 = vld [vmem:[%s6156 + $0xd0] sm:$0xf]
        %v6210 = vld [vmem:[%s6156 + $0xd4] sm:$0xf]
        %v6211 = vld [vmem:[%s6156 + $0xd8] sm:$0xf]
        %v6212 = vld [vmem:[%s6156 + $0xdc] sm:$0xf]
        %v6213 = vld [vmem:[%s6156 + $0xe0] sm:$0xf]
        %v6214 = vld [vmem:[%s6156 + $0xe4] sm:$0xf]
        %v6215 = vld [vmem:[%s6156 + $0xe8] sm:$0xf]
        %v6216 = vld [vmem:[%s6156 + $0xec] sm:$0xf]
        %v6217 = vld [vmem:[%s6156 + $0xf0] sm:$0xf]
        %v6218 = vld [vmem:[%s6156 + $0xf4] sm:$0xf]
        %v6219 = vld [vmem:[%s6156 + $0xf8] sm:$0xf]
        %v6220 = vld [vmem:[%s6156 + $0xfc] sm:$0xf]
        %v6221 = vld [vmem:[%s6156 + $0x100] sm:$0xf]
        %v6222 = vld [vmem:[%s6156 + $0x104] sm:$0xf]
        %v6223 = vld [vmem:[%s6156 + $0x108] sm:$0xf]
        %v6224 = vld [vmem:[%s6156 + $0x10c] sm:$0xf]
        %v6225 = vld [vmem:[%s6156 + $0x110] sm:$0xf]
        %v6226 = vld [vmem:[%s6156 + $0x114] sm:$0xf]
        %v6227 = vld [vmem:[%s6156 + $0x118] sm:$0xf]
        %v6228 = vld [vmem:[%s6156 + $0x11c] sm:$0xf]
        %v6229 = vld [vmem:[%s6156 + $0x120] sm:$0xf]
        %v6230 = vld [vmem:[%s6156 + $0x124] sm:$0xf]
        %v6231 = vld [vmem:[%s6156 + $0x128] sm:$0xf]
        %v6232 = vld [vmem:[%s6156 + $0x12c] sm:$0xf]
        %v6233 = vld [vmem:[%s6156 + $0x130] sm:$0xf]
        %v6234 = vld [vmem:[%s6156 + $0x134] sm:$0xf]
        %v6235 = vld [vmem:[%s6156 + $0x138] sm:$0xf]
        %v6236 = vld [vmem:[%s6156 + $0x13c] sm:$0xf]
        %v6237 = vld [vmem:[%s6156 + $0x140] sm:$0xf]
        %v6238 = vld [vmem:[%s6156 + $0x144] sm:$0xf]
        %v6239 = vld [vmem:[%s6156 + $0x148] sm:$0xf]
        %v6240 = vld [vmem:[%s6156 + $0x14c] sm:$0xf]
        %v6241 = vld [vmem:[%s6156 + $0x150] sm:$0xf]
        %v6242 = vld [vmem:[%s6156 + $0x154] sm:$0xf]
        %v6243 = vld [vmem:[%s6156 + $0x158] sm:$0xf]
        %v6244 = vld [vmem:[%s6156 + $0x15c] sm:$0xf]
        %v6245 = vld [vmem:[%s6156 + $0x160] sm:$0xf]
        %v6246 = vld [vmem:[%s6156 + $0x164] sm:$0xf]
        %v6247 = vld [vmem:[%s6156 + $0x168] sm:$0xf]
        %v6248 = vld [vmem:[%s6156 + $0x16c] sm:$0xf]
        %v6249 = vld [vmem:[%s6156 + $0x170] sm:$0xf]
        %v6250 = vld [vmem:[%s6156 + $0x174] sm:$0xf]
        %v6251 = vld [vmem:[%s6156 + $0x178] sm:$0xf]
        %v6252 = vld [vmem:[%s6156 + $0x17c] sm:$0xf]
        %v6253 = vpack.c.b16 %v6140, %v870
        %v6254 = vpack.c.b16 %v6141, %v870
        %v6255 = vpack.c.b16 %v6142, %v6140
        %v6256 = vpack.c.b16 %v6143, %v6141
        %v6257 = vpack.c.b16 %v6144, %v6142
        %v6258 = vpack.c.b16 %v6145, %v6143
        %v6259 = vpack.c.b16 %v6146, %v6144
        %v6260 = vpack.c.b16 %v6147, %v6145
        %v6261 = vpack.c.b16 %v6148, %v6146
        %v6262 = vpack.c.b16 %v6149, %v6147
        %v6263 = vpack.c.b16 %v6150, %v6148
        %v6264 = vpack.c.b16 %v6151, %v6149
        %v6265 = vpack.c.b16 %v6152, %v6150
        %v6266 = vpack.c.b16 %v6153, %v6151
        %v6267 = vpack.c.b16 %v6154, %v6152
        %v6268 = vpack.c.b16 %v6155, %v6153
        %v6269 = vpack.c.b16 %v870, %v6154
        %v6270 = vpack.c.b16 %v870, %v6155
        %v6385 = vunpack.c.l.b16 %v6157
        %v6386 = vunpack.c.l.b16 %v6158
        %v6387 = vunpack.c.l.b16 %v6159
        %v6388 = vunpack.c.l.b16 %v6160
        %v6389 = vunpack.c.l.b16 %v6161
        %v6390 = vunpack.c.l.b16 %v6162
        %v6391 = vunpack.c.l.b16 %v6163
        %v6392 = vunpack.c.l.b16 %v6164
        %v6393 = vunpack.c.l.b16 %v6165
        %v6394 = vunpack.c.l.b16 %v6166
        %v6395 = vunpack.c.l.b16 %v6167
        %v6396 = vunpack.c.l.b16 %v6168
        %v6397 = vunpack.c.l.b16 %v6169
        %v6398 = vunpack.c.l.b16 %v6170
        %v6399 = vunpack.c.l.b16 %v6171
        %v6400 = vunpack.c.l.b16 %v6172
        %v6401 = vunpack.c.l.b16 %v6173
        %v6402 = vunpack.c.l.b16 %v6174
        %v6403 = vunpack.c.l.b16 %v6175
        %v6404 = vunpack.c.l.b16 %v6176
        %v6405 = vunpack.c.l.b16 %v6177
        %v6406 = vunpack.c.l.b16 %v6178
        %v6407 = vunpack.c.l.b16 %v6179
        %v6408 = vunpack.c.l.b16 %v6180
        %v6409 = vunpack.c.l.b16 %v6181
        %v6410 = vunpack.c.l.b16 %v6182
        %v6411 = vunpack.c.l.b16 %v6183
        %v6412 = vunpack.c.l.b16 %v6184
        %v6413 = vunpack.c.l.b16 %v6185
        %v6414 = vunpack.c.l.b16 %v6186
        %v6415 = vunpack.c.l.b16 %v6187
        %v6416 = vunpack.c.l.b16 %v6188
        %v6417 = vunpack.c.l.b16 %v6189
        %v6418 = vunpack.c.l.b16 %v6190
        %v6419 = vunpack.c.l.b16 %v6191
        %v6420 = vunpack.c.l.b16 %v6192
        %v6421 = vunpack.c.l.b16 %v6193
        %v6422 = vunpack.c.l.b16 %v6194
        %v6423 = vunpack.c.l.b16 %v6195
        %v6424 = vunpack.c.l.b16 %v6196
        %v6425 = vunpack.c.l.b16 %v6197
        %v6426 = vunpack.c.l.b16 %v6198
        %v6427 = vunpack.c.l.b16 %v6199
        %v6428 = vunpack.c.l.b16 %v6200
        %v6429 = vunpack.c.l.b16 %v6201
        %v6430 = vunpack.c.l.b16 %v6202
        %v6431 = vunpack.c.l.b16 %v6203
        %v6432 = vunpack.c.l.b16 %v6204
        %v6433 = vunpack.c.l.b16 %v6205
        %v6434 = vunpack.c.l.b16 %v6206
        %v6435 = vunpack.c.l.b16 %v6207
        %v6436 = vunpack.c.l.b16 %v6208
        %v6437 = vunpack.c.l.b16 %v6209
        %v6438 = vunpack.c.l.b16 %v6210
        %v6439 = vunpack.c.l.b16 %v6211
        %v6440 = vunpack.c.l.b16 %v6212
        %v6441 = vunpack.c.l.b16 %v6213
        %v6442 = vunpack.c.l.b16 %v6214
        %v6443 = vunpack.c.l.b16 %v6215
        %v6444 = vunpack.c.l.b16 %v6216
        %v6445 = vunpack.c.l.b16 %v6217
        %v6446 = vunpack.c.l.b16 %v6218
        %v6447 = vunpack.c.l.b16 %v6219
        %v6448 = vunpack.c.l.b16 %v6220
        %v6449 = vunpack.c.l.b16 %v6221
        %v6450 = vunpack.c.l.b16 %v6222
        %v6451 = vunpack.c.l.b16 %v6223
        %v6452 = vunpack.c.l.b16 %v6224
        %v6453 = vunpack.c.l.b16 %v6225
        %v6454 = vunpack.c.l.b16 %v6226
        %v6455 = vunpack.c.l.b16 %v6227
        %v6456 = vunpack.c.l.b16 %v6228
        %v6457 = vunpack.c.l.b16 %v6229
        %v6458 = vunpack.c.l.b16 %v6230
        %v6459 = vunpack.c.l.b16 %v6231
        %v6460 = vunpack.c.l.b16 %v6232
        %v6461 = vunpack.c.l.b16 %v6233
        %v6462 = vunpack.c.l.b16 %v6234
        %v6463 = vunpack.c.l.b16 %v6235
        %v6464 = vunpack.c.l.b16 %v6236
        %v6465 = vunpack.c.l.b16 %v6237
        %v6466 = vunpack.c.l.b16 %v6238
        %v6467 = vunpack.c.l.b16 %v6239
        %v6468 = vunpack.c.l.b16 %v6240
        %v6469 = vunpack.c.l.b16 %v6241
        %v6470 = vunpack.c.l.b16 %v6242
        %v6471 = vunpack.c.l.b16 %v6243
        %v6472 = vunpack.c.l.b16 %v6244
        %v6473 = vunpack.c.l.b16 %v6245
        %v6474 = vunpack.c.l.b16 %v6246
        %v6475 = vunpack.c.l.b16 %v6247
        %v6476 = vunpack.c.l.b16 %v6248
        %v6477 = vunpack.c.l.b16 %v6249
        %v6478 = vunpack.c.l.b16 %v6250
        %v6479 = vunpack.c.l.b16 %v6251
        %v6480 = vunpack.c.l.b16 %v6252
        %v6481 = vpack.c.b16 %v6386, %v6385
        %v6482 = vpack.c.b16 %v6388, %v6387
        %v6483 = vpack.c.b16 %v6390, %v6389
        %v6484 = vpack.c.b16 %v6392, %v6391
        %v6485 = vpack.c.b16 %v6394, %v6393
        %v6486 = vpack.c.b16 %v6396, %v6395
        %v6487 = vpack.c.b16 %v6398, %v6397
        %v6488 = vpack.c.b16 %v6400, %v6399
        %v6489 = vpack.c.b16 %v6402, %v6401
        %v6490 = vpack.c.b16 %v6404, %v6403
        %v6491 = vpack.c.b16 %v6406, %v6405
        %v6492 = vpack.c.b16 %v6408, %v6407
        %v6493 = vpack.c.b16 %v6410, %v6409
        %v6494 = vpack.c.b16 %v6412, %v6411
        %v6495 = vpack.c.b16 %v6414, %v6413
        %v6496 = vpack.c.b16 %v6416, %v6415
        %v6497 = vpack.c.b16 %v6418, %v6417
        %v6498 = vpack.c.b16 %v6420, %v6419
        %v6499 = vpack.c.b16 %v6422, %v6421
        %v6500 = vpack.c.b16 %v6424, %v6423
        %v6501 = vpack.c.b16 %v6426, %v6425
        %v6502 = vpack.c.b16 %v6428, %v6427
        %v6503 = vpack.c.b16 %v6430, %v6429
        %v6504 = vpack.c.b16 %v6432, %v6431
        %v6505 = vpack.c.b16 %v6434, %v6433
        %v6506 = vpack.c.b16 %v6436, %v6435
        %v6507 = vpack.c.b16 %v6438, %v6437
        %v6508 = vpack.c.b16 %v6440, %v6439
        %v6509 = vpack.c.b16 %v6442, %v6441
        %v6510 = vpack.c.b16 %v6444, %v6443
        %v6511 = vpack.c.b16 %v6446, %v6445
        %v6512 = vpack.c.b16 %v6448, %v6447
        %v6513 = vpack.c.b16 %v6450, %v6449
        %v6514 = vpack.c.b16 %v6452, %v6451
        %v6515 = vpack.c.b16 %v6454, %v6453
        %v6516 = vpack.c.b16 %v6456, %v6455
        %v6517 = vpack.c.b16 %v6458, %v6457
        %v6518 = vpack.c.b16 %v6460, %v6459
        %v6519 = vpack.c.b16 %v6462, %v6461
        %v6520 = vpack.c.b16 %v6464, %v6463
        %v6521 = vpack.c.b16 %v6466, %v6465
        %v6522 = vpack.c.b16 %v6468, %v6467
        %v6523 = vpack.c.b16 %v6470, %v6469
        %v6524 = vpack.c.b16 %v6472, %v6471
        %v6525 = vpack.c.b16 %v6474, %v6473
        %v6526 = vpack.c.b16 %v6476, %v6475
        %v6527 = vpack.c.b16 %v6478, %v6477
        %v6528 = vpack.c.b16 %v6480, %v6479
        %6577 = vmatprep.subr.bf16.mxu0 0
        %6578 = vmatpush1.bf16.msra.mxu0 %v6481
        %6579 = vmatprep.subr.bf16.mxu0 0
        %6580 = vmatpush1.bf16.msra.mxu0 %v6482
        %6581 = vmatprep.subr.bf16.mxu0 0
        %6582 = vmatpush1.bf16.msra.mxu0 %v6483
        %6583 = vmatprep.subr.bf16.mxu0 0
        %6584 = vmatpush1.bf16.msra.mxu0 %v6484
        %6585 = vmatprep.subr.bf16.mxu0 0
        %6586 = vmatpush1.bf16.msra.mxu0 %v6485
        %6587 = vmatprep.subr.bf16.mxu0 0
        %6588 = vmatpush1.bf16.msra.mxu0 %v6486
        %6589 = vmatprep.subr.bf16.mxu0 0
        %6590 = vmatpush1.bf16.msra.mxu0 %v6487
        %6591 = vmatprep.subr.bf16.mxu0 0
        %6592 = vmatpush1.bf16.msra.mxu0 %v6488
        %6593 = vmatprep.subr.bf16.mxu0 0
        %6594 = vmatpush1.bf16.msra.mxu0 %v6489
        %6595 = vmatprep.subr.bf16.mxu0 0
        %6596 = vmatpush1.bf16.msra.mxu0 %v6490
        %6597 = vmatprep.subr.bf16.mxu0 0
        %6598 = vmatpush1.bf16.msra.mxu0 %v6491
        %6599 = vmatprep.subr.bf16.mxu0 0
        %6600 = vmatpush1.bf16.msra.mxu0 %v6492
        %6601 = vmatprep.subr.bf16.mxu0 0
        %6602 = vmatpush1.bf16.msra.mxu0 %v6493
        %6603 = vmatprep.subr.bf16.mxu0 0
        %6604 = vmatpush1.bf16.msra.mxu0 %v6494
        %6605 = vmatprep.subr.bf16.mxu0 0
        %6606 = vmatpush1.bf16.msra.mxu0 %v6495
        %6607 = vmatprep.subr.bf16.mxu0 0
        %6608 = vmatpush1.bf16.msra.mxu0 %v6496
        %6609 = vmatprep.mubr.bf16.mxu0 %v6254
        %6610 = vmatmul.mubr.bf16.gmra.mrb[0].mxu0 %v6253
        %v6611 = vpop.f32.mrb[0].mxu0
        %v6612 = vadd.f32 0.0, %v6611
        %v6613 = vpop.f32.mrb[0].mxu0
        %v6614 = vpop.f32.mrb[0].mxu0
        %v6615 = vadd.f32 0.0, %v6614
        %v6616 = vpop.f32.mrb[0].mxu0
        %6617 = vmatprep.mubr.bf16.mxu0 %v6258
        %6618 = vmatmul.mubr.bf16.gmra.mrb[0].mxu0 %v6257
        %v6619 = vpop.f32.mrb[0].mxu0
        %v6620 = vadd.f32 0.0, %v6619
        %v6621 = vpop.f32.mrb[0].mxu0
        %v6622 = vpop.f32.mrb[0].mxu0
        %v6623 = vadd.f32 0.0, %v6622
        %v6624 = vpop.f32.mrb[0].mxu0
        %6625 = vmatprep.mubr.bf16.mxu0 %v6262
        %6626 = vmatmul.mubr.bf16.gmra.mrb[0].mxu0 %v6261
        %v6627 = vpop.f32.mrb[0].mxu0
        %v6628 = vadd.f32 0.0, %v6627
        %v6629 = vpop.f32.mrb[0].mxu0
        %v6630 = vpop.f32.mrb[0].mxu0
        %v6631 = vadd.f32 0.0, %v6630
        %v6632 = vpop.f32.mrb[0].mxu0
        %6633 = vmatprep.mubr.bf16.mxu0 %v6266
        %6634 = vmatmul.mubr.bf16.gmra.mrb[0].mxu0 %v6265
        %v6635 = vpop.f32.mrb[0].mxu0
        %v6636 = vadd.f32 0.0, %v6635
        %v6637 = vpop.f32.mrb[0].mxu0
        %v6638 = vpop.f32.mrb[0].mxu0
        %v6639 = vadd.f32 0.0, %v6638
        %v6640 = vpop.f32.mrb[0].mxu0
        %6641 = vdwg.mxu0
        %6642 = vmatprep.subr.bf16.mxu0 0
        %6643 = vmatpush1.bf16.msra.mxu0 %v6497
        %6644 = vmatprep.subr.bf16.mxu0 0
        %6645 = vmatpush1.bf16.msra.mxu0 %v6498
        %6646 = vmatprep.subr.bf16.mxu0 0
        %6647 = vmatpush1.bf16.msra.mxu0 %v6499
        %6648 = vmatprep.subr.bf16.mxu0 0
        %6649 = vmatpush1.bf16.msra.mxu0 %v6500
        %6650 = vmatprep.subr.bf16.mxu0 0
        %6651 = vmatpush1.bf16.msra.mxu0 %v6501
        %6652 = vmatprep.subr.bf16.mxu0 0
        %6653 = vmatpush1.bf16.msra.mxu0 %v6502
        %6654 = vmatprep.subr.bf16.mxu0 0
        %6655 = vmatpush1.bf16.msra.mxu0 %v6503
        %6656 = vmatprep.subr.bf16.mxu0 0
        %6657 = vmatpush1.bf16.msra.mxu0 %v6504
        %6658 = vmatprep.subr.bf16.mxu0 0
        %6659 = vmatpush1.bf16.msra.mxu0 %v6505
        %6660 = vmatprep.subr.bf16.mxu0 0
        %6661 = vmatpush1.bf16.msra.mxu0 %v6506
        %6662 = vmatprep.subr.bf16.mxu0 0
        %6663 = vmatpush1.bf16.msra.mxu0 %v6507
        %6664 = vmatprep.subr.bf16.mxu0 0
        %6665 = vmatpush1.bf16.msra.mxu0 %v6508
        %6666 = vmatprep.subr.bf16.mxu0 0
        %6667 = vmatpush1.bf16.msra.mxu0 %v6509
        %6668 = vmatprep.subr.bf16.mxu0 0
        %6669 = vmatpush1.bf16.msra.mxu0 %v6510
        %6670 = vmatprep.subr.bf16.mxu0 0
        %6671 = vmatpush1.bf16.msra.mxu0 %v6511
        %6672 = vmatprep.subr.bf16.mxu0 0
        %6673 = vmatpush1.bf16.msra.mxu0 %v6512
        %6674 = vmatprep.mubr.bf16.mxu0 %v6256
        %6675 = vmatmul.mubr.bf16.gmra.mrb[0].mxu0 %v6255
        %v6676 = vpop.f32.mrb[0].mxu0
        %v6677 = vadd.f32 %v6612, %v6676
        %v6678 = vpop.f32.mrb[0].mxu0
        %v6679 = vpop.f32.mrb[0].mxu0
        %v6680 = vadd.f32 %v6615, %v6679
        %v6681 = vpop.f32.mrb[0].mxu0
        %6682 = vmatprep.mubr.bf16.mxu0 %v6260
        %6683 = vmatmul.mubr.bf16.gmra.mrb[0].mxu0 %v6259
        %v6684 = vpop.f32.mrb[0].mxu0
        %v6685 = vadd.f32 %v6620, %v6684
        %v6686 = vpop.f32.mrb[0].mxu0
        %v6687 = vpop.f32.mrb[0].mxu0
        %v6688 = vadd.f32 %v6623, %v6687
        %v6689 = vpop.f32.mrb[0].mxu0
        %6690 = vmatprep.mubr.bf16.mxu0 %v6264
        %6691 = vmatmul.mubr.bf16.gmra.mrb[0].mxu0 %v6263
        %v6692 = vpop.f32.mrb[0].mxu0
        %v6693 = vadd.f32 %v6628, %v6692
        %v6694 = vpop.f32.mrb[0].mxu0
        %v6695 = vpop.f32.mrb[0].mxu0
        %v6696 = vadd.f32 %v6631, %v6695
        %v6697 = vpop.f32.mrb[0].mxu0
        %6698 = vmatprep.mubr.bf16.mxu0 %v6268
        %6699 = vmatmul.mubr.bf16.gmra.mrb[0].mxu0 %v6267
        %v6700 = vpop.f32.mrb[0].mxu0
        %v6701 = vadd.f32 %v6636, %v6700
        %v6702 = vpop.f32.mrb[0].mxu0
        %v6703 = vpop.f32.mrb[0].mxu0
        %v6704 = vadd.f32 %v6639, %v6703
        %v6705 = vpop.f32.mrb[0].mxu0
        %6706 = vdwg.mxu0
        %6707 = vmatprep.subr.bf16.mxu0 0
        %6708 = vmatpush1.bf16.msra.mxu0 %v6513
        %6709 = vmatprep.subr.bf16.mxu0 0
        %6710 = vmatpush1.bf16.msra.mxu0 %v6514
        %6711 = vmatprep.subr.bf16.mxu0 0
        %6712 = vmatpush1.bf16.msra.mxu0 %v6515
        %6713 = vmatprep.subr.bf16.mxu0 0
        %6714 = vmatpush1.bf16.msra.mxu0 %v6516
        %6715 = vmatprep.subr.bf16.mxu0 0
        %6716 = vmatpush1.bf16.msra.mxu0 %v6517
        %6717 = vmatprep.subr.bf16.mxu0 0
        %6718 = vmatpush1.bf16.msra.mxu0 %v6518
        %6719 = vmatprep.subr.bf16.mxu0 0
        %6720 = vmatpush1.bf16.msra.mxu0 %v6519
        %6721 = vmatprep.subr.bf16.mxu0 0
        %6722 = vmatpush1.bf16.msra.mxu0 %v6520
        %6723 = vmatprep.subr.bf16.mxu0 0
        %6724 = vmatpush1.bf16.msra.mxu0 %v6521
        %6725 = vmatprep.subr.bf16.mxu0 0
        %6726 = vmatpush1.bf16.msra.mxu0 %v6522
        %6727 = vmatprep.subr.bf16.mxu0 0
        %6728 = vmatpush1.bf16.msra.mxu0 %v6523
        %6729 = vmatprep.subr.bf16.mxu0 0
        %6730 = vmatpush1.bf16.msra.mxu0 %v6524
        %6731 = vmatprep.subr.bf16.mxu0 0
        %6732 = vmatpush1.bf16.msra.mxu0 %v6525
        %6733 = vmatprep.subr.bf16.mxu0 0
        %6734 = vmatpush1.bf16.msra.mxu0 %v6526
        %6735 = vmatprep.subr.bf16.mxu0 0
        %6736 = vmatpush1.bf16.msra.mxu0 %v6527
        %6737 = vmatprep.subr.bf16.mxu0 0
        %6738 = vmatpush1.bf16.msra.mxu0 %v6528
        %6739 = vmatprep.mubr.bf16.mxu0 %v6258
        %6740 = vmatmul.mubr.bf16.gmra.mrb[0].mxu0 %v6257
        %v6741 = vpop.f32.mrb[0].mxu0
        %v6742 = vadd.f32 %v6677, %v6741
        %v6743 = vpop.f32.mrb[0].mxu0
        %v6744 = vpop.f32.mrb[0].mxu0
        %v6745 = vadd.f32 %v6680, %v6744
        %v6746 = vpop.f32.mrb[0].mxu0
        %6747 = vmatprep.mubr.bf16.mxu0 %v6262
        %6748 = vmatmul.mubr.bf16.gmra.mrb[0].mxu0 %v6261
        %v6749 = vpop.f32.mrb[0].mxu0
        %v6750 = vadd.f32 %v6685, %v6749
        %v6751 = vpop.f32.mrb[0].mxu0
        %v6752 = vpop.f32.mrb[0].mxu0
        %v6753 = vadd.f32 %v6688, %v6752
        %v6754 = vpop.f32.mrb[0].mxu0
        %6755 = vmatprep.mubr.bf16.mxu0 %v6266
        %6756 = vmatmul.mubr.bf16.gmra.mrb[0].mxu0 %v6265
        %v6757 = vpop.f32.mrb[0].mxu0
        %v6758 = vadd.f32 %v6693, %v6757
        %v6759 = vpop.f32.mrb[0].mxu0
        %v6760 = vpop.f32.mrb[0].mxu0
        %v6761 = vadd.f32 %v6696, %v6760
        %v6762 = vpop.f32.mrb[0].mxu0
        %6763 = vmatprep.mubr.bf16.mxu0 %v6270
        %6764 = vmatmul.mubr.bf16.gmra.mrb[0].mxu0 %v6269
        %v6765 = vpop.f32.mrb[0].mxu0
        %v6766 = vadd.f32 %v6701, %v6765
        %v6767 = vpop.f32.mrb[0].mxu0
        %v6768 = vpop.f32.mrb[0].mxu0
        %v6769 = vadd.f32 %v6704, %v6768
        %v6770 = vpop.f32.mrb[0].mxu0
        %6771 = vdwg.mxu0
        %v6772 = vadd.f32 %v6052, %v6742
        %v6773 = vadd.f32 %v6053, %v6745
        %v6774 = vadd.f32 %v6054, %v6750
        %v6775 = vadd.f32 %v6055, %v6753
        %v6776 = vadd.f32 %v6056, %v6758
        %v6777 = vadd.f32 %v6057, %v6761
        %v6778 = vadd.f32 %v6058, %v6766
        %v6779 = vadd.f32 %v6059, %v6769
        %v6780 = vmax.f32 %v6772, 0.0
        %v6781 = vmax.f32 %v6773, 0.0
        %v6782 = vmax.f32 %v6774, 0.0
        %v6783 = vmax.f32 %v6775, 0.0
        %v6784 = vmax.f32 %v6776, 0.0
        %v6785 = vmax.f32 %v6777, 0.0
        %v6786 = vmax.f32 %v6778, 0.0
        %v6787 = vmax.f32 %v6779, 0.0
        %v6788 = vpack.c.bf16 %v6781, %v6780
        %v6789 = vpack.c.bf16 %v6783, %v6782
        %v6790 = vpack.c.bf16 %v6785, %v6784
        %v6791 = vpack.c.bf16 %v6787, %v6786
        %v6792 = vld [vmem:[%s1] sm:$0xf]
        %v6793 = vld [vmem:[%s1 + $0x4] sm:$0xf]
        %v6794 = vld [vmem:[%s1 + $0x8] sm:$0xf]
        %v6795 = vld [vmem:[%s1 + $0xc] sm:$0xf]
        %v6796 = vld [vmem:[%s1 + $0x10] sm:$0xf]
        %v6797 = vld [vmem:[%s1 + $0x14] sm:$0xf]
        %v6798 = vld [vmem:[%s1 + $0x18] sm:$0xf]
        %v6799 = vld [vmem:[%s1 + $0x1c] sm:$0xf]
        %v6800 = vld [vmem:[%s1 + $0x20] sm:$0xf]
        %v6801 = vld [vmem:[%s1 + $0x24] sm:$0xf]
        %v6802 = vld [vmem:[%s1 + $0x28] sm:$0xf]
        %v6803 = vld [vmem:[%s1 + $0x2c] sm:$0xf]
        %v6804 = vld [vmem:[%s1 + $0x30] sm:$0xf]
        %v6805 = vld [vmem:[%s1 + $0x34] sm:$0xf]
        %v6806 = vld [vmem:[%s1 + $0x38] sm:$0xf]
        %v6807 = vld [vmem:[%s1 + $0x3c] sm:$0xf]
        %v6808 = vld [vmem:[%s1 + $0x40] sm:$0xf]
        %v6809 = vld [vmem:[%s1 + $0x44] sm:$0xf]
        %v6810 = vld [vmem:[%s1 + $0x48] sm:$0xf]
        %v6811 = vld [vmem:[%s1 + $0x4c] sm:$0xf]
        %v6812 = vld [vmem:[%s1 + $0x50] sm:$0xf]
        %v6813 = vld [vmem:[%s1 + $0x54] sm:$0xf]
        %v6814 = vld [vmem:[%s1 + $0x58] sm:$0xf]
        %v6815 = vld [vmem:[%s1 + $0x5c] sm:$0xf]
        %v6816 = vld [vmem:[%s1 + $0x60] sm:$0xf]
        %v6817 = vld [vmem:[%s1 + $0x64] sm:$0xf]
        %v6818 = vld [vmem:[%s1 + $0x68] sm:$0xf]
        %v6819 = vld [vmem:[%s1 + $0x6c] sm:$0xf]
        %v6820 = vld [vmem:[%s1 + $0x70] sm:$0xf]
        %v6821 = vld [vmem:[%s1 + $0x74] sm:$0xf]
        %v6822 = vld [vmem:[%s1 + $0x78] sm:$0xf]
        %v6823 = vld [vmem:[%s1 + $0x7c] sm:$0xf]
        %v6856 = vunpack.c.l.b16 %v6792
        %v6857 = vunpack.c.l.b16 %v6793
        %v6858 = vunpack.c.l.b16 %v6794
        %v6859 = vunpack.c.l.b16 %v6795
        %v6860 = vunpack.c.l.b16 %v6796
        %v6861 = vunpack.c.l.b16 %v6797
        %v6862 = vunpack.c.l.b16 %v6798
        %v6863 = vunpack.c.l.b16 %v6799
        %v6864 = vunpack.c.l.b16 %v6800
        %v6865 = vunpack.c.l.b16 %v6801
        %v6866 = vunpack.c.l.b16 %v6802
        %v6867 = vunpack.c.l.b16 %v6803
        %v6868 = vunpack.c.l.b16 %v6804
        %v6869 = vunpack.c.l.b16 %v6805
        %v6870 = vunpack.c.l.b16 %v6806
        %v6871 = vunpack.c.l.b16 %v6807
        %v6872 = vunpack.c.l.b16 %v6808
        %v6873 = vunpack.c.l.b16 %v6809
        %v6874 = vunpack.c.l.b16 %v6810
        %v6875 = vunpack.c.l.b16 %v6811
        %v6876 = vunpack.c.l.b16 %v6812
        %v6877 = vunpack.c.l.b16 %v6813
        %v6878 = vunpack.c.l.b16 %v6814
        %v6879 = vunpack.c.l.b16 %v6815
        %v6880 = vunpack.c.l.b16 %v6816
        %v6881 = vunpack.c.l.b16 %v6817
        %v6882 = vunpack.c.l.b16 %v6818
        %v6883 = vunpack.c.l.b16 %v6819
        %v6884 = vunpack.c.l.b16 %v6820
        %v6885 = vunpack.c.l.b16 %v6821
        %v6886 = vunpack.c.l.b16 %v6822
        %v6887 = vunpack.c.l.b16 %v6823
        %v6888 = vpack.c.b16 %v6857, %v6856
        %v6889 = vpack.c.b16 %v6859, %v6858
        %v6890 = vpack.c.b16 %v6861, %v6860
        %v6891 = vpack.c.b16 %v6863, %v6862
        %v6892 = vpack.c.b16 %v6865, %v6864
        %v6893 = vpack.c.b16 %v6867, %v6866
        %v6894 = vpack.c.b16 %v6869, %v6868
        %v6895 = vpack.c.b16 %v6871, %v6870
        %v6896 = vpack.c.b16 %v6873, %v6872
        %v6897 = vpack.c.b16 %v6875, %v6874
        %v6898 = vpack.c.b16 %v6877, %v6876
        %v6899 = vpack.c.b16 %v6879, %v6878
        %v6900 = vpack.c.b16 %v6881, %v6880
        %v6901 = vpack.c.b16 %v6883, %v6882
        %v6902 = vpack.c.b16 %v6885, %v6884
        %v6903 = vpack.c.b16 %v6887, %v6886
        %vm6904 = vcmask 523264
        %v6906 = vsel %vm6904, %v6888, 0
        %v6909 = vsel %vm6904, %v6889, 0
        %v6912 = vsel %vm6904, %v6890, 0
        %v6915 = vsel %vm6904, %v6891, 0
        %v6918 = vsel %vm6904, %v6892, 0
        %v6921 = vsel %vm6904, %v6893, 0
        %v6924 = vsel %vm6904, %v6894, 0
        %v6927 = vsel %vm6904, %v6895, 0
        %v6930 = vsel %vm6904, %v6896, 0
        %v6933 = vsel %vm6904, %v6897, 0
        %v6936 = vsel %vm6904, %v6898, 0
        %v6939 = vsel %vm6904, %v6899, 0
        %v6942 = vsel %vm6904, %v6900, 0
        %v6945 = vsel %vm6904, %v6901, 0
        %v6948 = vsel %vm6904, %v6902, 0
        %v6951 = vsel %vm6904, %v6903, 0
        %6953 = vmatprep.subr.bf16.mxu0 0
        %6954 = vmatpush1.bf16.msra.mxu0 %v6788
        %6955 = vmatprep.subr.bf16.mxu0 0
        %6956 = vmatpush1.bf16.msra.mxu0 %v6789
        %6957 = vmatprep.subr.bf16.mxu0 0
        %6958 = vmatpush1.bf16.msra.mxu0 %v6790
        %6959 = vmatprep.subr.bf16.mxu0 0
        %6960 = vmatpush1.bf16.msra.mxu0 %v6791
        %6961 = vmatprep.subr.bf16.mxu0 0
        %6962 = vmatpush1.bf16.msra.mxu0 0
        %6963 = vmatprep.subr.bf16.mxu0 0
        %6964 = vmatpush1.bf16.msra.mxu0 0
        %6965 = vmatprep.subr.bf16.mxu0 0
        %6966 = vmatpush1.bf16.msra.mxu0 0
        %6967 = vmatprep.subr.bf16.mxu0 0
        %6968 = vmatpush1.bf16.msra.mxu0 0
        %6969 = vmatprep.subr.bf16.mxu0 0
        %6970 = vmatpush1.bf16.msra.mxu0 0
        %6971 = vmatprep.subr.bf16.mxu0 0
        %6972 = vmatpush1.bf16.msra.mxu0 0
        %6973 = vmatprep.subr.bf16.mxu0 0
        %6974 = vmatpush1.bf16.msra.mxu0 0
        %6975 = vmatprep.subr.bf16.mxu0 0
        %6976 = vmatpush1.bf16.msra.mxu0 0
        %6977 = vmatprep.subr.bf16.mxu0 0
        %6978 = vmatpush1.bf16.msra.mxu0 0
        %6979 = vmatprep.subr.bf16.mxu0 0
        %6980 = vmatpush1.bf16.msra.mxu0 0
        %6981 = vmatprep.subr.bf16.mxu0 0
        %6982 = vmatpush1.bf16.msra.mxu0 0
        %6983 = vmatprep.subr.bf16.mxu0 0
        %6984 = vmatpush1.bf16.msra.mxu0 0
        %6985 = vmatprep.mubr.bf16.mxu0 0
        %6986 = vmatmul.mubr.bf16.gmra.mrb[0].mxu0 %v6906
        %v6987 = vpop.f32.mrb[0].mxu0
        %v6988 = vadd.f32 0.0, %v6987
        %v6989 = vpop.f32.mrb[0].mxu0
        %v6990 = vpop.f32.mrb[0].mxu0
        %v6991 = vadd.f32 0.0, %v6990
        %v6992 = vpop.f32.mrb[0].mxu0
        %6993 = vmatprep.mubr.bf16.mxu0 0
        %6994 = vmatmul.mubr.bf16.gmra.mrb[0].mxu0 %v6909
        %v6995 = vpop.f32.mrb[0].mxu0
        %v6996 = vadd.f32 0.0, %v6995
        %v6997 = vpop.f32.mrb[0].mxu0
        %v6998 = vpop.f32.mrb[0].mxu0
        %v6999 = vadd.f32 0.0, %v6998
        %v7000 = vpop.f32.mrb[0].mxu0
        %7001 = vmatprep.mubr.bf16.mxu0 0
        %7002 = vmatmul.mubr.bf16.gmra.mrb[0].mxu0 %v6912
        %v7003 = vpop.f32.mrb[0].mxu0
        %v7004 = vadd.f32 0.0, %v7003
        %v7005 = vpop.f32.mrb[0].mxu0
        %v7006 = vpop.f32.mrb[0].mxu0
        %v7007 = vadd.f32 0.0, %v7006
        %v7008 = vpop.f32.mrb[0].mxu0
        %7009 = vmatprep.mubr.bf16.mxu0 0
        %7010 = vmatmul.mubr.bf16.gmra.mrb[0].mxu0 %v6915
        %v7011 = vpop.f32.mrb[0].mxu0
        %v7012 = vadd.f32 0.0, %v7011
        %v7013 = vpop.f32.mrb[0].mxu0
        %v7014 = vpop.f32.mrb[0].mxu0
        %v7015 = vadd.f32 0.0, %v7014
        %v7016 = vpop.f32.mrb[0].mxu0
        %7017 = vmatprep.mubr.bf16.mxu0 0
        %7018 = vmatmul.mubr.bf16.gmra.mrb[0].mxu0 %v6918
        %v7019 = vpop.f32.mrb[0].mxu0
        %v7020 = vadd.f32 0.0, %v7019
        %v7021 = vpop.f32.mrb[0].mxu0
        %v7022 = vpop.f32.mrb[0].mxu0
        %v7023 = vadd.f32 0.0, %v7022
        %v7024 = vpop.f32.mrb[0].mxu0
        %7025 = vmatprep.mubr.bf16.mxu0 0
        %7026 = vmatmul.mubr.bf16.gmra.mrb[0].mxu0 %v6921
        %v7027 = vpop.f32.mrb[0].mxu0
        %v7028 = vadd.f32 0.0, %v7027
        %v7029 = vpop.f32.mrb[0].mxu0
        %v7030 = vpop.f32.mrb[0].mxu0
        %v7031 = vadd.f32 0.0, %v7030
        %v7032 = vpop.f32.mrb[0].mxu0
        %7033 = vmatprep.mubr.bf16.mxu0 0
        %7034 = vmatmul.mubr.bf16.gmra.mrb[0].mxu0 %v6924
        %v7035 = vpop.f32.mrb[0].mxu0
        %v7036 = vadd.f32 0.0, %v7035
        %v7037 = vpop.f32.mrb[0].mxu0
        %v7038 = vpop.f32.mrb[0].mxu0
        %v7039 = vadd.f32 0.0, %v7038
        %v7040 = vpop.f32.mrb[0].mxu0
        %7041 = vmatprep.mubr.bf16.mxu0 0
        %7042 = vmatmul.mubr.bf16.gmra.mrb[0].mxu0 %v6927
        %v7043 = vpop.f32.mrb[0].mxu0
        %v7044 = vadd.f32 0.0, %v7043
        %v7045 = vpop.f32.mrb[0].mxu0
        %v7046 = vpop.f32.mrb[0].mxu0
        %v7047 = vadd.f32 0.0, %v7046
        %v7048 = vpop.f32.mrb[0].mxu0
        %7049 = vmatprep.mubr.bf16.mxu0 0
        %7050 = vmatmul.mubr.bf16.gmra.mrb[0].mxu0 %v6930
        %v7051 = vpop.f32.mrb[0].mxu0
        %v7052 = vadd.f32 0.0, %v7051
        %v7053 = vpop.f32.mrb[0].mxu0
        %v7054 = vpop.f32.mrb[0].mxu0
        %v7055 = vadd.f32 0.0, %v7054
        %v7056 = vpop.f32.mrb[0].mxu0
        %7057 = vmatprep.mubr.bf16.mxu0 0
        %7058 = vmatmul.mubr.bf16.gmra.mrb[0].mxu0 %v6933
        %v7059 = vpop.f32.mrb[0].mxu0
        %v7060 = vadd.f32 0.0, %v7059
        %v7061 = vpop.f32.mrb[0].mxu0
        %v7062 = vpop.f32.mrb[0].mxu0
        %v7063 = vadd.f32 0.0, %v7062
        %v7064 = vpop.f32.mrb[0].mxu0
        %7065 = vmatprep.mubr.bf16.mxu0 0
        %7066 = vmatmul.mubr.bf16.gmra.mrb[0].mxu0 %v6936
        %v7067 = vpop.f32.mrb[0].mxu0
        %v7068 = vadd.f32 0.0, %v7067
        %v7069 = vpop.f32.mrb[0].mxu0
        %v7070 = vpop.f32.mrb[0].mxu0
        %v7071 = vadd.f32 0.0, %v7070
        %v7072 = vpop.f32.mrb[0].mxu0
        %7073 = vmatprep.mubr.bf16.mxu0 0
        %7074 = vmatmul.mubr.bf16.gmra.mrb[0].mxu0 %v6939
        %v7075 = vpop.f32.mrb[0].mxu0
        %v7076 = vadd.f32 0.0, %v7075
        %v7077 = vpop.f32.mrb[0].mxu0
        %v7078 = vpop.f32.mrb[0].mxu0
        %v7079 = vadd.f32 0.0, %v7078
        %v7080 = vpop.f32.mrb[0].mxu0
        %7081 = vmatprep.mubr.bf16.mxu0 0
        %7082 = vmatmul.mubr.bf16.gmra.mrb[0].mxu0 %v6942
        %v7083 = vpop.f32.mrb[0].mxu0
        %v7084 = vadd.f32 0.0, %v7083
        %v7085 = vpop.f32.mrb[0].mxu0
        %v7086 = vpop.f32.mrb[0].mxu0
        %v7087 = vadd.f32 0.0, %v7086
        %v7088 = vpop.f32.mrb[0].mxu0
        %7089 = vmatprep.mubr.bf16.mxu0 0
        %7090 = vmatmul.mubr.bf16.gmra.mrb[0].mxu0 %v6945
        %v7091 = vpop.f32.mrb[0].mxu0
        %v7092 = vadd.f32 0.0, %v7091
        %v7093 = vpop.f32.mrb[0].mxu0
        %v7094 = vpop.f32.mrb[0].mxu0
        %v7095 = vadd.f32 0.0, %v7094
        %v7096 = vpop.f32.mrb[0].mxu0
        %7097 = vmatprep.mubr.bf16.mxu0 0
        %7098 = vmatmul.mubr.bf16.gmra.mrb[0].mxu0 %v6948
        %v7099 = vpop.f32.mrb[0].mxu0
        %v7100 = vadd.f32 0.0, %v7099
        %v7101 = vpop.f32.mrb[0].mxu0
        %v7102 = vpop.f32.mrb[0].mxu0
        %v7103 = vadd.f32 0.0, %v7102
        %v7104 = vpop.f32.mrb[0].mxu0
        %7105 = vmatprep.mubr.bf16.mxu0 0
        %7106 = vmatmul.mubr.bf16.gmra.mrb[0].mxu0 %v6951
        %v7107 = vpop.f32.mrb[0].mxu0
        %v7108 = vadd.f32 0.0, %v7107
        %v7109 = vpop.f32.mrb[0].mxu0
        %v7110 = vpop.f32.mrb[0].mxu0
        %v7111 = vadd.f32 0.0, %v7110
        %v7112 = vpop.f32.mrb[0].mxu0
        %7113 = vdwg.mxu0
        %v7114 = vpack.c.bf16 %v6991, %v6988
        %v7115 = vpack.c.bf16 %v6999, %v6996
        %v7116 = vpack.c.bf16 %v7007, %v7004
        %v7117 = vpack.c.bf16 %v7015, %v7012
        %v7118 = vpack.c.bf16 %v7023, %v7020
        %v7119 = vpack.c.bf16 %v7031, %v7028
        %v7120 = vpack.c.bf16 %v7039, %v7036
        %v7121 = vpack.c.bf16 %v7047, %v7044
        %v7122 = vpack.c.bf16 %v7055, %v7052
        %v7123 = vpack.c.bf16 %v7063, %v7060
        %v7124 = vpack.c.bf16 %v7071, %v7068
        %v7125 = vpack.c.bf16 %v7079, %v7076
        %v7126 = vpack.c.bf16 %v7087, %v7084
        %v7127 = vpack.c.bf16 %v7095, %v7092
        %v7128 = vpack.c.bf16 %v7103, %v7100
        %v7129 = vpack.c.bf16 %v7111, %v7108
        %v7130 = vld [vmem:[#allocation11] sm:$0x1]
        %v7132 = vlaneseq
        %v7133 = vshrl.u32 %v7132, 7
        %v7134 = vsub.s32 0, %v7133
        %v7135 = vrot.slane %v7130, %v7134
        %v7138 = vshrl.u32 %v7114, 16
        %v7140 = vrot.slane %v7138, 7
        %v7141 = vshll.u32 %v7114, 16
        %v7143 = vor.u32 %v7140, %v7141
        %v7145 = vshrl.u32 %v7115, 16
        %v7147 = vrot.slane %v7145, 7
        %v7148 = vshll.u32 %v7115, 16
        %v7150 = vor.u32 %v7147, %v7148
        %v7152 = vshrl.u32 %v7116, 16
        %v7154 = vrot.slane %v7152, 7
        %v7155 = vshll.u32 %v7116, 16
        %v7157 = vor.u32 %v7154, %v7155
        %v7159 = vshrl.u32 %v7117, 16
        %v7161 = vrot.slane %v7159, 7
        %v7162 = vshll.u32 %v7117, 16
        %v7164 = vor.u32 %v7161, %v7162
        %v7166 = vshrl.u32 %v7118, 16
        %v7168 = vrot.slane %v7166, 7
        %v7169 = vshll.u32 %v7118, 16
        %v7171 = vor.u32 %v7168, %v7169
        %v7173 = vshrl.u32 %v7119, 16
        %v7175 = vrot.slane %v7173, 7
        %v7176 = vshll.u32 %v7119, 16
        %v7178 = vor.u32 %v7175, %v7176
        %v7180 = vshrl.u32 %v7120, 16
        %v7182 = vrot.slane %v7180, 7
        %v7183 = vshll.u32 %v7120, 16
        %v7185 = vor.u32 %v7182, %v7183
        %v7187 = vshrl.u32 %v7121, 16
        %v7189 = vrot.slane %v7187, 7
        %v7190 = vshll.u32 %v7121, 16
        %v7192 = vor.u32 %v7189, %v7190
        %v7194 = vshrl.u32 %v7122, 16
        %v7196 = vrot.slane %v7194, 7
        %v7197 = vshll.u32 %v7122, 16
        %v7199 = vor.u32 %v7196, %v7197
        %v7201 = vshrl.u32 %v7123, 16
        %v7203 = vrot.slane %v7201, 7
        %v7204 = vshll.u32 %v7123, 16
        %v7206 = vor.u32 %v7203, %v7204
        %v7208 = vshrl.u32 %v7124, 16
        %v7210 = vrot.slane %v7208, 7
        %v7211 = vshll.u32 %v7124, 16
        %v7213 = vor.u32 %v7210, %v7211
        %v7215 = vshrl.u32 %v7125, 16
        %v7217 = vrot.slane %v7215, 7
        %v7218 = vshll.u32 %v7125, 16
        %v7220 = vor.u32 %v7217, %v7218
        %v7222 = vshrl.u32 %v7126, 16
        %v7224 = vrot.slane %v7222, 7
        %v7225 = vshll.u32 %v7126, 16
        %v7227 = vor.u32 %v7224, %v7225
        %v7229 = vshrl.u32 %v7127, 16
        %v7231 = vrot.slane %v7229, 7
        %v7232 = vshll.u32 %v7127, 16
        %v7234 = vor.u32 %v7231, %v7232
        %v7236 = vshrl.u32 %v7128, 16
        %v7238 = vrot.slane %v7236, 7
        %v7239 = vshll.u32 %v7128, 16
        %v7241 = vor.u32 %v7238, %v7239
        %v7243 = vshrl.u32 %v7129, 16
        %v7245 = vrot.slane %v7243, 7
        %v7246 = vshll.u32 %v7129, 16
        %v7248 = vor.u32 %v7245, %v7246
        %v7265 = vsel %vm823, 0, %v7143
        %v7266 = vsel %vm823, 0, %v7150
        %v7267 = vsel %vm823, 0, %v7157
        %v7268 = vsel %vm823, 0, %v7164
        %v7269 = vsel %vm823, 0, %v7171
        %v7270 = vsel %vm823, 0, %v7178
        %v7271 = vsel %vm823, 0, %v7185
        %v7272 = vsel %vm823, 0, %v7192
        %v7273 = vsel %vm823, 0, %v7199
        %v7274 = vsel %vm823, 0, %v7206
        %v7275 = vsel %vm823, 0, %v7213
        %v7276 = vsel %vm823, 0, %v7220
        %v7277 = vsel %vm823, 0, %v7227
        %v7278 = vsel %vm823, 0, %v7234
        %v7279 = vsel %vm823, 0, %v7241
        %v7280 = vsel %vm823, 0, %v7248
        %v7281 = vld [vmem:[%s6] sm:$0xf]
        %v7282 = vld [vmem:[%s6 + $0x4] sm:$0xf]
        %v7283 = vld [vmem:[%s6 + $0x8] sm:$0xf]
        %v7284 = vld [vmem:[%s6 + $0xc] sm:$0xf]
        %v7285 = vld [vmem:[%s6 + $0x10] sm:$0xf]
        %v7286 = vld [vmem:[%s6 + $0x14] sm:$0xf]
        %v7287 = vld [vmem:[%s6 + $0x18] sm:$0xf]
        %v7288 = vld [vmem:[%s6 + $0x1c] sm:$0xf]
        %v7289 = vld [vmem:[%s6 + $0x20] sm:$0xf]
        %v7290 = vld [vmem:[%s6 + $0x24] sm:$0xf]
        %v7291 = vld [vmem:[%s6 + $0x28] sm:$0xf]
        %v7292 = vld [vmem:[%s6 + $0x2c] sm:$0xf]
        %v7293 = vld [vmem:[%s6 + $0x30] sm:$0xf]
        %v7294 = vld [vmem:[%s6 + $0x34] sm:$0xf]
        %v7295 = vld [vmem:[%s6 + $0x38] sm:$0xf]
        %v7296 = vld [vmem:[%s6 + $0x3c] sm:$0xf]
        %v7297 = vld [vmem:[%s6 + $0x40] sm:$0xf]
        %v7298 = vld [vmem:[%s6 + $0x44] sm:$0xf]
        %v7299 = vld [vmem:[%s6 + $0x48] sm:$0xf]
        %v7300 = vld [vmem:[%s6 + $0x4c] sm:$0xf]
        %v7301 = vld [vmem:[%s6 + $0x50] sm:$0xf]
        %v7302 = vld [vmem:[%s6 + $0x54] sm:$0xf]
        %v7303 = vld [vmem:[%s6 + $0x58] sm:$0xf]
        %v7304 = vld [vmem:[%s6 + $0x5c] sm:$0xf]
        %v7305 = vld [vmem:[%s6 + $0x60] sm:$0xf]
        %v7306 = vld [vmem:[%s6 + $0x64] sm:$0xf]
        %v7307 = vld [vmem:[%s6 + $0x68] sm:$0xf]
        %v7308 = vld [vmem:[%s6 + $0x6c] sm:$0xf]
        %v7309 = vld [vmem:[%s6 + $0x70] sm:$0xf]
        %v7310 = vld [vmem:[%s6 + $0x74] sm:$0xf]
        %v7311 = vld [vmem:[%s6 + $0x78] sm:$0xf]
        %v7312 = vld [vmem:[%s6 + $0x7c] sm:$0xf]
        %v7313 = vld [vmem:[%s6 + $0x80] sm:$0xf]
        %v7314 = vld [vmem:[%s6 + $0x84] sm:$0xf]
        %v7315 = vld [vmem:[%s6 + $0x88] sm:$0xf]
        %v7316 = vld [vmem:[%s6 + $0x8c] sm:$0xf]
        %v7317 = vld [vmem:[%s6 + $0x90] sm:$0xf]
        %v7318 = vld [vmem:[%s6 + $0x94] sm:$0xf]
        %v7319 = vld [vmem:[%s6 + $0x98] sm:$0xf]
        %v7320 = vld [vmem:[%s6 + $0x9c] sm:$0xf]
        %v7321 = vld [vmem:[%s6 + $0xa0] sm:$0xf]
        %v7322 = vld [vmem:[%s6 + $0xa4] sm:$0xf]
        %v7323 = vld [vmem:[%s6 + $0xa8] sm:$0xf]
        %v7324 = vld [vmem:[%s6 + $0xac] sm:$0xf]
        %v7325 = vld [vmem:[%s6 + $0xb0] sm:$0xf]
        %v7326 = vld [vmem:[%s6 + $0xb4] sm:$0xf]
        %v7327 = vld [vmem:[%s6 + $0xb8] sm:$0xf]
        %v7328 = vld [vmem:[%s6 + $0xbc] sm:$0xf]
        %v7377 = vunpack.c.l.b16 %v7281
        %v7378 = vunpack.c.l.b16 %v7282
        %v7379 = vunpack.c.l.b16 %v7283
        %v7380 = vunpack.c.l.b16 %v7284
        %v7381 = vunpack.c.l.b16 %v7285
        %v7382 = vunpack.c.l.b16 %v7286
        %v7383 = vunpack.c.l.b16 %v7287
        %v7384 = vunpack.c.l.b16 %v7288
        %v7385 = vunpack.c.l.b16 %v7289
        %v7386 = vunpack.c.l.b16 %v7290
        %v7387 = vunpack.c.l.b16 %v7291
        %v7388 = vunpack.c.l.b16 %v7292
        %v7389 = vunpack.c.l.b16 %v7293
        %v7390 = vunpack.c.l.b16 %v7294
        %v7391 = vunpack.c.l.b16 %v7295
        %v7392 = vunpack.c.l.b16 %v7296
        %v7393 = vunpack.c.l.b16 %v7297
        %v7394 = vunpack.c.l.b16 %v7298
        %v7395 = vunpack.c.l.b16 %v7299
        %v7396 = vunpack.c.l.b16 %v7300
        %v7397 = vunpack.c.l.b16 %v7301
        %v7398 = vunpack.c.l.b16 %v7302
        %v7399 = vunpack.c.l.b16 %v7303
        %v7400 = vunpack.c.l.b16 %v7304
        %v7401 = vunpack.c.l.b16 %v7305
        %v7402 = vunpack.c.l.b16 %v7306
        %v7403 = vunpack.c.l.b16 %v7307
        %v7404 = vunpack.c.l.b16 %v7308
        %v7405 = vunpack.c.l.b16 %v7309
        %v7406 = vunpack.c.l.b16 %v7310
        %v7407 = vunpack.c.l.b16 %v7311
        %v7408 = vunpack.c.l.b16 %v7312
        %v7409 = vunpack.c.l.b16 %v7313
        %v7410 = vunpack.c.l.b16 %v7314
        %v7411 = vunpack.c.l.b16 %v7315
        %v7412 = vunpack.c.l.b16 %v7316
        %v7413 = vunpack.c.l.b16 %v7317
        %v7414 = vunpack.c.l.b16 %v7318
        %v7415 = vunpack.c.l.b16 %v7319
        %v7416 = vunpack.c.l.b16 %v7320
        %v7417 = vunpack.c.l.b16 %v7321
        %v7418 = vunpack.c.l.b16 %v7322
        %v7419 = vunpack.c.l.b16 %v7323
        %v7420 = vunpack.c.l.b16 %v7324
        %v7421 = vunpack.c.l.b16 %v7325
        %v7422 = vunpack.c.l.b16 %v7326
        %v7423 = vunpack.c.l.b16 %v7327
        %v7424 = vunpack.c.l.b16 %v7328
        %v7425 = vpack.c.b16 %v7378, %v7377
        %v7426 = vpack.c.b16 %v7380, %v7379
        %v7427 = vpack.c.b16 %v7382, %v7381
        %v7428 = vpack.c.b16 %v7384, %v7383
        %v7429 = vpack.c.b16 %v7386, %v7385
        %v7430 = vpack.c.b16 %v7388, %v7387
        %v7431 = vpack.c.b16 %v7390, %v7389
        %v7432 = vpack.c.b16 %v7392, %v7391
        %v7433 = vpack.c.b16 %v7394, %v7393
        %v7434 = vpack.c.b16 %v7396, %v7395
        %v7435 = vpack.c.b16 %v7398, %v7397
        %v7436 = vpack.c.b16 %v7400, %v7399
        %v7437 = vpack.c.b16 %v7402, %v7401
        %v7438 = vpack.c.b16 %v7404, %v7403
        %v7439 = vpack.c.b16 %v7406, %v7405
        %v7440 = vpack.c.b16 %v7408, %v7407
        %v7441 = vpack.c.b16 %v7410, %v7409
        %v7442 = vpack.c.b16 %v7412, %v7411
        %v7443 = vpack.c.b16 %v7414, %v7413
        %v7444 = vpack.c.b16 %v7416, %v7415
        %v7445 = vpack.c.b16 %v7418, %v7417
        %v7446 = vpack.c.b16 %v7420, %v7419
        %v7447 = vpack.c.b16 %v7422, %v7421
        %v7448 = vpack.c.b16 %v7424, %v7423
        %7473 = vmatprep.subr.bf16.mxu0 0
        %7474 = vmatpush1.bf16.msra.mxu0 %v7425
        %7475 = vmatprep.subr.bf16.mxu0 0
        %7476 = vmatpush1.bf16.msra.mxu0 %v7426
        %7477 = vmatprep.subr.bf16.mxu0 0
        %7478 = vmatpush1.bf16.msra.mxu0 %v7427
        %7479 = vmatprep.subr.bf16.mxu0 0
        %7480 = vmatpush1.bf16.msra.mxu0 %v7428
        %7481 = vmatprep.subr.bf16.mxu0 0
        %7482 = vmatpush1.bf16.msra.mxu0 %v7429
        %7483 = vmatprep.subr.bf16.mxu0 0
        %7484 = vmatpush1.bf16.msra.mxu0 %v7430
        %7485 = vmatprep.subr.bf16.mxu0 0
        %7486 = vmatpush1.bf16.msra.mxu0 %v7431
        %7487 = vmatprep.subr.bf16.mxu0 0
        %7488 = vmatpush1.bf16.msra.mxu0 %v7432
        %7489 = vmatprep.subr.bf16.mxu0 0
        %7490 = vmatpush1.bf16.msra.mxu0 %v7433
        %7491 = vmatprep.subr.bf16.mxu0 0
        %7492 = vmatpush1.bf16.msra.mxu0 %v7434
        %7493 = vmatprep.subr.bf16.mxu0 0
        %7494 = vmatpush1.bf16.msra.mxu0 %v7435
        %7495 = vmatprep.subr.bf16.mxu0 0
        %7496 = vmatpush1.bf16.msra.mxu0 %v7436
        %7497 = vmatprep.subr.bf16.mxu0 0
        %7498 = vmatpush1.bf16.msra.mxu0 %v7437
        %7499 = vmatprep.subr.bf16.mxu0 0
        %7500 = vmatpush1.bf16.msra.mxu0 %v7438
        %7501 = vmatprep.subr.bf16.mxu0 0
        %7502 = vmatpush1.bf16.msra.mxu0 %v7439
        %7503 = vmatprep.subr.bf16.mxu0 0
        %7504 = vmatpush1.bf16.msra.mxu0 %v7440
        %7505 = vmatprep.mubr.bf16.mxu0 %v7265
        %7506 = vmatmul.mubr.bf16.gmra.mrb[0].mxu0 0
        %v7507 = vpop.f32.mrb[0].mxu0
        %v7508 = vadd.f32 0.0, %v7507
        %v7509 = vpop.f32.mrb[0].mxu0
        %v7510 = vpop.f32.mrb[0].mxu0
        %v7511 = vadd.f32 0.0, %v7510
        %v7512 = vpop.f32.mrb[0].mxu0
        %7513 = vmatprep.mubr.bf16.mxu0 %v7266
        %7514 = vmatmul.mubr.bf16.gmra.mrb[0].mxu0 %v7265
        %v7515 = vpop.f32.mrb[0].mxu0
        %v7516 = vadd.f32 0.0, %v7515
        %v7517 = vpop.f32.mrb[0].mxu0
        %v7518 = vpop.f32.mrb[0].mxu0
        %v7519 = vadd.f32 0.0, %v7518
        %v7520 = vpop.f32.mrb[0].mxu0
        %7521 = vmatprep.mubr.bf16.mxu0 %v7267
        %7522 = vmatmul.mubr.bf16.gmra.mrb[0].mxu0 %v7266
        %v7523 = vpop.f32.mrb[0].mxu0
        %v7524 = vadd.f32 0.0, %v7523
        %v7525 = vpop.f32.mrb[0].mxu0
        %v7526 = vpop.f32.mrb[0].mxu0
        %v7527 = vadd.f32 0.0, %v7526
        %v7528 = vpop.f32.mrb[0].mxu0
        %7529 = vmatprep.mubr.bf16.mxu0 %v7268
        %7530 = vmatmul.mubr.bf16.gmra.mrb[0].mxu0 %v7267
        %v7531 = vpop.f32.mrb[0].mxu0
        %v7532 = vadd.f32 0.0, %v7531
        %v7533 = vpop.f32.mrb[0].mxu0
        %v7534 = vpop.f32.mrb[0].mxu0
        %v7535 = vadd.f32 0.0, %v7534
        %v7536 = vpop.f32.mrb[0].mxu0
        %7537 = vmatprep.mubr.bf16.mxu0 %v7269
        %7538 = vmatmul.mubr.bf16.gmra.mrb[0].mxu0 %v7268
        %v7539 = vpop.f32.mrb[0].mxu0
        %v7540 = vadd.f32 0.0, %v7539
        %v7541 = vpop.f32.mrb[0].mxu0
        %v7542 = vpop.f32.mrb[0].mxu0
        %v7543 = vadd.f32 0.0, %v7542
        %v7544 = vpop.f32.mrb[0].mxu0
        %7545 = vmatprep.mubr.bf16.mxu0 %v7270
        %7546 = vmatmul.mubr.bf16.gmra.mrb[0].mxu0 %v7269
        %v7547 = vpop.f32.mrb[0].mxu0
        %v7548 = vadd.f32 0.0, %v7547
        %v7549 = vpop.f32.mrb[0].mxu0
        %v7550 = vpop.f32.mrb[0].mxu0
        %v7551 = vadd.f32 0.0, %v7550
        %v7552 = vpop.f32.mrb[0].mxu0
        %7553 = vmatprep.mubr.bf16.mxu0 %v7271
        %7554 = vmatmul.mubr.bf16.gmra.mrb[0].mxu0 %v7270
        %v7555 = vpop.f32.mrb[0].mxu0
        %v7556 = vadd.f32 0.0, %v7555
        %v7557 = vpop.f32.mrb[0].mxu0
        %v7558 = vpop.f32.mrb[0].mxu0
        %v7559 = vadd.f32 0.0, %v7558
        %v7560 = vpop.f32.mrb[0].mxu0
        %7561 = vmatprep.mubr.bf16.mxu0 %v7272
        %7562 = vmatmul.mubr.bf16.gmra.mrb[0].mxu0 %v7271
        %v7563 = vpop.f32.mrb[0].mxu0
        %v7564 = vadd.f32 0.0, %v7563
        %v7565 = vpop.f32.mrb[0].mxu0
        %v7566 = vpop.f32.mrb[0].mxu0
        %v7567 = vadd.f32 0.0, %v7566
        %v7568 = vpop.f32.mrb[0].mxu0
        %7569 = vmatprep.mubr.bf16.mxu0 %v7273
        %7570 = vmatmul.mubr.bf16.gmra.mrb[0].mxu0 %v7272
        %v7571 = vpop.f32.mrb[0].mxu0
        %v7572 = vadd.f32 0.0, %v7571
        %v7573 = vpop.f32.mrb[0].mxu0
        %v7574 = vpop.f32.mrb[0].mxu0
        %v7575 = vadd.f32 0.0, %v7574
        %v7576 = vpop.f32.mrb[0].mxu0
        %7577 = vmatprep.mubr.bf16.mxu0 %v7274
        %7578 = vmatmul.mubr.bf16.gmra.mrb[0].mxu0 %v7273
        %v7579 = vpop.f32.mrb[0].mxu0
        %v7580 = vadd.f32 0.0, %v7579
        %v7581 = vpop.f32.mrb[0].mxu0
        %v7582 = vpop.f32.mrb[0].mxu0
        %v7583 = vadd.f32 0.0, %v7582
        %v7584 = vpop.f32.mrb[0].mxu0
        %7585 = vmatprep.mubr.bf16.mxu0 %v7275
        %7586 = vmatmul.mubr.bf16.gmra.mrb[0].mxu0 %v7274
        %v7587 = vpop.f32.mrb[0].mxu0
        %v7588 = vadd.f32 0.0, %v7587
        %v7589 = vpop.f32.mrb[0].mxu0
        %v7590 = vpop.f32.mrb[0].mxu0
        %v7591 = vadd.f32 0.0, %v7590
        %v7592 = vpop.f32.mrb[0].mxu0
        %7593 = vmatprep.mubr.bf16.mxu0 %v7276
        %7594 = vmatmul.mubr.bf16.gmra.mrb[0].mxu0 %v7275
        %v7595 = vpop.f32.mrb[0].mxu0
        %v7596 = vadd.f32 0.0, %v7595
        %v7597 = vpop.f32.mrb[0].mxu0
        %v7598 = vpop.f32.mrb[0].mxu0
        %v7599 = vadd.f32 0.0, %v7598
        %v7600 = vpop.f32.mrb[0].mxu0
        %7601 = vmatprep.mubr.bf16.mxu0 %v7277
        %7602 = vmatmul.mubr.bf16.gmra.mrb[0].mxu0 %v7276
        %v7603 = vpop.f32.mrb[0].mxu0
        %v7604 = vadd.f32 0.0, %v7603
        %v7605 = vpop.f32.mrb[0].mxu0
        %v7606 = vpop.f32.mrb[0].mxu0
        %v7607 = vadd.f32 0.0, %v7606
        %v7608 = vpop.f32.mrb[0].mxu0
        %7609 = vmatprep.mubr.bf16.mxu0 %v7278
        %7610 = vmatmul.mubr.bf16.gmra.mrb[0].mxu0 %v7277
        %v7611 = vpop.f32.mrb[0].mxu0
        %v7612 = vadd.f32 0.0, %v7611
        %v7613 = vpop.f32.mrb[0].mxu0
        %v7614 = vpop.f32.mrb[0].mxu0
        %v7615 = vadd.f32 0.0, %v7614
        %v7616 = vpop.f32.mrb[0].mxu0
        %7617 = vmatprep.mubr.bf16.mxu0 %v7279
        %7618 = vmatmul.mubr.bf16.gmra.mrb[0].mxu0 %v7278
        %v7619 = vpop.f32.mrb[0].mxu0
        %v7620 = vadd.f32 0.0, %v7619
        %v7621 = vpop.f32.mrb[0].mxu0
        %v7622 = vpop.f32.mrb[0].mxu0
        %v7623 = vadd.f32 0.0, %v7622
        %v7624 = vpop.f32.mrb[0].mxu0
        %7625 = vmatprep.mubr.bf16.mxu0 %v7280
        %7626 = vmatmul.mubr.bf16.gmra.mrb[0].mxu0 %v7279
        %v7627 = vpop.f32.mrb[0].mxu0
        %v7628 = vadd.f32 0.0, %v7627
        %v7629 = vpop.f32.mrb[0].mxu0
        %v7630 = vpop.f32.mrb[0].mxu0
        %v7631 = vadd.f32 0.0, %v7630
        %v7632 = vpop.f32.mrb[0].mxu0
        %7633 = vdwg.mxu0
        %7634 = vmatprep.subr.bf16.mxu0 0
        %7635 = vmatpush1.bf16.msra.mxu0 %v7441
        %7636 = vmatprep.subr.bf16.mxu0 0
        %7637 = vmatpush1.bf16.msra.mxu0 %v7442
        %7638 = vmatprep.subr.bf16.mxu0 0
        %7639 = vmatpush1.bf16.msra.mxu0 %v7443
        %7640 = vmatprep.subr.bf16.mxu0 0
        %7641 = vmatpush1.bf16.msra.mxu0 %v7444
        %7642 = vmatprep.subr.bf16.mxu0 0
        %7643 = vmatpush1.bf16.msra.mxu0 %v7445
        %7644 = vmatprep.subr.bf16.mxu0 0
        %7645 = vmatpush1.bf16.msra.mxu0 %v7446
        %7646 = vmatprep.subr.bf16.mxu0 0
        %7647 = vmatpush1.bf16.msra.mxu0 %v7447
        %7648 = vmatprep.subr.bf16.mxu0 0
        %7649 = vmatpush1.bf16.msra.mxu0 %v7448
        %7650 = vmatprep.subr.bf16.mxu0 0
        %7651 = vmatpush1.bf16.msra.mxu0 0
        %7652 = vmatprep.subr.bf16.mxu0 0
        %7653 = vmatpush1.bf16.msra.mxu0 0
        %7654 = vmatprep.subr.bf16.mxu0 0
        %7655 = vmatpush1.bf16.msra.mxu0 0
        %7656 = vmatprep.subr.bf16.mxu0 0
        %7657 = vmatpush1.bf16.msra.mxu0 0
        %7658 = vmatprep.subr.bf16.mxu0 0
        %7659 = vmatpush1.bf16.msra.mxu0 0
        %7660 = vmatprep.subr.bf16.mxu0 0
        %7661 = vmatpush1.bf16.msra.mxu0 0
        %7662 = vmatprep.subr.bf16.mxu0 0
        %7663 = vmatpush1.bf16.msra.mxu0 0
        %7664 = vmatprep.subr.bf16.mxu0 0
        %7665 = vmatpush1.bf16.msra.mxu0 0
        %7666 = vmatprep.mubr.bf16.mxu0 0
        %7667 = vmatmul.mubr.bf16.gmra.mrb[0].mxu0 %v7266
        %v7668 = vpop.f32.mrb[0].mxu0
        %v7669 = vadd.f32 %v7508, %v7668
        %v7670 = vpop.f32.mrb[0].mxu0
        %v7671 = vpop.f32.mrb[0].mxu0
        %v7672 = vadd.f32 %v7511, %v7671
        %v7673 = vpop.f32.mrb[0].mxu0
        %7674 = vmatprep.mubr.bf16.mxu0 0
        %7675 = vmatmul.mubr.bf16.gmra.mrb[0].mxu0 %v7267
        %v7676 = vpop.f32.mrb[0].mxu0
        %v7677 = vadd.f32 %v7516, %v7676
        %v7678 = vpop.f32.mrb[0].mxu0
        %v7679 = vpop.f32.mrb[0].mxu0
        %v7680 = vadd.f32 %v7519, %v7679
        %v7681 = vpop.f32.mrb[0].mxu0
        %7682 = vmatprep.mubr.bf16.mxu0 0
        %7683 = vmatmul.mubr.bf16.gmra.mrb[0].mxu0 %v7268
        %v7684 = vpop.f32.mrb[0].mxu0
        %v7685 = vadd.f32 %v7524, %v7684
        %v7686 = vpop.f32.mrb[0].mxu0
        %v7687 = vpop.f32.mrb[0].mxu0
        %v7688 = vadd.f32 %v7527, %v7687
        %v7689 = vpop.f32.mrb[0].mxu0
        %7690 = vmatprep.mubr.bf16.mxu0 0
        %7691 = vmatmul.mubr.bf16.gmra.mrb[0].mxu0 %v7269
        %v7692 = vpop.f32.mrb[0].mxu0
        %v7693 = vadd.f32 %v7532, %v7692
        %v7694 = vpop.f32.mrb[0].mxu0
        %v7695 = vpop.f32.mrb[0].mxu0
        %v7696 = vadd.f32 %v7535, %v7695
        %v7697 = vpop.f32.mrb[0].mxu0
        %7698 = vmatprep.mubr.bf16.mxu0 0
        %7699 = vmatmul.mubr.bf16.gmra.mrb[0].mxu0 %v7270
        %v7700 = vpop.f32.mrb[0].mxu0
        %v7701 = vadd.f32 %v7540, %v7700
        %v7702 = vpop.f32.mrb[0].mxu0
        %v7703 = vpop.f32.mrb[0].mxu0
        %v7704 = vadd.f32 %v7543, %v7703
        %v7705 = vpop.f32.mrb[0].mxu0
        %7706 = vmatprep.mubr.bf16.mxu0 0
        %7707 = vmatmul.mubr.bf16.gmra.mrb[0].mxu0 %v7271
        %v7708 = vpop.f32.mrb[0].mxu0
        %v7709 = vadd.f32 %v7548, %v7708
        %v7710 = vpop.f32.mrb[0].mxu0
        %v7711 = vpop.f32.mrb[0].mxu0
        %v7712 = vadd.f32 %v7551, %v7711
        %v7713 = vpop.f32.mrb[0].mxu0
        %7714 = vmatprep.mubr.bf16.mxu0 0
        %7715 = vmatmul.mubr.bf16.gmra.mrb[0].mxu0 %v7272
        %v7716 = vpop.f32.mrb[0].mxu0
        %v7717 = vadd.f32 %v7556, %v7716
        %v7718 = vpop.f32.mrb[0].mxu0
        %v7719 = vpop.f32.mrb[0].mxu0
        %v7720 = vadd.f32 %v7559, %v7719
        %v7721 = vpop.f32.mrb[0].mxu0
        %7722 = vmatprep.mubr.bf16.mxu0 0
        %7723 = vmatmul.mubr.bf16.gmra.mrb[0].mxu0 %v7273
        %v7724 = vpop.f32.mrb[0].mxu0
        %v7725 = vadd.f32 %v7564, %v7724
        %v7726 = vpop.f32.mrb[0].mxu0
        %v7727 = vpop.f32.mrb[0].mxu0
        %v7728 = vadd.f32 %v7567, %v7727
        %v7729 = vpop.f32.mrb[0].mxu0
        %7730 = vmatprep.mubr.bf16.mxu0 0
        %7731 = vmatmul.mubr.bf16.gmra.mrb[0].mxu0 %v7274
        %v7732 = vpop.f32.mrb[0].mxu0
        %v7733 = vadd.f32 %v7572, %v7732
        %v7734 = vpop.f32.mrb[0].mxu0
        %v7735 = vpop.f32.mrb[0].mxu0
        %v7736 = vadd.f32 %v7575, %v7735
        %v7737 = vpop.f32.mrb[0].mxu0
        %7738 = vmatprep.mubr.bf16.mxu0 0
        %7739 = vmatmul.mubr.bf16.gmra.mrb[0].mxu0 %v7275
        %v7740 = vpop.f32.mrb[0].mxu0
        %v7741 = vadd.f32 %v7580, %v7740
        %v7742 = vpop.f32.mrb[0].mxu0
        %v7743 = vpop.f32.mrb[0].mxu0
        %v7744 = vadd.f32 %v7583, %v7743
        %v7745 = vpop.f32.mrb[0].mxu0
        %7746 = vmatprep.mubr.bf16.mxu0 0
        %7747 = vmatmul.mubr.bf16.gmra.mrb[0].mxu0 %v7276
        %v7748 = vpop.f32.mrb[0].mxu0
        %v7749 = vadd.f32 %v7588, %v7748
        %v7750 = vpop.f32.mrb[0].mxu0
        %v7751 = vpop.f32.mrb[0].mxu0
        %v7752 = vadd.f32 %v7591, %v7751
        %v7753 = vpop.f32.mrb[0].mxu0
        %7754 = vmatprep.mubr.bf16.mxu0 0
        %7755 = vmatmul.mubr.bf16.gmra.mrb[0].mxu0 %v7277
        %v7756 = vpop.f32.mrb[0].mxu0
        %v7757 = vadd.f32 %v7596, %v7756
        %v7758 = vpop.f32.mrb[0].mxu0
        %v7759 = vpop.f32.mrb[0].mxu0
        %v7760 = vadd.f32 %v7599, %v7759
        %v7761 = vpop.f32.mrb[0].mxu0
        %7762 = vmatprep.mubr.bf16.mxu0 0
        %7763 = vmatmul.mubr.bf16.gmra.mrb[0].mxu0 %v7278
        %v7764 = vpop.f32.mrb[0].mxu0
        %v7765 = vadd.f32 %v7604, %v7764
        %v7766 = vpop.f32.mrb[0].mxu0
        %v7767 = vpop.f32.mrb[0].mxu0
        %v7768 = vadd.f32 %v7607, %v7767
        %v7769 = vpop.f32.mrb[0].mxu0
        %7770 = vmatprep.mubr.bf16.mxu0 0
        %7771 = vmatmul.mubr.bf16.gmra.mrb[0].mxu0 %v7279
        %v7772 = vpop.f32.mrb[0].mxu0
        %v7773 = vadd.f32 %v7612, %v7772
        %v7774 = vpop.f32.mrb[0].mxu0
        %v7775 = vpop.f32.mrb[0].mxu0
        %v7776 = vadd.f32 %v7615, %v7775
        %v7777 = vpop.f32.mrb[0].mxu0
        %7778 = vmatprep.mubr.bf16.mxu0 0
        %7779 = vmatmul.mubr.bf16.gmra.mrb[0].mxu0 %v7280
        %v7780 = vpop.f32.mrb[0].mxu0
        %v7781 = vadd.f32 %v7620, %v7780
        %v7782 = vpop.f32.mrb[0].mxu0
        %v7783 = vpop.f32.mrb[0].mxu0
        %v7784 = vadd.f32 %v7623, %v7783
        %v7785 = vpop.f32.mrb[0].mxu0
        %7786 = vmatprep.mubr.bf16.mxu0 0
        %7787 = vmatmul.mubr.bf16.gmra.mrb[0].mxu0 0
        %v7788 = vpop.f32.mrb[0].mxu0
        %v7789 = vadd.f32 %v7628, %v7788
        %v7790 = vpop.f32.mrb[0].mxu0
        %v7791 = vpop.f32.mrb[0].mxu0
        %v7792 = vadd.f32 %v7631, %v7791
        %v7793 = vpop.f32.mrb[0].mxu0
        %7794 = vdwg.mxu0
        %v7795 = vadd.f32 %v7135, %v7669
        %v7796 = vadd.f32 %v7135, %v7672
        %v7797 = vadd.f32 %v7135, %v7677
        %v7798 = vadd.f32 %v7135, %v7680
        %v7799 = vadd.f32 %v7135, %v7685
        %v7800 = vadd.f32 %v7135, %v7688
        %v7801 = vadd.f32 %v7135, %v7693
        %v7802 = vadd.f32 %v7135, %v7696
        %v7803 = vadd.f32 %v7135, %v7701
        %v7804 = vadd.f32 %v7135, %v7704
        %v7805 = vadd.f32 %v7135, %v7709
        %v7806 = vadd.f32 %v7135, %v7712
        %v7807 = vadd.f32 %v7135, %v7717
        %v7808 = vadd.f32 %v7135, %v7720
        %v7809 = vadd.f32 %v7135, %v7725
        %v7810 = vadd.f32 %v7135, %v7728
        %v7811 = vadd.f32 %v7135, %v7733
        %v7812 = vadd.f32 %v7135, %v7736
        %v7813 = vadd.f32 %v7135, %v7741
        %v7814 = vadd.f32 %v7135, %v7744
        %v7815 = vadd.f32 %v7135, %v7749
        %v7816 = vadd.f32 %v7135, %v7752
        %v7817 = vadd.f32 %v7135, %v7757
        %v7818 = vadd.f32 %v7135, %v7760
        %v7819 = vadd.f32 %v7135, %v7765
        %v7820 = vadd.f32 %v7135, %v7768
        %v7821 = vadd.f32 %v7135, %v7773
        %v7822 = vadd.f32 %v7135, %v7776
        %v7823 = vadd.f32 %v7135, %v7781
        %v7824 = vadd.f32 %v7135, %v7784
        %v7825 = vadd.f32 %v7135, %v7789
        %v7826 = vadd.f32 %v7135, %v7792
        %s7827 = scalar_lea.vmem %s6, 192
        %v7828 = vld [vmem:[%s7827] sm:$0xf]
        %v7829 = vld [vmem:[%s7827 + $0x4] sm:$0xf]
        %v7830 = vld [vmem:[%s7827 + $0x8] sm:$0xf]
        %v7831 = vld [vmem:[%s7827 + $0xc] sm:$0xf]
        %v7832 = vld [vmem:[%s7827 + $0x10] sm:$0xf]
        %v7833 = vld [vmem:[%s7827 + $0x14] sm:$0xf]
        %v7834 = vld [vmem:[%s7827 + $0x18] sm:$0xf]
        %v7835 = vld [vmem:[%s7827 + $0x1c] sm:$0xf]
        %v7836 = vld [vmem:[%s7827 + $0x20] sm:$0xf]
        %v7837 = vld [vmem:[%s7827 + $0x24] sm:$0xf]
        %v7838 = vld [vmem:[%s7827 + $0x28] sm:$0xf]
        %v7839 = vld [vmem:[%s7827 + $0x2c] sm:$0xf]
        %v7840 = vld [vmem:[%s7827 + $0x30] sm:$0xf]
        %v7841 = vld [vmem:[%s7827 + $0x34] sm:$0xf]
        %v7842 = vld [vmem:[%s7827 + $0x38] sm:$0xf]
        %v7843 = vld [vmem:[%s7827 + $0x3c] sm:$0xf]
        %v7844 = vld [vmem:[%s7827 + $0x40] sm:$0xf]
        %v7845 = vld [vmem:[%s7827 + $0x44] sm:$0xf]
        %v7846 = vld [vmem:[%s7827 + $0x48] sm:$0xf]
        %v7847 = vld [vmem:[%s7827 + $0x4c] sm:$0xf]
        %v7848 = vld [vmem:[%s7827 + $0x50] sm:$0xf]
        %v7849 = vld [vmem:[%s7827 + $0x54] sm:$0xf]
        %v7850 = vld [vmem:[%s7827 + $0x58] sm:$0xf]
        %v7851 = vld [vmem:[%s7827 + $0x5c] sm:$0xf]
        %v7852 = vld [vmem:[%s7827 + $0x60] sm:$0xf]
        %v7853 = vld [vmem:[%s7827 + $0x64] sm:$0xf]
        %v7854 = vld [vmem:[%s7827 + $0x68] sm:$0xf]
        %v7855 = vld [vmem:[%s7827 + $0x6c] sm:$0xf]
        %v7856 = vld [vmem:[%s7827 + $0x70] sm:$0xf]
        %v7857 = vld [vmem:[%s7827 + $0x74] sm:$0xf]
        %v7858 = vld [vmem:[%s7827 + $0x78] sm:$0xf]
        %v7859 = vld [vmem:[%s7827 + $0x7c] sm:$0xf]
        %v7860 = vld [vmem:[%s7827 + $0x80] sm:$0xf]
        %v7861 = vld [vmem:[%s7827 + $0x84] sm:$0xf]
        %v7862 = vld [vmem:[%s7827 + $0x88] sm:$0xf]
        %v7863 = vld [vmem:[%s7827 + $0x8c] sm:$0xf]
        %v7864 = vld [vmem:[%s7827 + $0x90] sm:$0xf]
        %v7865 = vld [vmem:[%s7827 + $0x94] sm:$0xf]
        %v7866 = vld [vmem:[%s7827 + $0x98] sm:$0xf]
        %v7867 = vld [vmem:[%s7827 + $0x9c] sm:$0xf]
        %v7868 = vld [vmem:[%s7827 + $0xa0] sm:$0xf]
        %v7869 = vld [vmem:[%s7827 + $0xa4] sm:$0xf]
        %v7870 = vld [vmem:[%s7827 + $0xa8] sm:$0xf]
        %v7871 = vld [vmem:[%s7827 + $0xac] sm:$0xf]
        %v7872 = vld [vmem:[%s7827 + $0xb0] sm:$0xf]
        %v7873 = vld [vmem:[%s7827 + $0xb4] sm:$0xf]
        %v7874 = vld [vmem:[%s7827 + $0xb8] sm:$0xf]
        %v7875 = vld [vmem:[%s7827 + $0xbc] sm:$0xf]
        %v7924 = vunpack.c.l.b16 %v7828
        %v7925 = vunpack.c.l.b16 %v7829
        %v7926 = vunpack.c.l.b16 %v7830
        %v7927 = vunpack.c.l.b16 %v7831
        %v7928 = vunpack.c.l.b16 %v7832
        %v7929 = vunpack.c.l.b16 %v7833
        %v7930 = vunpack.c.l.b16 %v7834
        %v7931 = vunpack.c.l.b16 %v7835
        %v7932 = vunpack.c.l.b16 %v7836
        %v7933 = vunpack.c.l.b16 %v7837
        %v7934 = vunpack.c.l.b16 %v7838
        %v7935 = vunpack.c.l.b16 %v7839
        %v7936 = vunpack.c.l.b16 %v7840
        %v7937 = vunpack.c.l.b16 %v7841
        %v7938 = vunpack.c.l.b16 %v7842
        %v7939 = vunpack.c.l.b16 %v7843
        %v7940 = vunpack.c.l.b16 %v7844
        %v7941 = vunpack.c.l.b16 %v7845
        %v7942 = vunpack.c.l.b16 %v7846
        %v7943 = vunpack.c.l.b16 %v7847
        %v7944 = vunpack.c.l.b16 %v7848
        %v7945 = vunpack.c.l.b16 %v7849
        %v7946 = vunpack.c.l.b16 %v7850
        %v7947 = vunpack.c.l.b16 %v7851
        %v7948 = vunpack.c.l.b16 %v7852
        %v7949 = vunpack.c.l.b16 %v7853
        %v7950 = vunpack.c.l.b16 %v7854
        %v7951 = vunpack.c.l.b16 %v7855
        %v7952 = vunpack.c.l.b16 %v7856
        %v7953 = vunpack.c.l.b16 %v7857
        %v7954 = vunpack.c.l.b16 %v7858
        %v7955 = vunpack.c.l.b16 %v7859
        %v7956 = vunpack.c.l.b16 %v7860
        %v7957 = vunpack.c.l.b16 %v7861
        %v7958 = vunpack.c.l.b16 %v7862
        %v7959 = vunpack.c.l.b16 %v7863
        %v7960 = vunpack.c.l.b16 %v7864
        %v7961 = vunpack.c.l.b16 %v7865
        %v7962 = vunpack.c.l.b16 %v7866
        %v7963 = vunpack.c.l.b16 %v7867
        %v7964 = vunpack.c.l.b16 %v7868
        %v7965 = vunpack.c.l.b16 %v7869
        %v7966 = vunpack.c.l.b16 %v7870
        %v7967 = vunpack.c.l.b16 %v7871
        %v7968 = vunpack.c.l.b16 %v7872
        %v7969 = vunpack.c.l.b16 %v7873
        %v7970 = vunpack.c.l.b16 %v7874
        %v7971 = vunpack.c.l.b16 %v7875
        %v7972 = vpack.c.b16 %v7925, %v7924
        %v7973 = vpack.c.b16 %v7927, %v7926
        %v7974 = vpack.c.b16 %v7929, %v7928
        %v7975 = vpack.c.b16 %v7931, %v7930
        %v7976 = vpack.c.b16 %v7933, %v7932
        %v7977 = vpack.c.b16 %v7935, %v7934
        %v7978 = vpack.c.b16 %v7937, %v7936
        %v7979 = vpack.c.b16 %v7939, %v7938
        %v7980 = vpack.c.b16 %v7941, %v7940
        %v7981 = vpack.c.b16 %v7943, %v7942
        %v7982 = vpack.c.b16 %v7945, %v7944
        %v7983 = vpack.c.b16 %v7947, %v7946
        %v7984 = vpack.c.b16 %v7949, %v7948
        %v7985 = vpack.c.b16 %v7951, %v7950
        %v7986 = vpack.c.b16 %v7953, %v7952
        %v7987 = vpack.c.b16 %v7955, %v7954
        %v7988 = vpack.c.b16 %v7957, %v7956
        %v7989 = vpack.c.b16 %v7959, %v7958
        %v7990 = vpack.c.b16 %v7961, %v7960
        %v7991 = vpack.c.b16 %v7963, %v7962
        %v7992 = vpack.c.b16 %v7965, %v7964
        %v7993 = vpack.c.b16 %v7967, %v7966
        %v7994 = vpack.c.b16 %v7969, %v7968
        %v7995 = vpack.c.b16 %v7971, %v7970
        %8020 = vmatprep.subr.bf16.mxu0 0
        %8021 = vmatpush1.bf16.msra.mxu0 %v7972
        %8022 = vmatprep.subr.bf16.mxu0 0
        %8023 = vmatpush1.bf16.msra.mxu0 %v7973
        %8024 = vmatprep.subr.bf16.mxu0 0
        %8025 = vmatpush1.bf16.msra.mxu0 %v7974
        %8026 = vmatprep.subr.bf16.mxu0 0
        %8027 = vmatpush1.bf16.msra.mxu0 %v7975
        %8028 = vmatprep.subr.bf16.mxu0 0
        %8029 = vmatpush1.bf16.msra.mxu0 %v7976
        %8030 = vmatprep.subr.bf16.mxu0 0
        %8031 = vmatpush1.bf16.msra.mxu0 %v7977
        %8032 = vmatprep.subr.bf16.mxu0 0
        %8033 = vmatpush1.bf16.msra.mxu0 %v7978
        %8034 = vmatprep.subr.bf16.mxu0 0
        %8035 = vmatpush1.bf16.msra.mxu0 %v7979
        %8036 = vmatprep.subr.bf16.mxu0 0
        %8037 = vmatpush1.bf16.msra.mxu0 %v7980
        %8038 = vmatprep.subr.bf16.mxu0 0
        %8039 = vmatpush1.bf16.msra.mxu0 %v7981
        %8040 = vmatprep.subr.bf16.mxu0 0
        %8041 = vmatpush1.bf16.msra.mxu0 %v7982
        %8042 = vmatprep.subr.bf16.mxu0 0
        %8043 = vmatpush1.bf16.msra.mxu0 %v7983
        %8044 = vmatprep.subr.bf16.mxu0 0
        %8045 = vmatpush1.bf16.msra.mxu0 %v7984
        %8046 = vmatprep.subr.bf16.mxu0 0
        %8047 = vmatpush1.bf16.msra.mxu0 %v7985
        %8048 = vmatprep.subr.bf16.mxu0 0
        %8049 = vmatpush1.bf16.msra.mxu0 %v7986
        %8050 = vmatprep.subr.bf16.mxu0 0
        %8051 = vmatpush1.bf16.msra.mxu0 %v7987
        %8052 = vmatprep.mubr.bf16.mxu0 %v7114
        %8053 = vmatmul.mubr.bf16.gmra.mrb[0].mxu0 0
        %v8054 = vpop.f32.mrb[0].mxu0
        %v8055 = vadd.f32 0.0, %v8054
        %v8056 = vpop.f32.mrb[0].mxu0
        %v8057 = vpop.f32.mrb[0].mxu0
        %v8058 = vadd.f32 0.0, %v8057
        %v8059 = vpop.f32.mrb[0].mxu0
        %8060 = vmatprep.mubr.bf16.mxu0 %v7115
        %8061 = vmatmul.mubr.bf16.gmra.mrb[0].mxu0 %v7114
        %v8062 = vpop.f32.mrb[0].mxu0
        %v8063 = vadd.f32 0.0, %v8062
        %v8064 = vpop.f32.mrb[0].mxu0
        %v8065 = vpop.f32.mrb[0].mxu0
        %v8066 = vadd.f32 0.0, %v8065
        %v8067 = vpop.f32.mrb[0].mxu0
        %8068 = vmatprep.mubr.bf16.mxu0 %v7116
        %8069 = vmatmul.mubr.bf16.gmra.mrb[0].mxu0 %v7115
        %v8070 = vpop.f32.mrb[0].mxu0
        %v8071 = vadd.f32 0.0, %v8070
        %v8072 = vpop.f32.mrb[0].mxu0
        %v8073 = vpop.f32.mrb[0].mxu0
        %v8074 = vadd.f32 0.0, %v8073
        %v8075 = vpop.f32.mrb[0].mxu0
        %8076 = vmatprep.mubr.bf16.mxu0 %v7117
        %8077 = vmatmul.mubr.bf16.gmra.mrb[0].mxu0 %v7116
        %v8078 = vpop.f32.mrb[0].mxu0
        %v8079 = vadd.f32 0.0, %v8078
        %v8080 = vpop.f32.mrb[0].mxu0
        %v8081 = vpop.f32.mrb[0].mxu0
        %v8082 = vadd.f32 0.0, %v8081
        %v8083 = vpop.f32.mrb[0].mxu0
        %8084 = vmatprep.mubr.bf16.mxu0 %v7118
        %8085 = vmatmul.mubr.bf16.gmra.mrb[0].mxu0 %v7117
        %v8086 = vpop.f32.mrb[0].mxu0
        %v8087 = vadd.f32 0.0, %v8086
        %v8088 = vpop.f32.mrb[0].mxu0
        %v8089 = vpop.f32.mrb[0].mxu0
        %v8090 = vadd.f32 0.0, %v8089
        %v8091 = vpop.f32.mrb[0].mxu0
        %8092 = vmatprep.mubr.bf16.mxu0 %v7119
        %8093 = vmatmul.mubr.bf16.gmra.mrb[0].mxu0 %v7118
        %v8094 = vpop.f32.mrb[0].mxu0
        %v8095 = vadd.f32 0.0, %v8094
        %v8096 = vpop.f32.mrb[0].mxu0
        %v8097 = vpop.f32.mrb[0].mxu0
        %v8098 = vadd.f32 0.0, %v8097
        %v8099 = vpop.f32.mrb[0].mxu0
        %8100 = vmatprep.mubr.bf16.mxu0 %v7120
        %8101 = vmatmul.mubr.bf16.gmra.mrb[0].mxu0 %v7119
        %v8102 = vpop.f32.mrb[0].mxu0
        %v8103 = vadd.f32 0.0, %v8102
        %v8104 = vpop.f32.mrb[0].mxu0
        %v8105 = vpop.f32.mrb[0].mxu0
        %v8106 = vadd.f32 0.0, %v8105
        %v8107 = vpop.f32.mrb[0].mxu0
        %8108 = vmatprep.mubr.bf16.mxu0 %v7121
        %8109 = vmatmul.mubr.bf16.gmra.mrb[0].mxu0 %v7120
        %v8110 = vpop.f32.mrb[0].mxu0
        %v8111 = vadd.f32 0.0, %v8110
        %v8112 = vpop.f32.mrb[0].mxu0
        %v8113 = vpop.f32.mrb[0].mxu0
        %v8114 = vadd.f32 0.0, %v8113
        %v8115 = vpop.f32.mrb[0].mxu0
        %8116 = vmatprep.mubr.bf16.mxu0 %v7122
        %8117 = vmatmul.mubr.bf16.gmra.mrb[0].mxu0 %v7121
        %v8118 = vpop.f32.mrb[0].mxu0
        %v8119 = vadd.f32 0.0, %v8118
        %v8120 = vpop.f32.mrb[0].mxu0
        %v8121 = vpop.f32.mrb[0].mxu0
        %v8122 = vadd.f32 0.0, %v8121
        %v8123 = vpop.f32.mrb[0].mxu0
        %8124 = vmatprep.mubr.bf16.mxu0 %v7123
        %8125 = vmatmul.mubr.bf16.gmra.mrb[0].mxu0 %v7122
        %v8126 = vpop.f32.mrb[0].mxu0
        %v8127 = vadd.f32 0.0, %v8126
        %v8128 = vpop.f32.mrb[0].mxu0
        %v8129 = vpop.f32.mrb[0].mxu0
        %v8130 = vadd.f32 0.0, %v8129
        %v8131 = vpop.f32.mrb[0].mxu0
        %8132 = vmatprep.mubr.bf16.mxu0 %v7124
        %8133 = vmatmul.mubr.bf16.gmra.mrb[0].mxu0 %v7123
        %v8134 = vpop.f32.mrb[0].mxu0
        %v8135 = vadd.f32 0.0, %v8134
        %v8136 = vpop.f32.mrb[0].mxu0
        %v8137 = vpop.f32.mrb[0].mxu0
        %v8138 = vadd.f32 0.0, %v8137
        %v8139 = vpop.f32.mrb[0].mxu0
        %8140 = vmatprep.mubr.bf16.mxu0 %v7125
        %8141 = vmatmul.mubr.bf16.gmra.mrb[0].mxu0 %v7124
        %v8142 = vpop.f32.mrb[0].mxu0
        %v8143 = vadd.f32 0.0, %v8142
        %v8144 = vpop.f32.mrb[0].mxu0
        %v8145 = vpop.f32.mrb[0].mxu0
        %v8146 = vadd.f32 0.0, %v8145
        %v8147 = vpop.f32.mrb[0].mxu0
        %8148 = vmatprep.mubr.bf16.mxu0 %v7126
        %8149 = vmatmul.mubr.bf16.gmra.mrb[0].mxu0 %v7125
        %v8150 = vpop.f32.mrb[0].mxu0
        %v8151 = vadd.f32 0.0, %v8150
        %v8152 = vpop.f32.mrb[0].mxu0
        %v8153 = vpop.f32.mrb[0].mxu0
        %v8154 = vadd.f32 0.0, %v8153
        %v8155 = vpop.f32.mrb[0].mxu0
        %8156 = vmatprep.mubr.bf16.mxu0 %v7127
        %8157 = vmatmul.mubr.bf16.gmra.mrb[0].mxu0 %v7126
        %v8158 = vpop.f32.mrb[0].mxu0
        %v8159 = vadd.f32 0.0, %v8158
        %v8160 = vpop.f32.mrb[0].mxu0
        %v8161 = vpop.f32.mrb[0].mxu0
        %v8162 = vadd.f32 0.0, %v8161
        %v8163 = vpop.f32.mrb[0].mxu0
        %8164 = vmatprep.mubr.bf16.mxu0 %v7128
        %8165 = vmatmul.mubr.bf16.gmra.mrb[0].mxu0 %v7127
        %v8166 = vpop.f32.mrb[0].mxu0
        %v8167 = vadd.f32 0.0, %v8166
        %v8168 = vpop.f32.mrb[0].mxu0
        %v8169 = vpop.f32.mrb[0].mxu0
        %v8170 = vadd.f32 0.0, %v8169
        %v8171 = vpop.f32.mrb[0].mxu0
        %8172 = vmatprep.mubr.bf16.mxu0 %v7129
        %8173 = vmatmul.mubr.bf16.gmra.mrb[0].mxu0 %v7128
        %v8174 = vpop.f32.mrb[0].mxu0
        %v8175 = vadd.f32 0.0, %v8174
        %v8176 = vpop.f32.mrb[0].mxu0
        %v8177 = vpop.f32.mrb[0].mxu0
        %v8178 = vadd.f32 0.0, %v8177
        %v8179 = vpop.f32.mrb[0].mxu0
        %8180 = vdwg.mxu0
        %8181 = vmatprep.subr.bf16.mxu0 0
        %8182 = vmatpush1.bf16.msra.mxu0 %v7988
        %8183 = vmatprep.subr.bf16.mxu0 0
        %8184 = vmatpush1.bf16.msra.mxu0 %v7989
        %8185 = vmatprep.subr.bf16.mxu0 0
        %8186 = vmatpush1.bf16.msra.mxu0 %v7990
        %8187 = vmatprep.subr.bf16.mxu0 0
        %8188 = vmatpush1.bf16.msra.mxu0 %v7991
        %8189 = vmatprep.subr.bf16.mxu0 0
        %8190 = vmatpush1.bf16.msra.mxu0 %v7992
        %8191 = vmatprep.subr.bf16.mxu0 0
        %8192 = vmatpush1.bf16.msra.mxu0 %v7993
        %8193 = vmatprep.subr.bf16.mxu0 0
        %8194 = vmatpush1.bf16.msra.mxu0 %v7994
        %8195 = vmatprep.subr.bf16.mxu0 0
        %8196 = vmatpush1.bf16.msra.mxu0 %v7995
        %8197 = vmatprep.subr.bf16.mxu0 0
        %8198 = vmatpush1.bf16.msra.mxu0 0
        %8199 = vmatprep.subr.bf16.mxu0 0
        %8200 = vmatpush1.bf16.msra.mxu0 0
        %8201 = vmatprep.subr.bf16.mxu0 0
        %8202 = vmatpush1.bf16.msra.mxu0 0
        %8203 = vmatprep.subr.bf16.mxu0 0
        %8204 = vmatpush1.bf16.msra.mxu0 0
        %8205 = vmatprep.subr.bf16.mxu0 0
        %8206 = vmatpush1.bf16.msra.mxu0 0
        %8207 = vmatprep.subr.bf16.mxu0 0
        %8208 = vmatpush1.bf16.msra.mxu0 0
        %8209 = vmatprep.subr.bf16.mxu0 0
        %8210 = vmatpush1.bf16.msra.mxu0 0
        %8211 = vmatprep.subr.bf16.mxu0 0
        %8212 = vmatpush1.bf16.msra.mxu0 0
        %8213 = vmatprep.mubr.bf16.mxu0 0
        %8214 = vmatmul.mubr.bf16.gmra.mrb[0].mxu0 %v7115
        %v8215 = vpop.f32.mrb[0].mxu0
        %v8216 = vadd.f32 %v8055, %v8215
        %v8217 = vpop.f32.mrb[0].mxu0
        %v8218 = vpop.f32.mrb[0].mxu0
        %v8219 = vadd.f32 %v8058, %v8218
        %v8220 = vpop.f32.mrb[0].mxu0
        %8221 = vmatprep.mubr.bf16.mxu0 0
        %8222 = vmatmul.mubr.bf16.gmra.mrb[0].mxu0 %v7116
        %v8223 = vpop.f32.mrb[0].mxu0
        %v8224 = vadd.f32 %v8063, %v8223
        %v8225 = vpop.f32.mrb[0].mxu0
        %v8226 = vpop.f32.mrb[0].mxu0
        %v8227 = vadd.f32 %v8066, %v8226
        %v8228 = vpop.f32.mrb[0].mxu0
        %8229 = vmatprep.mubr.bf16.mxu0 0
        %8230 = vmatmul.mubr.bf16.gmra.mrb[0].mxu0 %v7117
        %v8231 = vpop.f32.mrb[0].mxu0
        %v8232 = vadd.f32 %v8071, %v8231
        %v8233 = vpop.f32.mrb[0].mxu0
        %v8234 = vpop.f32.mrb[0].mxu0
        %v8235 = vadd.f32 %v8074, %v8234
        %v8236 = vpop.f32.mrb[0].mxu0
        %8237 = vmatprep.mubr.bf16.mxu0 0
        %8238 = vmatmul.mubr.bf16.gmra.mrb[0].mxu0 %v7118
        %v8239 = vpop.f32.mrb[0].mxu0
        %v8240 = vadd.f32 %v8079, %v8239
        %v8241 = vpop.f32.mrb[0].mxu0
        %v8242 = vpop.f32.mrb[0].mxu0
        %v8243 = vadd.f32 %v8082, %v8242
        %v8244 = vpop.f32.mrb[0].mxu0
        %8245 = vmatprep.mubr.bf16.mxu0 0
        %8246 = vmatmul.mubr.bf16.gmra.mrb[0].mxu0 %v7119
        %v8247 = vpop.f32.mrb[0].mxu0
        %v8248 = vadd.f32 %v8087, %v8247
        %v8249 = vpop.f32.mrb[0].mxu0
        %v8250 = vpop.f32.mrb[0].mxu0
        %v8251 = vadd.f32 %v8090, %v8250
        %v8252 = vpop.f32.mrb[0].mxu0
        %8253 = vmatprep.mubr.bf16.mxu0 0
        %8254 = vmatmul.mubr.bf16.gmra.mrb[0].mxu0 %v7120
        %v8255 = vpop.f32.mrb[0].mxu0
        %v8256 = vadd.f32 %v8095, %v8255
        %v8257 = vpop.f32.mrb[0].mxu0
        %v8258 = vpop.f32.mrb[0].mxu0
        %v8259 = vadd.f32 %v8098, %v8258
        %v8260 = vpop.f32.mrb[0].mxu0
        %8261 = vmatprep.mubr.bf16.mxu0 0
        %8262 = vmatmul.mubr.bf16.gmra.mrb[0].mxu0 %v7121
        %v8263 = vpop.f32.mrb[0].mxu0
        %v8264 = vadd.f32 %v8103, %v8263
        %v8265 = vpop.f32.mrb[0].mxu0
        %v8266 = vpop.f32.mrb[0].mxu0
        %v8267 = vadd.f32 %v8106, %v8266
        %v8268 = vpop.f32.mrb[0].mxu0
        %8269 = vmatprep.mubr.bf16.mxu0 0
        %8270 = vmatmul.mubr.bf16.gmra.mrb[0].mxu0 %v7122
        %v8271 = vpop.f32.mrb[0].mxu0
        %v8272 = vadd.f32 %v8111, %v8271
        %v8273 = vpop.f32.mrb[0].mxu0
        %v8274 = vpop.f32.mrb[0].mxu0
        %v8275 = vadd.f32 %v8114, %v8274
        %v8276 = vpop.f32.mrb[0].mxu0
        %8277 = vmatprep.mubr.bf16.mxu0 0
        %8278 = vmatmul.mubr.bf16.gmra.mrb[0].mxu0 %v7123
        %v8279 = vpop.f32.mrb[0].mxu0
        %v8280 = vadd.f32 %v8119, %v8279
        %v8281 = vpop.f32.mrb[0].mxu0
        %v8282 = vpop.f32.mrb[0].mxu0
        %v8283 = vadd.f32 %v8122, %v8282
        %v8284 = vpop.f32.mrb[0].mxu0
        %8285 = vmatprep.mubr.bf16.mxu0 0
        %8286 = vmatmul.mubr.bf16.gmra.mrb[0].mxu0 %v7124
        %v8287 = vpop.f32.mrb[0].mxu0
        %v8288 = vadd.f32 %v8127, %v8287
        %v8289 = vpop.f32.mrb[0].mxu0
        %v8290 = vpop.f32.mrb[0].mxu0
        %v8291 = vadd.f32 %v8130, %v8290
        %v8292 = vpop.f32.mrb[0].mxu0
        %8293 = vmatprep.mubr.bf16.mxu0 0
        %8294 = vmatmul.mubr.bf16.gmra.mrb[0].mxu0 %v7125
        %v8295 = vpop.f32.mrb[0].mxu0
        %v8296 = vadd.f32 %v8135, %v8295
        %v8297 = vpop.f32.mrb[0].mxu0
        %v8298 = vpop.f32.mrb[0].mxu0
        %v8299 = vadd.f32 %v8138, %v8298
        %v8300 = vpop.f32.mrb[0].mxu0
        %8301 = vmatprep.mubr.bf16.mxu0 0
        %8302 = vmatmul.mubr.bf16.gmra.mrb[0].mxu0 %v7126
        %v8303 = vpop.f32.mrb[0].mxu0
        %v8304 = vadd.f32 %v8143, %v8303
        %v8305 = vpop.f32.mrb[0].mxu0
        %v8306 = vpop.f32.mrb[0].mxu0
        %v8307 = vadd.f32 %v8146, %v8306
        %v8308 = vpop.f32.mrb[0].mxu0
        %8309 = vmatprep.mubr.bf16.mxu0 0
        %8310 = vmatmul.mubr.bf16.gmra.mrb[0].mxu0 %v7127
        %v8311 = vpop.f32.mrb[0].mxu0
        %v8312 = vadd.f32 %v8151, %v8311
        %v8313 = vpop.f32.mrb[0].mxu0
        %v8314 = vpop.f32.mrb[0].mxu0
        %v8315 = vadd.f32 %v8154, %v8314
        %v8316 = vpop.f32.mrb[0].mxu0
        %8317 = vmatprep.mubr.bf16.mxu0 0
        %8318 = vmatmul.mubr.bf16.gmra.mrb[0].mxu0 %v7128
        %v8319 = vpop.f32.mrb[0].mxu0
        %v8320 = vadd.f32 %v8159, %v8319
        %v8321 = vpop.f32.mrb[0].mxu0
        %v8322 = vpop.f32.mrb[0].mxu0
        %v8323 = vadd.f32 %v8162, %v8322
        %v8324 = vpop.f32.mrb[0].mxu0
        %8325 = vmatprep.mubr.bf16.mxu0 0
        %8326 = vmatmul.mubr.bf16.gmra.mrb[0].mxu0 %v7129
        %v8327 = vpop.f32.mrb[0].mxu0
        %v8328 = vadd.f32 %v8167, %v8327
        %v8329 = vpop.f32.mrb[0].mxu0
        %v8330 = vpop.f32.mrb[0].mxu0
        %v8331 = vadd.f32 %v8170, %v8330
        %v8332 = vpop.f32.mrb[0].mxu0
        %8333 = vmatprep.mubr.bf16.mxu0 0
        %8334 = vmatmul.mubr.bf16.gmra.mrb[0].mxu0 0
        %v8335 = vpop.f32.mrb[0].mxu0
        %v8336 = vadd.f32 %v8175, %v8335
        %v8337 = vpop.f32.mrb[0].mxu0
        %v8338 = vpop.f32.mrb[0].mxu0
        %v8339 = vadd.f32 %v8178, %v8338
        %v8340 = vpop.f32.mrb[0].mxu0
        %8341 = vdwg.mxu0
        %v8342 = vadd.f32 %v7795, %v8216
        %v8343 = vadd.f32 %v7796, %v8219
        %v8344 = vadd.f32 %v7797, %v8224
        %v8345 = vadd.f32 %v7798, %v8227
        %v8346 = vadd.f32 %v7799, %v8232
        %v8347 = vadd.f32 %v7800, %v8235
        %v8348 = vadd.f32 %v7801, %v8240
        %v8349 = vadd.f32 %v7802, %v8243
        %v8350 = vadd.f32 %v7803, %v8248
        %v8351 = vadd.f32 %v7804, %v8251
        %v8352 = vadd.f32 %v7805, %v8256
        %v8353 = vadd.f32 %v7806, %v8259
        %v8354 = vadd.f32 %v7807, %v8264
        %v8355 = vadd.f32 %v7808, %v8267
        %v8356 = vadd.f32 %v7809, %v8272
        %v8357 = vadd.f32 %v7810, %v8275
        %v8358 = vadd.f32 %v7811, %v8280
        %v8359 = vadd.f32 %v7812, %v8283
        %v8360 = vadd.f32 %v7813, %v8288
        %v8361 = vadd.f32 %v7814, %v8291
        %v8362 = vadd.f32 %v7815, %v8296
        %v8363 = vadd.f32 %v7816, %v8299
        %v8364 = vadd.f32 %v7817, %v8304
        %v8365 = vadd.f32 %v7818, %v8307
        %v8366 = vadd.f32 %v7819, %v8312
        %v8367 = vadd.f32 %v7820, %v8315
        %v8368 = vadd.f32 %v7821, %v8320
        %v8369 = vadd.f32 %v7822, %v8323
        %v8370 = vadd.f32 %v7823, %v8328
        %v8371 = vadd.f32 %v7824, %v8331
        %v8372 = vadd.f32 %v7825, %v8336
        %v8373 = vadd.f32 %v7826, %v8339
        %v8374 = vrot.slane %v7141, 1
        %v8375 = vor.u32 %v7138, %v8374
        %v8376 = vrot.slane %v7148, 1
        %v8377 = vor.u32 %v7145, %v8376
        %v8378 = vrot.slane %v7155, 1
        %v8379 = vor.u32 %v7152, %v8378
        %v8380 = vrot.slane %v7162, 1
        %v8381 = vor.u32 %v7159, %v8380
        %v8382 = vrot.slane %v7169, 1
        %v8383 = vor.u32 %v7166, %v8382
        %v8384 = vrot.slane %v7176, 1
        %v8385 = vor.u32 %v7173, %v8384
        %v8386 = vrot.slane %v7183, 1
        %v8387 = vor.u32 %v7180, %v8386
        %v8388 = vrot.slane %v7190, 1
        %v8389 = vor.u32 %v7187, %v8388
        %v8390 = vrot.slane %v7197, 1
        %v8391 = vor.u32 %v7194, %v8390
        %v8392 = vrot.slane %v7204, 1
        %v8393 = vor.u32 %v7201, %v8392
        %v8394 = vrot.slane %v7211, 1
        %v8395 = vor.u32 %v7208, %v8394
        %v8396 = vrot.slane %v7218, 1
        %v8397 = vor.u32 %v7215, %v8396
        %v8398 = vrot.slane %v7225, 1
        %v8399 = vor.u32 %v7222, %v8398
        %v8400 = vrot.slane %v7232, 1
        %v8401 = vor.u32 %v7229, %v8400
        %v8402 = vrot.slane %v7239, 1
        %v8403 = vor.u32 %v7236, %v8402
        %v8404 = vrot.slane %v7246, 1
        %v8405 = vor.u32 %v7243, %v8404
        %vm8422 = vcmask 1047552
        %vm8423 = vsmask.f32 7424
        %vm8424 = vmand %vm8422, %vm8423
        %v8425 = vsel %vm8424, %v8375, 0
        %v8426 = vsel %vm8424, %v8377, 0
        %v8427 = vsel %vm8424, %v8379, 0
        %v8428 = vsel %vm8424, %v8381, 0
        %v8429 = vsel %vm8424, %v8383, 0
        %v8430 = vsel %vm8424, %v8385, 0
        %v8431 = vsel %vm8424, %v8387, 0
        %v8432 = vsel %vm8424, %v8389, 0
        %v8433 = vsel %vm8424, %v8391, 0
        %v8434 = vsel %vm8424, %v8393, 0
        %v8435 = vsel %vm8424, %v8395, 0
        %v8436 = vsel %vm8424, %v8397, 0
        %v8437 = vsel %vm8424, %v8399, 0
        %v8438 = vsel %vm8424, %v8401, 0
        %v8439 = vsel %vm8424, %v8403, 0
        %v8440 = vsel %vm8424, %v8405, 0
        %s8441 = scalar_lea.vmem %s6, 384
        %v8442 = vld [vmem:[%s8441] sm:$0xf]
        %v8443 = vld [vmem:[%s8441 + $0x4] sm:$0xf]
        %v8444 = vld [vmem:[%s8441 + $0x8] sm:$0xf]
        %v8445 = vld [vmem:[%s8441 + $0xc] sm:$0xf]
        %v8446 = vld [vmem:[%s8441 + $0x10] sm:$0xf]
        %v8447 = vld [vmem:[%s8441 + $0x14] sm:$0xf]
        %v8448 = vld [vmem:[%s8441 + $0x18] sm:$0xf]
        %v8449 = vld [vmem:[%s8441 + $0x1c] sm:$0xf]
        %v8450 = vld [vmem:[%s8441 + $0x20] sm:$0xf]
        %v8451 = vld [vmem:[%s8441 + $0x24] sm:$0xf]
        %v8452 = vld [vmem:[%s8441 + $0x28] sm:$0xf]
        %v8453 = vld [vmem:[%s8441 + $0x2c] sm:$0xf]
        %v8454 = vld [vmem:[%s8441 + $0x30] sm:$0xf]
        %v8455 = vld [vmem:[%s8441 + $0x34] sm:$0xf]
        %v8456 = vld [vmem:[%s8441 + $0x38] sm:$0xf]
        %v8457 = vld [vmem:[%s8441 + $0x3c] sm:$0xf]
        %v8458 = vld [vmem:[%s8441 + $0x40] sm:$0xf]
        %v8459 = vld [vmem:[%s8441 + $0x44] sm:$0xf]
        %v8460 = vld [vmem:[%s8441 + $0x48] sm:$0xf]
        %v8461 = vld [vmem:[%s8441 + $0x4c] sm:$0xf]
        %v8462 = vld [vmem:[%s8441 + $0x50] sm:$0xf]
        %v8463 = vld [vmem:[%s8441 + $0x54] sm:$0xf]
        %v8464 = vld [vmem:[%s8441 + $0x58] sm:$0xf]
        %v8465 = vld [vmem:[%s8441 + $0x5c] sm:$0xf]
        %v8466 = vld [vmem:[%s8441 + $0x60] sm:$0xf]
        %v8467 = vld [vmem:[%s8441 + $0x64] sm:$0xf]
        %v8468 = vld [vmem:[%s8441 + $0x68] sm:$0xf]
        %v8469 = vld [vmem:[%s8441 + $0x6c] sm:$0xf]
        %v8470 = vld [vmem:[%s8441 + $0x70] sm:$0xf]
        %v8471 = vld [vmem:[%s8441 + $0x74] sm:$0xf]
        %v8472 = vld [vmem:[%s8441 + $0x78] sm:$0xf]
        %v8473 = vld [vmem:[%s8441 + $0x7c] sm:$0xf]
        %v8474 = vld [vmem:[%s8441 + $0x80] sm:$0xf]
        %v8475 = vld [vmem:[%s8441 + $0x84] sm:$0xf]
        %v8476 = vld [vmem:[%s8441 + $0x88] sm:$0xf]
        %v8477 = vld [vmem:[%s8441 + $0x8c] sm:$0xf]
        %v8478 = vld [vmem:[%s8441 + $0x90] sm:$0xf]
        %v8479 = vld [vmem:[%s8441 + $0x94] sm:$0xf]
        %v8480 = vld [vmem:[%s8441 + $0x98] sm:$0xf]
        %v8481 = vld [vmem:[%s8441 + $0x9c] sm:$0xf]
        %v8482 = vld [vmem:[%s8441 + $0xa0] sm:$0xf]
        %v8483 = vld [vmem:[%s8441 + $0xa4] sm:$0xf]
        %v8484 = vld [vmem:[%s8441 + $0xa8] sm:$0xf]
        %v8485 = vld [vmem:[%s8441 + $0xac] sm:$0xf]
        %v8486 = vld [vmem:[%s8441 + $0xb0] sm:$0xf]
        %v8487 = vld [vmem:[%s8441 + $0xb4] sm:$0xf]
        %v8488 = vld [vmem:[%s8441 + $0xb8] sm:$0xf]
        %v8489 = vld [vmem:[%s8441 + $0xbc] sm:$0xf]
        %v8538 = vunpack.c.l.b16 %v8442
        %v8539 = vunpack.c.l.b16 %v8443
        %v8540 = vunpack.c.l.b16 %v8444
        %v8541 = vunpack.c.l.b16 %v8445
        %v8542 = vunpack.c.l.b16 %v8446
        %v8543 = vunpack.c.l.b16 %v8447
        %v8544 = vunpack.c.l.b16 %v8448
        %v8545 = vunpack.c.l.b16 %v8449
        %v8546 = vunpack.c.l.b16 %v8450
        %v8547 = vunpack.c.l.b16 %v8451
        %v8548 = vunpack.c.l.b16 %v8452
        %v8549 = vunpack.c.l.b16 %v8453
        %v8550 = vunpack.c.l.b16 %v8454
        %v8551 = vunpack.c.l.b16 %v8455
        %v8552 = vunpack.c.l.b16 %v8456
        %v8553 = vunpack.c.l.b16 %v8457
        %v8554 = vunpack.c.l.b16 %v8458
        %v8555 = vunpack.c.l.b16 %v8459
        %v8556 = vunpack.c.l.b16 %v8460
        %v8557 = vunpack.c.l.b16 %v8461
        %v8558 = vunpack.c.l.b16 %v8462
        %v8559 = vunpack.c.l.b16 %v8463
        %v8560 = vunpack.c.l.b16 %v8464
        %v8561 = vunpack.c.l.b16 %v8465
        %v8562 = vunpack.c.l.b16 %v8466
        %v8563 = vunpack.c.l.b16 %v8467
        %v8564 = vunpack.c.l.b16 %v8468
        %v8565 = vunpack.c.l.b16 %v8469
        %v8566 = vunpack.c.l.b16 %v8470
        %v8567 = vunpack.c.l.b16 %v8471
        %v8568 = vunpack.c.l.b16 %v8472
        %v8569 = vunpack.c.l.b16 %v8473
        %v8570 = vunpack.c.l.b16 %v8474
        %v8571 = vunpack.c.l.b16 %v8475
        %v8572 = vunpack.c.l.b16 %v8476
        %v8573 = vunpack.c.l.b16 %v8477
        %v8574 = vunpack.c.l.b16 %v8478
        %v8575 = vunpack.c.l.b16 %v8479
        %v8576 = vunpack.c.l.b16 %v8480
        %v8577 = vunpack.c.l.b16 %v8481
        %v8578 = vunpack.c.l.b16 %v8482
        %v8579 = vunpack.c.l.b16 %v8483
        %v8580 = vunpack.c.l.b16 %v8484
        %v8581 = vunpack.c.l.b16 %v8485
        %v8582 = vunpack.c.l.b16 %v8486
        %v8583 = vunpack.c.l.b16 %v8487
        %v8584 = vunpack.c.l.b16 %v8488
        %v8585 = vunpack.c.l.b16 %v8489
        %v8586 = vpack.c.b16 %v8539, %v8538
        %v8587 = vpack.c.b16 %v8541, %v8540
        %v8588 = vpack.c.b16 %v8543, %v8542
        %v8589 = vpack.c.b16 %v8545, %v8544
        %v8590 = vpack.c.b16 %v8547, %v8546
        %v8591 = vpack.c.b16 %v8549, %v8548
        %v8592 = vpack.c.b16 %v8551, %v8550
        %v8593 = vpack.c.b16 %v8553, %v8552
        %v8594 = vpack.c.b16 %v8555, %v8554
        %v8595 = vpack.c.b16 %v8557, %v8556
        %v8596 = vpack.c.b16 %v8559, %v8558
        %v8597 = vpack.c.b16 %v8561, %v8560
        %v8598 = vpack.c.b16 %v8563, %v8562
        %v8599 = vpack.c.b16 %v8565, %v8564
        %v8600 = vpack.c.b16 %v8567, %v8566
        %v8601 = vpack.c.b16 %v8569, %v8568
        %v8602 = vpack.c.b16 %v8571, %v8570
        %v8603 = vpack.c.b16 %v8573, %v8572
        %v8604 = vpack.c.b16 %v8575, %v8574
        %v8605 = vpack.c.b16 %v8577, %v8576
        %v8606 = vpack.c.b16 %v8579, %v8578
        %v8607 = vpack.c.b16 %v8581, %v8580
        %v8608 = vpack.c.b16 %v8583, %v8582
        %v8609 = vpack.c.b16 %v8585, %v8584
        %8634 = vmatprep.subr.bf16.mxu0 0
        %8635 = vmatpush1.bf16.msra.mxu0 %v8586
        %8636 = vmatprep.subr.bf16.mxu0 0
        %8637 = vmatpush1.bf16.msra.mxu0 %v8587
        %8638 = vmatprep.subr.bf16.mxu0 0
        %8639 = vmatpush1.bf16.msra.mxu0 %v8588
        %8640 = vmatprep.subr.bf16.mxu0 0
        %8641 = vmatpush1.bf16.msra.mxu0 %v8589
        %8642 = vmatprep.subr.bf16.mxu0 0
        %8643 = vmatpush1.bf16.msra.mxu0 %v8590
        %8644 = vmatprep.subr.bf16.mxu0 0
        %8645 = vmatpush1.bf16.msra.mxu0 %v8591
        %8646 = vmatprep.subr.bf16.mxu0 0
        %8647 = vmatpush1.bf16.msra.mxu0 %v8592
        %8648 = vmatprep.subr.bf16.mxu0 0
        %8649 = vmatpush1.bf16.msra.mxu0 %v8593
        %8650 = vmatprep.subr.bf16.mxu0 0
        %8651 = vmatpush1.bf16.msra.mxu0 %v8594
        %8652 = vmatprep.subr.bf16.mxu0 0
        %8653 = vmatpush1.bf16.msra.mxu0 %v8595
        %8654 = vmatprep.subr.bf16.mxu0 0
        %8655 = vmatpush1.bf16.msra.mxu0 %v8596
        %8656 = vmatprep.subr.bf16.mxu0 0
        %8657 = vmatpush1.bf16.msra.mxu0 %v8597
        %8658 = vmatprep.subr.bf16.mxu0 0
        %8659 = vmatpush1.bf16.msra.mxu0 %v8598
        %8660 = vmatprep.subr.bf16.mxu0 0
        %8661 = vmatpush1.bf16.msra.mxu0 %v8599
        %8662 = vmatprep.subr.bf16.mxu0 0
        %8663 = vmatpush1.bf16.msra.mxu0 %v8600
        %8664 = vmatprep.subr.bf16.mxu0 0
        %8665 = vmatpush1.bf16.msra.mxu0 %v8601
        %8666 = vmatprep.mubr.bf16.mxu0 %v8425
        %8667 = vmatmul.mubr.bf16.gmra.mrb[0].mxu0 0
        %v8668 = vpop.f32.mrb[0].mxu0
        %v8669 = vadd.f32 0.0, %v8668
        %v8670 = vpop.f32.mrb[0].mxu0
        %v8671 = vpop.f32.mrb[0].mxu0
        %v8672 = vadd.f32 0.0, %v8671
        %v8673 = vpop.f32.mrb[0].mxu0
        %8674 = vmatprep.mubr.bf16.mxu0 %v8426
        %8675 = vmatmul.mubr.bf16.gmra.mrb[0].mxu0 %v8425
        %v8676 = vpop.f32.mrb[0].mxu0
        %v8677 = vadd.f32 0.0, %v8676
        %v8678 = vpop.f32.mrb[0].mxu0
        %v8679 = vpop.f32.mrb[0].mxu0
        %v8680 = vadd.f32 0.0, %v8679
        %v8681 = vpop.f32.mrb[0].mxu0
        %8682 = vmatprep.mubr.bf16.mxu0 %v8427
        %8683 = vmatmul.mubr.bf16.gmra.mrb[0].mxu0 %v8426
        %v8684 = vpop.f32.mrb[0].mxu0
        %v8685 = vadd.f32 0.0, %v8684
        %v8686 = vpop.f32.mrb[0].mxu0
        %v8687 = vpop.f32.mrb[0].mxu0
        %v8688 = vadd.f32 0.0, %v8687
        %v8689 = vpop.f32.mrb[0].mxu0
        %8690 = vmatprep.mubr.bf16.mxu0 %v8428
        %8691 = vmatmul.mubr.bf16.gmra.mrb[0].mxu0 %v8427
        %v8692 = vpop.f32.mrb[0].mxu0
        %v8693 = vadd.f32 0.0, %v8692
        %v8694 = vpop.f32.mrb[0].mxu0
        %v8695 = vpop.f32.mrb[0].mxu0
        %v8696 = vadd.f32 0.0, %v8695
        %v8697 = vpop.f32.mrb[0].mxu0
        %8698 = vmatprep.mubr.bf16.mxu0 %v8429
        %8699 = vmatmul.mubr.bf16.gmra.mrb[0].mxu0 %v8428
        %v8700 = vpop.f32.mrb[0].mxu0
        %v8701 = vadd.f32 0.0, %v8700
        %v8702 = vpop.f32.mrb[0].mxu0
        %v8703 = vpop.f32.mrb[0].mxu0
        %v8704 = vadd.f32 0.0, %v8703
        %v8705 = vpop.f32.mrb[0].mxu0
        %8706 = vmatprep.mubr.bf16.mxu0 %v8430
        %8707 = vmatmul.mubr.bf16.gmra.mrb[0].mxu0 %v8429
        %v8708 = vpop.f32.mrb[0].mxu0
        %v8709 = vadd.f32 0.0, %v8708
        %v8710 = vpop.f32.mrb[0].mxu0
        %v8711 = vpop.f32.mrb[0].mxu0
        %v8712 = vadd.f32 0.0, %v8711
        %v8713 = vpop.f32.mrb[0].mxu0
        %8714 = vmatprep.mubr.bf16.mxu0 %v8431
        %8715 = vmatmul.mubr.bf16.gmra.mrb[0].mxu0 %v8430
        %v8716 = vpop.f32.mrb[0].mxu0
        %v8717 = vadd.f32 0.0, %v8716
        %v8718 = vpop.f32.mrb[0].mxu0
        %v8719 = vpop.f32.mrb[0].mxu0
        %v8720 = vadd.f32 0.0, %v8719
        %v8721 = vpop.f32.mrb[0].mxu0
        %8722 = vmatprep.mubr.bf16.mxu0 %v8432
        %8723 = vmatmul.mubr.bf16.gmra.mrb[0].mxu0 %v8431
        %v8724 = vpop.f32.mrb[0].mxu0
        %v8725 = vadd.f32 0.0, %v8724
        %v8726 = vpop.f32.mrb[0].mxu0
        %v8727 = vpop.f32.mrb[0].mxu0
        %v8728 = vadd.f32 0.0, %v8727
        %v8729 = vpop.f32.mrb[0].mxu0
        %8730 = vmatprep.mubr.bf16.mxu0 %v8433
        %8731 = vmatmul.mubr.bf16.gmra.mrb[0].mxu0 %v8432
        %v8732 = vpop.f32.mrb[0].mxu0
        %v8733 = vadd.f32 0.0, %v8732
        %v8734 = vpop.f32.mrb[0].mxu0
        %v8735 = vpop.f32.mrb[0].mxu0
        %v8736 = vadd.f32 0.0, %v8735
        %v8737 = vpop.f32.mrb[0].mxu0
        %8738 = vmatprep.mubr.bf16.mxu0 %v8434
        %8739 = vmatmul.mubr.bf16.gmra.mrb[0].mxu0 %v8433
        %v8740 = vpop.f32.mrb[0].mxu0
        %v8741 = vadd.f32 0.0, %v8740
        %v8742 = vpop.f32.mrb[0].mxu0
        %v8743 = vpop.f32.mrb[0].mxu0
        %v8744 = vadd.f32 0.0, %v8743
        %v8745 = vpop.f32.mrb[0].mxu0
        %8746 = vmatprep.mubr.bf16.mxu0 %v8435
        %8747 = vmatmul.mubr.bf16.gmra.mrb[0].mxu0 %v8434
        %v8748 = vpop.f32.mrb[0].mxu0
        %v8749 = vadd.f32 0.0, %v8748
        %v8750 = vpop.f32.mrb[0].mxu0
        %v8751 = vpop.f32.mrb[0].mxu0
        %v8752 = vadd.f32 0.0, %v8751
        %v8753 = vpop.f32.mrb[0].mxu0
        %8754 = vmatprep.mubr.bf16.mxu0 %v8436
        %8755 = vmatmul.mubr.bf16.gmra.mrb[0].mxu0 %v8435
        %v8756 = vpop.f32.mrb[0].mxu0
        %v8757 = vadd.f32 0.0, %v8756
        %v8758 = vpop.f32.mrb[0].mxu0
        %v8759 = vpop.f32.mrb[0].mxu0
        %v8760 = vadd.f32 0.0, %v8759
        %v8761 = vpop.f32.mrb[0].mxu0
        %8762 = vmatprep.mubr.bf16.mxu0 %v8437
        %8763 = vmatmul.mubr.bf16.gmra.mrb[0].mxu0 %v8436
        %v8764 = vpop.f32.mrb[0].mxu0
        %v8765 = vadd.f32 0.0, %v8764
        %v8766 = vpop.f32.mrb[0].mxu0
        %v8767 = vpop.f32.mrb[0].mxu0
        %v8768 = vadd.f32 0.0, %v8767
        %v8769 = vpop.f32.mrb[0].mxu0
        %8770 = vmatprep.mubr.bf16.mxu0 %v8438
        %8771 = vmatmul.mubr.bf16.gmra.mrb[0].mxu0 %v8437
        %v8772 = vpop.f32.mrb[0].mxu0
        %v8773 = vadd.f32 0.0, %v8772
        %v8774 = vpop.f32.mrb[0].mxu0
        %v8775 = vpop.f32.mrb[0].mxu0
        %v8776 = vadd.f32 0.0, %v8775
        %v8777 = vpop.f32.mrb[0].mxu0
        %8778 = vmatprep.mubr.bf16.mxu0 %v8439
        %8779 = vmatmul.mubr.bf16.gmra.mrb[0].mxu0 %v8438
        %v8780 = vpop.f32.mrb[0].mxu0
        %v8781 = vadd.f32 0.0, %v8780
        %v8782 = vpop.f32.mrb[0].mxu0
        %v8783 = vpop.f32.mrb[0].mxu0
        %v8784 = vadd.f32 0.0, %v8783
        %v8785 = vpop.f32.mrb[0].mxu0
        %8786 = vmatprep.mubr.bf16.mxu0 %v8440
        %8787 = vmatmul.mubr.bf16.gmra.mrb[0].mxu0 %v8439
        %v8788 = vpop.f32.mrb[0].mxu0
        %v8789 = vadd.f32 0.0, %v8788
        %v8790 = vpop.f32.mrb[0].mxu0
        %v8791 = vpop.f32.mrb[0].mxu0
        %v8792 = vadd.f32 0.0, %v8791
        %v8793 = vpop.f32.mrb[0].mxu0
        %8794 = vdwg.mxu0
        %8795 = vmatprep.subr.bf16.mxu0 0
        %8796 = vmatpush1.bf16.msra.mxu0 %v8602
        %8797 = vmatprep.subr.bf16.mxu0 0
        %8798 = vmatpush1.bf16.msra.mxu0 %v8603
        %8799 = vmatprep.subr.bf16.mxu0 0
        %8800 = vmatpush1.bf16.msra.mxu0 %v8604
        %8801 = vmatprep.subr.bf16.mxu0 0
        %8802 = vmatpush1.bf16.msra.mxu0 %v8605
        %8803 = vmatprep.subr.bf16.mxu0 0
        %8804 = vmatpush1.bf16.msra.mxu0 %v8606
        %8805 = vmatprep.subr.bf16.mxu0 0
        %8806 = vmatpush1.bf16.msra.mxu0 %v8607
        %8807 = vmatprep.subr.bf16.mxu0 0
        %8808 = vmatpush1.bf16.msra.mxu0 %v8608
        %8809 = vmatprep.subr.bf16.mxu0 0
        %8810 = vmatpush1.bf16.msra.mxu0 %v8609
        %8811 = vmatprep.subr.bf16.mxu0 0
        %8812 = vmatpush1.bf16.msra.mxu0 0
        %8813 = vmatprep.subr.bf16.mxu0 0
        %8814 = vmatpush1.bf16.msra.mxu0 0
        %8815 = vmatprep.subr.bf16.mxu0 0
        %8816 = vmatpush1.bf16.msra.mxu0 0
        %8817 = vmatprep.subr.bf16.mxu0 0
        %8818 = vmatpush1.bf16.msra.mxu0 0
        %8819 = vmatprep.subr.bf16.mxu0 0
        %8820 = vmatpush1.bf16.msra.mxu0 0
        %8821 = vmatprep.subr.bf16.mxu0 0
        %8822 = vmatpush1.bf16.msra.mxu0 0
        %8823 = vmatprep.subr.bf16.mxu0 0
        %8824 = vmatpush1.bf16.msra.mxu0 0
        %8825 = vmatprep.subr.bf16.mxu0 0
        %8826 = vmatpush1.bf16.msra.mxu0 0
        %8827 = vmatprep.mubr.bf16.mxu0 0
        %8828 = vmatmul.mubr.bf16.gmra.mrb[0].mxu0 %v8426
        %v8829 = vpop.f32.mrb[0].mxu0
        %v8830 = vadd.f32 %v8669, %v8829
        %v8831 = vpop.f32.mrb[0].mxu0
        %v8832 = vpop.f32.mrb[0].mxu0
        %v8833 = vadd.f32 %v8672, %v8832
        %v8834 = vpop.f32.mrb[0].mxu0
        %8835 = vmatprep.mubr.bf16.mxu0 0
        %8836 = vmatmul.mubr.bf16.gmra.mrb[0].mxu0 %v8427
        %v8837 = vpop.f32.mrb[0].mxu0
        %v8838 = vadd.f32 %v8677, %v8837
        %v8839 = vpop.f32.mrb[0].mxu0
        %v8840 = vpop.f32.mrb[0].mxu0
        %v8841 = vadd.f32 %v8680, %v8840
        %v8842 = vpop.f32.mrb[0].mxu0
        %8843 = vmatprep.mubr.bf16.mxu0 0
        %8844 = vmatmul.mubr.bf16.gmra.mrb[0].mxu0 %v8428
        %v8845 = vpop.f32.mrb[0].mxu0
        %v8846 = vadd.f32 %v8685, %v8845
        %v8847 = vpop.f32.mrb[0].mxu0
        %v8848 = vpop.f32.mrb[0].mxu0
        %v8849 = vadd.f32 %v8688, %v8848
        %v8850 = vpop.f32.mrb[0].mxu0
        %8851 = vmatprep.mubr.bf16.mxu0 0
        %8852 = vmatmul.mubr.bf16.gmra.mrb[0].mxu0 %v8429
        %v8853 = vpop.f32.mrb[0].mxu0
        %v8854 = vadd.f32 %v8693, %v8853
        %v8855 = vpop.f32.mrb[0].mxu0
        %v8856 = vpop.f32.mrb[0].mxu0
        %v8857 = vadd.f32 %v8696, %v8856
        %v8858 = vpop.f32.mrb[0].mxu0
        %8859 = vmatprep.mubr.bf16.mxu0 0
        %8860 = vmatmul.mubr.bf16.gmra.mrb[0].mxu0 %v8430
        %v8861 = vpop.f32.mrb[0].mxu0
        %v8862 = vadd.f32 %v8701, %v8861
        %v8863 = vpop.f32.mrb[0].mxu0
        %v8864 = vpop.f32.mrb[0].mxu0
        %v8865 = vadd.f32 %v8704, %v8864
        %v8866 = vpop.f32.mrb[0].mxu0
        %8867 = vmatprep.mubr.bf16.mxu0 0
        %8868 = vmatmul.mubr.bf16.gmra.mrb[0].mxu0 %v8431
        %v8869 = vpop.f32.mrb[0].mxu0
        %v8870 = vadd.f32 %v8709, %v8869
        %v8871 = vpop.f32.mrb[0].mxu0
        %v8872 = vpop.f32.mrb[0].mxu0
        %v8873 = vadd.f32 %v8712, %v8872
        %v8874 = vpop.f32.mrb[0].mxu0
        %8875 = vmatprep.mubr.bf16.mxu0 0
        %8876 = vmatmul.mubr.bf16.gmra.mrb[0].mxu0 %v8432
        %v8877 = vpop.f32.mrb[0].mxu0
        %v8878 = vadd.f32 %v8717, %v8877
        %v8879 = vpop.f32.mrb[0].mxu0
        %v8880 = vpop.f32.mrb[0].mxu0
        %v8881 = vadd.f32 %v8720, %v8880
        %v8882 = vpop.f32.mrb[0].mxu0
        %8883 = vmatprep.mubr.bf16.mxu0 0
        %8884 = vmatmul.mubr.bf16.gmra.mrb[0].mxu0 %v8433
        %v8885 = vpop.f32.mrb[0].mxu0
        %v8886 = vadd.f32 %v8725, %v8885
        %v8887 = vpop.f32.mrb[0].mxu0
        %v8888 = vpop.f32.mrb[0].mxu0
        %v8889 = vadd.f32 %v8728, %v8888
        %v8890 = vpop.f32.mrb[0].mxu0
        %8891 = vmatprep.mubr.bf16.mxu0 0
        %8892 = vmatmul.mubr.bf16.gmra.mrb[0].mxu0 %v8434
        %v8893 = vpop.f32.mrb[0].mxu0
        %v8894 = vadd.f32 %v8733, %v8893
        %v8895 = vpop.f32.mrb[0].mxu0
        %v8896 = vpop.f32.mrb[0].mxu0
        %v8897 = vadd.f32 %v8736, %v8896
        %v8898 = vpop.f32.mrb[0].mxu0
        %8899 = vmatprep.mubr.bf16.mxu0 0
        %8900 = vmatmul.mubr.bf16.gmra.mrb[0].mxu0 %v8435
        %v8901 = vpop.f32.mrb[0].mxu0
        %v8902 = vadd.f32 %v8741, %v8901
        %v8903 = vpop.f32.mrb[0].mxu0
        %v8904 = vpop.f32.mrb[0].mxu0
        %v8905 = vadd.f32 %v8744, %v8904
        %v8906 = vpop.f32.mrb[0].mxu0
        %8907 = vmatprep.mubr.bf16.mxu0 0
        %8908 = vmatmul.mubr.bf16.gmra.mrb[0].mxu0 %v8436
        %v8909 = vpop.f32.mrb[0].mxu0
        %v8910 = vadd.f32 %v8749, %v8909
        %v8911 = vpop.f32.mrb[0].mxu0
        %v8912 = vpop.f32.mrb[0].mxu0
        %v8913 = vadd.f32 %v8752, %v8912
        %v8914 = vpop.f32.mrb[0].mxu0
        %8915 = vmatprep.mubr.bf16.mxu0 0
        %8916 = vmatmul.mubr.bf16.gmra.mrb[0].mxu0 %v8437
        %v8917 = vpop.f32.mrb[0].mxu0
        %v8918 = vadd.f32 %v8757, %v8917
        %v8919 = vpop.f32.mrb[0].mxu0
        %v8920 = vpop.f32.mrb[0].mxu0
        %v8921 = vadd.f32 %v8760, %v8920
        %v8922 = vpop.f32.mrb[0].mxu0
        %8923 = vmatprep.mubr.bf16.mxu0 0
        %8924 = vmatmul.mubr.bf16.gmra.mrb[0].mxu0 %v8438
        %v8925 = vpop.f32.mrb[0].mxu0
        %v8926 = vadd.f32 %v8765, %v8925
        %v8927 = vpop.f32.mrb[0].mxu0
        %v8928 = vpop.f32.mrb[0].mxu0
        %v8929 = vadd.f32 %v8768, %v8928
        %v8930 = vpop.f32.mrb[0].mxu0
        %8931 = vmatprep.mubr.bf16.mxu0 0
        %8932 = vmatmul.mubr.bf16.gmra.mrb[0].mxu0 %v8439
        %v8933 = vpop.f32.mrb[0].mxu0
        %v8934 = vadd.f32 %v8773, %v8933
        %v8935 = vpop.f32.mrb[0].mxu0
        %v8936 = vpop.f32.mrb[0].mxu0
        %v8937 = vadd.f32 %v8776, %v8936
        %v8938 = vpop.f32.mrb[0].mxu0
        %8939 = vmatprep.mubr.bf16.mxu0 0
        %8940 = vmatmul.mubr.bf16.gmra.mrb[0].mxu0 %v8440
        %v8941 = vpop.f32.mrb[0].mxu0
        %v8942 = vadd.f32 %v8781, %v8941
        %v8943 = vpop.f32.mrb[0].mxu0
        %v8944 = vpop.f32.mrb[0].mxu0
        %v8945 = vadd.f32 %v8784, %v8944
        %v8946 = vpop.f32.mrb[0].mxu0
        %8947 = vmatprep.mubr.bf16.mxu0 0
        %8948 = vmatmul.mubr.bf16.gmra.mrb[0].mxu0 0
        %v8949 = vpop.f32.mrb[0].mxu0
        %v8950 = vadd.f32 %v8789, %v8949
        %v8951 = vpop.f32.mrb[0].mxu0
        %v8952 = vpop.f32.mrb[0].mxu0
        %v8953 = vadd.f32 %v8792, %v8952
        %v8954 = vpop.f32.mrb[0].mxu0
        %8955 = vdwg.mxu0
        %v8956 = vadd.f32 %v8342, %v8830
        %v8957 = vadd.f32 %v8343, %v8833
        %v8958 = vadd.f32 %v8344, %v8838
        %v8959 = vadd.f32 %v8345, %v8841
        %v8960 = vadd.f32 %v8346, %v8846
        %v8961 = vadd.f32 %v8347, %v8849
        %v8962 = vadd.f32 %v8348, %v8854
        %v8963 = vadd.f32 %v8349, %v8857
        %v8964 = vadd.f32 %v8350, %v8862
        %v8965 = vadd.f32 %v8351, %v8865
        %v8966 = vadd.f32 %v8352, %v8870
        %v8967 = vadd.f32 %v8353, %v8873
        %v8968 = vadd.f32 %v8354, %v8878
        %v8969 = vadd.f32 %v8355, %v8881
        %v8970 = vadd.f32 %v8356, %v8886
        %v8971 = vadd.f32 %v8357, %v8889
        %v8972 = vadd.f32 %v8358, %v8894
        %v8973 = vadd.f32 %v8359, %v8897
        %v8974 = vadd.f32 %v8360, %v8902
        %v8975 = vadd.f32 %v8361, %v8905
        %v8976 = vadd.f32 %v8362, %v8910
        %v8977 = vadd.f32 %v8363, %v8913
        %v8978 = vadd.f32 %v8364, %v8918
        %v8979 = vadd.f32 %v8365, %v8921
        %v8980 = vadd.f32 %v8366, %v8926
        %v8981 = vadd.f32 %v8367, %v8929
        %v8982 = vadd.f32 %v8368, %v8934
        %v8983 = vadd.f32 %v8369, %v8937
        %v8984 = vadd.f32 %v8370, %v8942
        %v8985 = vadd.f32 %v8371, %v8945
        %v8986 = vadd.f32 %v8372, %v8950
        %v8987 = vadd.f32 %v8373, %v8953
        %v8988 = vmax.f32 %v8956, 0.0
        %v8989 = vmax.f32 %v8957, 0.0
        %v8990 = vmax.f32 %v8958, 0.0
        %v8991 = vmax.f32 %v8959, 0.0
        %v8992 = vmax.f32 %v8960, 0.0
        %v8993 = vmax.f32 %v8961, 0.0
        %v8994 = vmax.f32 %v8962, 0.0
        %v8995 = vmax.f32 %v8963, 0.0
        %v8996 = vmax.f32 %v8964, 0.0
        %v8997 = vmax.f32 %v8965, 0.0
        %v8998 = vmax.f32 %v8966, 0.0
        %v8999 = vmax.f32 %v8967, 0.0
        %v9000 = vmax.f32 %v8968, 0.0
        %v9001 = vmax.f32 %v8969, 0.0
        %v9002 = vmax.f32 %v8970, 0.0
        %v9003 = vmax.f32 %v8971, 0.0
        %v9004 = vmax.f32 %v8972, 0.0
        %v9005 = vmax.f32 %v8973, 0.0
        %v9006 = vmax.f32 %v8974, 0.0
        %v9007 = vmax.f32 %v8975, 0.0
        %v9008 = vmax.f32 %v8976, 0.0
        %v9009 = vmax.f32 %v8977, 0.0
        %v9010 = vmax.f32 %v8978, 0.0
        %v9011 = vmax.f32 %v8979, 0.0
        %v9012 = vmax.f32 %v8980, 0.0
        %v9013 = vmax.f32 %v8981, 0.0
        %v9014 = vmax.f32 %v8982, 0.0
        %v9015 = vmax.f32 %v8983, 0.0
        %v9016 = vmax.f32 %v8984, 0.0
        %v9017 = vmax.f32 %v8985, 0.0
        %v9018 = vmax.f32 %v8986, 0.0
        %v9019 = vmax.f32 %v8987, 0.0
        %v9020 = vpack.c.bf16 %v8989, %v8988
        %v9021 = vpack.c.bf16 %v8991, %v8990
        %v9022 = vpack.c.bf16 %v8993, %v8992
        %v9023 = vpack.c.bf16 %v8995, %v8994
        %v9024 = vpack.c.bf16 %v8997, %v8996
        %v9025 = vpack.c.bf16 %v8999, %v8998
        %v9026 = vpack.c.bf16 %v9001, %v9000
        %v9027 = vpack.c.bf16 %v9003, %v9002
        %v9028 = vpack.c.bf16 %v9005, %v9004
        %v9029 = vpack.c.bf16 %v9007, %v9006
        %v9030 = vpack.c.bf16 %v9009, %v9008
        %v9031 = vpack.c.bf16 %v9011, %v9010
        %v9032 = vpack.c.bf16 %v9013, %v9012
        %v9033 = vpack.c.bf16 %v9015, %v9014
        %v9034 = vpack.c.bf16 %v9017, %v9016
        %v9035 = vpack.c.bf16 %v9019, %v9018
        %v9036 = vld [vmem:[#allocation13] sm:$0x1]
        %v9038 = vlaneseq
        %v9039 = vshrl.u32 %v9038, 7
        %v9040 = vsub.s32 0, %v9039
        %v9041 = vrot.slane %v9036, %v9040
        %v9044 = vshrl.u32 %v9020, 16
        %v9046 = vrot.slane %v9044, 7
        %v9047 = vshll.u32 %v9020, 16
        %v9049 = vor.u32 %v9046, %v9047
        %v9051 = vshrl.u32 %v9021, 16
        %v9053 = vrot.slane %v9051, 7
        %v9054 = vshll.u32 %v9021, 16
        %v9056 = vor.u32 %v9053, %v9054
        %v9058 = vshrl.u32 %v9022, 16
        %v9060 = vrot.slane %v9058, 7
        %v9061 = vshll.u32 %v9022, 16
        %v9063 = vor.u32 %v9060, %v9061
        %v9065 = vshrl.u32 %v9023, 16
        %v9067 = vrot.slane %v9065, 7
        %v9068 = vshll.u32 %v9023, 16
        %v9070 = vor.u32 %v9067, %v9068
        %v9072 = vshrl.u32 %v9024, 16
        %v9074 = vrot.slane %v9072, 7
        %v9075 = vshll.u32 %v9024, 16
        %v9077 = vor.u32 %v9074, %v9075
        %v9079 = vshrl.u32 %v9025, 16
        %v9081 = vrot.slane %v9079, 7
        %v9082 = vshll.u32 %v9025, 16
        %v9084 = vor.u32 %v9081, %v9082
        %v9086 = vshrl.u32 %v9026, 16
        %v9088 = vrot.slane %v9086, 7
        %v9089 = vshll.u32 %v9026, 16
        %v9091 = vor.u32 %v9088, %v9089
        %v9093 = vshrl.u32 %v9027, 16
        %v9095 = vrot.slane %v9093, 7
        %v9096 = vshll.u32 %v9027, 16
        %v9098 = vor.u32 %v9095, %v9096
        %v9100 = vshrl.u32 %v9028, 16
        %v9102 = vrot.slane %v9100, 7
        %v9103 = vshll.u32 %v9028, 16
        %v9105 = vor.u32 %v9102, %v9103
        %v9107 = vshrl.u32 %v9029, 16
        %v9109 = vrot.slane %v9107, 7
        %v9110 = vshll.u32 %v9029, 16
        %v9112 = vor.u32 %v9109, %v9110
        %v9114 = vshrl.u32 %v9030, 16
        %v9116 = vrot.slane %v9114, 7
        %v9117 = vshll.u32 %v9030, 16
        %v9119 = vor.u32 %v9116, %v9117
        %v9121 = vshrl.u32 %v9031, 16
        %v9123 = vrot.slane %v9121, 7
        %v9124 = vshll.u32 %v9031, 16
        %v9126 = vor.u32 %v9123, %v9124
        %v9128 = vshrl.u32 %v9032, 16
        %v9130 = vrot.slane %v9128, 7
        %v9131 = vshll.u32 %v9032, 16
        %v9133 = vor.u32 %v9130, %v9131
        %v9135 = vshrl.u32 %v9033, 16
        %v9137 = vrot.slane %v9135, 7
        %v9138 = vshll.u32 %v9033, 16
        %v9140 = vor.u32 %v9137, %v9138
        %v9142 = vshrl.u32 %v9034, 16
        %v9144 = vrot.slane %v9142, 7
        %v9145 = vshll.u32 %v9034, 16
        %v9147 = vor.u32 %v9144, %v9145
        %v9149 = vshrl.u32 %v9035, 16
        %v9151 = vrot.slane %v9149, 7
        %v9152 = vshll.u32 %v9035, 16
        %v9154 = vor.u32 %v9151, %v9152
        %v9171 = vsel %vm823, 0, %v9049
        %v9172 = vsel %vm823, 0, %v9056
        %v9173 = vsel %vm823, 0, %v9063
        %v9174 = vsel %vm823, 0, %v9070
        %v9175 = vsel %vm823, 0, %v9077
        %v9176 = vsel %vm823, 0, %v9084
        %v9177 = vsel %vm823, 0, %v9091
        %v9178 = vsel %vm823, 0, %v9098
        %v9179 = vsel %vm823, 0, %v9105
        %v9180 = vsel %vm823, 0, %v9112
        %v9181 = vsel %vm823, 0, %v9119
        %v9182 = vsel %vm823, 0, %v9126
        %v9183 = vsel %vm823, 0, %v9133
        %v9184 = vsel %vm823, 0, %v9140
        %v9185 = vsel %vm823, 0, %v9147
        %v9186 = vsel %vm823, 0, %v9154
        %v9187 = vld [vmem:[%s8] sm:$0xf]
        %v9188 = vld [vmem:[%s8 + $0x4] sm:$0xf]
        %v9189 = vld [vmem:[%s8 + $0x8] sm:$0xf]
        %v9190 = vld [vmem:[%s8 + $0xc] sm:$0xf]
        %v9191 = vld [vmem:[%s8 + $0x10] sm:$0xf]
        %v9192 = vld [vmem:[%s8 + $0x14] sm:$0xf]
        %v9193 = vld [vmem:[%s8 + $0x18] sm:$0xf]
        %v9194 = vld [vmem:[%s8 + $0x1c] sm:$0xf]
        %v9203 = vunpack.c.l.b16 %v9187
        %v9204 = vunpack.c.l.b16 %v9188
        %v9205 = vunpack.c.l.b16 %v9189
        %v9206 = vunpack.c.l.b16 %v9190
        %v9207 = vunpack.c.l.b16 %v9191
        %v9208 = vunpack.c.l.b16 %v9192
        %v9209 = vunpack.c.l.b16 %v9193
        %v9210 = vunpack.c.l.b16 %v9194
        %v9211 = vpack.c.b16 %v9204, %v9203
        %v9212 = vpack.c.b16 %v9206, %v9205
        %v9213 = vpack.c.b16 %v9208, %v9207
        %v9214 = vpack.c.b16 %v9210, %v9209
        %v9220 = vsel %vm6904, 0, 0
        %v9223 = vsel %vm6904, %v9171, 0
        %v9226 = vsel %vm6904, %v9172, 0
        %v9229 = vsel %vm6904, %v9173, 0
        %v9232 = vsel %vm6904, %v9174, 0
        %v9235 = vsel %vm6904, %v9175, 0
        %v9238 = vsel %vm6904, %v9176, 0
        %v9241 = vsel %vm6904, %v9177, 0
        %v9244 = vsel %vm6904, %v9178, 0
        %v9247 = vsel %vm6904, %v9179, 0
        %v9250 = vsel %vm6904, %v9180, 0
        %v9253 = vsel %vm6904, %v9181, 0
        %v9256 = vsel %vm6904, %v9182, 0
        %v9259 = vsel %vm6904, %v9183, 0
        %v9262 = vsel %vm6904, %v9184, 0
        %v9265 = vsel %vm6904, %v9185, 0
        %9267 = vmatprep.subr.bf16.mxu0 0
        %9268 = vmatpush1.bf16.msra.mxu0 %v9211
        %9269 = vmatprep.subr.bf16.mxu0 0
        %9270 = vmatpush1.bf16.msra.mxu0 %v9212
        %9271 = vmatprep.subr.bf16.mxu0 0
        %9272 = vmatpush1.bf16.msra.mxu0 %v9213
        %9273 = vmatprep.subr.bf16.mxu0 0
        %9274 = vmatpush1.bf16.msra.mxu0 %v9214
        %9275 = vmatprep.subr.bf16.mxu0 0
        %9276 = vmatpush1.bf16.msra.mxu0 0
        %9277 = vmatprep.subr.bf16.mxu0 0
        %9278 = vmatpush1.bf16.msra.mxu0 0
        %9279 = vmatprep.subr.bf16.mxu0 0
        %9280 = vmatpush1.bf16.msra.mxu0 0
        %9281 = vmatprep.subr.bf16.mxu0 0
        %9282 = vmatpush1.bf16.msra.mxu0 0
        %9283 = vmatprep.subr.bf16.mxu0 0
        %9284 = vmatpush1.bf16.msra.mxu0 0
        %9285 = vmatprep.subr.bf16.mxu0 0
        %9286 = vmatpush1.bf16.msra.mxu0 0
        %9287 = vmatprep.subr.bf16.mxu0 0
        %9288 = vmatpush1.bf16.msra.mxu0 0
        %9289 = vmatprep.subr.bf16.mxu0 0
        %9290 = vmatpush1.bf16.msra.mxu0 0
        %9291 = vmatprep.subr.bf16.mxu0 0
        %9292 = vmatpush1.bf16.msra.mxu0 0
        %9293 = vmatprep.subr.bf16.mxu0 0
        %9294 = vmatpush1.bf16.msra.mxu0 0
        %9295 = vmatprep.subr.bf16.mxu0 0
        %9296 = vmatpush1.bf16.msra.mxu0 0
        %9297 = vmatprep.subr.bf16.mxu0 0
        %9298 = vmatpush1.bf16.msra.mxu0 0
        %9299 = vmatprep.mubr.bf16.mxu0 0
        %9300 = vmatmul.mubr.bf16.gmra.mrb[0].mxu0 %v9220
        %v9301 = vpop.f32.mrb[0].mxu0
        %v9302 = vadd.f32 0.0, %v9301
        %v9303 = vpop.f32.mrb[0].mxu0
        %v9304 = vpop.f32.mrb[0].mxu0
        %v9305 = vadd.f32 0.0, %v9304
        %v9306 = vpop.f32.mrb[0].mxu0
        %9307 = vmatprep.mubr.bf16.mxu0 0
        %9308 = vmatmul.mubr.bf16.gmra.mrb[0].mxu0 %v9223
        %v9309 = vpop.f32.mrb[0].mxu0
        %v9310 = vadd.f32 0.0, %v9309
        %v9311 = vpop.f32.mrb[0].mxu0
        %v9312 = vpop.f32.mrb[0].mxu0
        %v9313 = vadd.f32 0.0, %v9312
        %v9314 = vpop.f32.mrb[0].mxu0
        %9315 = vmatprep.mubr.bf16.mxu0 0
        %9316 = vmatmul.mubr.bf16.gmra.mrb[0].mxu0 %v9226
        %v9317 = vpop.f32.mrb[0].mxu0
        %v9318 = vadd.f32 0.0, %v9317
        %v9319 = vpop.f32.mrb[0].mxu0
        %v9320 = vpop.f32.mrb[0].mxu0
        %v9321 = vadd.f32 0.0, %v9320
        %v9322 = vpop.f32.mrb[0].mxu0
        %9323 = vmatprep.mubr.bf16.mxu0 0
        %9324 = vmatmul.mubr.bf16.gmra.mrb[0].mxu0 %v9229
        %v9325 = vpop.f32.mrb[0].mxu0
        %v9326 = vadd.f32 0.0, %v9325
        %v9327 = vpop.f32.mrb[0].mxu0
        %v9328 = vpop.f32.mrb[0].mxu0
        %v9329 = vadd.f32 0.0, %v9328
        %v9330 = vpop.f32.mrb[0].mxu0
        %9331 = vmatprep.mubr.bf16.mxu0 0
        %9332 = vmatmul.mubr.bf16.gmra.mrb[0].mxu0 %v9232
        %v9333 = vpop.f32.mrb[0].mxu0
        %v9334 = vadd.f32 0.0, %v9333
        %v9335 = vpop.f32.mrb[0].mxu0
        %v9336 = vpop.f32.mrb[0].mxu0
        %v9337 = vadd.f32 0.0, %v9336
        %v9338 = vpop.f32.mrb[0].mxu0
        %9339 = vmatprep.mubr.bf16.mxu0 0
        %9340 = vmatmul.mubr.bf16.gmra.mrb[0].mxu0 %v9235
        %v9341 = vpop.f32.mrb[0].mxu0
        %v9342 = vadd.f32 0.0, %v9341
        %v9343 = vpop.f32.mrb[0].mxu0
        %v9344 = vpop.f32.mrb[0].mxu0
        %v9345 = vadd.f32 0.0, %v9344
        %v9346 = vpop.f32.mrb[0].mxu0
        %9347 = vmatprep.mubr.bf16.mxu0 0
        %9348 = vmatmul.mubr.bf16.gmra.mrb[0].mxu0 %v9238
        %v9349 = vpop.f32.mrb[0].mxu0
        %v9350 = vadd.f32 0.0, %v9349
        %v9351 = vpop.f32.mrb[0].mxu0
        %v9352 = vpop.f32.mrb[0].mxu0
        %v9353 = vadd.f32 0.0, %v9352
        %v9354 = vpop.f32.mrb[0].mxu0
        %9355 = vmatprep.mubr.bf16.mxu0 0
        %9356 = vmatmul.mubr.bf16.gmra.mrb[0].mxu0 %v9241
        %v9357 = vpop.f32.mrb[0].mxu0
        %v9358 = vadd.f32 0.0, %v9357
        %v9359 = vpop.f32.mrb[0].mxu0
        %v9360 = vpop.f32.mrb[0].mxu0
        %v9361 = vadd.f32 0.0, %v9360
        %v9362 = vpop.f32.mrb[0].mxu0
        %9363 = vmatprep.mubr.bf16.mxu0 0
        %9364 = vmatmul.mubr.bf16.gmra.mrb[0].mxu0 %v9244
        %v9365 = vpop.f32.mrb[0].mxu0
        %v9366 = vadd.f32 0.0, %v9365
        %v9367 = vpop.f32.mrb[0].mxu0
        %v9368 = vpop.f32.mrb[0].mxu0
        %v9369 = vadd.f32 0.0, %v9368
        %v9370 = vpop.f32.mrb[0].mxu0
        %9371 = vmatprep.mubr.bf16.mxu0 0
        %9372 = vmatmul.mubr.bf16.gmra.mrb[0].mxu0 %v9247
        %v9373 = vpop.f32.mrb[0].mxu0
        %v9374 = vadd.f32 0.0, %v9373
        %v9375 = vpop.f32.mrb[0].mxu0
        %v9376 = vpop.f32.mrb[0].mxu0
        %v9377 = vadd.f32 0.0, %v9376
        %v9378 = vpop.f32.mrb[0].mxu0
        %9379 = vmatprep.mubr.bf16.mxu0 0
        %9380 = vmatmul.mubr.bf16.gmra.mrb[0].mxu0 %v9250
        %v9381 = vpop.f32.mrb[0].mxu0
        %v9382 = vadd.f32 0.0, %v9381
        %v9383 = vpop.f32.mrb[0].mxu0
        %v9384 = vpop.f32.mrb[0].mxu0
        %v9385 = vadd.f32 0.0, %v9384
        %v9386 = vpop.f32.mrb[0].mxu0
        %9387 = vmatprep.mubr.bf16.mxu0 0
        %9388 = vmatmul.mubr.bf16.gmra.mrb[0].mxu0 %v9253
        %v9389 = vpop.f32.mrb[0].mxu0
        %v9390 = vadd.f32 0.0, %v9389
        %v9391 = vpop.f32.mrb[0].mxu0
        %v9392 = vpop.f32.mrb[0].mxu0
        %v9393 = vadd.f32 0.0, %v9392
        %v9394 = vpop.f32.mrb[0].mxu0
        %9395 = vmatprep.mubr.bf16.mxu0 0
        %9396 = vmatmul.mubr.bf16.gmra.mrb[0].mxu0 %v9256
        %v9397 = vpop.f32.mrb[0].mxu0
        %v9398 = vadd.f32 0.0, %v9397
        %v9399 = vpop.f32.mrb[0].mxu0
        %v9400 = vpop.f32.mrb[0].mxu0
        %v9401 = vadd.f32 0.0, %v9400
        %v9402 = vpop.f32.mrb[0].mxu0
        %9403 = vmatprep.mubr.bf16.mxu0 0
        %9404 = vmatmul.mubr.bf16.gmra.mrb[0].mxu0 %v9259
        %v9405 = vpop.f32.mrb[0].mxu0
        %v9406 = vadd.f32 0.0, %v9405
        %v9407 = vpop.f32.mrb[0].mxu0
        %v9408 = vpop.f32.mrb[0].mxu0
        %v9409 = vadd.f32 0.0, %v9408
        %v9410 = vpop.f32.mrb[0].mxu0
        %9411 = vmatprep.mubr.bf16.mxu0 0
        %9412 = vmatmul.mubr.bf16.gmra.mrb[0].mxu0 %v9262
        %v9413 = vpop.f32.mrb[0].mxu0
        %v9414 = vadd.f32 0.0, %v9413
        %v9415 = vpop.f32.mrb[0].mxu0
        %v9416 = vpop.f32.mrb[0].mxu0
        %v9417 = vadd.f32 0.0, %v9416
        %v9418 = vpop.f32.mrb[0].mxu0
        %9419 = vmatprep.mubr.bf16.mxu0 0
        %9420 = vmatmul.mubr.bf16.gmra.mrb[0].mxu0 %v9265
        %v9421 = vpop.f32.mrb[0].mxu0
        %v9422 = vadd.f32 0.0, %v9421
        %v9423 = vpop.f32.mrb[0].mxu0
        %v9424 = vpop.f32.mrb[0].mxu0
        %v9425 = vadd.f32 0.0, %v9424
        %v9426 = vpop.f32.mrb[0].mxu0
        %9427 = vdwg.mxu0
        %v9428 = vadd.f32 %v9041, %v9302
        %v9429 = vadd.f32 %v9041, %v9305
        %v9430 = vadd.f32 %v9041, %v9310
        %v9431 = vadd.f32 %v9041, %v9313
        %v9432 = vadd.f32 %v9041, %v9318
        %v9433 = vadd.f32 %v9041, %v9321
        %v9434 = vadd.f32 %v9041, %v9326
        %v9435 = vadd.f32 %v9041, %v9329
        %v9436 = vadd.f32 %v9041, %v9334
        %v9437 = vadd.f32 %v9041, %v9337
        %v9438 = vadd.f32 %v9041, %v9342
        %v9439 = vadd.f32 %v9041, %v9345
        %v9440 = vadd.f32 %v9041, %v9350
        %v9441 = vadd.f32 %v9041, %v9353
        %v9442 = vadd.f32 %v9041, %v9358
        %v9443 = vadd.f32 %v9041, %v9361
        %v9444 = vadd.f32 %v9041, %v9366
        %v9445 = vadd.f32 %v9041, %v9369
        %v9446 = vadd.f32 %v9041, %v9374
        %v9447 = vadd.f32 %v9041, %v9377
        %v9448 = vadd.f32 %v9041, %v9382
        %v9449 = vadd.f32 %v9041, %v9385
        %v9450 = vadd.f32 %v9041, %v9390
        %v9451 = vadd.f32 %v9041, %v9393
        %v9452 = vadd.f32 %v9041, %v9398
        %v9453 = vadd.f32 %v9041, %v9401
        %v9454 = vadd.f32 %v9041, %v9406
        %v9455 = vadd.f32 %v9041, %v9409
        %v9456 = vadd.f32 %v9041, %v9414
        %v9457 = vadd.f32 %v9041, %v9417
        %v9458 = vadd.f32 %v9041, %v9422
        %v9459 = vadd.f32 %v9041, %v9425
        %s9460 = scalar_lea.vmem %s8, 96
        %v9461 = vld [vmem:[%s9460] sm:$0xf]
        %v9462 = vld [vmem:[%s9460 + $0x4] sm:$0xf]
        %v9463 = vld [vmem:[%s9460 + $0x8] sm:$0xf]
        %v9464 = vld [vmem:[%s9460 + $0xc] sm:$0xf]
        %v9465 = vld [vmem:[%s9460 + $0x10] sm:$0xf]
        %v9466 = vld [vmem:[%s9460 + $0x14] sm:$0xf]
        %v9467 = vld [vmem:[%s9460 + $0x18] sm:$0xf]
        %v9468 = vld [vmem:[%s9460 + $0x1c] sm:$0xf]
        %v9477 = vunpack.c.l.b16 %v9461
        %v9478 = vunpack.c.l.b16 %v9462
        %v9479 = vunpack.c.l.b16 %v9463
        %v9480 = vunpack.c.l.b16 %v9464
        %v9481 = vunpack.c.l.b16 %v9465
        %v9482 = vunpack.c.l.b16 %v9466
        %v9483 = vunpack.c.l.b16 %v9467
        %v9484 = vunpack.c.l.b16 %v9468
        %v9485 = vpack.c.b16 %v9478, %v9477
        %v9486 = vpack.c.b16 %v9480, %v9479
        %v9487 = vpack.c.b16 %v9482, %v9481
        %v9488 = vpack.c.b16 %v9484, %v9483
        %v9494 = vsel %vm6904, %v9186, 0
        %9496 = vmatprep.subr.bf16.mxu0 0
        %9497 = vmatpush1.bf16.msra.mxu0 %v9485
        %9498 = vmatprep.subr.bf16.mxu0 0
        %9499 = vmatpush1.bf16.msra.mxu0 %v9486
        %9500 = vmatprep.subr.bf16.mxu0 0
        %9501 = vmatpush1.bf16.msra.mxu0 %v9487
        %9502 = vmatprep.subr.bf16.mxu0 0
        %9503 = vmatpush1.bf16.msra.mxu0 %v9488
        %9504 = vmatprep.subr.bf16.mxu0 0
        %9505 = vmatpush1.bf16.msra.mxu0 0
        %9506 = vmatprep.subr.bf16.mxu0 0
        %9507 = vmatpush1.bf16.msra.mxu0 0
        %9508 = vmatprep.subr.bf16.mxu0 0
        %9509 = vmatpush1.bf16.msra.mxu0 0
        %9510 = vmatprep.subr.bf16.mxu0 0
        %9511 = vmatpush1.bf16.msra.mxu0 0
        %9512 = vmatprep.subr.bf16.mxu0 0
        %9513 = vmatpush1.bf16.msra.mxu0 0
        %9514 = vmatprep.subr.bf16.mxu0 0
        %9515 = vmatpush1.bf16.msra.mxu0 0
        %9516 = vmatprep.subr.bf16.mxu0 0
        %9517 = vmatpush1.bf16.msra.mxu0 0
        %9518 = vmatprep.subr.bf16.mxu0 0
        %9519 = vmatpush1.bf16.msra.mxu0 0
        %9520 = vmatprep.subr.bf16.mxu0 0
        %9521 = vmatpush1.bf16.msra.mxu0 0
        %9522 = vmatprep.subr.bf16.mxu0 0
        %9523 = vmatpush1.bf16.msra.mxu0 0
        %9524 = vmatprep.subr.bf16.mxu0 0
        %9525 = vmatpush1.bf16.msra.mxu0 0
        %9526 = vmatprep.subr.bf16.mxu0 0
        %9527 = vmatpush1.bf16.msra.mxu0 0
        %9528 = vmatprep.mubr.bf16.mxu0 0
        %9529 = vmatmul.mubr.bf16.gmra.mrb[0].mxu0 %v9223
        %v9530 = vpop.f32.mrb[0].mxu0
        %v9531 = vadd.f32 0.0, %v9530
        %v9532 = vpop.f32.mrb[0].mxu0
        %v9533 = vpop.f32.mrb[0].mxu0
        %v9534 = vadd.f32 0.0, %v9533
        %v9535 = vpop.f32.mrb[0].mxu0
        %9536 = vmatprep.mubr.bf16.mxu0 0
        %9537 = vmatmul.mubr.bf16.gmra.mrb[0].mxu0 %v9226
        %v9538 = vpop.f32.mrb[0].mxu0
        %v9539 = vadd.f32 0.0, %v9538
        %v9540 = vpop.f32.mrb[0].mxu0
        %v9541 = vpop.f32.mrb[0].mxu0
        %v9542 = vadd.f32 0.0, %v9541
        %v9543 = vpop.f32.mrb[0].mxu0
        %9544 = vmatprep.mubr.bf16.mxu0 0
        %9545 = vmatmul.mubr.bf16.gmra.mrb[0].mxu0 %v9229
        %v9546 = vpop.f32.mrb[0].mxu0
        %v9547 = vadd.f32 0.0, %v9546
        %v9548 = vpop.f32.mrb[0].mxu0
        %v9549 = vpop.f32.mrb[0].mxu0
        %v9550 = vadd.f32 0.0, %v9549
        %v9551 = vpop.f32.mrb[0].mxu0
        %9552 = vmatprep.mubr.bf16.mxu0 0
        %9553 = vmatmul.mubr.bf16.gmra.mrb[0].mxu0 %v9232
        %v9554 = vpop.f32.mrb[0].mxu0
        %v9555 = vadd.f32 0.0, %v9554
        %v9556 = vpop.f32.mrb[0].mxu0
        %v9557 = vpop.f32.mrb[0].mxu0
        %v9558 = vadd.f32 0.0, %v9557
        %v9559 = vpop.f32.mrb[0].mxu0
        %9560 = vmatprep.mubr.bf16.mxu0 0
        %9561 = vmatmul.mubr.bf16.gmra.mrb[0].mxu0 %v9235
        %v9562 = vpop.f32.mrb[0].mxu0
        %v9563 = vadd.f32 0.0, %v9562
        %v9564 = vpop.f32.mrb[0].mxu0
        %v9565 = vpop.f32.mrb[0].mxu0
        %v9566 = vadd.f32 0.0, %v9565
        %v9567 = vpop.f32.mrb[0].mxu0
        %9568 = vmatprep.mubr.bf16.mxu0 0
        %9569 = vmatmul.mubr.bf16.gmra.mrb[0].mxu0 %v9238
        %v9570 = vpop.f32.mrb[0].mxu0
        %v9571 = vadd.f32 0.0, %v9570
        %v9572 = vpop.f32.mrb[0].mxu0
        %v9573 = vpop.f32.mrb[0].mxu0
        %v9574 = vadd.f32 0.0, %v9573
        %v9575 = vpop.f32.mrb[0].mxu0
        %9576 = vmatprep.mubr.bf16.mxu0 0
        %9577 = vmatmul.mubr.bf16.gmra.mrb[0].mxu0 %v9241
        %v9578 = vpop.f32.mrb[0].mxu0
        %v9579 = vadd.f32 0.0, %v9578
        %v9580 = vpop.f32.mrb[0].mxu0
        %v9581 = vpop.f32.mrb[0].mxu0
        %v9582 = vadd.f32 0.0, %v9581
        %v9583 = vpop.f32.mrb[0].mxu0
        %9584 = vmatprep.mubr.bf16.mxu0 0
        %9585 = vmatmul.mubr.bf16.gmra.mrb[0].mxu0 %v9244
        %v9586 = vpop.f32.mrb[0].mxu0
        %v9587 = vadd.f32 0.0, %v9586
        %v9588 = vpop.f32.mrb[0].mxu0
        %v9589 = vpop.f32.mrb[0].mxu0
        %v9590 = vadd.f32 0.0, %v9589
        %v9591 = vpop.f32.mrb[0].mxu0
        %9592 = vmatprep.mubr.bf16.mxu0 0
        %9593 = vmatmul.mubr.bf16.gmra.mrb[0].mxu0 %v9247
        %v9594 = vpop.f32.mrb[0].mxu0
        %v9595 = vadd.f32 0.0, %v9594
        %v9596 = vpop.f32.mrb[0].mxu0
        %v9597 = vpop.f32.mrb[0].mxu0
        %v9598 = vadd.f32 0.0, %v9597
        %v9599 = vpop.f32.mrb[0].mxu0
        %9600 = vmatprep.mubr.bf16.mxu0 0
        %9601 = vmatmul.mubr.bf16.gmra.mrb[0].mxu0 %v9250
        %v9602 = vpop.f32.mrb[0].mxu0
        %v9603 = vadd.f32 0.0, %v9602
        %v9604 = vpop.f32.mrb[0].mxu0
        %v9605 = vpop.f32.mrb[0].mxu0
        %v9606 = vadd.f32 0.0, %v9605
        %v9607 = vpop.f32.mrb[0].mxu0
        %9608 = vmatprep.mubr.bf16.mxu0 0
        %9609 = vmatmul.mubr.bf16.gmra.mrb[0].mxu0 %v9253
        %v9610 = vpop.f32.mrb[0].mxu0
        %v9611 = vadd.f32 0.0, %v9610
        %v9612 = vpop.f32.mrb[0].mxu0
        %v9613 = vpop.f32.mrb[0].mxu0
        %v9614 = vadd.f32 0.0, %v9613
        %v9615 = vpop.f32.mrb[0].mxu0
        %9616 = vmatprep.mubr.bf16.mxu0 0
        %9617 = vmatmul.mubr.bf16.gmra.mrb[0].mxu0 %v9256
        %v9618 = vpop.f32.mrb[0].mxu0
        %v9619 = vadd.f32 0.0, %v9618
        %v9620 = vpop.f32.mrb[0].mxu0
        %v9621 = vpop.f32.mrb[0].mxu0
        %v9622 = vadd.f32 0.0, %v9621
        %v9623 = vpop.f32.mrb[0].mxu0
        %9624 = vmatprep.mubr.bf16.mxu0 0
        %9625 = vmatmul.mubr.bf16.gmra.mrb[0].mxu0 %v9259
        %v9626 = vpop.f32.mrb[0].mxu0
        %v9627 = vadd.f32 0.0, %v9626
        %v9628 = vpop.f32.mrb[0].mxu0
        %v9629 = vpop.f32.mrb[0].mxu0
        %v9630 = vadd.f32 0.0, %v9629
        %v9631 = vpop.f32.mrb[0].mxu0
        %9632 = vmatprep.mubr.bf16.mxu0 0
        %9633 = vmatmul.mubr.bf16.gmra.mrb[0].mxu0 %v9262
        %v9634 = vpop.f32.mrb[0].mxu0
        %v9635 = vadd.f32 0.0, %v9634
        %v9636 = vpop.f32.mrb[0].mxu0
        %v9637 = vpop.f32.mrb[0].mxu0
        %v9638 = vadd.f32 0.0, %v9637
        %v9639 = vpop.f32.mrb[0].mxu0
        %9640 = vmatprep.mubr.bf16.mxu0 0
        %9641 = vmatmul.mubr.bf16.gmra.mrb[0].mxu0 %v9265
        %v9642 = vpop.f32.mrb[0].mxu0
        %v9643 = vadd.f32 0.0, %v9642
        %v9644 = vpop.f32.mrb[0].mxu0
        %v9645 = vpop.f32.mrb[0].mxu0
        %v9646 = vadd.f32 0.0, %v9645
        %v9647 = vpop.f32.mrb[0].mxu0
        %9648 = vmatprep.mubr.bf16.mxu0 0
        %9649 = vmatmul.mubr.bf16.gmra.mrb[0].mxu0 %v9494
        %v9650 = vpop.f32.mrb[0].mxu0
        %v9651 = vadd.f32 0.0, %v9650
        %v9652 = vpop.f32.mrb[0].mxu0
        %v9653 = vpop.f32.mrb[0].mxu0
        %v9654 = vadd.f32 0.0, %v9653
        %v9655 = vpop.f32.mrb[0].mxu0
        %9656 = vdwg.mxu0
        %v9657 = vadd.f32 %v9428, %v9531
        %v9658 = vadd.f32 %v9429, %v9534
        %v9659 = vadd.f32 %v9430, %v9539
        %v9660 = vadd.f32 %v9431, %v9542
        %v9661 = vadd.f32 %v9432, %v9547
        %v9662 = vadd.f32 %v9433, %v9550
        %v9663 = vadd.f32 %v9434, %v9555
        %v9664 = vadd.f32 %v9435, %v9558
        %v9665 = vadd.f32 %v9436, %v9563
        %v9666 = vadd.f32 %v9437, %v9566
        %v9667 = vadd.f32 %v9438, %v9571
        %v9668 = vadd.f32 %v9439, %v9574
        %v9669 = vadd.f32 %v9440, %v9579
        %v9670 = vadd.f32 %v9441, %v9582
        %v9671 = vadd.f32 %v9442, %v9587
        %v9672 = vadd.f32 %v9443, %v9590
        %v9673 = vadd.f32 %v9444, %v9595
        %v9674 = vadd.f32 %v9445, %v9598
        %v9675 = vadd.f32 %v9446, %v9603
        %v9676 = vadd.f32 %v9447, %v9606
        %v9677 = vadd.f32 %v9448, %v9611
        %v9678 = vadd.f32 %v9449, %v9614
        %v9679 = vadd.f32 %v9450, %v9619
        %v9680 = vadd.f32 %v9451, %v9622
        %v9681 = vadd.f32 %v9452, %v9627
        %v9682 = vadd.f32 %v9453, %v9630
        %v9683 = vadd.f32 %v9454, %v9635
        %v9684 = vadd.f32 %v9455, %v9638
        %v9685 = vadd.f32 %v9456, %v9643
        %v9686 = vadd.f32 %v9457, %v9646
        %v9687 = vadd.f32 %v9458, %v9651
        %v9688 = vadd.f32 %v9459, %v9654
        %s9689 = scalar_lea.vmem %s8, 192
        %v9690 = vld [vmem:[%s9689] sm:$0xf]
        %v9691 = vld [vmem:[%s9689 + $0x4] sm:$0xf]
        %v9692 = vld [vmem:[%s9689 + $0x8] sm:$0xf]
        %v9693 = vld [vmem:[%s9689 + $0xc] sm:$0xf]
        %v9694 = vld [vmem:[%s9689 + $0x10] sm:$0xf]
        %v9695 = vld [vmem:[%s9689 + $0x14] sm:$0xf]
        %v9696 = vld [vmem:[%s9689 + $0x18] sm:$0xf]
        %v9697 = vld [vmem:[%s9689 + $0x1c] sm:$0xf]
        %v9706 = vunpack.c.l.b16 %v9690
        %v9707 = vunpack.c.l.b16 %v9691
        %v9708 = vunpack.c.l.b16 %v9692
        %v9709 = vunpack.c.l.b16 %v9693
        %v9710 = vunpack.c.l.b16 %v9694
        %v9711 = vunpack.c.l.b16 %v9695
        %v9712 = vunpack.c.l.b16 %v9696
        %v9713 = vunpack.c.l.b16 %v9697
        %v9714 = vpack.c.b16 %v9707, %v9706
        %v9715 = vpack.c.b16 %v9709, %v9708
        %v9716 = vpack.c.b16 %v9711, %v9710
        %v9717 = vpack.c.b16 %v9713, %v9712
        %9722 = vmatprep.subr.bf16.mxu0 0
        %9723 = vmatpush1.bf16.msra.mxu0 %v9714
        %9724 = vmatprep.subr.bf16.mxu0 0
        %9725 = vmatpush1.bf16.msra.mxu0 %v9715
        %9726 = vmatprep.subr.bf16.mxu0 0
        %9727 = vmatpush1.bf16.msra.mxu0 %v9716
        %9728 = vmatprep.subr.bf16.mxu0 0
        %9729 = vmatpush1.bf16.msra.mxu0 %v9717
        %9730 = vmatprep.subr.bf16.mxu0 0
        %9731 = vmatpush1.bf16.msra.mxu0 0
        %9732 = vmatprep.subr.bf16.mxu0 0
        %9733 = vmatpush1.bf16.msra.mxu0 0
        %9734 = vmatprep.subr.bf16.mxu0 0
        %9735 = vmatpush1.bf16.msra.mxu0 0
        %9736 = vmatprep.subr.bf16.mxu0 0
        %9737 = vmatpush1.bf16.msra.mxu0 0
        %9738 = vmatprep.subr.bf16.mxu0 0
        %9739 = vmatpush1.bf16.msra.mxu0 0
        %9740 = vmatprep.subr.bf16.mxu0 0
        %9741 = vmatpush1.bf16.msra.mxu0 0
        %9742 = vmatprep.subr.bf16.mxu0 0
        %9743 = vmatpush1.bf16.msra.mxu0 0
        %9744 = vmatprep.subr.bf16.mxu0 0
        %9745 = vmatpush1.bf16.msra.mxu0 0
        %9746 = vmatprep.subr.bf16.mxu0 0
        %9747 = vmatpush1.bf16.msra.mxu0 0
        %9748 = vmatprep.subr.bf16.mxu0 0
        %9749 = vmatpush1.bf16.msra.mxu0 0
        %9750 = vmatprep.subr.bf16.mxu0 0
        %9751 = vmatpush1.bf16.msra.mxu0 0
        %9752 = vmatprep.subr.bf16.mxu0 0
        %9753 = vmatpush1.bf16.msra.mxu0 0
        %9754 = vmatprep.mubr.bf16.mxu0 0
        %9755 = vmatmul.mubr.bf16.gmra.mrb[0].mxu0 %v9226
        %v9756 = vpop.f32.mrb[0].mxu0
        %v9757 = vadd.f32 0.0, %v9756
        %v9758 = vpop.f32.mrb[0].mxu0
        %v9759 = vpop.f32.mrb[0].mxu0
        %v9760 = vadd.f32 0.0, %v9759
        %v9761 = vpop.f32.mrb[0].mxu0
        %9762 = vmatprep.mubr.bf16.mxu0 0
        %9763 = vmatmul.mubr.bf16.gmra.mrb[0].mxu0 %v9229
        %v9764 = vpop.f32.mrb[0].mxu0
        %v9765 = vadd.f32 0.0, %v9764
        %v9766 = vpop.f32.mrb[0].mxu0
        %v9767 = vpop.f32.mrb[0].mxu0
        %v9768 = vadd.f32 0.0, %v9767
        %v9769 = vpop.f32.mrb[0].mxu0
        %9770 = vmatprep.mubr.bf16.mxu0 0
        %9771 = vmatmul.mubr.bf16.gmra.mrb[0].mxu0 %v9232
        %v9772 = vpop.f32.mrb[0].mxu0
        %v9773 = vadd.f32 0.0, %v9772
        %v9774 = vpop.f32.mrb[0].mxu0
        %v9775 = vpop.f32.mrb[0].mxu0
        %v9776 = vadd.f32 0.0, %v9775
        %v9777 = vpop.f32.mrb[0].mxu0
        %9778 = vmatprep.mubr.bf16.mxu0 0
        %9779 = vmatmul.mubr.bf16.gmra.mrb[0].mxu0 %v9235
        %v9780 = vpop.f32.mrb[0].mxu0
        %v9781 = vadd.f32 0.0, %v9780
        %v9782 = vpop.f32.mrb[0].mxu0
        %v9783 = vpop.f32.mrb[0].mxu0
        %v9784 = vadd.f32 0.0, %v9783
        %v9785 = vpop.f32.mrb[0].mxu0
        %9786 = vmatprep.mubr.bf16.mxu0 0
        %9787 = vmatmul.mubr.bf16.gmra.mrb[0].mxu0 %v9238
        %v9788 = vpop.f32.mrb[0].mxu0
        %v9789 = vadd.f32 0.0, %v9788
        %v9790 = vpop.f32.mrb[0].mxu0
        %v9791 = vpop.f32.mrb[0].mxu0
        %v9792 = vadd.f32 0.0, %v9791
        %v9793 = vpop.f32.mrb[0].mxu0
        %9794 = vmatprep.mubr.bf16.mxu0 0
        %9795 = vmatmul.mubr.bf16.gmra.mrb[0].mxu0 %v9241
        %v9796 = vpop.f32.mrb[0].mxu0
        %v9797 = vadd.f32 0.0, %v9796
        %v9798 = vpop.f32.mrb[0].mxu0
        %v9799 = vpop.f32.mrb[0].mxu0
        %v9800 = vadd.f32 0.0, %v9799
        %v9801 = vpop.f32.mrb[0].mxu0
        %9802 = vmatprep.mubr.bf16.mxu0 0
        %9803 = vmatmul.mubr.bf16.gmra.mrb[0].mxu0 %v9244
        %v9804 = vpop.f32.mrb[0].mxu0
        %v9805 = vadd.f32 0.0, %v9804
        %v9806 = vpop.f32.mrb[0].mxu0
        %v9807 = vpop.f32.mrb[0].mxu0
        %v9808 = vadd.f32 0.0, %v9807
        %v9809 = vpop.f32.mrb[0].mxu0
        %9810 = vmatprep.mubr.bf16.mxu0 0
        %9811 = vmatmul.mubr.bf16.gmra.mrb[0].mxu0 %v9247
        %v9812 = vpop.f32.mrb[0].mxu0
        %v9813 = vadd.f32 0.0, %v9812
        %v9814 = vpop.f32.mrb[0].mxu0
        %v9815 = vpop.f32.mrb[0].mxu0
        %v9816 = vadd.f32 0.0, %v9815
        %v9817 = vpop.f32.mrb[0].mxu0
        %9818 = vmatprep.mubr.bf16.mxu0 0
        %9819 = vmatmul.mubr.bf16.gmra.mrb[0].mxu0 %v9250
        %v9820 = vpop.f32.mrb[0].mxu0
        %v9821 = vadd.f32 0.0, %v9820
        %v9822 = vpop.f32.mrb[0].mxu0
        %v9823 = vpop.f32.mrb[0].mxu0
        %v9824 = vadd.f32 0.0, %v9823
        %v9825 = vpop.f32.mrb[0].mxu0
        %9826 = vmatprep.mubr.bf16.mxu0 0
        %9827 = vmatmul.mubr.bf16.gmra.mrb[0].mxu0 %v9253
        %v9828 = vpop.f32.mrb[0].mxu0
        %v9829 = vadd.f32 0.0, %v9828
        %v9830 = vpop.f32.mrb[0].mxu0
        %v9831 = vpop.f32.mrb[0].mxu0
        %v9832 = vadd.f32 0.0, %v9831
        %v9833 = vpop.f32.mrb[0].mxu0
        %9834 = vmatprep.mubr.bf16.mxu0 0
        %9835 = vmatmul.mubr.bf16.gmra.mrb[0].mxu0 %v9256
        %v9836 = vpop.f32.mrb[0].mxu0
        %v9837 = vadd.f32 0.0, %v9836
        %v9838 = vpop.f32.mrb[0].mxu0
        %v9839 = vpop.f32.mrb[0].mxu0
        %v9840 = vadd.f32 0.0, %v9839
        %v9841 = vpop.f32.mrb[0].mxu0
        %9842 = vmatprep.mubr.bf16.mxu0 0
        %9843 = vmatmul.mubr.bf16.gmra.mrb[0].mxu0 %v9259
        %v9844 = vpop.f32.mrb[0].mxu0
        %v9845 = vadd.f32 0.0, %v9844
        %v9846 = vpop.f32.mrb[0].mxu0
        %v9847 = vpop.f32.mrb[0].mxu0
        %v9848 = vadd.f32 0.0, %v9847
        %v9849 = vpop.f32.mrb[0].mxu0
        %9850 = vmatprep.mubr.bf16.mxu0 0
        %9851 = vmatmul.mubr.bf16.gmra.mrb[0].mxu0 %v9262
        %v9852 = vpop.f32.mrb[0].mxu0
        %v9853 = vadd.f32 0.0, %v9852
        %v9854 = vpop.f32.mrb[0].mxu0
        %v9855 = vpop.f32.mrb[0].mxu0
        %v9856 = vadd.f32 0.0, %v9855
        %v9857 = vpop.f32.mrb[0].mxu0
        %9858 = vmatprep.mubr.bf16.mxu0 0
        %9859 = vmatmul.mubr.bf16.gmra.mrb[0].mxu0 %v9265
        %v9860 = vpop.f32.mrb[0].mxu0
        %v9861 = vadd.f32 0.0, %v9860
        %v9862 = vpop.f32.mrb[0].mxu0
        %v9863 = vpop.f32.mrb[0].mxu0
        %v9864 = vadd.f32 0.0, %v9863
        %v9865 = vpop.f32.mrb[0].mxu0
        %9866 = vmatprep.mubr.bf16.mxu0 0
        %9867 = vmatmul.mubr.bf16.gmra.mrb[0].mxu0 %v9494
        %v9868 = vpop.f32.mrb[0].mxu0
        %v9869 = vadd.f32 0.0, %v9868
        %v9870 = vpop.f32.mrb[0].mxu0
        %v9871 = vpop.f32.mrb[0].mxu0
        %v9872 = vadd.f32 0.0, %v9871
        %v9873 = vpop.f32.mrb[0].mxu0
        %9874 = vmatprep.mubr.bf16.mxu0 0
        %9875 = vmatmul.mubr.bf16.gmra.mrb[0].mxu0 %v9220
        %v9876 = vpop.f32.mrb[0].mxu0
        %v9877 = vadd.f32 0.0, %v9876
        %v9878 = vpop.f32.mrb[0].mxu0
        %v9879 = vpop.f32.mrb[0].mxu0
        %v9880 = vadd.f32 0.0, %v9879
        %v9881 = vpop.f32.mrb[0].mxu0
        %9882 = vdwg.mxu0
        %v9883 = vadd.f32 %v9657, %v9757
        %v9884 = vadd.f32 %v9658, %v9760
        %v9885 = vadd.f32 %v9659, %v9765
        %v9886 = vadd.f32 %v9660, %v9768
        %v9887 = vadd.f32 %v9661, %v9773
        %v9888 = vadd.f32 %v9662, %v9776
        %v9889 = vadd.f32 %v9663, %v9781
        %v9890 = vadd.f32 %v9664, %v9784
        %v9891 = vadd.f32 %v9665, %v9789
        %v9892 = vadd.f32 %v9666, %v9792
        %v9893 = vadd.f32 %v9667, %v9797
        %v9894 = vadd.f32 %v9668, %v9800
        %v9895 = vadd.f32 %v9669, %v9805
        %v9896 = vadd.f32 %v9670, %v9808
        %v9897 = vadd.f32 %v9671, %v9813
        %v9898 = vadd.f32 %v9672, %v9816
        %v9899 = vadd.f32 %v9673, %v9821
        %v9900 = vadd.f32 %v9674, %v9824
        %v9901 = vadd.f32 %v9675, %v9829
        %v9902 = vadd.f32 %v9676, %v9832
        %v9903 = vadd.f32 %v9677, %v9837
        %v9904 = vadd.f32 %v9678, %v9840
        %v9905 = vadd.f32 %v9679, %v9845
        %v9906 = vadd.f32 %v9680, %v9848
        %v9907 = vadd.f32 %v9681, %v9853
        %v9908 = vadd.f32 %v9682, %v9856
        %v9909 = vadd.f32 %v9683, %v9861
        %v9910 = vadd.f32 %v9684, %v9864
        %v9911 = vadd.f32 %v9685, %v9869
        %v9912 = vadd.f32 %v9686, %v9872
        %v9913 = vadd.f32 %v9687, %v9877
        %v9914 = vadd.f32 %v9688, %v9880
        %s9915 = scalar_lea.vmem %s8, 32
        %v9916 = vld [vmem:[%s9915] sm:$0xf]
        %v9917 = vld [vmem:[%s9915 + $0x4] sm:$0xf]
        %v9918 = vld [vmem:[%s9915 + $0x8] sm:$0xf]
        %v9919 = vld [vmem:[%s9915 + $0xc] sm:$0xf]
        %v9920 = vld [vmem:[%s9915 + $0x10] sm:$0xf]
        %v9921 = vld [vmem:[%s9915 + $0x14] sm:$0xf]
        %v9922 = vld [vmem:[%s9915 + $0x18] sm:$0xf]
        %v9923 = vld [vmem:[%s9915 + $0x1c] sm:$0xf]
        %v9932 = vunpack.c.l.b16 %v9916
        %v9933 = vunpack.c.l.b16 %v9917
        %v9934 = vunpack.c.l.b16 %v9918
        %v9935 = vunpack.c.l.b16 %v9919
        %v9936 = vunpack.c.l.b16 %v9920
        %v9937 = vunpack.c.l.b16 %v9921
        %v9938 = vunpack.c.l.b16 %v9922
        %v9939 = vunpack.c.l.b16 %v9923
        %v9940 = vpack.c.b16 %v9933, %v9932
        %v9941 = vpack.c.b16 %v9935, %v9934
        %v9942 = vpack.c.b16 %v9937, %v9936
        %v9943 = vpack.c.b16 %v9939, %v9938
        %v9948 = vsel %vm6904, %v9020, 0
        %v9950 = vsel %vm6904, %v9021, 0
        %v9952 = vsel %vm6904, %v9022, 0
        %v9954 = vsel %vm6904, %v9023, 0
        %v9956 = vsel %vm6904, %v9024, 0
        %v9958 = vsel %vm6904, %v9025, 0
        %v9960 = vsel %vm6904, %v9026, 0
        %v9962 = vsel %vm6904, %v9027, 0
        %v9964 = vsel %vm6904, %v9028, 0
        %v9966 = vsel %vm6904, %v9029, 0
        %v9968 = vsel %vm6904, %v9030, 0
        %v9970 = vsel %vm6904, %v9031, 0
        %v9972 = vsel %vm6904, %v9032, 0
        %v9974 = vsel %vm6904, %v9033, 0
        %v9976 = vsel %vm6904, %v9034, 0
        %9978 = vmatprep.subr.bf16.mxu0 0
        %9979 = vmatpush1.bf16.msra.mxu0 %v9940
        %9980 = vmatprep.subr.bf16.mxu0 0
        %9981 = vmatpush1.bf16.msra.mxu0 %v9941
        %9982 = vmatprep.subr.bf16.mxu0 0
        %9983 = vmatpush1.bf16.msra.mxu0 %v9942
        %9984 = vmatprep.subr.bf16.mxu0 0
        %9985 = vmatpush1.bf16.msra.mxu0 %v9943
        %9986 = vmatprep.subr.bf16.mxu0 0
        %9987 = vmatpush1.bf16.msra.mxu0 0
        %9988 = vmatprep.subr.bf16.mxu0 0
        %9989 = vmatpush1.bf16.msra.mxu0 0
        %9990 = vmatprep.subr.bf16.mxu0 0
        %9991 = vmatpush1.bf16.msra.mxu0 0
        %9992 = vmatprep.subr.bf16.mxu0 0
        %9993 = vmatpush1.bf16.msra.mxu0 0
        %9994 = vmatprep.subr.bf16.mxu0 0
        %9995 = vmatpush1.bf16.msra.mxu0 0
        %9996 = vmatprep.subr.bf16.mxu0 0
        %9997 = vmatpush1.bf16.msra.mxu0 0
        %9998 = vmatprep.subr.bf16.mxu0 0
        %9999 = vmatpush1.bf16.msra.mxu0 0
        %10000 = vmatprep.subr.bf16.mxu0 0
        %10001 = vmatpush1.bf16.msra.mxu0 0
        %10002 = vmatprep.subr.bf16.mxu0 0
        %10003 = vmatpush1.bf16.msra.mxu0 0
        %10004 = vmatprep.subr.bf16.mxu0 0
        %10005 = vmatpush1.bf16.msra.mxu0 0
        %10006 = vmatprep.subr.bf16.mxu0 0
        %10007 = vmatpush1.bf16.msra.mxu0 0
        %10008 = vmatprep.subr.bf16.mxu0 0
        %10009 = vmatpush1.bf16.msra.mxu0 0
        %10010 = vmatprep.mubr.bf16.mxu0 0
        %10011 = vmatmul.mubr.bf16.gmra.mrb[0].mxu0 %v9220
        %v10012 = vpop.f32.mrb[0].mxu0
        %v10013 = vadd.f32 0.0, %v10012
        %v10014 = vpop.f32.mrb[0].mxu0
        %v10015 = vpop.f32.mrb[0].mxu0
        %v10016 = vadd.f32 0.0, %v10015
        %v10017 = vpop.f32.mrb[0].mxu0
        %10018 = vmatprep.mubr.bf16.mxu0 0
        %10019 = vmatmul.mubr.bf16.gmra.mrb[0].mxu0 %v9948
        %v10020 = vpop.f32.mrb[0].mxu0
        %v10021 = vadd.f32 0.0, %v10020
        %v10022 = vpop.f32.mrb[0].mxu0
        %v10023 = vpop.f32.mrb[0].mxu0
        %v10024 = vadd.f32 0.0, %v10023
        %v10025 = vpop.f32.mrb[0].mxu0
        %10026 = vmatprep.mubr.bf16.mxu0 0
        %10027 = vmatmul.mubr.bf16.gmra.mrb[0].mxu0 %v9950
        %v10028 = vpop.f32.mrb[0].mxu0
        %v10029 = vadd.f32 0.0, %v10028
        %v10030 = vpop.f32.mrb[0].mxu0
        %v10031 = vpop.f32.mrb[0].mxu0
        %v10032 = vadd.f32 0.0, %v10031
        %v10033 = vpop.f32.mrb[0].mxu0
        %10034 = vmatprep.mubr.bf16.mxu0 0
        %10035 = vmatmul.mubr.bf16.gmra.mrb[0].mxu0 %v9952
        %v10036 = vpop.f32.mrb[0].mxu0
        %v10037 = vadd.f32 0.0, %v10036
        %v10038 = vpop.f32.mrb[0].mxu0
        %v10039 = vpop.f32.mrb[0].mxu0
        %v10040 = vadd.f32 0.0, %v10039
        %v10041 = vpop.f32.mrb[0].mxu0
        %10042 = vmatprep.mubr.bf16.mxu0 0
        %10043 = vmatmul.mubr.bf16.gmra.mrb[0].mxu0 %v9954
        %v10044 = vpop.f32.mrb[0].mxu0
        %v10045 = vadd.f32 0.0, %v10044
        %v10046 = vpop.f32.mrb[0].mxu0
        %v10047 = vpop.f32.mrb[0].mxu0
        %v10048 = vadd.f32 0.0, %v10047
        %v10049 = vpop.f32.mrb[0].mxu0
        %10050 = vmatprep.mubr.bf16.mxu0 0
        %10051 = vmatmul.mubr.bf16.gmra.mrb[0].mxu0 %v9956
        %v10052 = vpop.f32.mrb[0].mxu0
        %v10053 = vadd.f32 0.0, %v10052
        %v10054 = vpop.f32.mrb[0].mxu0
        %v10055 = vpop.f32.mrb[0].mxu0
        %v10056 = vadd.f32 0.0, %v10055
        %v10057 = vpop.f32.mrb[0].mxu0
        %10058 = vmatprep.mubr.bf16.mxu0 0
        %10059 = vmatmul.mubr.bf16.gmra.mrb[0].mxu0 %v9958
        %v10060 = vpop.f32.mrb[0].mxu0
        %v10061 = vadd.f32 0.0, %v10060
        %v10062 = vpop.f32.mrb[0].mxu0
        %v10063 = vpop.f32.mrb[0].mxu0
        %v10064 = vadd.f32 0.0, %v10063
        %v10065 = vpop.f32.mrb[0].mxu0
        %10066 = vmatprep.mubr.bf16.mxu0 0
        %10067 = vmatmul.mubr.bf16.gmra.mrb[0].mxu0 %v9960
        %v10068 = vpop.f32.mrb[0].mxu0
        %v10069 = vadd.f32 0.0, %v10068
        %v10070 = vpop.f32.mrb[0].mxu0
        %v10071 = vpop.f32.mrb[0].mxu0
        %v10072 = vadd.f32 0.0, %v10071
        %v10073 = vpop.f32.mrb[0].mxu0
        %10074 = vmatprep.mubr.bf16.mxu0 0
        %10075 = vmatmul.mubr.bf16.gmra.mrb[0].mxu0 %v9962
        %v10076 = vpop.f32.mrb[0].mxu0
        %v10077 = vadd.f32 0.0, %v10076
        %v10078 = vpop.f32.mrb[0].mxu0
        %v10079 = vpop.f32.mrb[0].mxu0
        %v10080 = vadd.f32 0.0, %v10079
        %v10081 = vpop.f32.mrb[0].mxu0
        %10082 = vmatprep.mubr.bf16.mxu0 0
        %10083 = vmatmul.mubr.bf16.gmra.mrb[0].mxu0 %v9964
        %v10084 = vpop.f32.mrb[0].mxu0
        %v10085 = vadd.f32 0.0, %v10084
        %v10086 = vpop.f32.mrb[0].mxu0
        %v10087 = vpop.f32.mrb[0].mxu0
        %v10088 = vadd.f32 0.0, %v10087
        %v10089 = vpop.f32.mrb[0].mxu0
        %10090 = vmatprep.mubr.bf16.mxu0 0
        %10091 = vmatmul.mubr.bf16.gmra.mrb[0].mxu0 %v9966
        %v10092 = vpop.f32.mrb[0].mxu0
        %v10093 = vadd.f32 0.0, %v10092
        %v10094 = vpop.f32.mrb[0].mxu0
        %v10095 = vpop.f32.mrb[0].mxu0
        %v10096 = vadd.f32 0.0, %v10095
        %v10097 = vpop.f32.mrb[0].mxu0
        %10098 = vmatprep.mubr.bf16.mxu0 0
        %10099 = vmatmul.mubr.bf16.gmra.mrb[0].mxu0 %v9968
        %v10100 = vpop.f32.mrb[0].mxu0
        %v10101 = vadd.f32 0.0, %v10100
        %v10102 = vpop.f32.mrb[0].mxu0
        %v10103 = vpop.f32.mrb[0].mxu0
        %v10104 = vadd.f32 0.0, %v10103
        %v10105 = vpop.f32.mrb[0].mxu0
        %10106 = vmatprep.mubr.bf16.mxu0 0
        %10107 = vmatmul.mubr.bf16.gmra.mrb[0].mxu0 %v9970
        %v10108 = vpop.f32.mrb[0].mxu0
        %v10109 = vadd.f32 0.0, %v10108
        %v10110 = vpop.f32.mrb[0].mxu0
        %v10111 = vpop.f32.mrb[0].mxu0
        %v10112 = vadd.f32 0.0, %v10111
        %v10113 = vpop.f32.mrb[0].mxu0
        %10114 = vmatprep.mubr.bf16.mxu0 0
        %10115 = vmatmul.mubr.bf16.gmra.mrb[0].mxu0 %v9972
        %v10116 = vpop.f32.mrb[0].mxu0
        %v10117 = vadd.f32 0.0, %v10116
        %v10118 = vpop.f32.mrb[0].mxu0
        %v10119 = vpop.f32.mrb[0].mxu0
        %v10120 = vadd.f32 0.0, %v10119
        %v10121 = vpop.f32.mrb[0].mxu0
        %10122 = vmatprep.mubr.bf16.mxu0 0
        %10123 = vmatmul.mubr.bf16.gmra.mrb[0].mxu0 %v9974
        %v10124 = vpop.f32.mrb[0].mxu0
        %v10125 = vadd.f32 0.0, %v10124
        %v10126 = vpop.f32.mrb[0].mxu0
        %v10127 = vpop.f32.mrb[0].mxu0
        %v10128 = vadd.f32 0.0, %v10127
        %v10129 = vpop.f32.mrb[0].mxu0
        %10130 = vmatprep.mubr.bf16.mxu0 0
        %10131 = vmatmul.mubr.bf16.gmra.mrb[0].mxu0 %v9976
        %v10132 = vpop.f32.mrb[0].mxu0
        %v10133 = vadd.f32 0.0, %v10132
        %v10134 = vpop.f32.mrb[0].mxu0
        %v10135 = vpop.f32.mrb[0].mxu0
        %v10136 = vadd.f32 0.0, %v10135
        %v10137 = vpop.f32.mrb[0].mxu0
        %10138 = vdwg.mxu0
        %v10139 = vadd.f32 %v9883, %v10013
        %v10140 = vadd.f32 %v9884, %v10016
        %v10141 = vadd.f32 %v9885, %v10021
        %v10142 = vadd.f32 %v9886, %v10024
        %v10143 = vadd.f32 %v9887, %v10029
        %v10144 = vadd.f32 %v9888, %v10032
        %v10145 = vadd.f32 %v9889, %v10037
        %v10146 = vadd.f32 %v9890, %v10040
        %v10147 = vadd.f32 %v9891, %v10045
        %v10148 = vadd.f32 %v9892, %v10048
        %v10149 = vadd.f32 %v9893, %v10053
        %v10150 = vadd.f32 %v9894, %v10056
        %v10151 = vadd.f32 %v9895, %v10061
        %v10152 = vadd.f32 %v9896, %v10064
        %v10153 = vadd.f32 %v9897, %v10069
        %v10154 = vadd.f32 %v9898, %v10072
        %v10155 = vadd.f32 %v9899, %v10077
        %v10156 = vadd.f32 %v9900, %v10080
        %v10157 = vadd.f32 %v9901, %v10085
        %v10158 = vadd.f32 %v9902, %v10088
        %v10159 = vadd.f32 %v9903, %v10093
        %v10160 = vadd.f32 %v9904, %v10096
        %v10161 = vadd.f32 %v9905, %v10101
        %v10162 = vadd.f32 %v9906, %v10104
        %v10163 = vadd.f32 %v9907, %v10109
        %v10164 = vadd.f32 %v9908, %v10112
        %v10165 = vadd.f32 %v9909, %v10117
        %v10166 = vadd.f32 %v9910, %v10120
        %v10167 = vadd.f32 %v9911, %v10125
        %v10168 = vadd.f32 %v9912, %v10128
        %v10169 = vadd.f32 %v9913, %v10133
        %v10170 = vadd.f32 %v9914, %v10136
        %s10171 = scalar_lea.vmem %s8, 128
        %v10172 = vld [vmem:[%s10171] sm:$0xf]
        %v10173 = vld [vmem:[%s10171 + $0x4] sm:$0xf]
        %v10174 = vld [vmem:[%s10171 + $0x8] sm:$0xf]
        %v10175 = vld [vmem:[%s10171 + $0xc] sm:$0xf]
        %v10176 = vld [vmem:[%s10171 + $0x10] sm:$0xf]
        %v10177 = vld [vmem:[%s10171 + $0x14] sm:$0xf]
        %v10178 = vld [vmem:[%s10171 + $0x18] sm:$0xf]
        %v10179 = vld [vmem:[%s10171 + $0x1c] sm:$0xf]
        %v10188 = vunpack.c.l.b16 %v10172
        %v10189 = vunpack.c.l.b16 %v10173
        %v10190 = vunpack.c.l.b16 %v10174
        %v10191 = vunpack.c.l.b16 %v10175
        %v10192 = vunpack.c.l.b16 %v10176
        %v10193 = vunpack.c.l.b16 %v10177
        %v10194 = vunpack.c.l.b16 %v10178
        %v10195 = vunpack.c.l.b16 %v10179
        %v10196 = vpack.c.b16 %v10189, %v10188
        %v10197 = vpack.c.b16 %v10191, %v10190
        %v10198 = vpack.c.b16 %v10193, %v10192
        %v10199 = vpack.c.b16 %v10195, %v10194
        %v10204 = vsel %vm6904, %v9035, 0
        %10206 = vmatprep.subr.bf16.mxu0 0
        %10207 = vmatpush1.bf16.msra.mxu0 %v10196
        %10208 = vmatprep.subr.bf16.mxu0 0
        %10209 = vmatpush1.bf16.msra.mxu0 %v10197
        %10210 = vmatprep.subr.bf16.mxu0 0
        %10211 = vmatpush1.bf16.msra.mxu0 %v10198
        %10212 = vmatprep.subr.bf16.mxu0 0
        %10213 = vmatpush1.bf16.msra.mxu0 %v10199
        %10214 = vmatprep.subr.bf16.mxu0 0
        %10215 = vmatpush1.bf16.msra.mxu0 0
        %10216 = vmatprep.subr.bf16.mxu0 0
        %10217 = vmatpush1.bf16.msra.mxu0 0
        %10218 = vmatprep.subr.bf16.mxu0 0
        %10219 = vmatpush1.bf16.msra.mxu0 0
        %10220 = vmatprep.subr.bf16.mxu0 0
        %10221 = vmatpush1.bf16.msra.mxu0 0
        %10222 = vmatprep.subr.bf16.mxu0 0
        %10223 = vmatpush1.bf16.msra.mxu0 0
        %10224 = vmatprep.subr.bf16.mxu0 0
        %10225 = vmatpush1.bf16.msra.mxu0 0
        %10226 = vmatprep.subr.bf16.mxu0 0
        %10227 = vmatpush1.bf16.msra.mxu0 0
        %10228 = vmatprep.subr.bf16.mxu0 0
        %10229 = vmatpush1.bf16.msra.mxu0 0
        %10230 = vmatprep.subr.bf16.mxu0 0
        %10231 = vmatpush1.bf16.msra.mxu0 0
        %10232 = vmatprep.subr.bf16.mxu0 0
        %10233 = vmatpush1.bf16.msra.mxu0 0
        %10234 = vmatprep.subr.bf16.mxu0 0
        %10235 = vmatpush1.bf16.msra.mxu0 0
        %10236 = vmatprep.subr.bf16.mxu0 0
        %10237 = vmatpush1.bf16.msra.mxu0 0
        %10238 = vmatprep.mubr.bf16.mxu0 0
        %10239 = vmatmul.mubr.bf16.gmra.mrb[0].mxu0 %v9948
        %v10240 = vpop.f32.mrb[0].mxu0
        %v10241 = vadd.f32 0.0, %v10240
        %v10242 = vpop.f32.mrb[0].mxu0
        %v10243 = vpop.f32.mrb[0].mxu0
        %v10244 = vadd.f32 0.0, %v10243
        %v10245 = vpop.f32.mrb[0].mxu0
        %10246 = vmatprep.mubr.bf16.mxu0 0
        %10247 = vmatmul.mubr.bf16.gmra.mrb[0].mxu0 %v9950
        %v10248 = vpop.f32.mrb[0].mxu0
        %v10249 = vadd.f32 0.0, %v10248
        %v10250 = vpop.f32.mrb[0].mxu0
        %v10251 = vpop.f32.mrb[0].mxu0
        %v10252 = vadd.f32 0.0, %v10251
        %v10253 = vpop.f32.mrb[0].mxu0
        %10254 = vmatprep.mubr.bf16.mxu0 0
        %10255 = vmatmul.mubr.bf16.gmra.mrb[0].mxu0 %v9952
        %v10256 = vpop.f32.mrb[0].mxu0
        %v10257 = vadd.f32 0.0, %v10256
        %v10258 = vpop.f32.mrb[0].mxu0
        %v10259 = vpop.f32.mrb[0].mxu0
        %v10260 = vadd.f32 0.0, %v10259
        %v10261 = vpop.f32.mrb[0].mxu0
        %10262 = vmatprep.mubr.bf16.mxu0 0
        %10263 = vmatmul.mubr.bf16.gmra.mrb[0].mxu0 %v9954
        %v10264 = vpop.f32.mrb[0].mxu0
        %v10265 = vadd.f32 0.0, %v10264
        %v10266 = vpop.f32.mrb[0].mxu0
        %v10267 = vpop.f32.mrb[0].mxu0
        %v10268 = vadd.f32 0.0, %v10267
        %v10269 = vpop.f32.mrb[0].mxu0
        %10270 = vmatprep.mubr.bf16.mxu0 0
        %10271 = vmatmul.mubr.bf16.gmra.mrb[0].mxu0 %v9956
        %v10272 = vpop.f32.mrb[0].mxu0
        %v10273 = vadd.f32 0.0, %v10272
        %v10274 = vpop.f32.mrb[0].mxu0
        %v10275 = vpop.f32.mrb[0].mxu0
        %v10276 = vadd.f32 0.0, %v10275
        %v10277 = vpop.f32.mrb[0].mxu0
        %10278 = vmatprep.mubr.bf16.mxu0 0
        %10279 = vmatmul.mubr.bf16.gmra.mrb[0].mxu0 %v9958
        %v10280 = vpop.f32.mrb[0].mxu0
        %v10281 = vadd.f32 0.0, %v10280
        %v10282 = vpop.f32.mrb[0].mxu0
        %v10283 = vpop.f32.mrb[0].mxu0
        %v10284 = vadd.f32 0.0, %v10283
        %v10285 = vpop.f32.mrb[0].mxu0
        %10286 = vmatprep.mubr.bf16.mxu0 0
        %10287 = vmatmul.mubr.bf16.gmra.mrb[0].mxu0 %v9960
        %v10288 = vpop.f32.mrb[0].mxu0
        %v10289 = vadd.f32 0.0, %v10288
        %v10290 = vpop.f32.mrb[0].mxu0
        %v10291 = vpop.f32.mrb[0].mxu0
        %v10292 = vadd.f32 0.0, %v10291
        %v10293 = vpop.f32.mrb[0].mxu0
        %10294 = vmatprep.mubr.bf16.mxu0 0
        %10295 = vmatmul.mubr.bf16.gmra.mrb[0].mxu0 %v9962
        %v10296 = vpop.f32.mrb[0].mxu0
        %v10297 = vadd.f32 0.0, %v10296
        %v10298 = vpop.f32.mrb[0].mxu0
        %v10299 = vpop.f32.mrb[0].mxu0
        %v10300 = vadd.f32 0.0, %v10299
        %v10301 = vpop.f32.mrb[0].mxu0
        %10302 = vmatprep.mubr.bf16.mxu0 0
        %10303 = vmatmul.mubr.bf16.gmra.mrb[0].mxu0 %v9964
        %v10304 = vpop.f32.mrb[0].mxu0
        %v10305 = vadd.f32 0.0, %v10304
        %v10306 = vpop.f32.mrb[0].mxu0
        %v10307 = vpop.f32.mrb[0].mxu0
        %v10308 = vadd.f32 0.0, %v10307
        %v10309 = vpop.f32.mrb[0].mxu0
        %10310 = vmatprep.mubr.bf16.mxu0 0
        %10311 = vmatmul.mubr.bf16.gmra.mrb[0].mxu0 %v9966
        %v10312 = vpop.f32.mrb[0].mxu0
        %v10313 = vadd.f32 0.0, %v10312
        %v10314 = vpop.f32.mrb[0].mxu0
        %v10315 = vpop.f32.mrb[0].mxu0
        %v10316 = vadd.f32 0.0, %v10315
        %v10317 = vpop.f32.mrb[0].mxu0
        %10318 = vmatprep.mubr.bf16.mxu0 0
        %10319 = vmatmul.mubr.bf16.gmra.mrb[0].mxu0 %v9968
        %v10320 = vpop.f32.mrb[0].mxu0
        %v10321 = vadd.f32 0.0, %v10320
        %v10322 = vpop.f32.mrb[0].mxu0
        %v10323 = vpop.f32.mrb[0].mxu0
        %v10324 = vadd.f32 0.0, %v10323
        %v10325 = vpop.f32.mrb[0].mxu0
        %10326 = vmatprep.mubr.bf16.mxu0 0
        %10327 = vmatmul.mubr.bf16.gmra.mrb[0].mxu0 %v9970
        %v10328 = vpop.f32.mrb[0].mxu0
        %v10329 = vadd.f32 0.0, %v10328
        %v10330 = vpop.f32.mrb[0].mxu0
        %v10331 = vpop.f32.mrb[0].mxu0
        %v10332 = vadd.f32 0.0, %v10331
        %v10333 = vpop.f32.mrb[0].mxu0
        %10334 = vmatprep.mubr.bf16.mxu0 0
        %10335 = vmatmul.mubr.bf16.gmra.mrb[0].mxu0 %v9972
        %v10336 = vpop.f32.mrb[0].mxu0
        %v10337 = vadd.f32 0.0, %v10336
        %v10338 = vpop.f32.mrb[0].mxu0
        %v10339 = vpop.f32.mrb[0].mxu0
        %v10340 = vadd.f32 0.0, %v10339
        %v10341 = vpop.f32.mrb[0].mxu0
        %10342 = vmatprep.mubr.bf16.mxu0 0
        %10343 = vmatmul.mubr.bf16.gmra.mrb[0].mxu0 %v9974
        %v10344 = vpop.f32.mrb[0].mxu0
        %v10345 = vadd.f32 0.0, %v10344
        %v10346 = vpop.f32.mrb[0].mxu0
        %v10347 = vpop.f32.mrb[0].mxu0
        %v10348 = vadd.f32 0.0, %v10347
        %v10349 = vpop.f32.mrb[0].mxu0
        %10350 = vmatprep.mubr.bf16.mxu0 0
        %10351 = vmatmul.mubr.bf16.gmra.mrb[0].mxu0 %v9976
        %v10352 = vpop.f32.mrb[0].mxu0
        %v10353 = vadd.f32 0.0, %v10352
        %v10354 = vpop.f32.mrb[0].mxu0
        %v10355 = vpop.f32.mrb[0].mxu0
        %v10356 = vadd.f32 0.0, %v10355
        %v10357 = vpop.f32.mrb[0].mxu0
        %10358 = vmatprep.mubr.bf16.mxu0 0
        %10359 = vmatmul.mubr.bf16.gmra.mrb[0].mxu0 %v10204
        %v10360 = vpop.f32.mrb[0].mxu0
        %v10361 = vadd.f32 0.0, %v10360
        %v10362 = vpop.f32.mrb[0].mxu0
        %v10363 = vpop.f32.mrb[0].mxu0
        %v10364 = vadd.f32 0.0, %v10363
        %v10365 = vpop.f32.mrb[0].mxu0
        %10366 = vdwg.mxu0
        %v10367 = vadd.f32 %v10139, %v10241
        %v10368 = vadd.f32 %v10140, %v10244
        %v10369 = vadd.f32 %v10141, %v10249
        %v10370 = vadd.f32 %v10142, %v10252
        %v10371 = vadd.f32 %v10143, %v10257
        %v10372 = vadd.f32 %v10144, %v10260
        %v10373 = vadd.f32 %v10145, %v10265
        %v10374 = vadd.f32 %v10146, %v10268
        %v10375 = vadd.f32 %v10147, %v10273
        %v10376 = vadd.f32 %v10148, %v10276
        %v10377 = vadd.f32 %v10149, %v10281
        %v10378 = vadd.f32 %v10150, %v10284
        %v10379 = vadd.f32 %v10151, %v10289
        %v10380 = vadd.f32 %v10152, %v10292
        %v10381 = vadd.f32 %v10153, %v10297
        %v10382 = vadd.f32 %v10154, %v10300
        %v10383 = vadd.f32 %v10155, %v10305
        %v10384 = vadd.f32 %v10156, %v10308
        %v10385 = vadd.f32 %v10157, %v10313
        %v10386 = vadd.f32 %v10158, %v10316
        %v10387 = vadd.f32 %v10159, %v10321
        %v10388 = vadd.f32 %v10160, %v10324
        %v10389 = vadd.f32 %v10161, %v10329
        %v10390 = vadd.f32 %v10162, %v10332
        %v10391 = vadd.f32 %v10163, %v10337
        %v10392 = vadd.f32 %v10164, %v10340
        %v10393 = vadd.f32 %v10165, %v10345
        %v10394 = vadd.f32 %v10166, %v10348
        %v10395 = vadd.f32 %v10167, %v10353
        %v10396 = vadd.f32 %v10168, %v10356
        %v10397 = vadd.f32 %v10169, %v10361
        %v10398 = vadd.f32 %v10170, %v10364
        %s10399 = scalar_lea.vmem %s8, 224
        %v10400 = vld [vmem:[%s10399] sm:$0xf]
        %v10401 = vld [vmem:[%s10399 + $0x4] sm:$0xf]
        %v10402 = vld [vmem:[%s10399 + $0x8] sm:$0xf]
        %v10403 = vld [vmem:[%s10399 + $0xc] sm:$0xf]
        %v10404 = vld [vmem:[%s10399 + $0x10] sm:$0xf]
        %v10405 = vld [vmem:[%s10399 + $0x14] sm:$0xf]
        %v10406 = vld [vmem:[%s10399 + $0x18] sm:$0xf]
        %v10407 = vld [vmem:[%s10399 + $0x1c] sm:$0xf]
        %v10416 = vunpack.c.l.b16 %v10400
        %v10417 = vunpack.c.l.b16 %v10401
        %v10418 = vunpack.c.l.b16 %v10402
        %v10419 = vunpack.c.l.b16 %v10403
        %v10420 = vunpack.c.l.b16 %v10404
        %v10421 = vunpack.c.l.b16 %v10405
        %v10422 = vunpack.c.l.b16 %v10406
        %v10423 = vunpack.c.l.b16 %v10407
        %v10424 = vpack.c.b16 %v10417, %v10416
        %v10425 = vpack.c.b16 %v10419, %v10418
        %v10426 = vpack.c.b16 %v10421, %v10420
        %v10427 = vpack.c.b16 %v10423, %v10422
        %10432 = vmatprep.subr.bf16.mxu0 0
        %10433 = vmatpush1.bf16.msra.mxu0 %v10424
        %10434 = vmatprep.subr.bf16.mxu0 0
        %10435 = vmatpush1.bf16.msra.mxu0 %v10425
        %10436 = vmatprep.subr.bf16.mxu0 0
        %10437 = vmatpush1.bf16.msra.mxu0 %v10426
        %10438 = vmatprep.subr.bf16.mxu0 0
        %10439 = vmatpush1.bf16.msra.mxu0 %v10427
        %10440 = vmatprep.subr.bf16.mxu0 0
        %10441 = vmatpush1.bf16.msra.mxu0 0
        %10442 = vmatprep.subr.bf16.mxu0 0
        %10443 = vmatpush1.bf16.msra.mxu0 0
        %10444 = vmatprep.subr.bf16.mxu0 0
        %10445 = vmatpush1.bf16.msra.mxu0 0
        %10446 = vmatprep.subr.bf16.mxu0 0
        %10447 = vmatpush1.bf16.msra.mxu0 0
        %10448 = vmatprep.subr.bf16.mxu0 0
        %10449 = vmatpush1.bf16.msra.mxu0 0
        %10450 = vmatprep.subr.bf16.mxu0 0
        %10451 = vmatpush1.bf16.msra.mxu0 0
        %10452 = vmatprep.subr.bf16.mxu0 0
        %10453 = vmatpush1.bf16.msra.mxu0 0
        %10454 = vmatprep.subr.bf16.mxu0 0
        %10455 = vmatpush1.bf16.msra.mxu0 0
        %10456 = vmatprep.subr.bf16.mxu0 0
        %10457 = vmatpush1.bf16.msra.mxu0 0
        %10458 = vmatprep.subr.bf16.mxu0 0
        %10459 = vmatpush1.bf16.msra.mxu0 0
        %10460 = vmatprep.subr.bf16.mxu0 0
        %10461 = vmatpush1.bf16.msra.mxu0 0
        %10462 = vmatprep.subr.bf16.mxu0 0
        %10463 = vmatpush1.bf16.msra.mxu0 0
        %10464 = vmatprep.mubr.bf16.mxu0 0
        %10465 = vmatmul.mubr.bf16.gmra.mrb[0].mxu0 %v9950
        %v10466 = vpop.f32.mrb[0].mxu0
        %v10467 = vadd.f32 0.0, %v10466
        %v10468 = vpop.f32.mrb[0].mxu0
        %v10469 = vpop.f32.mrb[0].mxu0
        %v10470 = vadd.f32 0.0, %v10469
        %v10471 = vpop.f32.mrb[0].mxu0
        %10472 = vmatprep.mubr.bf16.mxu0 0
        %10473 = vmatmul.mubr.bf16.gmra.mrb[0].mxu0 %v9952
        %v10474 = vpop.f32.mrb[0].mxu0
        %v10475 = vadd.f32 0.0, %v10474
        %v10476 = vpop.f32.mrb[0].mxu0
        %v10477 = vpop.f32.mrb[0].mxu0
        %v10478 = vadd.f32 0.0, %v10477
        %v10479 = vpop.f32.mrb[0].mxu0
        %10480 = vmatprep.mubr.bf16.mxu0 0
        %10481 = vmatmul.mubr.bf16.gmra.mrb[0].mxu0 %v9954
        %v10482 = vpop.f32.mrb[0].mxu0
        %v10483 = vadd.f32 0.0, %v10482
        %v10484 = vpop.f32.mrb[0].mxu0
        %v10485 = vpop.f32.mrb[0].mxu0
        %v10486 = vadd.f32 0.0, %v10485
        %v10487 = vpop.f32.mrb[0].mxu0
        %10488 = vmatprep.mubr.bf16.mxu0 0
        %10489 = vmatmul.mubr.bf16.gmra.mrb[0].mxu0 %v9956
        %v10490 = vpop.f32.mrb[0].mxu0
        %v10491 = vadd.f32 0.0, %v10490
        %v10492 = vpop.f32.mrb[0].mxu0
        %v10493 = vpop.f32.mrb[0].mxu0
        %v10494 = vadd.f32 0.0, %v10493
        %v10495 = vpop.f32.mrb[0].mxu0
        %10496 = vmatprep.mubr.bf16.mxu0 0
        %10497 = vmatmul.mubr.bf16.gmra.mrb[0].mxu0 %v9958
        %v10498 = vpop.f32.mrb[0].mxu0
        %v10499 = vadd.f32 0.0, %v10498
        %v10500 = vpop.f32.mrb[0].mxu0
        %v10501 = vpop.f32.mrb[0].mxu0
        %v10502 = vadd.f32 0.0, %v10501
        %v10503 = vpop.f32.mrb[0].mxu0
        %10504 = vmatprep.mubr.bf16.mxu0 0
        %10505 = vmatmul.mubr.bf16.gmra.mrb[0].mxu0 %v9960
        %v10506 = vpop.f32.mrb[0].mxu0
        %v10507 = vadd.f32 0.0, %v10506
        %v10508 = vpop.f32.mrb[0].mxu0
        %v10509 = vpop.f32.mrb[0].mxu0
        %v10510 = vadd.f32 0.0, %v10509
        %v10511 = vpop.f32.mrb[0].mxu0
        %10512 = vmatprep.mubr.bf16.mxu0 0
        %10513 = vmatmul.mubr.bf16.gmra.mrb[0].mxu0 %v9962
        %v10514 = vpop.f32.mrb[0].mxu0
        %v10515 = vadd.f32 0.0, %v10514
        %v10516 = vpop.f32.mrb[0].mxu0
        %v10517 = vpop.f32.mrb[0].mxu0
        %v10518 = vadd.f32 0.0, %v10517
        %v10519 = vpop.f32.mrb[0].mxu0
        %10520 = vmatprep.mubr.bf16.mxu0 0
        %10521 = vmatmul.mubr.bf16.gmra.mrb[0].mxu0 %v9964
        %v10522 = vpop.f32.mrb[0].mxu0
        %v10523 = vadd.f32 0.0, %v10522
        %v10524 = vpop.f32.mrb[0].mxu0
        %v10525 = vpop.f32.mrb[0].mxu0
        %v10526 = vadd.f32 0.0, %v10525
        %v10527 = vpop.f32.mrb[0].mxu0
        %10528 = vmatprep.mubr.bf16.mxu0 0
        %10529 = vmatmul.mubr.bf16.gmra.mrb[0].mxu0 %v9966
        %v10530 = vpop.f32.mrb[0].mxu0
        %v10531 = vadd.f32 0.0, %v10530
        %v10532 = vpop.f32.mrb[0].mxu0
        %v10533 = vpop.f32.mrb[0].mxu0
        %v10534 = vadd.f32 0.0, %v10533
        %v10535 = vpop.f32.mrb[0].mxu0
        %10536 = vmatprep.mubr.bf16.mxu0 0
        %10537 = vmatmul.mubr.bf16.gmra.mrb[0].mxu0 %v9968
        %v10538 = vpop.f32.mrb[0].mxu0
        %v10539 = vadd.f32 0.0, %v10538
        %v10540 = vpop.f32.mrb[0].mxu0
        %v10541 = vpop.f32.mrb[0].mxu0
        %v10542 = vadd.f32 0.0, %v10541
        %v10543 = vpop.f32.mrb[0].mxu0
        %10544 = vmatprep.mubr.bf16.mxu0 0
        %10545 = vmatmul.mubr.bf16.gmra.mrb[0].mxu0 %v9970
        %v10546 = vpop.f32.mrb[0].mxu0
        %v10547 = vadd.f32 0.0, %v10546
        %v10548 = vpop.f32.mrb[0].mxu0
        %v10549 = vpop.f32.mrb[0].mxu0
        %v10550 = vadd.f32 0.0, %v10549
        %v10551 = vpop.f32.mrb[0].mxu0
        %10552 = vmatprep.mubr.bf16.mxu0 0
        %10553 = vmatmul.mubr.bf16.gmra.mrb[0].mxu0 %v9972
        %v10554 = vpop.f32.mrb[0].mxu0
        %v10555 = vadd.f32 0.0, %v10554
        %v10556 = vpop.f32.mrb[0].mxu0
        %v10557 = vpop.f32.mrb[0].mxu0
        %v10558 = vadd.f32 0.0, %v10557
        %v10559 = vpop.f32.mrb[0].mxu0
        %10560 = vmatprep.mubr.bf16.mxu0 0
        %10561 = vmatmul.mubr.bf16.gmra.mrb[0].mxu0 %v9974
        %v10562 = vpop.f32.mrb[0].mxu0
        %v10563 = vadd.f32 0.0, %v10562
        %v10564 = vpop.f32.mrb[0].mxu0
        %v10565 = vpop.f32.mrb[0].mxu0
        %v10566 = vadd.f32 0.0, %v10565
        %v10567 = vpop.f32.mrb[0].mxu0
        %10568 = vmatprep.mubr.bf16.mxu0 0
        %10569 = vmatmul.mubr.bf16.gmra.mrb[0].mxu0 %v9976
        %v10570 = vpop.f32.mrb[0].mxu0
        %v10571 = vadd.f32 0.0, %v10570
        %v10572 = vpop.f32.mrb[0].mxu0
        %v10573 = vpop.f32.mrb[0].mxu0
        %v10574 = vadd.f32 0.0, %v10573
        %v10575 = vpop.f32.mrb[0].mxu0
        %10576 = vmatprep.mubr.bf16.mxu0 0
        %10577 = vmatmul.mubr.bf16.gmra.mrb[0].mxu0 %v10204
        %v10578 = vpop.f32.mrb[0].mxu0
        %v10579 = vadd.f32 0.0, %v10578
        %v10580 = vpop.f32.mrb[0].mxu0
        %v10581 = vpop.f32.mrb[0].mxu0
        %v10582 = vadd.f32 0.0, %v10581
        %v10583 = vpop.f32.mrb[0].mxu0
        %10584 = vmatprep.mubr.bf16.mxu0 0
        %10585 = vmatmul.mubr.bf16.gmra.mrb[0].mxu0 %v9220
        %v10586 = vpop.f32.mrb[0].mxu0
        %v10587 = vadd.f32 0.0, %v10586
        %v10588 = vpop.f32.mrb[0].mxu0
        %v10589 = vpop.f32.mrb[0].mxu0
        %v10590 = vadd.f32 0.0, %v10589
        %v10591 = vpop.f32.mrb[0].mxu0
        %10592 = vdwg.mxu0
        %v10593 = vadd.f32 %v10367, %v10467
        %v10594 = vadd.f32 %v10368, %v10470
        %v10595 = vadd.f32 %v10369, %v10475
        %v10596 = vadd.f32 %v10370, %v10478
        %v10597 = vadd.f32 %v10371, %v10483
        %v10598 = vadd.f32 %v10372, %v10486
        %v10599 = vadd.f32 %v10373, %v10491
        %v10600 = vadd.f32 %v10374, %v10494
        %v10601 = vadd.f32 %v10375, %v10499
        %v10602 = vadd.f32 %v10376, %v10502
        %v10603 = vadd.f32 %v10377, %v10507
        %v10604 = vadd.f32 %v10378, %v10510
        %v10605 = vadd.f32 %v10379, %v10515
        %v10606 = vadd.f32 %v10380, %v10518
        %v10607 = vadd.f32 %v10381, %v10523
        %v10608 = vadd.f32 %v10382, %v10526
        %v10609 = vadd.f32 %v10383, %v10531
        %v10610 = vadd.f32 %v10384, %v10534
        %v10611 = vadd.f32 %v10385, %v10539
        %v10612 = vadd.f32 %v10386, %v10542
        %v10613 = vadd.f32 %v10387, %v10547
        %v10614 = vadd.f32 %v10388, %v10550
        %v10615 = vadd.f32 %v10389, %v10555
        %v10616 = vadd.f32 %v10390, %v10558
        %v10617 = vadd.f32 %v10391, %v10563
        %v10618 = vadd.f32 %v10392, %v10566
        %v10619 = vadd.f32 %v10393, %v10571
        %v10620 = vadd.f32 %v10394, %v10574
        %v10621 = vadd.f32 %v10395, %v10579
        %v10622 = vadd.f32 %v10396, %v10582
        %v10623 = vadd.f32 %v10397, %v10587
        %v10624 = vadd.f32 %v10398, %v10590
        %v10625 = vrot.slane %v9047, 1
        %v10626 = vor.u32 %v9044, %v10625
        %v10627 = vrot.slane %v9054, 1
        %v10628 = vor.u32 %v9051, %v10627
        %v10629 = vrot.slane %v9061, 1
        %v10630 = vor.u32 %v9058, %v10629
        %v10631 = vrot.slane %v9068, 1
        %v10632 = vor.u32 %v9065, %v10631
        %v10633 = vrot.slane %v9075, 1
        %v10634 = vor.u32 %v9072, %v10633
        %v10635 = vrot.slane %v9082, 1
        %v10636 = vor.u32 %v9079, %v10635
        %v10637 = vrot.slane %v9089, 1
        %v10638 = vor.u32 %v9086, %v10637
        %v10639 = vrot.slane %v9096, 1
        %v10640 = vor.u32 %v9093, %v10639
        %v10641 = vrot.slane %v9103, 1
        %v10642 = vor.u32 %v9100, %v10641
        %v10643 = vrot.slane %v9110, 1
        %v10644 = vor.u32 %v9107, %v10643
        %v10645 = vrot.slane %v9117, 1
        %v10646 = vor.u32 %v9114, %v10645
        %v10647 = vrot.slane %v9124, 1
        %v10648 = vor.u32 %v9121, %v10647
        %v10649 = vrot.slane %v9131, 1
        %v10650 = vor.u32 %v9128, %v10649
        %v10651 = vrot.slane %v9138, 1
        %v10652 = vor.u32 %v9135, %v10651
        %v10653 = vrot.slane %v9145, 1
        %v10654 = vor.u32 %v9142, %v10653
        %v10655 = vrot.slane %v9152, 1
        %v10656 = vor.u32 %v9149, %v10655
        %v10673 = vsel %vm8424, %v10626, 0
        %v10674 = vsel %vm8424, %v10628, 0
        %v10675 = vsel %vm8424, %v10630, 0
        %v10676 = vsel %vm8424, %v10632, 0
        %v10677 = vsel %vm8424, %v10634, 0
        %v10678 = vsel %vm8424, %v10636, 0
        %v10679 = vsel %vm8424, %v10638, 0
        %v10680 = vsel %vm8424, %v10640, 0
        %v10681 = vsel %vm8424, %v10642, 0
        %v10682 = vsel %vm8424, %v10644, 0
        %v10683 = vsel %vm8424, %v10646, 0
        %v10684 = vsel %vm8424, %v10648, 0
        %v10685 = vsel %vm8424, %v10650, 0
        %v10686 = vsel %vm8424, %v10652, 0
        %v10687 = vsel %vm8424, %v10654, 0
        %v10688 = vsel %vm8424, %v10656, 0
        %s10689 = scalar_lea.vmem %s8, 64
        %v10690 = vld [vmem:[%s10689] sm:$0xf]
        %v10691 = vld [vmem:[%s10689 + $0x4] sm:$0xf]
        %v10692 = vld [vmem:[%s10689 + $0x8] sm:$0xf]
        %v10693 = vld [vmem:[%s10689 + $0xc] sm:$0xf]
        %v10694 = vld [vmem:[%s10689 + $0x10] sm:$0xf]
        %v10695 = vld [vmem:[%s10689 + $0x14] sm:$0xf]
        %v10696 = vld [vmem:[%s10689 + $0x18] sm:$0xf]
        %v10697 = vld [vmem:[%s10689 + $0x1c] sm:$0xf]
        %v10706 = vunpack.c.l.b16 %v10690
        %v10707 = vunpack.c.l.b16 %v10691
        %v10708 = vunpack.c.l.b16 %v10692
        %v10709 = vunpack.c.l.b16 %v10693
        %v10710 = vunpack.c.l.b16 %v10694
        %v10711 = vunpack.c.l.b16 %v10695
        %v10712 = vunpack.c.l.b16 %v10696
        %v10713 = vunpack.c.l.b16 %v10697
        %v10714 = vpack.c.b16 %v10707, %v10706
        %v10715 = vpack.c.b16 %v10709, %v10708
        %v10716 = vpack.c.b16 %v10711, %v10710
        %v10717 = vpack.c.b16 %v10713, %v10712
        %v10723 = vsel %vm6904, %v10673, 0
        %v10726 = vsel %vm6904, %v10674, 0
        %v10729 = vsel %vm6904, %v10675, 0
        %v10732 = vsel %vm6904, %v10676, 0
        %v10735 = vsel %vm6904, %v10677, 0
        %v10738 = vsel %vm6904, %v10678, 0
        %v10741 = vsel %vm6904, %v10679, 0
        %v10744 = vsel %vm6904, %v10680, 0
        %v10747 = vsel %vm6904, %v10681, 0
        %v10750 = vsel %vm6904, %v10682, 0
        %v10753 = vsel %vm6904, %v10683, 0
        %v10756 = vsel %vm6904, %v10684, 0
        %v10759 = vsel %vm6904, %v10685, 0
        %v10762 = vsel %vm6904, %v10686, 0
        %v10765 = vsel %vm6904, %v10687, 0
        %10767 = vmatprep.subr.bf16.mxu0 0
        %10768 = vmatpush1.bf16.msra.mxu0 %v10714
        %10769 = vmatprep.subr.bf16.mxu0 0
        %10770 = vmatpush1.bf16.msra.mxu0 %v10715
        %10771 = vmatprep.subr.bf16.mxu0 0
        %10772 = vmatpush1.bf16.msra.mxu0 %v10716
        %10773 = vmatprep.subr.bf16.mxu0 0
        %10774 = vmatpush1.bf16.msra.mxu0 %v10717
        %10775 = vmatprep.subr.bf16.mxu0 0
        %10776 = vmatpush1.bf16.msra.mxu0 0
        %10777 = vmatprep.subr.bf16.mxu0 0
        %10778 = vmatpush1.bf16.msra.mxu0 0
        %10779 = vmatprep.subr.bf16.mxu0 0
        %10780 = vmatpush1.bf16.msra.mxu0 0
        %10781 = vmatprep.subr.bf16.mxu0 0
        %10782 = vmatpush1.bf16.msra.mxu0 0
        %10783 = vmatprep.subr.bf16.mxu0 0
        %10784 = vmatpush1.bf16.msra.mxu0 0
        %10785 = vmatprep.subr.bf16.mxu0 0
        %10786 = vmatpush1.bf16.msra.mxu0 0
        %10787 = vmatprep.subr.bf16.mxu0 0
        %10788 = vmatpush1.bf16.msra.mxu0 0
        %10789 = vmatprep.subr.bf16.mxu0 0
        %10790 = vmatpush1.bf16.msra.mxu0 0
        %10791 = vmatprep.subr.bf16.mxu0 0
        %10792 = vmatpush1.bf16.msra.mxu0 0
        %10793 = vmatprep.subr.bf16.mxu0 0
        %10794 = vmatpush1.bf16.msra.mxu0 0
        %10795 = vmatprep.subr.bf16.mxu0 0
        %10796 = vmatpush1.bf16.msra.mxu0 0
        %10797 = vmatprep.subr.bf16.mxu0 0
        %10798 = vmatpush1.bf16.msra.mxu0 0
        %10799 = vmatprep.mubr.bf16.mxu0 0
        %10800 = vmatmul.mubr.bf16.gmra.mrb[0].mxu0 %v9220
        %v10801 = vpop.f32.mrb[0].mxu0
        %v10802 = vadd.f32 0.0, %v10801
        %v10803 = vpop.f32.mrb[0].mxu0
        %v10804 = vpop.f32.mrb[0].mxu0
        %v10805 = vadd.f32 0.0, %v10804
        %v10806 = vpop.f32.mrb[0].mxu0
        %10807 = vmatprep.mubr.bf16.mxu0 0
        %10808 = vmatmul.mubr.bf16.gmra.mrb[0].mxu0 %v10723
        %v10809 = vpop.f32.mrb[0].mxu0
        %v10810 = vadd.f32 0.0, %v10809
        %v10811 = vpop.f32.mrb[0].mxu0
        %v10812 = vpop.f32.mrb[0].mxu0
        %v10813 = vadd.f32 0.0, %v10812
        %v10814 = vpop.f32.mrb[0].mxu0
        %10815 = vmatprep.mubr.bf16.mxu0 0
        %10816 = vmatmul.mubr.bf16.gmra.mrb[0].mxu0 %v10726
        %v10817 = vpop.f32.mrb[0].mxu0
        %v10818 = vadd.f32 0.0, %v10817
        %v10819 = vpop.f32.mrb[0].mxu0
        %v10820 = vpop.f32.mrb[0].mxu0
        %v10821 = vadd.f32 0.0, %v10820
        %v10822 = vpop.f32.mrb[0].mxu0
        %10823 = vmatprep.mubr.bf16.mxu0 0
        %10824 = vmatmul.mubr.bf16.gmra.mrb[0].mxu0 %v10729
        %v10825 = vpop.f32.mrb[0].mxu0
        %v10826 = vadd.f32 0.0, %v10825
        %v10827 = vpop.f32.mrb[0].mxu0
        %v10828 = vpop.f32.mrb[0].mxu0
        %v10829 = vadd.f32 0.0, %v10828
        %v10830 = vpop.f32.mrb[0].mxu0
        %10831 = vmatprep.mubr.bf16.mxu0 0
        %10832 = vmatmul.mubr.bf16.gmra.mrb[0].mxu0 %v10732
        %v10833 = vpop.f32.mrb[0].mxu0
        %v10834 = vadd.f32 0.0, %v10833
        %v10835 = vpop.f32.mrb[0].mxu0
        %v10836 = vpop.f32.mrb[0].mxu0
        %v10837 = vadd.f32 0.0, %v10836
        %v10838 = vpop.f32.mrb[0].mxu0
        %10839 = vmatprep.mubr.bf16.mxu0 0
        %10840 = vmatmul.mubr.bf16.gmra.mrb[0].mxu0 %v10735
        %v10841 = vpop.f32.mrb[0].mxu0
        %v10842 = vadd.f32 0.0, %v10841
        %v10843 = vpop.f32.mrb[0].mxu0
        %v10844 = vpop.f32.mrb[0].mxu0
        %v10845 = vadd.f32 0.0, %v10844
        %v10846 = vpop.f32.mrb[0].mxu0
        %10847 = vmatprep.mubr.bf16.mxu0 0
        %10848 = vmatmul.mubr.bf16.gmra.mrb[0].mxu0 %v10738
        %v10849 = vpop.f32.mrb[0].mxu0
        %v10850 = vadd.f32 0.0, %v10849
        %v10851 = vpop.f32.mrb[0].mxu0
        %v10852 = vpop.f32.mrb[0].mxu0
        %v10853 = vadd.f32 0.0, %v10852
        %v10854 = vpop.f32.mrb[0].mxu0
        %10855 = vmatprep.mubr.bf16.mxu0 0
        %10856 = vmatmul.mubr.bf16.gmra.mrb[0].mxu0 %v10741
        %v10857 = vpop.f32.mrb[0].mxu0
        %v10858 = vadd.f32 0.0, %v10857
        %v10859 = vpop.f32.mrb[0].mxu0
        %v10860 = vpop.f32.mrb[0].mxu0
        %v10861 = vadd.f32 0.0, %v10860
        %v10862 = vpop.f32.mrb[0].mxu0
        %10863 = vmatprep.mubr.bf16.mxu0 0
        %10864 = vmatmul.mubr.bf16.gmra.mrb[0].mxu0 %v10744
        %v10865 = vpop.f32.mrb[0].mxu0
        %v10866 = vadd.f32 0.0, %v10865
        %v10867 = vpop.f32.mrb[0].mxu0
        %v10868 = vpop.f32.mrb[0].mxu0
        %v10869 = vadd.f32 0.0, %v10868
        %v10870 = vpop.f32.mrb[0].mxu0
        %10871 = vmatprep.mubr.bf16.mxu0 0
        %10872 = vmatmul.mubr.bf16.gmra.mrb[0].mxu0 %v10747
        %v10873 = vpop.f32.mrb[0].mxu0
        %v10874 = vadd.f32 0.0, %v10873
        %v10875 = vpop.f32.mrb[0].mxu0
        %v10876 = vpop.f32.mrb[0].mxu0
        %v10877 = vadd.f32 0.0, %v10876
        %v10878 = vpop.f32.mrb[0].mxu0
        %10879 = vmatprep.mubr.bf16.mxu0 0
        %10880 = vmatmul.mubr.bf16.gmra.mrb[0].mxu0 %v10750
        %v10881 = vpop.f32.mrb[0].mxu0
        %v10882 = vadd.f32 0.0, %v10881
        %v10883 = vpop.f32.mrb[0].mxu0
        %v10884 = vpop.f32.mrb[0].mxu0
        %v10885 = vadd.f32 0.0, %v10884
        %v10886 = vpop.f32.mrb[0].mxu0
        %10887 = vmatprep.mubr.bf16.mxu0 0
        %10888 = vmatmul.mubr.bf16.gmra.mrb[0].mxu0 %v10753
        %v10889 = vpop.f32.mrb[0].mxu0
        %v10890 = vadd.f32 0.0, %v10889
        %v10891 = vpop.f32.mrb[0].mxu0
        %v10892 = vpop.f32.mrb[0].mxu0
        %v10893 = vadd.f32 0.0, %v10892
        %v10894 = vpop.f32.mrb[0].mxu0
        %10895 = vmatprep.mubr.bf16.mxu0 0
        %10896 = vmatmul.mubr.bf16.gmra.mrb[0].mxu0 %v10756
        %v10897 = vpop.f32.mrb[0].mxu0
        %v10898 = vadd.f32 0.0, %v10897
        %v10899 = vpop.f32.mrb[0].mxu0
        %v10900 = vpop.f32.mrb[0].mxu0
        %v10901 = vadd.f32 0.0, %v10900
        %v10902 = vpop.f32.mrb[0].mxu0
        %10903 = vmatprep.mubr.bf16.mxu0 0
        %10904 = vmatmul.mubr.bf16.gmra.mrb[0].mxu0 %v10759
        %v10905 = vpop.f32.mrb[0].mxu0
        %v10906 = vadd.f32 0.0, %v10905
        %v10907 = vpop.f32.mrb[0].mxu0
        %v10908 = vpop.f32.mrb[0].mxu0
        %v10909 = vadd.f32 0.0, %v10908
        %v10910 = vpop.f32.mrb[0].mxu0
        %10911 = vmatprep.mubr.bf16.mxu0 0
        %10912 = vmatmul.mubr.bf16.gmra.mrb[0].mxu0 %v10762
        %v10913 = vpop.f32.mrb[0].mxu0
        %v10914 = vadd.f32 0.0, %v10913
        %v10915 = vpop.f32.mrb[0].mxu0
        %v10916 = vpop.f32.mrb[0].mxu0
        %v10917 = vadd.f32 0.0, %v10916
        %v10918 = vpop.f32.mrb[0].mxu0
        %10919 = vmatprep.mubr.bf16.mxu0 0
        %10920 = vmatmul.mubr.bf16.gmra.mrb[0].mxu0 %v10765
        %v10921 = vpop.f32.mrb[0].mxu0
        %v10922 = vadd.f32 0.0, %v10921
        %v10923 = vpop.f32.mrb[0].mxu0
        %v10924 = vpop.f32.mrb[0].mxu0
        %v10925 = vadd.f32 0.0, %v10924
        %v10926 = vpop.f32.mrb[0].mxu0
        %10927 = vdwg.mxu0
        %v10928 = vadd.f32 %v10593, %v10802
        %v10929 = vadd.f32 %v10594, %v10805
        %v10930 = vadd.f32 %v10595, %v10810
        %v10931 = vadd.f32 %v10596, %v10813
        %v10932 = vadd.f32 %v10597, %v10818
        %v10933 = vadd.f32 %v10598, %v10821
        %v10934 = vadd.f32 %v10599, %v10826
        %v10935 = vadd.f32 %v10600, %v10829
        %v10936 = vadd.f32 %v10601, %v10834
        %v10937 = vadd.f32 %v10602, %v10837
        %v10938 = vadd.f32 %v10603, %v10842
        %v10939 = vadd.f32 %v10604, %v10845
        %v10940 = vadd.f32 %v10605, %v10850
        %v10941 = vadd.f32 %v10606, %v10853
        %v10942 = vadd.f32 %v10607, %v10858
        %v10943 = vadd.f32 %v10608, %v10861
        %v10944 = vadd.f32 %v10609, %v10866
        %v10945 = vadd.f32 %v10610, %v10869
        %v10946 = vadd.f32 %v10611, %v10874
        %v10947 = vadd.f32 %v10612, %v10877
        %v10948 = vadd.f32 %v10613, %v10882
        %v10949 = vadd.f32 %v10614, %v10885
        %v10950 = vadd.f32 %v10615, %v10890
        %v10951 = vadd.f32 %v10616, %v10893
        %v10952 = vadd.f32 %v10617, %v10898
        %v10953 = vadd.f32 %v10618, %v10901
        %v10954 = vadd.f32 %v10619, %v10906
        %v10955 = vadd.f32 %v10620, %v10909
        %v10956 = vadd.f32 %v10621, %v10914
        %v10957 = vadd.f32 %v10622, %v10917
        %v10958 = vadd.f32 %v10623, %v10922
        %v10959 = vadd.f32 %v10624, %v10925
        %s10960 = scalar_lea.vmem %s8, 160
        %v10961 = vld [vmem:[%s10960] sm:$0xf]
        %v10962 = vld [vmem:[%s10960 + $0x4] sm:$0xf]
        %v10963 = vld [vmem:[%s10960 + $0x8] sm:$0xf]
        %v10964 = vld [vmem:[%s10960 + $0xc] sm:$0xf]
        %v10965 = vld [vmem:[%s10960 + $0x10] sm:$0xf]
        %v10966 = vld [vmem:[%s10960 + $0x14] sm:$0xf]
        %v10967 = vld [vmem:[%s10960 + $0x18] sm:$0xf]
        %v10968 = vld [vmem:[%s10960 + $0x1c] sm:$0xf]
        %v10977 = vunpack.c.l.b16 %v10961
        %v10978 = vunpack.c.l.b16 %v10962
        %v10979 = vunpack.c.l.b16 %v10963
        %v10980 = vunpack.c.l.b16 %v10964
        %v10981 = vunpack.c.l.b16 %v10965
        %v10982 = vunpack.c.l.b16 %v10966
        %v10983 = vunpack.c.l.b16 %v10967
        %v10984 = vunpack.c.l.b16 %v10968
        %v10985 = vpack.c.b16 %v10978, %v10977
        %v10986 = vpack.c.b16 %v10980, %v10979
        %v10987 = vpack.c.b16 %v10982, %v10981
        %v10988 = vpack.c.b16 %v10984, %v10983
        %v10994 = vsel %vm6904, %v10688, 0
        %10996 = vmatprep.subr.bf16.mxu0 0
        %10997 = vmatpush1.bf16.msra.mxu0 %v10985
        %10998 = vmatprep.subr.bf16.mxu0 0
        %10999 = vmatpush1.bf16.msra.mxu0 %v10986
        %11000 = vmatprep.subr.bf16.mxu0 0
        %11001 = vmatpush1.bf16.msra.mxu0 %v10987
        %11002 = vmatprep.subr.bf16.mxu0 0
        %11003 = vmatpush1.bf16.msra.mxu0 %v10988
        %11004 = vmatprep.subr.bf16.mxu0 0
        %11005 = vmatpush1.bf16.msra.mxu0 0
        %11006 = vmatprep.subr.bf16.mxu0 0
        %11007 = vmatpush1.bf16.msra.mxu0 0
        %11008 = vmatprep.subr.bf16.mxu0 0
        %11009 = vmatpush1.bf16.msra.mxu0 0
        %11010 = vmatprep.subr.bf16.mxu0 0
        %11011 = vmatpush1.bf16.msra.mxu0 0
        %11012 = vmatprep.subr.bf16.mxu0 0
        %11013 = vmatpush1.bf16.msra.mxu0 0
        %11014 = vmatprep.subr.bf16.mxu0 0
        %11015 = vmatpush1.bf16.msra.mxu0 0
        %11016 = vmatprep.subr.bf16.mxu0 0
        %11017 = vmatpush1.bf16.msra.mxu0 0
        %11018 = vmatprep.subr.bf16.mxu0 0
        %11019 = vmatpush1.bf16.msra.mxu0 0
        %11020 = vmatprep.subr.bf16.mxu0 0
        %11021 = vmatpush1.bf16.msra.mxu0 0
        %11022 = vmatprep.subr.bf16.mxu0 0
        %11023 = vmatpush1.bf16.msra.mxu0 0
        %11024 = vmatprep.subr.bf16.mxu0 0
        %11025 = vmatpush1.bf16.msra.mxu0 0
        %11026 = vmatprep.subr.bf16.mxu0 0
        %11027 = vmatpush1.bf16.msra.mxu0 0
        %11028 = vmatprep.mubr.bf16.mxu0 0
        %11029 = vmatmul.mubr.bf16.gmra.mrb[0].mxu0 %v10723
        %v11030 = vpop.f32.mrb[0].mxu0
        %v11031 = vadd.f32 0.0, %v11030
        %v11032 = vpop.f32.mrb[0].mxu0
        %v11033 = vpop.f32.mrb[0].mxu0
        %v11034 = vadd.f32 0.0, %v11033
        %v11035 = vpop.f32.mrb[0].mxu0
        %11036 = vmatprep.mubr.bf16.mxu0 0
        %11037 = vmatmul.mubr.bf16.gmra.mrb[0].mxu0 %v10726
        %v11038 = vpop.f32.mrb[0].mxu0
        %v11039 = vadd.f32 0.0, %v11038
        %v11040 = vpop.f32.mrb[0].mxu0
        %v11041 = vpop.f32.mrb[0].mxu0
        %v11042 = vadd.f32 0.0, %v11041
        %v11043 = vpop.f32.mrb[0].mxu0
        %11044 = vmatprep.mubr.bf16.mxu0 0
        %11045 = vmatmul.mubr.bf16.gmra.mrb[0].mxu0 %v10729
        %v11046 = vpop.f32.mrb[0].mxu0
        %v11047 = vadd.f32 0.0, %v11046
        %v11048 = vpop.f32.mrb[0].mxu0
        %v11049 = vpop.f32.mrb[0].mxu0
        %v11050 = vadd.f32 0.0, %v11049
        %v11051 = vpop.f32.mrb[0].mxu0
        %11052 = vmatprep.mubr.bf16.mxu0 0
        %11053 = vmatmul.mubr.bf16.gmra.mrb[0].mxu0 %v10732
        %v11054 = vpop.f32.mrb[0].mxu0
        %v11055 = vadd.f32 0.0, %v11054
        %v11056 = vpop.f32.mrb[0].mxu0
        %v11057 = vpop.f32.mrb[0].mxu0
        %v11058 = vadd.f32 0.0, %v11057
        %v11059 = vpop.f32.mrb[0].mxu0
        %11060 = vmatprep.mubr.bf16.mxu0 0
        %11061 = vmatmul.mubr.bf16.gmra.mrb[0].mxu0 %v10735
        %v11062 = vpop.f32.mrb[0].mxu0
        %v11063 = vadd.f32 0.0, %v11062
        %v11064 = vpop.f32.mrb[0].mxu0
        %v11065 = vpop.f32.mrb[0].mxu0
        %v11066 = vadd.f32 0.0, %v11065
        %v11067 = vpop.f32.mrb[0].mxu0
        %11068 = vmatprep.mubr.bf16.mxu0 0
        %11069 = vmatmul.mubr.bf16.gmra.mrb[0].mxu0 %v10738
        %v11070 = vpop.f32.mrb[0].mxu0
        %v11071 = vadd.f32 0.0, %v11070
        %v11072 = vpop.f32.mrb[0].mxu0
        %v11073 = vpop.f32.mrb[0].mxu0
        %v11074 = vadd.f32 0.0, %v11073
        %v11075 = vpop.f32.mrb[0].mxu0
        %11076 = vmatprep.mubr.bf16.mxu0 0
        %11077 = vmatmul.mubr.bf16.gmra.mrb[0].mxu0 %v10741
        %v11078 = vpop.f32.mrb[0].mxu0
        %v11079 = vadd.f32 0.0, %v11078
        %v11080 = vpop.f32.mrb[0].mxu0
        %v11081 = vpop.f32.mrb[0].mxu0
        %v11082 = vadd.f32 0.0, %v11081
        %v11083 = vpop.f32.mrb[0].mxu0
        %11084 = vmatprep.mubr.bf16.mxu0 0
        %11085 = vmatmul.mubr.bf16.gmra.mrb[0].mxu0 %v10744
        %v11086 = vpop.f32.mrb[0].mxu0
        %v11087 = vadd.f32 0.0, %v11086
        %v11088 = vpop.f32.mrb[0].mxu0
        %v11089 = vpop.f32.mrb[0].mxu0
        %v11090 = vadd.f32 0.0, %v11089
        %v11091 = vpop.f32.mrb[0].mxu0
        %11092 = vmatprep.mubr.bf16.mxu0 0
        %11093 = vmatmul.mubr.bf16.gmra.mrb[0].mxu0 %v10747
        %v11094 = vpop.f32.mrb[0].mxu0
        %v11095 = vadd.f32 0.0, %v11094
        %v11096 = vpop.f32.mrb[0].mxu0
        %v11097 = vpop.f32.mrb[0].mxu0
        %v11098 = vadd.f32 0.0, %v11097
        %v11099 = vpop.f32.mrb[0].mxu0
        %11100 = vmatprep.mubr.bf16.mxu0 0
        %11101 = vmatmul.mubr.bf16.gmra.mrb[0].mxu0 %v10750
        %v11102 = vpop.f32.mrb[0].mxu0
        %v11103 = vadd.f32 0.0, %v11102
        %v11104 = vpop.f32.mrb[0].mxu0
        %v11105 = vpop.f32.mrb[0].mxu0
        %v11106 = vadd.f32 0.0, %v11105
        %v11107 = vpop.f32.mrb[0].mxu0
        %11108 = vmatprep.mubr.bf16.mxu0 0
        %11109 = vmatmul.mubr.bf16.gmra.mrb[0].mxu0 %v10753
        %v11110 = vpop.f32.mrb[0].mxu0
        %v11111 = vadd.f32 0.0, %v11110
        %v11112 = vpop.f32.mrb[0].mxu0
        %v11113 = vpop.f32.mrb[0].mxu0
        %v11114 = vadd.f32 0.0, %v11113
        %v11115 = vpop.f32.mrb[0].mxu0
        %11116 = vmatprep.mubr.bf16.mxu0 0
        %11117 = vmatmul.mubr.bf16.gmra.mrb[0].mxu0 %v10756
        %v11118 = vpop.f32.mrb[0].mxu0
        %v11119 = vadd.f32 0.0, %v11118
        %v11120 = vpop.f32.mrb[0].mxu0
        %v11121 = vpop.f32.mrb[0].mxu0
        %v11122 = vadd.f32 0.0, %v11121
        %v11123 = vpop.f32.mrb[0].mxu0
        %11124 = vmatprep.mubr.bf16.mxu0 0
        %11125 = vmatmul.mubr.bf16.gmra.mrb[0].mxu0 %v10759
        %v11126 = vpop.f32.mrb[0].mxu0
        %v11127 = vadd.f32 0.0, %v11126
        %v11128 = vpop.f32.mrb[0].mxu0
        %v11129 = vpop.f32.mrb[0].mxu0
        %v11130 = vadd.f32 0.0, %v11129
        %v11131 = vpop.f32.mrb[0].mxu0
        %11132 = vmatprep.mubr.bf16.mxu0 0
        %11133 = vmatmul.mubr.bf16.gmra.mrb[0].mxu0 %v10762
        %v11134 = vpop.f32.mrb[0].mxu0
        %v11135 = vadd.f32 0.0, %v11134
        %v11136 = vpop.f32.mrb[0].mxu0
        %v11137 = vpop.f32.mrb[0].mxu0
        %v11138 = vadd.f32 0.0, %v11137
        %v11139 = vpop.f32.mrb[0].mxu0
        %11140 = vmatprep.mubr.bf16.mxu0 0
        %11141 = vmatmul.mubr.bf16.gmra.mrb[0].mxu0 %v10765
        %v11142 = vpop.f32.mrb[0].mxu0
        %v11143 = vadd.f32 0.0, %v11142
        %v11144 = vpop.f32.mrb[0].mxu0
        %v11145 = vpop.f32.mrb[0].mxu0
        %v11146 = vadd.f32 0.0, %v11145
        %v11147 = vpop.f32.mrb[0].mxu0
        %11148 = vmatprep.mubr.bf16.mxu0 0
        %11149 = vmatmul.mubr.bf16.gmra.mrb[0].mxu0 %v10994
        %v11150 = vpop.f32.mrb[0].mxu0
        %v11151 = vadd.f32 0.0, %v11150
        %v11152 = vpop.f32.mrb[0].mxu0
        %v11153 = vpop.f32.mrb[0].mxu0
        %v11154 = vadd.f32 0.0, %v11153
        %v11155 = vpop.f32.mrb[0].mxu0
        %11156 = vdwg.mxu0
        %v11157 = vadd.f32 %v10928, %v11031
        %v11158 = vadd.f32 %v10929, %v11034
        %v11159 = vadd.f32 %v10930, %v11039
        %v11160 = vadd.f32 %v10931, %v11042
        %v11161 = vadd.f32 %v10932, %v11047
        %v11162 = vadd.f32 %v10933, %v11050
        %v11163 = vadd.f32 %v10934, %v11055
        %v11164 = vadd.f32 %v10935, %v11058
        %v11165 = vadd.f32 %v10936, %v11063
        %v11166 = vadd.f32 %v10937, %v11066
        %v11167 = vadd.f32 %v10938, %v11071
        %v11168 = vadd.f32 %v10939, %v11074
        %v11169 = vadd.f32 %v10940, %v11079
        %v11170 = vadd.f32 %v10941, %v11082
        %v11171 = vadd.f32 %v10942, %v11087
        %v11172 = vadd.f32 %v10943, %v11090
        %v11173 = vadd.f32 %v10944, %v11095
        %v11174 = vadd.f32 %v10945, %v11098
        %v11175 = vadd.f32 %v10946, %v11103
        %v11176 = vadd.f32 %v10947, %v11106
        %v11177 = vadd.f32 %v10948, %v11111
        %v11178 = vadd.f32 %v10949, %v11114
        %v11179 = vadd.f32 %v10950, %v11119
        %v11180 = vadd.f32 %v10951, %v11122
        %v11181 = vadd.f32 %v10952, %v11127
        %v11182 = vadd.f32 %v10953, %v11130
        %v11183 = vadd.f32 %v10954, %v11135
        %v11184 = vadd.f32 %v10955, %v11138
        %v11185 = vadd.f32 %v10956, %v11143
        %v11186 = vadd.f32 %v10957, %v11146
        %v11187 = vadd.f32 %v10958, %v11151
        %v11188 = vadd.f32 %v10959, %v11154
        %s11189 = scalar_lea.vmem %s8, 256
        %v11190 = vld [vmem:[%s11189] sm:$0xf]
        %v11191 = vld [vmem:[%s11189 + $0x4] sm:$0xf]
        %v11192 = vld [vmem:[%s11189 + $0x8] sm:$0xf]
        %v11193 = vld [vmem:[%s11189 + $0xc] sm:$0xf]
        %v11194 = vld [vmem:[%s11189 + $0x10] sm:$0xf]
        %v11195 = vld [vmem:[%s11189 + $0x14] sm:$0xf]
        %v11196 = vld [vmem:[%s11189 + $0x18] sm:$0xf]
        %v11197 = vld [vmem:[%s11189 + $0x1c] sm:$0xf]
        %v11206 = vunpack.c.l.b16 %v11190
        %v11207 = vunpack.c.l.b16 %v11191
        %v11208 = vunpack.c.l.b16 %v11192
        %v11209 = vunpack.c.l.b16 %v11193
        %v11210 = vunpack.c.l.b16 %v11194
        %v11211 = vunpack.c.l.b16 %v11195
        %v11212 = vunpack.c.l.b16 %v11196
        %v11213 = vunpack.c.l.b16 %v11197
        %v11214 = vpack.c.b16 %v11207, %v11206
        %v11215 = vpack.c.b16 %v11209, %v11208
        %v11216 = vpack.c.b16 %v11211, %v11210
        %v11217 = vpack.c.b16 %v11213, %v11212
        %11222 = vmatprep.subr.bf16.mxu0 0
        %11223 = vmatpush1.bf16.msra.mxu0 %v11214
        %11224 = vmatprep.subr.bf16.mxu0 0
        %11225 = vmatpush1.bf16.msra.mxu0 %v11215
        %11226 = vmatprep.subr.bf16.mxu0 0
        %11227 = vmatpush1.bf16.msra.mxu0 %v11216
        %11228 = vmatprep.subr.bf16.mxu0 0
        %11229 = vmatpush1.bf16.msra.mxu0 %v11217
        %11230 = vmatprep.subr.bf16.mxu0 0
        %11231 = vmatpush1.bf16.msra.mxu0 0
        %11232 = vmatprep.subr.bf16.mxu0 0
        %11233 = vmatpush1.bf16.msra.mxu0 0
        %11234 = vmatprep.subr.bf16.mxu0 0
        %11235 = vmatpush1.bf16.msra.mxu0 0
        %11236 = vmatprep.subr.bf16.mxu0 0
        %11237 = vmatpush1.bf16.msra.mxu0 0
        %11238 = vmatprep.subr.bf16.mxu0 0
        %11239 = vmatpush1.bf16.msra.mxu0 0
        %11240 = vmatprep.subr.bf16.mxu0 0
        %11241 = vmatpush1.bf16.msra.mxu0 0
        %11242 = vmatprep.subr.bf16.mxu0 0
        %11243 = vmatpush1.bf16.msra.mxu0 0
        %11244 = vmatprep.subr.bf16.mxu0 0
        %11245 = vmatpush1.bf16.msra.mxu0 0
        %11246 = vmatprep.subr.bf16.mxu0 0
        %11247 = vmatpush1.bf16.msra.mxu0 0
        %11248 = vmatprep.subr.bf16.mxu0 0
        %11249 = vmatpush1.bf16.msra.mxu0 0
        %11250 = vmatprep.subr.bf16.mxu0 0
        %11251 = vmatpush1.bf16.msra.mxu0 0
        %11252 = vmatprep.subr.bf16.mxu0 0
        %11253 = vmatpush1.bf16.msra.mxu0 0
        %11254 = vmatprep.mubr.bf16.mxu0 0
        %11255 = vmatmul.mubr.bf16.gmra.mrb[0].mxu0 %v10726
        %v11256 = vpop.f32.mrb[0].mxu0
        %v11257 = vadd.f32 0.0, %v11256
        %v11258 = vpop.f32.mrb[0].mxu0
        %v11259 = vpop.f32.mrb[0].mxu0
        %v11260 = vadd.f32 0.0, %v11259
        %v11261 = vpop.f32.mrb[0].mxu0
        %11262 = vmatprep.mubr.bf16.mxu0 0
        %11263 = vmatmul.mubr.bf16.gmra.mrb[0].mxu0 %v10729
        %v11264 = vpop.f32.mrb[0].mxu0
        %v11265 = vadd.f32 0.0, %v11264
        %v11266 = vpop.f32.mrb[0].mxu0
        %v11267 = vpop.f32.mrb[0].mxu0
        %v11268 = vadd.f32 0.0, %v11267
        %v11269 = vpop.f32.mrb[0].mxu0
        %11270 = vmatprep.mubr.bf16.mxu0 0
        %11271 = vmatmul.mubr.bf16.gmra.mrb[0].mxu0 %v10732
        %v11272 = vpop.f32.mrb[0].mxu0
        %v11273 = vadd.f32 0.0, %v11272
        %v11274 = vpop.f32.mrb[0].mxu0
        %v11275 = vpop.f32.mrb[0].mxu0
        %v11276 = vadd.f32 0.0, %v11275
        %v11277 = vpop.f32.mrb[0].mxu0
        %11278 = vmatprep.mubr.bf16.mxu0 0
        %11279 = vmatmul.mubr.bf16.gmra.mrb[0].mxu0 %v10735
        %v11280 = vpop.f32.mrb[0].mxu0
        %v11281 = vadd.f32 0.0, %v11280
        %v11282 = vpop.f32.mrb[0].mxu0
        %v11283 = vpop.f32.mrb[0].mxu0
        %v11284 = vadd.f32 0.0, %v11283
        %v11285 = vpop.f32.mrb[0].mxu0
        %11286 = vmatprep.mubr.bf16.mxu0 0
        %11287 = vmatmul.mubr.bf16.gmra.mrb[0].mxu0 %v10738
        %v11288 = vpop.f32.mrb[0].mxu0
        %v11289 = vadd.f32 0.0, %v11288
        %v11290 = vpop.f32.mrb[0].mxu0
        %v11291 = vpop.f32.mrb[0].mxu0
        %v11292 = vadd.f32 0.0, %v11291
        %v11293 = vpop.f32.mrb[0].mxu0
        %11294 = vmatprep.mubr.bf16.mxu0 0
        %11295 = vmatmul.mubr.bf16.gmra.mrb[0].mxu0 %v10741
        %v11296 = vpop.f32.mrb[0].mxu0
        %v11297 = vadd.f32 0.0, %v11296
        %v11298 = vpop.f32.mrb[0].mxu0
        %v11299 = vpop.f32.mrb[0].mxu0
        %v11300 = vadd.f32 0.0, %v11299
        %v11301 = vpop.f32.mrb[0].mxu0
        %11302 = vmatprep.mubr.bf16.mxu0 0
        %11303 = vmatmul.mubr.bf16.gmra.mrb[0].mxu0 %v10744
        %v11304 = vpop.f32.mrb[0].mxu0
        %v11305 = vadd.f32 0.0, %v11304
        %v11306 = vpop.f32.mrb[0].mxu0
        %v11307 = vpop.f32.mrb[0].mxu0
        %v11308 = vadd.f32 0.0, %v11307
        %v11309 = vpop.f32.mrb[0].mxu0
        %11310 = vmatprep.mubr.bf16.mxu0 0
        %11311 = vmatmul.mubr.bf16.gmra.mrb[0].mxu0 %v10747
        %v11312 = vpop.f32.mrb[0].mxu0
        %v11313 = vadd.f32 0.0, %v11312
        %v11314 = vpop.f32.mrb[0].mxu0
        %v11315 = vpop.f32.mrb[0].mxu0
        %v11316 = vadd.f32 0.0, %v11315
        %v11317 = vpop.f32.mrb[0].mxu0
        %11318 = vmatprep.mubr.bf16.mxu0 0
        %11319 = vmatmul.mubr.bf16.gmra.mrb[0].mxu0 %v10750
        %v11320 = vpop.f32.mrb[0].mxu0
        %v11321 = vadd.f32 0.0, %v11320
        %v11322 = vpop.f32.mrb[0].mxu0
        %v11323 = vpop.f32.mrb[0].mxu0
        %v11324 = vadd.f32 0.0, %v11323
        %v11325 = vpop.f32.mrb[0].mxu0
        %11326 = vmatprep.mubr.bf16.mxu0 0
        %11327 = vmatmul.mubr.bf16.gmra.mrb[0].mxu0 %v10753
        %v11328 = vpop.f32.mrb[0].mxu0
        %v11329 = vadd.f32 0.0, %v11328
        %v11330 = vpop.f32.mrb[0].mxu0
        %v11331 = vpop.f32.mrb[0].mxu0
        %v11332 = vadd.f32 0.0, %v11331
        %v11333 = vpop.f32.mrb[0].mxu0
        %11334 = vmatprep.mubr.bf16.mxu0 0
        %11335 = vmatmul.mubr.bf16.gmra.mrb[0].mxu0 %v10756
        %v11336 = vpop.f32.mrb[0].mxu0
        %v11337 = vadd.f32 0.0, %v11336
        %v11338 = vpop.f32.mrb[0].mxu0
        %v11339 = vpop.f32.mrb[0].mxu0
        %v11340 = vadd.f32 0.0, %v11339
        %v11341 = vpop.f32.mrb[0].mxu0
        %11342 = vmatprep.mubr.bf16.mxu0 0
        %11343 = vmatmul.mubr.bf16.gmra.mrb[0].mxu0 %v10759
        %v11344 = vpop.f32.mrb[0].mxu0
        %v11345 = vadd.f32 0.0, %v11344
        %v11346 = vpop.f32.mrb[0].mxu0
        %v11347 = vpop.f32.mrb[0].mxu0
        %v11348 = vadd.f32 0.0, %v11347
        %v11349 = vpop.f32.mrb[0].mxu0
        %11350 = vmatprep.mubr.bf16.mxu0 0
        %11351 = vmatmul.mubr.bf16.gmra.mrb[0].mxu0 %v10762
        %v11352 = vpop.f32.mrb[0].mxu0
        %v11353 = vadd.f32 0.0, %v11352
        %v11354 = vpop.f32.mrb[0].mxu0
        %v11355 = vpop.f32.mrb[0].mxu0
        %v11356 = vadd.f32 0.0, %v11355
        %v11357 = vpop.f32.mrb[0].mxu0
        %11358 = vmatprep.mubr.bf16.mxu0 0
        %11359 = vmatmul.mubr.bf16.gmra.mrb[0].mxu0 %v10765
        %v11360 = vpop.f32.mrb[0].mxu0
        %v11361 = vadd.f32 0.0, %v11360
        %v11362 = vpop.f32.mrb[0].mxu0
        %v11363 = vpop.f32.mrb[0].mxu0
        %v11364 = vadd.f32 0.0, %v11363
        %v11365 = vpop.f32.mrb[0].mxu0
        %11366 = vmatprep.mubr.bf16.mxu0 0
        %11367 = vmatmul.mubr.bf16.gmra.mrb[0].mxu0 %v10994
        %v11368 = vpop.f32.mrb[0].mxu0
        %v11369 = vadd.f32 0.0, %v11368
        %v11370 = vpop.f32.mrb[0].mxu0
        %v11371 = vpop.f32.mrb[0].mxu0
        %v11372 = vadd.f32 0.0, %v11371
        %v11373 = vpop.f32.mrb[0].mxu0
        %11374 = vmatprep.mubr.bf16.mxu0 0
        %11375 = vmatmul.mubr.bf16.gmra.mrb[0].mxu0 %v9220
        %v11376 = vpop.f32.mrb[0].mxu0
        %v11377 = vadd.f32 0.0, %v11376
        %v11378 = vpop.f32.mrb[0].mxu0
        %v11379 = vpop.f32.mrb[0].mxu0
        %v11380 = vadd.f32 0.0, %v11379
        %v11381 = vpop.f32.mrb[0].mxu0
        %11382 = vdwg.mxu0
        %v11383 = vadd.f32 %v11157, %v11257
        %v11384 = vadd.f32 %v11158, %v11260
        %v11385 = vadd.f32 %v11159, %v11265
        %v11386 = vadd.f32 %v11160, %v11268
        %v11387 = vadd.f32 %v11161, %v11273
        %v11388 = vadd.f32 %v11162, %v11276
        %v11389 = vadd.f32 %v11163, %v11281
        %v11390 = vadd.f32 %v11164, %v11284
        %v11391 = vadd.f32 %v11165, %v11289
        %v11392 = vadd.f32 %v11166, %v11292
        %v11393 = vadd.f32 %v11167, %v11297
        %v11394 = vadd.f32 %v11168, %v11300
        %v11395 = vadd.f32 %v11169, %v11305
        %v11396 = vadd.f32 %v11170, %v11308
        %v11397 = vadd.f32 %v11171, %v11313
        %v11398 = vadd.f32 %v11172, %v11316
        %v11399 = vadd.f32 %v11173, %v11321
        %v11400 = vadd.f32 %v11174, %v11324
        %v11401 = vadd.f32 %v11175, %v11329
        %v11402 = vadd.f32 %v11176, %v11332
        %v11403 = vadd.f32 %v11177, %v11337
        %v11404 = vadd.f32 %v11178, %v11340
        %v11405 = vadd.f32 %v11179, %v11345
        %v11406 = vadd.f32 %v11180, %v11348
        %v11407 = vadd.f32 %v11181, %v11353
        %v11408 = vadd.f32 %v11182, %v11356
        %v11409 = vadd.f32 %v11183, %v11361
        %v11410 = vadd.f32 %v11184, %v11364
        %v11411 = vadd.f32 %v11185, %v11369
        %v11412 = vadd.f32 %v11186, %v11372
        %v11413 = vadd.f32 %v11187, %v11377
        %v11414 = vadd.f32 %v11188, %v11380
        %v11415 = vmax.f32 %v11383, 0.0
        %v11416 = vmax.f32 %v11384, 0.0
        %v11417 = vmax.f32 %v11385, 0.0
        %v11418 = vmax.f32 %v11386, 0.0
        %v11419 = vmax.f32 %v11387, 0.0
        %v11420 = vmax.f32 %v11388, 0.0
        %v11421 = vmax.f32 %v11389, 0.0
        %v11422 = vmax.f32 %v11390, 0.0
        %v11423 = vmax.f32 %v11391, 0.0
        %v11424 = vmax.f32 %v11392, 0.0
        %v11425 = vmax.f32 %v11393, 0.0
        %v11426 = vmax.f32 %v11394, 0.0
        %v11427 = vmax.f32 %v11395, 0.0
        %v11428 = vmax.f32 %v11396, 0.0
        %v11429 = vmax.f32 %v11397, 0.0
        %v11430 = vmax.f32 %v11398, 0.0
        %v11431 = vmax.f32 %v11399, 0.0
        %v11432 = vmax.f32 %v11400, 0.0
        %v11433 = vmax.f32 %v11401, 0.0
        %v11434 = vmax.f32 %v11402, 0.0
        %v11435 = vmax.f32 %v11403, 0.0
        %v11436 = vmax.f32 %v11404, 0.0
        %v11437 = vmax.f32 %v11405, 0.0
        %v11438 = vmax.f32 %v11406, 0.0
        %v11439 = vmax.f32 %v11407, 0.0
        %v11440 = vmax.f32 %v11408, 0.0
        %v11441 = vmax.f32 %v11409, 0.0
        %v11442 = vmax.f32 %v11410, 0.0
        %v11443 = vmax.f32 %v11411, 0.0
        %v11444 = vmax.f32 %v11412, 0.0
        %v11445 = vmax.f32 %v11413, 0.0
        %v11446 = vmax.f32 %v11414, 0.0
        %v11447 = vpack.c.bf16 %v11416, %v11415
        %v11448 = vpack.c.bf16 %v11418, %v11417
        %v11449 = vpack.c.bf16 %v11420, %v11419
        %v11450 = vpack.c.bf16 %v11422, %v11421
        %v11451 = vpack.c.bf16 %v11424, %v11423
        %v11452 = vpack.c.bf16 %v11426, %v11425
        %v11453 = vpack.c.bf16 %v11428, %v11427
        %v11454 = vpack.c.bf16 %v11430, %v11429
        %v11455 = vpack.c.bf16 %v11432, %v11431
        %v11456 = vpack.c.bf16 %v11434, %v11433
        %v11457 = vpack.c.bf16 %v11436, %v11435
        %v11458 = vpack.c.bf16 %v11438, %v11437
        %v11459 = vpack.c.bf16 %v11440, %v11439
        %v11460 = vpack.c.bf16 %v11442, %v11441
        %v11461 = vpack.c.bf16 %v11444, %v11443
        %v11462 = vpack.c.bf16 %v11446, %v11445
        %v11463 = vld [vmem:[#allocation14] sm:$0x3]
        %v11464 = vld [vmem:[#allocation16] sm:$0x1]
        %v11466 = vlaneseq
        %v11467 = vshrl.u32 %v11466, 7
        %v11468 = vsub.s32 0, %v11467
        %v11469 = vrot.slane %v11464, %v11468
        %vm11471 = vcmask 31744
        %v11473 = vsel %vm11471, %v11447, 0
        %v11476 = vsel %vm11471, %v11448, 0
        %v11479 = vsel %vm11471, %v11449, 0
        %v11482 = vsel %vm11471, %v11450, 0
        %v11485 = vsel %vm11471, %v11451, 0
        %v11488 = vsel %vm11471, %v11452, 0
        %v11491 = vsel %vm11471, %v11453, 0
        %v11494 = vsel %vm11471, %v11454, 0
        %v11497 = vsel %vm11471, %v11455, 0
        %v11500 = vsel %vm11471, %v11456, 0
        %v11503 = vsel %vm11471, %v11457, 0
        %v11506 = vsel %vm11471, %v11458, 0
        %v11509 = vsel %vm11471, %v11459, 0
        %v11512 = vsel %vm11471, %v11460, 0
        %v11515 = vsel %vm11471, %v11461, 0
        %v11518 = vsel %vm11471, %v11462, 0
        %vm11520 = vcmask 1041408
        %v11522 = vsel %vm11520, %v11463, 0
        %11524 = vmatprep.subr.bf16.mxu0 0
        %11525 = vmatpush1.bf16.msra.mxu0 %v11522
        %11526 = vmatprep.subr.bf16.mxu0 0
        %11527 = vmatpush1.bf16.msra.mxu0 0
        %11528 = vmatprep.subr.bf16.mxu0 0
        %11529 = vmatpush1.bf16.msra.mxu0 0
        %11530 = vmatprep.subr.bf16.mxu0 0
        %11531 = vmatpush1.bf16.msra.mxu0 0
        %11532 = vmatprep.subr.bf16.mxu0 0
        %11533 = vmatpush1.bf16.msra.mxu0 0
        %11534 = vmatprep.subr.bf16.mxu0 0
        %11535 = vmatpush1.bf16.msra.mxu0 0
        %11536 = vmatprep.subr.bf16.mxu0 0
        %11537 = vmatpush1.bf16.msra.mxu0 0
        %11538 = vmatprep.subr.bf16.mxu0 0
        %11539 = vmatpush1.bf16.msra.mxu0 0
        %11540 = vmatprep.subr.bf16.mxu0 0
        %11541 = vmatpush1.bf16.msra.mxu0 0
        %11542 = vmatprep.subr.bf16.mxu0 0
        %11543 = vmatpush1.bf16.msra.mxu0 0
        %11544 = vmatprep.subr.bf16.mxu0 0
        %11545 = vmatpush1.bf16.msra.mxu0 0
        %11546 = vmatprep.subr.bf16.mxu0 0
        %11547 = vmatpush1.bf16.msra.mxu0 0
        %11548 = vmatprep.subr.bf16.mxu0 0
        %11549 = vmatpush1.bf16.msra.mxu0 0
        %11550 = vmatprep.subr.bf16.mxu0 0
        %11551 = vmatpush1.bf16.msra.mxu0 0
        %11552 = vmatprep.subr.bf16.mxu0 0
        %11553 = vmatpush1.bf16.msra.mxu0 0
        %11554 = vmatprep.subr.bf16.mxu0 0
        %11555 = vmatpush1.bf16.msra.mxu0 0
        %11556 = vmatprep.mubr.bf16.mxu0 0
        %11557 = vmatmul.mubr.bf16.gmra.mrb[0].mxu0 %v11473
        %v11558 = vpop.f32.mrb[0].mxu0
        %v11559 = vadd.f32 %v11469, %v11558
        %v11560 = vpop.f32.mrb[0].mxu0
        %v11561 = vpop.f32.mrb[0].mxu0
        %v11562 = vadd.f32 %v11469, %v11561
        %v11563 = vpop.f32.mrb[0].mxu0
        %11564 = vmatprep.mubr.bf16.mxu0 0
        %11565 = vmatmul.mubr.bf16.gmra.mrb[0].mxu0 %v11476
        %v11566 = vpop.f32.mrb[0].mxu0
        %v11567 = vadd.f32 %v11469, %v11566
        %v11568 = vpop.f32.mrb[0].mxu0
        %v11569 = vpop.f32.mrb[0].mxu0
        %v11570 = vadd.f32 %v11469, %v11569
        %v11571 = vpop.f32.mrb[0].mxu0
        %11572 = vmatprep.mubr.bf16.mxu0 0
        %11573 = vmatmul.mubr.bf16.gmra.mrb[0].mxu0 %v11479
        %v11574 = vpop.f32.mrb[0].mxu0
        %v11575 = vadd.f32 %v11469, %v11574
        %v11576 = vpop.f32.mrb[0].mxu0
        %v11577 = vpop.f32.mrb[0].mxu0
        %v11578 = vadd.f32 %v11469, %v11577
        %v11579 = vpop.f32.mrb[0].mxu0
        %11580 = vmatprep.mubr.bf16.mxu0 0
        %11581 = vmatmul.mubr.bf16.gmra.mrb[0].mxu0 %v11482
        %v11582 = vpop.f32.mrb[0].mxu0
        %v11583 = vadd.f32 %v11469, %v11582
        %v11584 = vpop.f32.mrb[0].mxu0
        %v11585 = vpop.f32.mrb[0].mxu0
        %v11586 = vadd.f32 %v11469, %v11585
        %v11587 = vpop.f32.mrb[0].mxu0
        %11588 = vmatprep.mubr.bf16.mxu0 0
        %11589 = vmatmul.mubr.bf16.gmra.mrb[0].mxu0 %v11485
        %v11590 = vpop.f32.mrb[0].mxu0
        %v11591 = vadd.f32 %v11469, %v11590
        %v11592 = vpop.f32.mrb[0].mxu0
        %v11593 = vpop.f32.mrb[0].mxu0
        %v11594 = vadd.f32 %v11469, %v11593
        %v11595 = vpop.f32.mrb[0].mxu0
        %11596 = vmatprep.mubr.bf16.mxu0 0
        %11597 = vmatmul.mubr.bf16.gmra.mrb[0].mxu0 %v11488
        %v11598 = vpop.f32.mrb[0].mxu0
        %v11599 = vadd.f32 %v11469, %v11598
        %v11600 = vpop.f32.mrb[0].mxu0
        %v11601 = vpop.f32.mrb[0].mxu0
        %v11602 = vadd.f32 %v11469, %v11601
        %v11603 = vpop.f32.mrb[0].mxu0
        %11604 = vmatprep.mubr.bf16.mxu0 0
        %11605 = vmatmul.mubr.bf16.gmra.mrb[0].mxu0 %v11491
        %v11606 = vpop.f32.mrb[0].mxu0
        %v11607 = vadd.f32 %v11469, %v11606
        %v11608 = vpop.f32.mrb[0].mxu0
        %v11609 = vpop.f32.mrb[0].mxu0
        %v11610 = vadd.f32 %v11469, %v11609
        %v11611 = vpop.f32.mrb[0].mxu0
        %11612 = vmatprep.mubr.bf16.mxu0 0
        %11613 = vmatmul.mubr.bf16.gmra.mrb[0].mxu0 %v11494
        %v11614 = vpop.f32.mrb[0].mxu0
        %v11615 = vadd.f32 %v11469, %v11614
        %v11616 = vpop.f32.mrb[0].mxu0
        %v11617 = vpop.f32.mrb[0].mxu0
        %v11618 = vadd.f32 %v11469, %v11617
        %v11619 = vpop.f32.mrb[0].mxu0
        %11620 = vmatprep.mubr.bf16.mxu0 0
        %11621 = vmatmul.mubr.bf16.gmra.mrb[0].mxu0 %v11497
        %v11622 = vpop.f32.mrb[0].mxu0
        %v11623 = vadd.f32 %v11469, %v11622
        %v11624 = vpop.f32.mrb[0].mxu0
        %v11625 = vpop.f32.mrb[0].mxu0
        %v11626 = vadd.f32 %v11469, %v11625
        %v11627 = vpop.f32.mrb[0].mxu0
        %11628 = vmatprep.mubr.bf16.mxu0 0
        %11629 = vmatmul.mubr.bf16.gmra.mrb[0].mxu0 %v11500
        %v11630 = vpop.f32.mrb[0].mxu0
        %v11631 = vadd.f32 %v11469, %v11630
        %v11632 = vpop.f32.mrb[0].mxu0
        %v11633 = vpop.f32.mrb[0].mxu0
        %v11634 = vadd.f32 %v11469, %v11633
        %v11635 = vpop.f32.mrb[0].mxu0
        %11636 = vmatprep.mubr.bf16.mxu0 0
        %11637 = vmatmul.mubr.bf16.gmra.mrb[0].mxu0 %v11503
        %v11638 = vpop.f32.mrb[0].mxu0
        %v11639 = vadd.f32 %v11469, %v11638
        %v11640 = vpop.f32.mrb[0].mxu0
        %v11641 = vpop.f32.mrb[0].mxu0
        %v11642 = vadd.f32 %v11469, %v11641
        %v11643 = vpop.f32.mrb[0].mxu0
        %11644 = vmatprep.mubr.bf16.mxu0 0
        %11645 = vmatmul.mubr.bf16.gmra.mrb[0].mxu0 %v11506
        %v11646 = vpop.f32.mrb[0].mxu0
        %v11647 = vadd.f32 %v11469, %v11646
        %v11648 = vpop.f32.mrb[0].mxu0
        %v11649 = vpop.f32.mrb[0].mxu0
        %v11650 = vadd.f32 %v11469, %v11649
        %v11651 = vpop.f32.mrb[0].mxu0
        %11652 = vmatprep.mubr.bf16.mxu0 0
        %11653 = vmatmul.mubr.bf16.gmra.mrb[0].mxu0 %v11509
        %v11654 = vpop.f32.mrb[0].mxu0
        %v11655 = vadd.f32 %v11469, %v11654
        %v11656 = vpop.f32.mrb[0].mxu0
        %v11657 = vpop.f32.mrb[0].mxu0
        %v11658 = vadd.f32 %v11469, %v11657
        %v11659 = vpop.f32.mrb[0].mxu0
        %11660 = vmatprep.mubr.bf16.mxu0 0
        %11661 = vmatmul.mubr.bf16.gmra.mrb[0].mxu0 %v11512
        %v11662 = vpop.f32.mrb[0].mxu0
        %v11663 = vadd.f32 %v11469, %v11662
        %v11664 = vpop.f32.mrb[0].mxu0
        %v11665 = vpop.f32.mrb[0].mxu0
        %v11666 = vadd.f32 %v11469, %v11665
        %v11667 = vpop.f32.mrb[0].mxu0
        %11668 = vmatprep.mubr.bf16.mxu0 0
        %11669 = vmatmul.mubr.bf16.gmra.mrb[0].mxu0 %v11515
        %v11670 = vpop.f32.mrb[0].mxu0
        %v11671 = vadd.f32 %v11469, %v11670
        %v11672 = vpop.f32.mrb[0].mxu0
        %v11673 = vpop.f32.mrb[0].mxu0
        %v11674 = vadd.f32 %v11469, %v11673
        %v11675 = vpop.f32.mrb[0].mxu0
        %11676 = vmatprep.mubr.bf16.mxu0 0
        %11677 = vmatmul.mubr.bf16.gmra.mrb[0].mxu0 %v11518
        %v11678 = vpop.f32.mrb[0].mxu0
        %v11679 = vadd.f32 %v11469, %v11678
        %v11680 = vpop.f32.mrb[0].mxu0
        %v11681 = vpop.f32.mrb[0].mxu0
        %v11682 = vadd.f32 %v11469, %v11681
        %v11683 = vpop.f32.mrb[0].mxu0
        %11684 = vdwg.mxu0
        %11685 = vxpose.xlu0.b32.start [1/16] %v11559, 128
        %11686 = vxpose.xlu0.b32.cont [2/16] %v11562, 128
        %11687 = vxpose.xlu0.b32.cont [3/16] %v11567, 128
        %11688 = vxpose.xlu0.b32.cont [4/16] %v11570, 128
        %11689 = vxpose.xlu0.b32.cont [5/16] %v11575, 128
        %11690 = vxpose.xlu0.b32.cont [6/16] %v11578, 128
        %11691 = vxpose.xlu0.b32.cont [7/16] %v11583, 128
        %11692 = vxpose.xlu0.b32.cont [8/16] %v11586, 128
        %11693 = vxpose.xlu0.b32.cont [9/16] %v11591, 128
        %11694 = vxpose.xlu0.b32.cont [10/16] %v11594, 128
        %11695 = vxpose.xlu0.b32.cont [11/16] %v11599, 128
        %11696 = vxpose.xlu0.b32.cont [12/16] %v11602, 128
        %11697 = vxpose.xlu0.b32.cont [13/16] %v11607, 128
        %11698 = vxpose.xlu0.b32.cont [14/16] %v11610, 128
        %11699 = vxpose.xlu0.b32.cont [15/16] %v11615, 128
        %11700 = vxpose.xlu0.b32.end [16/16] %v11618, 128
        %v11701 = vpop.trf.xlu0
        %v11702 = vpop.trf.xlu0
        %v11703 = vpop.trf.xlu0
        %v11704 = vpop.trf.xlu0
        %v11705 = vpop.trf.xlu0
        %v11706 = vpop.trf.xlu0
        %v11707 = vpop.trf.xlu0
        %v11708 = vpop.trf.xlu0
        %v11709 = vpop.trf.xlu0
        %v11710 = vpop.trf.xlu0
        %v11711 = vpop.trf.xlu0
        %v11712 = vpop.trf.xlu0
        %v11713 = vpop.trf.xlu0
        %v11714 = vpop.trf.xlu0
        %v11715 = vpop.trf.xlu0
        %v11716 = vpop.trf.xlu0
        %11717 = vxpose.xlu0.b32.start [1/16] %v11623, 128
        %11718 = vxpose.xlu0.b32.cont [2/16] %v11626, 128
        %11719 = vxpose.xlu0.b32.cont [3/16] %v11631, 128
        %11720 = vxpose.xlu0.b32.cont [4/16] %v11634, 128
        %11721 = vxpose.xlu0.b32.cont [5/16] %v11639, 128
        %11722 = vxpose.xlu0.b32.cont [6/16] %v11642, 128
        %11723 = vxpose.xlu0.b32.cont [7/16] %v11647, 128
        %11724 = vxpose.xlu0.b32.cont [8/16] %v11650, 128
        %11725 = vxpose.xlu0.b32.cont [9/16] %v11655, 128
        %11726 = vxpose.xlu0.b32.cont [10/16] %v11658, 128
        %11727 = vxpose.xlu0.b32.cont [11/16] %v11663, 128
        %11728 = vxpose.xlu0.b32.cont [12/16] %v11666, 128
        %11729 = vxpose.xlu0.b32.cont [13/16] %v11671, 128
        %11730 = vxpose.xlu0.b32.cont [14/16] %v11674, 128
        %11731 = vxpose.xlu0.b32.cont [15/16] %v11679, 128
        %11732 = vxpose.xlu0.b32.end [16/16] %v11682, 128
        %v11733 = vpop.trf.xlu0
        %v11734 = vpop.trf.xlu0
        %v11735 = vpop.trf.xlu0
        %v11736 = vpop.trf.xlu0
        %v11737 = vpop.trf.xlu0
        %v11738 = vpop.trf.xlu0
        %v11739 = vpop.trf.xlu0
        %v11740 = vpop.trf.xlu0
        %v11741 = vpop.trf.xlu0
        %v11742 = vpop.trf.xlu0
        %v11743 = vpop.trf.xlu0
        %v11744 = vpop.trf.xlu0
        %v11745 = vpop.trf.xlu0
        %v11746 = vpop.trf.xlu0
        %v11747 = vpop.trf.xlu0
        %v11748 = vpop.trf.xlu0
        %v11751 = vcombine.low %v11701, %v11733
        %11753 = vst [vmem:[%s535] sm:$0xff] %v11751
        %s11754 = sand.u32 %s298, 1
        %s11755 = scalar_lea.sflag [#allocation4], %s11754
        %s11756 = sand.u32 %s298, 1
        %s11757 = smul.addr %s11756, 8
        %s11758 = scalar_lea.vmem [#allocation17], %s11757
        // Predicated region
        $region105: #{tpu_custom_call.1} parent=67 // pred_check
          %p11759 = pneg %p308
        $region106: #{tpu_custom_call.1} parent=67 // pred_check_branch
          %11761 = sbr.rel (%p11759) target = $region108
        $region107: #{tpu_custom_call.1} parent=67 // pred_region
          %s11763 = ssub.s32 128, 128
          %11764 = vsyncadd %s11755, %s11763
          %s11765 = smul.addr %s33, 2
          %s11766 = smul.addr %s11765, 64
          %s11767 = scalar_lea.hbm %s12, %s11766
          %s11769 = sshll.u32 %s11758, 4
          %s11770 = int_to_ptr.vmem [resolvable:$true] %s11769
          %11772 = dma.vmem_to_hbm [thread:$0]  %s11770, 128, %s11767, %s11755
        $region108: #{tpu_custom_call.1} parent=67 // pred_fallthru
          _
      $region68: #{tpu_custom_call.1} parent=5 // pred_fallthru
        _
      %p11773 = scmp.le.s32.totalorder 2, %s28
      // Predicated region
      $region109: #{tpu_custom_call.1} parent=5 // pred_check
        %p11774 = pneg %p11773
      $region110: #{tpu_custom_call.1} parent=5 // pred_check_branch
        %11776 = sbr.rel (%p11774) target = $region112
      $region111: #{tpu_custom_call.1} parent=5 // pred_region
        %s11777 = ssub.s32 %s28, 2
        // Predicated region
        $region113: #{tpu_custom_call.1} parent=111 // pred_check
          %p11778 = pneg %p314
        $region114: #{tpu_custom_call.1} parent=111 // pred_check_branch
          %11780 = sbr.rel (%p11778) target = $region116
        $region115: #{tpu_custom_call.1} parent=111 // pred_region
          %s11781 = sand.u32 %s299, 1
          %s11782 = scalar_lea.sflag [#allocation4], %s11781
          %s11783 = sand.u32 %s299, 1
          %s11784 = smul.addr %s11783, 8
          %s11785 = scalar_lea.vmem [#allocation17], %s11784
          %11786 = dma.done %s11782, 128
        $region116: #{tpu_custom_call.1} parent=111 // pred_fallthru
          _
      $region112: #{tpu_custom_call.1} parent=5 // pred_fallthru
        _
    $region6: #{tpu_custom_call.1} parent=1 // loop_footer
      %s32 = sadd.s32 1, %s28
    $region7: #{tpu_custom_call.1} parent=1 // loop_footer_branch
      %27 = sbr.rel target = $region3
    $region8: #{tpu_custom_call.1} parent=1 // loop_exit
      _
    %11787 = vsyncpa [#allocation3], 1
    %s11788 = scalar_lea.sflag [#allocation3], 1
    %11789 = vsyncpa %s11788, 1
    %11790 = vsyncpa [#allocation6], 1
    %11791 = vsyncpa [#allocation9], 1
    %11792 = vsyncpa [#allocation12], 1
    %11793 = vsyncpa [#allocation15], 1
    %11794 = vsyncpa [#allocation4], 1
    %s11795 = scalar_lea.sflag [#allocation4], 1
    %11796 = vsyncpa %s11795, 1

</llo_original>
